<compile_context>
chip_gen: v7x
topology: tpu7x:2x2x1
jax: 0.10.0
libtpu: 0.0.40
codegen_flags: <defaults>
</compile_context>

<pallas_src>
import functools

import jax
import jax.numpy as jnp
from jax.experimental import pallas as pl
from jax.experimental.pallas import tpu as pltpu

CHANNEL = 32
K_EXPERTS = 4
KSIZE = 3
KK = KSIZE * KSIZE                         # 9 taps
KC = K_EXPERTS * CHANNEL                   # 128 wide output lanes (expert-major)
HIDDEN = int(CHANNEL * 0.25) + 1           # 9
TEMPERATURE = 34.0
LEAKY_SLOPE = 0.01                         # nn.LeakyReLU() default


# ----------------------------------------------------------------------------
# Fused Resblock kernel: per-sample dynamic conv x2 + attention branches +
# LeakyReLU + residual, all in VMEM.
# ----------------------------------------------------------------------------
def _resblock_kernel(x_ref, w0_ref, b0_ref, w1_ref, b1_ref,
                     fc1w0_ref, fc2w0_ref, fc2b0_ref,
                     fc1w1_ref, fc2w1_ref, fc2b1_ref,
                     rep_ref, mix_ref,
                     out_ref,
                     xpad_ref, col_ref, wide_ref,
                     *, H, W):
    C = CHANNEL
    HW = H * W

    def attention(x_hwc, fc1w, fc2w, fc2b):
        # GAP -> fc1 -> relu -> fc2 -> softmax(./T); returns pi expanded to the
        # wide column layout (1, K*Cout) so mixing is a lane-wise multiply.
        gap = jnp.mean(x_hwc, axis=0, keepdims=True)                   # (1, C)
        h = jnp.maximum(
            jnp.dot(gap, fc1w, preferred_element_type=jnp.float32), 0.0)
        logits = (jnp.dot(h, fc2w, preferred_element_type=jnp.float32)
                  + fc2b) * (1.0 / TEMPERATURE)                        # (1, K)
        e = jnp.exp(logits - jnp.max(logits, axis=-1, keepdims=True))
        pi = e / jnp.sum(e, axis=-1, keepdims=True)                    # (1, K)
        return jnp.dot(pi, rep_ref[...],
                       preferred_element_type=jnp.float32)             # (1, KC)

    def dyn_conv(x_hwc, pi_wide, w_ref_, b_ref_):
        # Zero-pad in VMEM (no HBM round trip), build im2col once, then one
        # deep (HW, 9C) @ (9C, KC) MXU matmul with the shared expert bank.
        xpad_ref[...] = jnp.zeros_like(xpad_ref)
        xpad_ref[1:H + 1, 1:W + 1, :] = x_hwc.reshape(H, W, C)
        for kh in range(KSIZE):
            for kw in range(KSIZE):
                t = kh * KSIZE + kw
                col_ref[:, t * C:(t + 1) * C] = (
                    xpad_ref[kh:kh + H, kw:kw + W, :].reshape(HW, C))
        wide_ref[...] = jnp.dot(col_ref[...], w_ref_[...],
                                preferred_element_type=jnp.float32) + b_ref_[...]
        # Expert mixing: scale each expert's 32-column block by its pi, then
        # fold the K blocks back to Cout with kron(1_K, I) -> (HW, C).
        return jnp.dot(wide_ref[...] * pi_wide, mix_ref[...],
                       preferred_element_type=jnp.float32)

    x_chw = x_ref[0].astype(jnp.float32)        # (C, HW) lane-dense block
    x_hwc = x_chw.T                             # (HW, C)

    # conv20 + LeakyReLU (attention branch fused in-kernel).
    pw0 = attention(x_hwc, fc1w0_ref[...], fc2w0_ref[...], fc2b0_ref[...])
    rs1 = dyn_conv(x_hwc, pw0, w0_ref, b0_ref)
    rs1 = jnp.where(rs1 >= 0, rs1, LEAKY_SLOPE * rs1)

    # conv21 + residual add (residual applied in the lane-dense (C, HW) layout).
    pw1 = attention(rs1, fc1w1_ref[...], fc2w1_ref[...], fc2b1_ref[...])
    rs2 = dyn_conv(rs1, pw1, w1_ref, b1_ref)

    out_ref[0] = (x_chw + rs2.T).astype(out_ref.dtype)


def resblock_forward(x_nchw, p20, p21):
    """Resblock.forward: x + conv21(LeakyReLU(conv20(x))).  NCHW in/out."""
    B, C, H, W = x_nchw.shape
    assert C == CHANNEL
    HW = H * W
    x_chw = x_nchw.reshape(B, C, HW)            # pure reshape (no relayout)

    def wide_params(p):
        # Expert bank (K,3,3,Cin,Cout) -> (9*Cin, K*Cout); bias -> (1, K*Cout).
        w = jnp.transpose(p["w_bank"], (1, 2, 3, 0, 4)).reshape(KK * C, KC)
        b = p["bias"].reshape(1, KC)
        return w.astype(jnp.float32), b.astype(jnp.float32)

    w0, b0 = wide_params(p20)
    w1, b1 = wide_params(p21)

    # pi (1,K) @ rep -> pi repeated over each expert's Cout lanes of `wide`.
    rep = jnp.kron(jnp.eye(K_EXPERTS, dtype=jnp.float32),
                   jnp.ones((1, CHANNEL), jnp.float32))                 # (K, KC)
    # (wide * pi_wide) @ mix sums the K expert blocks back to Cout channels.
    mix = jnp.tile(jnp.eye(CHANNEL, dtype=jnp.float32), (K_EXPERTS, 1))  # (KC, C)

    def fc(p):
        return (p["fc1_w"].astype(jnp.float32),
                p["fc2_w"].astype(jnp.float32),
                p["fc2_b"].reshape(1, K_EXPERTS).astype(jnp.float32))

    fc1w0, fc2w0, fc2b0 = fc(p20)
    fc1w1, fc2w1, fc2b1 = fc(p21)

    def resident(a):                              # VMEM-resident across the grid
        return pl.BlockSpec(a.shape, lambda b: (0, 0))

    kernel = functools.partial(_resblock_kernel, H=H, W=W)

    out = pl.pallas_call(
        kernel,
        out_shape=jax.ShapeDtypeStruct((B, C, HW), x_nchw.dtype),
        grid_spec=pltpu.PrefetchScalarGridSpec(
            num_scalar_prefetch=0,
            grid=(B,),
            in_specs=[
                pl.BlockSpec((1, C, HW), lambda b: (b, 0, 0)),
                resident(w0), resident(b0), resident(w1), resident(b1),
                resident(fc1w0), resident(fc2w0), resident(fc2b0),
                resident(fc1w1), resident(fc2w1), resident(fc2b1),
                resident(rep), resident(mix),
            ],
            out_specs=pl.BlockSpec((1, C, HW), lambda b: (b, 0, 0)),
            scratch_shapes=[
                pltpu.VMEM((H + 2, W + 2, C), jnp.float32),   # padded sample
                pltpu.VMEM((HW, KK * C), jnp.float32),        # im2col
                pltpu.VMEM((HW, KC), jnp.float32),            # wide conv out
            ],
        ),
        compiler_params=pltpu.CompilerParams(
            dimension_semantics=("parallel",)),               # v7x: 2 TCs split B
    )(x_chw, w0, b0, w1, b1,
      fc1w0, fc2w0, fc2b0, fc1w1, fc2w1, fc2b1, rep, mix)

    return out.reshape(B, C, H, W)


# ----------------------------------------------------------------------------
# Pure-JAX reference (per-sample aggregated weights, as in the PyTorch module).
# ----------------------------------------------------------------------------
def _attention_ref(gap, p):
    h = jnp.maximum(gap @ p["fc1_w"], 0.0)
    logits = h @ p["fc2_w"] + p["fc2_b"]
    return jax.nn.softmax(logits / TEMPERATURE, axis=-1)


def _conv3x3_ref(x_nhwc, w_agg, b_agg):
    B, H, W, C = x_nhwc.shape
    Cout = w_agg.shape[-1]
    xpad = jnp.pad(x_nhwc, ((0, 0), (1, 1), (1, 1), (0, 0)))
    out = jnp.zeros((B, H, W, Cout), jnp.float32)
    for kh in range(KSIZE):
        for kw in range(KSIZE):
            out = out + jnp.einsum("bhwi,bio->bhwo",
                                   xpad[:, kh:kh + H, kw:kw + W, :],
                                   w_agg[:, kh, kw])
    return out + b_agg[:, None, None, :]


def resblock_ref(x_nchw, p20, p21):
    x = jnp.transpose(x_nchw, (0, 2, 3, 1))                   # NHWC
    pi0 = _attention_ref(jnp.mean(x, axis=(1, 2)), p20)
    w0 = jnp.einsum("bk,khwio->bhwio", pi0, p20["w_bank"])
    b0 = pi0 @ p20["bias"]
    rs1 = _conv3x3_ref(x, w0, b0)
    rs1 = jnp.where(rs1 >= 0, rs1, LEAKY_SLOPE * rs1)
    pi1 = _attention_ref(jnp.mean(rs1, axis=(1, 2)), p21)
    w1 = jnp.einsum("bk,khwio->bhwio", pi1, p21["w_bank"])
    b1 = pi1 @ p21["bias"]
    rs = x + _conv3x3_ref(rs1, w1, b1)
    return jnp.transpose(rs, (0, 3, 1, 2))


# ----------------------------------------------------------------------------
# Deterministic synthetic parameters (shapes follow Dynamic_conv2d.__init__).
# ----------------------------------------------------------------------------
def _init_dynconv_params(key):
    k0, k1, k2, k3, k4 = jax.random.split(key, 5)
    return {
        # PyTorch bank is (K, Cout, Cin, 3, 3); stored pre-permuted to
        # (K, 3, 3, Cin, Cout) for the NHWC formulation.
        "w_bank": 0.1 * jax.random.normal(
            k0, (K_EXPERTS, KSIZE, KSIZE, CHANNEL, CHANNEL), jnp.float32),
        "bias": 0.1 * jax.random.normal(
            k1, (K_EXPERTS, CHANNEL), jnp.float32),
        # attention2d: fc1 Conv1x1 (no bias), fc2 Conv1x1 (bias).
        "fc1_w": 0.1 * jax.random.normal(k2, (CHANNEL, HIDDEN), jnp.float32),
        "fc2_w": 0.1 * jax.random.normal(k3, (HIDDEN, K_EXPERTS), jnp.float32),
        "fc2_b": 0.1 * jax.random.normal(k4, (K_EXPERTS,), jnp.float32),
    }


if __name__ == "__main__":
    key = jax.random.PRNGKey(0)
    kx, k20, k21 = jax.random.split(key, 3)

    B, C, H, W = 2, CHANNEL, 16, 16
    x = jax.random.normal(kx, (B, C, H, W), jnp.float32)      # NCHW like PyTorch
    p20 = _init_dynconv_params(k20)
    p21 = _init_dynconv_params(k21)

    out = jax.block_until_ready(jax.jit(resblock_forward)(x, p20, p21))
    assert out.shape == (B, C, H, W), out.shape

    ref = jax.block_until_ready(resblock_ref(x, p20, p21))
    max_err = float(jnp.max(jnp.abs(out - ref)))
    assert jnp.allclose(out, ref, atol=2e-3, rtol=2e-3), max_err

    print("KERNEL_OK")
</pallas_src>

<mosaic_0001>
module attributes {stable_mosaic.version = 11 : i64} {
  func.func @_resblock_kernel(%arg0: i32, %arg1: memref<1x32x256xf32, #tpu.memory_space<vmem>>, %arg2: memref<288x128xf32, #tpu.memory_space<vmem>>, %arg3: memref<1x128xf32, #tpu.memory_space<vmem>>, %arg4: memref<288x128xf32, #tpu.memory_space<vmem>>, %arg5: memref<1x128xf32, #tpu.memory_space<vmem>>, %arg6: memref<32x9xf32, #tpu.memory_space<vmem>>, %arg7: memref<9x4xf32, #tpu.memory_space<vmem>>, %arg8: memref<1x4xf32, #tpu.memory_space<vmem>>, %arg9: memref<32x9xf32, #tpu.memory_space<vmem>>, %arg10: memref<9x4xf32, #tpu.memory_space<vmem>>, %arg11: memref<1x4xf32, #tpu.memory_space<vmem>>, %arg12: memref<4x128xf32, #tpu.memory_space<vmem>>, %arg13: memref<128x32xf32, #tpu.memory_space<vmem>>, %arg14: memref<1x32x256xf32, #tpu.memory_space<vmem>>, %arg15: memref<18x18x32xf32, #tpu.memory_space<vmem>>, %arg16: memref<256x288xf32, #tpu.memory_space<vmem>>, %arg17: memref<256x128xf32, #tpu.memory_space<vmem>>) attributes {dimension_semantics = [#tpu.dimension_semantics<parallel>], iteration_bounds = array<i64: 2>, scalar_prefetch = 0 : i64, scratch_operands = 3 : i64, tpu.core_type = #tpu.core_type<tc>, window_params = [{transform_indices = @transform_0, window_bounds = array<i64: 1, 32, 256>}, {pipeline_mode = #tpu.pipeline_mode<synchronous>, transform_indices = @transform_1, window_bounds = array<i64: 288, 128>}, {pipeline_mode = #tpu.pipeline_mode<synchronous>, transform_indices = @transform_2, window_bounds = array<i64: 1, 128>}, {pipeline_mode = #tpu.pipeline_mode<synchronous>, transform_indices = @transform_3, window_bounds = array<i64: 288, 128>}, {pipeline_mode = #tpu.pipeline_mode<synchronous>, transform_indices = @transform_4, window_bounds = array<i64: 1, 128>}, {pipeline_mode = #tpu.pipeline_mode<synchronous>, transform_indices = @transform_5, window_bounds = array<i64: 32, 9>}, {pipeline_mode = #tpu.pipeline_mode<synchronous>, transform_indices = @transform_6, window_bounds = array<i64: 9, 4>}, {pipeline_mode = #tpu.pipeline_mode<synchronous>, transform_indices = @transform_7, window_bounds = array<i64: 1, 4>}, {pipeline_mode = #tpu.pipeline_mode<synchronous>, transform_indices = @transform_8, window_bounds = array<i64: 32, 9>}, {pipeline_mode = #tpu.pipeline_mode<synchronous>, transform_indices = @transform_9, window_bounds = array<i64: 9, 4>}, {pipeline_mode = #tpu.pipeline_mode<synchronous>, transform_indices = @transform_10, window_bounds = array<i64: 1, 4>}, {pipeline_mode = #tpu.pipeline_mode<synchronous>, transform_indices = @transform_11, window_bounds = array<i64: 4, 128>}, {pipeline_mode = #tpu.pipeline_mode<synchronous>, transform_indices = @transform_12, window_bounds = array<i64: 128, 32>}, {transform_indices = @transform_13, window_bounds = array<i64: 1, 32, 256>}]} {
    %c0 = arith.constant 0 : index
    %c0_0 = arith.constant 0 : index
    %c0_1 = arith.constant 0 : index
    %0 = vector.load %arg1[%c0, %c0_0, %c0_1] : memref<1x32x256xf32, #tpu.memory_space<vmem>>, vector<1x32x256xf32>
    %1 = vector.shape_cast %0 : vector<1x32x256xf32> to vector<32x256xf32>
    %2 = tpu.transpose %1, [1, 0] : vector<32x256xf32> -> vector<256x32xf32>
    %c0_2 = arith.constant 0 : index
    %c0_3 = arith.constant 0 : index
    %3 = vector.load %arg6[%c0_2, %c0_3] : memref<32x9xf32, #tpu.memory_space<vmem>>, vector<32x9xf32>
    %c0_4 = arith.constant 0 : index
    %c0_5 = arith.constant 0 : index
    %4 = vector.load %arg7[%c0_4, %c0_5] : memref<9x4xf32, #tpu.memory_space<vmem>>, vector<9x4xf32>
    %c0_6 = arith.constant 0 : index
    %c0_7 = arith.constant 0 : index
    %5 = vector.load %arg8[%c0_6, %c0_7] : memref<1x4xf32, #tpu.memory_space<vmem>>, vector<1x4xf32>
    %cst = arith.constant dense<0.000000e+00> : vector<32xf32>
    %6 = vector.multi_reduction <add>, %2, %cst [0] : vector<256x32xf32> to vector<32xf32>
    %7 = vector.shape_cast %6 : vector<32xf32> to vector<1x32xf32>
    %cst_8 = arith.constant 2.560000e+02 : f32
    %8 = vector.broadcast %cst_8 : f32 to vector<1x32xf32>
    %9 = arith.divf %7, %8 : vector<1x32xf32>
    %cst_9 = arith.constant dense<0.000000e+00> : vector<1x9xf32>
    %10 = tpu.matmul %9, %3, %cst_9 {dimension_numbers = #tpu.dot_dimension_numbers<[1], [0], [0], [1], [0, 0, 1, 1], [], []>} : vector<1x32xf32>, vector<32x9xf32>, vector<1x9xf32> -> vector<1x9xf32>
    %cst_10 = arith.constant 0.000000e+00 : f32
    %11 = vector.broadcast %cst_10 : f32 to vector<1x9xf32>
    %12 = arith.maximumf %10, %11 : vector<1x9xf32>
    %cst_11 = arith.constant dense<0.000000e+00> : vector<1x4xf32>
    %13 = tpu.matmul %12, %4, %cst_11 {dimension_numbers = #tpu.dot_dimension_numbers<[1], [0], [0], [1], [0, 0, 1, 1], [], []>} : vector<1x9xf32>, vector<9x4xf32>, vector<1x4xf32> -> vector<1x4xf32>
    %14 = arith.addf %13, %5 : vector<1x4xf32>
    %cst_12 = arith.constant 0.0294117648 : f32
    %15 = vector.broadcast %cst_12 : f32 to vector<1x4xf32>
    %16 = arith.mulf %14, %15 : vector<1x4xf32>
    %cst_13 = arith.constant dense<0xFF800000> : vector<1xf32>
    %17 = vector.multi_reduction <maximumf>, %16, %cst_13 [1] : vector<1x4xf32> to vector<1xf32>
    %18 = vector.shape_cast %17 : vector<1xf32> to vector<1x1xf32>
    %19 = vector.broadcast %18 : vector<1x1xf32> to vector<1x4xf32>
    %20 = arith.subf %16, %19 : vector<1x4xf32>
    %21 = math.exp %20 : vector<1x4xf32>
    %cst_14 = arith.constant dense<0.000000e+00> : vector<1xf32>
    %22 = vector.multi_reduction <add>, %21, %cst_14 [1] : vector<1x4xf32> to vector<1xf32>
    %23 = vector.shape_cast %22 : vector<1xf32> to vector<1x1xf32>
    %24 = vector.broadcast %23 : vector<1x1xf32> to vector<1x4xf32>
    %25 = arith.divf %21, %24 : vector<1x4xf32>
    %c0_15 = arith.constant 0 : index
    %c0_16 = arith.constant 0 : index
    %26 = vector.load %arg12[%c0_15, %c0_16] : memref<4x128xf32, #tpu.memory_space<vmem>>, vector<4x128xf32>
    %cst_17 = arith.constant dense<0.000000e+00> : vector<1x128xf32>
    %27 = tpu.matmul %25, %26, %cst_17 {dimension_numbers = #tpu.dot_dimension_numbers<[1], [0], [0], [1], [0, 0, 1, 1], [], []>} : vector<1x4xf32>, vector<4x128xf32>, vector<1x128xf32> -> vector<1x128xf32>
    %cst_18 = arith.constant 0.000000e+00 : f32
    %28 = vector.broadcast %cst_18 : f32 to vector<18x18x32xf32>
    %c0_19 = arith.constant 0 : index
    %c0_20 = arith.constant 0 : index
    %c0_21 = arith.constant 0 : index
    %29 = vector.load %arg15[%c0_19, %c0_20, %c0_21] : memref<18x18x32xf32, #tpu.memory_space<vmem>>, vector<18x18x32xf32>
    tpu.vector_store %arg15[%c0_19, %c0_20, %c0_21], %28 {strides = array<i32>} : memref<18x18x32xf32, #tpu.memory_space<vmem>>, vector<18x18x32xf32>,
    %30 = vector.shape_cast %2 : vector<256x32xf32> to vector<16x16x32xf32>
    %c1 = arith.constant 1 : index
    %c1_22 = arith.constant 1 : index
    %c0_23 = arith.constant 0 : index
    %31 = vector.load %arg15[%c1, %c1_22, %c0_23] : memref<18x18x32xf32, #tpu.memory_space<vmem>>, vector<16x16x32xf32>
    tpu.vector_store %arg15[%c1, %c1_22, %c0_23], %30 {strides = array<i32>} : memref<18x18x32xf32, #tpu.memory_space<vmem>>, vector<16x16x32xf32>,
    %c0_24 = arith.constant 0 : index
    %c0_25 = arith.constant 0 : index
    %c0_26 = arith.constant 0 : index
    %32 = vector.load %arg15[%c0_24, %c0_25, %c0_26] : memref<18x18x32xf32, #tpu.memory_space<vmem>>, vector<16x16x32xf32>
    %33 = vector.shape_cast %32 : vector<16x16x32xf32> to vector<256x32xf32>
    %c0_27 = arith.constant 0 : index
    %c0_28 = arith.constant 0 : index
    %34 = vector.load %arg16[%c0_27, %c0_28] : memref<256x288xf32, #tpu.memory_space<vmem>>, vector<256x32xf32>
    tpu.vector_store %arg16[%c0_27, %c0_28], %33 {strides = array<i32>} : memref<256x288xf32, #tpu.memory_space<vmem>>, vector<256x32xf32>,
    %c0_29 = arith.constant 0 : index
    %c1_30 = arith.constant 1 : index
    %c0_31 = arith.constant 0 : index
    %35 = vector.load %arg15[%c0_29, %c1_30, %c0_31] : memref<18x18x32xf32, #tpu.memory_space<vmem>>, vector<16x16x32xf32>
    %36 = vector.shape_cast %35 : vector<16x16x32xf32> to vector<256x32xf32>
    %c0_32 = arith.constant 0 : index
    %c32 = arith.constant 32 : index
    %37 = vector.load %arg16[%c0_32, %c32] : memref<256x288xf32, #tpu.memory_space<vmem>>, vector<256x32xf32>
    tpu.vector_store %arg16[%c0_32, %c32], %36 {strides = array<i32>} : memref<256x288xf32, #tpu.memory_space<vmem>>, vector<256x32xf32>,
    %c0_33 = arith.constant 0 : index
    %c2 = arith.constant 2 : index
    %c0_34 = arith.constant 0 : index
    %38 = vector.load %arg15[%c0_33, %c2, %c0_34] : memref<18x18x32xf32, #tpu.memory_space<vmem>>, vector<16x16x32xf32>
    %39 = vector.shape_cast %38 : vector<16x16x32xf32> to vector<256x32xf32>
    %c0_35 = arith.constant 0 : index
    %c64 = arith.constant 64 : index
    %40 = vector.load %arg16[%c0_35, %c64] : memref<256x288xf32, #tpu.memory_space<vmem>>, vector<256x32xf32>
    tpu.vector_store %arg16[%c0_35, %c64], %39 {strides = array<i32>} : memref<256x288xf32, #tpu.memory_space<vmem>>, vector<256x32xf32>,
    %c1_36 = arith.constant 1 : index
    %c0_37 = arith.constant 0 : index
    %c0_38 = arith.constant 0 : index
    %41 = vector.load %arg15[%c1_36, %c0_37, %c0_38] : memref<18x18x32xf32, #tpu.memory_space<vmem>>, vector<16x16x32xf32>
    %42 = vector.shape_cast %41 : vector<16x16x32xf32> to vector<256x32xf32>
    %c0_39 = arith.constant 0 : index
    %c96 = arith.constant 96 : index
    %43 = vector.load %arg16[%c0_39, %c96] : memref<256x288xf32, #tpu.memory_space<vmem>>, vector<256x32xf32>
    tpu.vector_store %arg16[%c0_39, %c96], %42 {strides = array<i32>} : memref<256x288xf32, #tpu.memory_space<vmem>>, vector<256x32xf32>,
    %c1_40 = arith.constant 1 : index
    %c1_41 = arith.constant 1 : index
    %c0_42 = arith.constant 0 : index
    %44 = vector.load %arg15[%c1_40, %c1_41, %c0_42] : memref<18x18x32xf32, #tpu.memory_space<vmem>>, vector<16x16x32xf32>
    %45 = vector.shape_cast %44 : vector<16x16x32xf32> to vector<256x32xf32>
    %c0_43 = arith.constant 0 : index
    %c128 = arith.constant 128 : index
    %46 = vector.load %arg16[%c0_43, %c128] : memref<256x288xf32, #tpu.memory_space<vmem>>, vector<256x32xf32>
    tpu.vector_store %arg16[%c0_43, %c128], %45 {strides = array<i32>} : memref<256x288xf32, #tpu.memory_space<vmem>>, vector<256x32xf32>,
    %c1_44 = arith.constant 1 : index
    %c2_45 = arith.constant 2 : index
    %c0_46 = arith.constant 0 : index
    %47 = vector.load %arg15[%c1_44, %c2_45, %c0_46] : memref<18x18x32xf32, #tpu.memory_space<vmem>>, vector<16x16x32xf32>
    %48 = vector.shape_cast %47 : vector<16x16x32xf32> to vector<256x32xf32>
    %c0_47 = arith.constant 0 : index
    %c160 = arith.constant 160 : index
    %49 = vector.load %arg16[%c0_47, %c160] : memref<256x288xf32, #tpu.memory_space<vmem>>, vector<256x32xf32>
    tpu.vector_store %arg16[%c0_47, %c160], %48 {strides = array<i32>} : memref<256x288xf32, #tpu.memory_space<vmem>>, vector<256x32xf32>,
    %c2_48 = arith.constant 2 : index
    %c0_49 = arith.constant 0 : index
    %c0_50 = arith.constant 0 : index
    %50 = vector.load %arg15[%c2_48, %c0_49, %c0_50] : memref<18x18x32xf32, #tpu.memory_space<vmem>>, vector<16x16x32xf32>
    %51 = vector.shape_cast %50 : vector<16x16x32xf32> to vector<256x32xf32>
    %c0_51 = arith.constant 0 : index
    %c192 = arith.constant 192 : index
    %52 = vector.load %arg16[%c0_51, %c192] : memref<256x288xf32, #tpu.memory_space<vmem>>, vector<256x32xf32>
    tpu.vector_store %arg16[%c0_51, %c192], %51 {strides = array<i32>} : memref<256x288xf32, #tpu.memory_space<vmem>>, vector<256x32xf32>,
    %c2_52 = arith.constant 2 : index
    %c1_53 = arith.constant 1 : index
    %c0_54 = arith.constant 0 : index
    %53 = vector.load %arg15[%c2_52, %c1_53, %c0_54] : memref<18x18x32xf32, #tpu.memory_space<vmem>>, vector<16x16x32xf32>
    %54 = vector.shape_cast %53 : vector<16x16x32xf32> to vector<256x32xf32>
    %c0_55 = arith.constant 0 : index
    %c224 = arith.constant 224 : index
    %55 = vector.load %arg16[%c0_55, %c224] : memref<256x288xf32, #tpu.memory_space<vmem>>, vector<256x32xf32>
    tpu.vector_store %arg16[%c0_55, %c224], %54 {strides = array<i32>} : memref<256x288xf32, #tpu.memory_space<vmem>>, vector<256x32xf32>,
    %c2_56 = arith.constant 2 : index
    %c2_57 = arith.constant 2 : index
    %c0_58 = arith.constant 0 : index
    %56 = vector.load %arg15[%c2_56, %c2_57, %c0_58] : memref<18x18x32xf32, #tpu.memory_space<vmem>>, vector<16x16x32xf32>
    %57 = vector.shape_cast %56 : vector<16x16x32xf32> to vector<256x32xf32>
    %c0_59 = arith.constant 0 : index
    %c256 = arith.constant 256 : index
    %58 = vector.load %arg16[%c0_59, %c256] : memref<256x288xf32, #tpu.memory_space<vmem>>, vector<256x32xf32>
    tpu.vector_store %arg16[%c0_59, %c256], %57 {strides = array<i32>} : memref<256x288xf32, #tpu.memory_space<vmem>>, vector<256x32xf32>,
    %c0_60 = arith.constant 0 : index
    %c0_61 = arith.constant 0 : index
    %59 = vector.load %arg16[%c0_60, %c0_61] : memref<256x288xf32, #tpu.memory_space<vmem>>, vector<256x288xf32>
    %c0_62 = arith.constant 0 : index
    %c0_63 = arith.constant 0 : index
    %60 = vector.load %arg2[%c0_62, %c0_63] : memref<288x128xf32, #tpu.memory_space<vmem>>, vector<288x128xf32>
    %cst_64 = arith.constant dense<0.000000e+00> : vector<256x128xf32>
    %61 = tpu.matmul %59, %60, %cst_64 {dimension_numbers = #tpu.dot_dimension_numbers<[1], [0], [0], [1], [0, 0, 1, 1], [], []>} : vector<256x288xf32>, vector<288x128xf32>, vector<256x128xf32> -> vector<256x128xf32>
    %c0_65 = arith.constant 0 : index
    %c0_66 = arith.constant 0 : index
    %62 = vector.load %arg3[%c0_65, %c0_66] : memref<1x128xf32, #tpu.memory_space<vmem>>, vector<1x128xf32>
    %63 = vector.broadcast %62 : vector<1x128xf32> to vector<256x128xf32>
    %64 = arith.addf %61, %63 : vector<256x128xf32>
    %c0_67 = arith.constant 0 : index
    %c0_68 = arith.constant 0 : index
    %65 = vector.load %arg17[%c0_67, %c0_68] : memref<256x128xf32, #tpu.memory_space<vmem>>, vector<256x128xf32>
    tpu.vector_store %arg17[%c0_67, %c0_68], %64 {strides = array<i32>} : memref<256x128xf32, #tpu.memory_space<vmem>>, vector<256x128xf32>,
    %c0_69 = arith.constant 0 : index
    %c0_70 = arith.constant 0 : index
    %66 = vector.load %arg17[%c0_69, %c0_70] : memref<256x128xf32, #tpu.memory_space<vmem>>, vector<256x128xf32>
    %67 = vector.broadcast %27 : vector<1x128xf32> to vector<256x128xf32>
    %68 = arith.mulf %66, %67 : vector<256x128xf32>
    %c0_71 = arith.constant 0 : index
    %c0_72 = arith.constant 0 : index
    %69 = vector.load %arg13[%c0_71, %c0_72] : memref<128x32xf32, #tpu.memory_space<vmem>>, vector<128x32xf32>
    %cst_73 = arith.constant dense<0.000000e+00> : vector<256x32xf32>
    %70 = tpu.matmul %68, %69, %cst_73 {dimension_numbers = #tpu.dot_dimension_numbers<[1], [0], [0], [1], [0, 0, 1, 1], [], []>} : vector<256x128xf32>, vector<128x32xf32>, vector<256x32xf32> -> vector<256x32xf32>
    %cst_74 = arith.constant 0.000000e+00 : f32
    %71 = vector.broadcast %cst_74 : f32 to vector<256x32xf32>
    %72 = arith.cmpf oge, %70, %71 : vector<256x32xf32>
    %cst_75 = arith.constant 0.00999999977 : f32
    %73 = vector.broadcast %cst_75 : f32 to vector<256x32xf32>
    %74 = arith.mulf %73, %70 : vector<256x32xf32>
    %75 = arith.select %72, %70, %74 : vector<256x32xi1>, vector<256x32xf32>
    %c0_76 = arith.constant 0 : index
    %c0_77 = arith.constant 0 : index
    %76 = vector.load %arg9[%c0_76, %c0_77] : memref<32x9xf32, #tpu.memory_space<vmem>>, vector<32x9xf32>
    %c0_78 = arith.constant 0 : index
    %c0_79 = arith.constant 0 : index
    %77 = vector.load %arg10[%c0_78, %c0_79] : memref<9x4xf32, #tpu.memory_space<vmem>>, vector<9x4xf32>
    %c0_80 = arith.constant 0 : index
    %c0_81 = arith.constant 0 : index
    %78 = vector.load %arg11[%c0_80, %c0_81] : memref<1x4xf32, #tpu.memory_space<vmem>>, vector<1x4xf32>
    %cst_82 = arith.constant dense<0.000000e+00> : vector<32xf32>
    %79 = vector.multi_reduction <add>, %75, %cst_82 [0] : vector<256x32xf32> to vector<32xf32>
    %80 = vector.shape_cast %79 : vector<32xf32> to vector<1x32xf32>
    %cst_83 = arith.constant 2.560000e+02 : f32
    %81 = vector.broadcast %cst_83 : f32 to vector<1x32xf32>
    %82 = arith.divf %80, %81 : vector<1x32xf32>
    %cst_84 = arith.constant dense<0.000000e+00> : vector<1x9xf32>
    %83 = tpu.matmul %82, %76, %cst_84 {dimension_numbers = #tpu.dot_dimension_numbers<[1], [0], [0], [1], [0, 0, 1, 1], [], []>} : vector<1x32xf32>, vector<32x9xf32>, vector<1x9xf32> -> vector<1x9xf32>
    %cst_85 = arith.constant 0.000000e+00 : f32
    %84 = vector.broadcast %cst_85 : f32 to vector<1x9xf32>
    %85 = arith.maximumf %83, %84 : vector<1x9xf32>
    %cst_86 = arith.constant dense<0.000000e+00> : vector<1x4xf32>
    %86 = tpu.matmul %85, %77, %cst_86 {dimension_numbers = #tpu.dot_dimension_numbers<[1], [0], [0], [1], [0, 0, 1, 1], [], []>} : vector<1x9xf32>, vector<9x4xf32>, vector<1x4xf32> -> vector<1x4xf32>
    %87 = arith.addf %86, %78 : vector<1x4xf32>
    %cst_87 = arith.constant 0.0294117648 : f32
    %88 = vector.broadcast %cst_87 : f32 to vector<1x4xf32>
    %89 = arith.mulf %87, %88 : vector<1x4xf32>
    %cst_88 = arith.constant dense<0xFF800000> : vector<1xf32>
    %90 = vector.multi_reduction <maximumf>, %89, %cst_88 [1] : vector<1x4xf32> to vector<1xf32>
    %91 = vector.shape_cast %90 : vector<1xf32> to vector<1x1xf32>
    %92 = vector.broadcast %91 : vector<1x1xf32> to vector<1x4xf32>
    %93 = arith.subf %89, %92 : vector<1x4xf32>
    %94 = math.exp %93 : vector<1x4xf32>
    %cst_89 = arith.constant dense<0.000000e+00> : vector<1xf32>
    %95 = vector.multi_reduction <add>, %94, %cst_89 [1] : vector<1x4xf32> to vector<1xf32>
    %96 = vector.shape_cast %95 : vector<1xf32> to vector<1x1xf32>
    %97 = vector.broadcast %96 : vector<1x1xf32> to vector<1x4xf32>
    %98 = arith.divf %94, %97 : vector<1x4xf32>
    %c0_90 = arith.constant 0 : index
    %c0_91 = arith.constant 0 : index
    %99 = vector.load %arg12[%c0_90, %c0_91] : memref<4x128xf32, #tpu.memory_space<vmem>>, vector<4x128xf32>
    %cst_92 = arith.constant dense<0.000000e+00> : vector<1x128xf32>
    %100 = tpu.matmul %98, %99, %cst_92 {dimension_numbers = #tpu.dot_dimension_numbers<[1], [0], [0], [1], [0, 0, 1, 1], [], []>} : vector<1x4xf32>, vector<4x128xf32>, vector<1x128xf32> -> vector<1x128xf32>
    %cst_93 = arith.constant 0.000000e+00 : f32
    %101 = vector.broadcast %cst_93 : f32 to vector<18x18x32xf32>
    %c0_94 = arith.constant 0 : index
    %c0_95 = arith.constant 0 : index
    %c0_96 = arith.constant 0 : index
    %102 = vector.load %arg15[%c0_94, %c0_95, %c0_96] : memref<18x18x32xf32, #tpu.memory_space<vmem>>, vector<18x18x32xf32>
    tpu.vector_store %arg15[%c0_94, %c0_95, %c0_96], %101 {strides = array<i32>} : memref<18x18x32xf32, #tpu.memory_space<vmem>>, vector<18x18x32xf32>,
    %103 = vector.shape_cast %75 : vector<256x32xf32> to vector<16x16x32xf32>
    %c1_97 = arith.constant 1 : index
    %c1_98 = arith.constant 1 : index
    %c0_99 = arith.constant 0 : index
    %104 = vector.load %arg15[%c1_97, %c1_98, %c0_99] : memref<18x18x32xf32, #tpu.memory_space<vmem>>, vector<16x16x32xf32>
    tpu.vector_store %arg15[%c1_97, %c1_98, %c0_99], %103 {strides = array<i32>} : memref<18x18x32xf32, #tpu.memory_space<vmem>>, vector<16x16x32xf32>,
    %c0_100 = arith.constant 0 : index
    %c0_101 = arith.constant 0 : index
    %c0_102 = arith.constant 0 : index
    %105 = vector.load %arg15[%c0_100, %c0_101, %c0_102] : memref<18x18x32xf32, #tpu.memory_space<vmem>>, vector<16x16x32xf32>
    %106 = vector.shape_cast %105 : vector<16x16x32xf32> to vector<256x32xf32>
    %c0_103 = arith.constant 0 : index
    %c0_104 = arith.constant 0 : index
    %107 = vector.load %arg16[%c0_103, %c0_104] : memref<256x288xf32, #tpu.memory_space<vmem>>, vector<256x32xf32>
    tpu.vector_store %arg16[%c0_103, %c0_104], %106 {strides = array<i32>} : memref<256x288xf32, #tpu.memory_space<vmem>>, vector<256x32xf32>,
    %c0_105 = arith.constant 0 : index
    %c1_106 = arith.constant 1 : index
    %c0_107 = arith.constant 0 : index
    %108 = vector.load %arg15[%c0_105, %c1_106, %c0_107] : memref<18x18x32xf32, #tpu.memory_space<vmem>>, vector<16x16x32xf32>
    %109 = vector.shape_cast %108 : vector<16x16x32xf32> to vector<256x32xf32>
    %c0_108 = arith.constant 0 : index
    %c32_109 = arith.constant 32 : index
    %110 = vector.load %arg16[%c0_108, %c32_109] : memref<256x288xf32, #tpu.memory_space<vmem>>, vector<256x32xf32>
    tpu.vector_store %arg16[%c0_108, %c32_109], %109 {strides = array<i32>} : memref<256x288xf32, #tpu.memory_space<vmem>>, vector<256x32xf32>,
    %c0_110 = arith.constant 0 : index
    %c2_111 = arith.constant 2 : index
    %c0_112 = arith.constant 0 : index
    %111 = vector.load %arg15[%c0_110, %c2_111, %c0_112] : memref<18x18x32xf32, #tpu.memory_space<vmem>>, vector<16x16x32xf32>
    %112 = vector.shape_cast %111 : vector<16x16x32xf32> to vector<256x32xf32>
    %c0_113 = arith.constant 0 : index
    %c64_114 = arith.constant 64 : index
    %113 = vector.load %arg16[%c0_113, %c64_114] : memref<256x288xf32, #tpu.memory_space<vmem>>, vector<256x32xf32>
    tpu.vector_store %arg16[%c0_113, %c64_114], %112 {strides = array<i32>} : memref<256x288xf32, #tpu.memory_space<vmem>>, vector<256x32xf32>,
    %c1_115 = arith.constant 1 : index
    %c0_116 = arith.constant 0 : index
    %c0_117 = arith.constant 0 : index
    %114 = vector.load %arg15[%c1_115, %c0_116, %c0_117] : memref<18x18x32xf32, #tpu.memory_space<vmem>>, vector<16x16x32xf32>
    %115 = vector.shape_cast %114 : vector<16x16x32xf32> to vector<256x32xf32>
    %c0_118 = arith.constant 0 : index
    %c96_119 = arith.constant 96 : index
    %116 = vector.load %arg16[%c0_118, %c96_119] : memref<256x288xf32, #tpu.memory_space<vmem>>, vector<256x32xf32>
    tpu.vector_store %arg16[%c0_118, %c96_119], %115 {strides = array<i32>} : memref<256x288xf32, #tpu.memory_space<vmem>>, vector<256x32xf32>,
    %c1_120 = arith.constant 1 : index
    %c1_121 = arith.constant 1 : index
    %c0_122 = arith.constant 0 : index
    %117 = vector.load %arg15[%c1_120, %c1_121, %c0_122] : memref<18x18x32xf32, #tpu.memory_space<vmem>>, vector<16x16x32xf32>
    %118 = vector.shape_cast %117 : vector<16x16x32xf32> to vector<256x32xf32>
    %c0_123 = arith.constant 0 : index
    %c128_124 = arith.constant 128 : index
    %119 = vector.load %arg16[%c0_123, %c128_124] : memref<256x288xf32, #tpu.memory_space<vmem>>, vector<256x32xf32>
    tpu.vector_store %arg16[%c0_123, %c128_124], %118 {strides = array<i32>} : memref<256x288xf32, #tpu.memory_space<vmem>>, vector<256x32xf32>,
    %c1_125 = arith.constant 1 : index
    %c2_126 = arith.constant 2 : index
    %c0_127 = arith.constant 0 : index
    %120 = vector.load %arg15[%c1_125, %c2_126, %c0_127] : memref<18x18x32xf32, #tpu.memory_space<vmem>>, vector<16x16x32xf32>
    %121 = vector.shape_cast %120 : vector<16x16x32xf32> to vector<256x32xf32>
    %c0_128 = arith.constant 0 : index
    %c160_129 = arith.constant 160 : index
    %122 = vector.load %arg16[%c0_128, %c160_129] : memref<256x288xf32, #tpu.memory_space<vmem>>, vector<256x32xf32>
    tpu.vector_store %arg16[%c0_128, %c160_129], %121 {strides = array<i32>} : memref<256x288xf32, #tpu.memory_space<vmem>>, vector<256x32xf32>,
    %c2_130 = arith.constant 2 : index
    %c0_131 = arith.constant 0 : index
    %c0_132 = arith.constant 0 : index
    %123 = vector.load %arg15[%c2_130, %c0_131, %c0_132] : memref<18x18x32xf32, #tpu.memory_space<vmem>>, vector<16x16x32xf32>
    %124 = vector.shape_cast %123 : vector<16x16x32xf32> to vector<256x32xf32>
    %c0_133 = arith.constant 0 : index
    %c192_134 = arith.constant 192 : index
    %125 = vector.load %arg16[%c0_133, %c192_134] : memref<256x288xf32, #tpu.memory_space<vmem>>, vector<256x32xf32>
    tpu.vector_store %arg16[%c0_133, %c192_134], %124 {strides = array<i32>} : memref<256x288xf32, #tpu.memory_space<vmem>>, vector<256x32xf32>,
    %c2_135 = arith.constant 2 : index
    %c1_136 = arith.constant 1 : index
    %c0_137 = arith.constant 0 : index
    %126 = vector.load %arg15[%c2_135, %c1_136, %c0_137] : memref<18x18x32xf32, #tpu.memory_space<vmem>>, vector<16x16x32xf32>
    %127 = vector.shape_cast %126 : vector<16x16x32xf32> to vector<256x32xf32>
    %c0_138 = arith.constant 0 : index
    %c224_139 = arith.constant 224 : index
    %128 = vector.load %arg16[%c0_138, %c224_139] : memref<256x288xf32, #tpu.memory_space<vmem>>, vector<256x32xf32>
    tpu.vector_store %arg16[%c0_138, %c224_139], %127 {strides = array<i32>} : memref<256x288xf32, #tpu.memory_space<vmem>>, vector<256x32xf32>,
    %c2_140 = arith.constant 2 : index
    %c2_141 = arith.constant 2 : index
    %c0_142 = arith.constant 0 : index
    %129 = vector.load %arg15[%c2_140, %c2_141, %c0_142] : memref<18x18x32xf32, #tpu.memory_space<vmem>>, vector<16x16x32xf32>
    %130 = vector.shape_cast %129 : vector<16x16x32xf32> to vector<256x32xf32>
    %c0_143 = arith.constant 0 : index
    %c256_144 = arith.constant 256 : index
    %131 = vector.load %arg16[%c0_143, %c256_144] : memref<256x288xf32, #tpu.memory_space<vmem>>, vector<256x32xf32>
    tpu.vector_store %arg16[%c0_143, %c256_144], %130 {strides = array<i32>} : memref<256x288xf32, #tpu.memory_space<vmem>>, vector<256x32xf32>,
    %c0_145 = arith.constant 0 : index
    %c0_146 = arith.constant 0 : index
    %132 = vector.load %arg16[%c0_145, %c0_146] : memref<256x288xf32, #tpu.memory_space<vmem>>, vector<256x288xf32>
    %c0_147 = arith.constant 0 : index
    %c0_148 = arith.constant 0 : index
    %133 = vector.load %arg4[%c0_147, %c0_148] : memref<288x128xf32, #tpu.memory_space<vmem>>, vector<288x128xf32>
    %cst_149 = arith.constant dense<0.000000e+00> : vector<256x128xf32>
    %134 = tpu.matmul %132, %133, %cst_149 {dimension_numbers = #tpu.dot_dimension_numbers<[1], [0], [0], [1], [0, 0, 1, 1], [], []>} : vector<256x288xf32>, vector<288x128xf32>, vector<256x128xf32> -> vector<256x128xf32>
    %c0_150 = arith.constant 0 : index
    %c0_151 = arith.constant 0 : index
    %135 = vector.load %arg5[%c0_150, %c0_151] : memref<1x128xf32, #tpu.memory_space<vmem>>, vector<1x128xf32>
    %136 = vector.broadcast %135 : vector<1x128xf32> to vector<256x128xf32>
    %137 = arith.addf %134, %136 : vector<256x128xf32>
    %c0_152 = arith.constant 0 : index
    %c0_153 = arith.constant 0 : index
    %138 = vector.load %arg17[%c0_152, %c0_153] : memref<256x128xf32, #tpu.memory_space<vmem>>, vector<256x128xf32>
    tpu.vector_store %arg17[%c0_152, %c0_153], %137 {strides = array<i32>} : memref<256x128xf32, #tpu.memory_space<vmem>>, vector<256x128xf32>,
    %c0_154 = arith.constant 0 : index
    %c0_155 = arith.constant 0 : index
    %139 = vector.load %arg17[%c0_154, %c0_155] : memref<256x128xf32, #tpu.memory_space<vmem>>, vector<256x128xf32>
    %140 = vector.broadcast %100 : vector<1x128xf32> to vector<256x128xf32>
    %141 = arith.mulf %139, %140 : vector<256x128xf32>
    %c0_156 = arith.constant 0 : index
    %c0_157 = arith.constant 0 : index
    %142 = vector.load %arg13[%c0_156, %c0_157] : memref<128x32xf32, #tpu.memory_space<vmem>>, vector<128x32xf32>
    %cst_158 = arith.constant dense<0.000000e+00> : vector<256x32xf32>
    %143 = tpu.matmul %141, %142, %cst_158 {dimension_numbers = #tpu.dot_dimension_numbers<[1], [0], [0], [1], [0, 0, 1, 1], [], []>} : vector<256x128xf32>, vector<128x32xf32>, vector<256x32xf32> -> vector<256x32xf32>
    %144 = tpu.transpose %143, [1, 0] : vector<256x32xf32> -> vector<32x256xf32>
    %145 = arith.addf %1, %144 : vector<32x256xf32>
    %c0_159 = arith.constant 0 : index
    %c0_160 = arith.constant 0 : index
    %c0_161 = arith.constant 0 : index
    %146 = vector.load %arg14[%c0_159, %c0_160, %c0_161] : memref<1x32x256xf32, #tpu.memory_space<vmem>>, vector<1x32x256xf32>
    %147 = vector.shape_cast %146 : vector<1x32x256xf32> to vector<32x256xf32>
    %148 = vector.shape_cast %145 : vector<32x256xf32> to vector<1x32x256xf32>
    tpu.vector_store %arg14[%c0_159, %c0_160, %c0_161], %148 {strides = array<i32>} : memref<1x32x256xf32, #tpu.memory_space<vmem>>, vector<1x32x256xf32>,
    return
  }
  func.func @transform_0(%arg0: i32) -> (i32, i32, i32) {
    %c0_i32 = arith.constant 0 : i32
    %c0_i32_0 = arith.constant 0 : i32
    %c0_i32_1 = arith.constant 0 : i32
    return %arg0, %c0_i32, %c0_i32_0 : i32, i32, i32
  }
  func.func @transform_1(%arg0: i32) -> (i32, i32) {
    %c0_i32 = arith.constant 0 : i32
    %c0_i32_0 = arith.constant 0 : i32
    %c0_i32_1 = arith.constant 0 : i32
    return %c0_i32, %c0_i32_0 : i32, i32
  }
  func.func @transform_2(%arg0: i32) -> (i32, i32) {
    %c0_i32 = arith.constant 0 : i32
    %c0_i32_0 = arith.constant 0 : i32
    %c0_i32_1 = arith.constant 0 : i32
    return %c0_i32, %c0_i32_0 : i32, i32
  }
  func.func @transform_3(%arg0: i32) -> (i32, i32) {
    %c0_i32 = arith.constant 0 : i32
    %c0_i32_0 = arith.constant 0 : i32
    %c0_i32_1 = arith.constant 0 : i32
    return %c0_i32, %c0_i32_0 : i32, i32
  }
  func.func @transform_4(%arg0: i32) -> (i32, i32) {
    %c0_i32 = arith.constant 0 : i32
    %c0_i32_0 = arith.constant 0 : i32
    %c0_i32_1 = arith.constant 0 : i32
    return %c0_i32, %c0_i32_0 : i32, i32
  }
  func.func @transform_5(%arg0: i32) -> (i32, i32) {
    %c0_i32 = arith.constant 0 : i32
    %c0_i32_0 = arith.constant 0 : i32
    %c0_i32_1 = arith.constant 0 : i32
    return %c0_i32, %c0_i32_0 : i32, i32
  }
  func.func @transform_6(%arg0: i32) -> (i32, i32) {
    %c0_i32 = arith.constant 0 : i32
    %c0_i32_0 = arith.constant 0 : i32
    %c0_i32_1 = arith.constant 0 : i32
    return %c0_i32, %c0_i32_0 : i32, i32
  }
  func.func @transform_7(%arg0: i32) -> (i32, i32) {
    %c0_i32 = arith.constant 0 : i32
    %c0_i32_0 = arith.constant 0 : i32
    %c0_i32_1 = arith.constant 0 : i32
    return %c0_i32, %c0_i32_0 : i32, i32
  }
  func.func @transform_8(%arg0: i32) -> (i32, i32) {
    %c0_i32 = arith.constant 0 : i32
    %c0_i32_0 = arith.constant 0 : i32
    %c0_i32_1 = arith.constant 0 : i32
    return %c0_i32, %c0_i32_0 : i32, i32
  }
  func.func @transform_9(%arg0: i32) -> (i32, i32) {
    %c0_i32 = arith.constant 0 : i32
    %c0_i32_0 = arith.constant 0 : i32
    %c0_i32_1 = arith.constant 0 : i32
    return %c0_i32, %c0_i32_0 : i32, i32
  }
  func.func @transform_10(%arg0: i32) -> (i32, i32) {
    %c0_i32 = arith.constant 0 : i32
    %c0_i32_0 = arith.constant 0 : i32
    %c0_i32_1 = arith.constant 0 : i32
    return %c0_i32, %c0_i32_0 : i32, i32
  }
  func.func @transform_11(%arg0: i32) -> (i32, i32) {
    %c0_i32 = arith.constant 0 : i32
    %c0_i32_0 = arith.constant 0 : i32
    %c0_i32_1 = arith.constant 0 : i32
    return %c0_i32, %c0_i32_0 : i32, i32
  }
  func.func @transform_12(%arg0: i32) -> (i32, i32) {
    %c0_i32 = arith.constant 0 : i32
    %c0_i32_0 = arith.constant 0 : i32
    %c0_i32_1 = arith.constant 0 : i32
    return %c0_i32, %c0_i32_0 : i32, i32
  }
  func.func @transform_13(%arg0: i32) -> (i32, i32, i32) {
    %c0_i32 = arith.constant 0 : i32
    %c0_i32_0 = arith.constant 0 : i32
    %c0_i32_1 = arith.constant 0 : i32
    return %arg0, %c0_i32, %c0_i32_0 : i32, i32, i32
  }
}

</mosaic_0001>

<llo_original>
// kernel: resblock_forward.1
$region0: #{resblock_forward.1}
  #allocation0 [shape = 'u32[]', space=smem, size = 0x4, offset = 0x4, fixed_abs, tag = 'smem constant byte address 0x4 - core index']
  #allocation1 [shape = 'u32[144,128]{1,0:T(1,128)}', space=vmem, size = 0x12000, scoped, tag = 'internal scratch']
  #allocation2 [shape = 'f32[18,18,32]{2,1,0:T(8,128)}', space=vmem, size = 0x36000, scoped, tag = 'scratch operand']
  #allocation3 [shape = 'f32[256,288]{1,0:T(8,128)}', space=vmem, size = 0x60000, scoped, tag = 'scratch operand']
  #allocation4 [shape = 'f32[256,128]{1,0:T(8,128)}', space=vmem, size = 0x20000, scoped, tag = 'scratch operand']
  %s0 = inlined_call_operand.vmem [shape: f32[2,32,256], index: 0, kind: input, shape index: {}]
  %s1 = inlined_call_operand.vmem [shape: f32[288,128], index: 1, kind: input, shape index: {}]
  %s2 = inlined_call_operand.vmem [shape: f32[1,128], index: 2, kind: input, shape index: {}]
  %s3 = inlined_call_operand.vmem [shape: f32[288,128], index: 3, kind: input, shape index: {}]
  %s4 = inlined_call_operand.vmem [shape: f32[1,128], index: 4, kind: input, shape index: {}]
  %s5 = inlined_call_operand.vmem [shape: f32[32,9], index: 5, kind: input, shape index: {}]
  %s6 = inlined_call_operand.vmem [shape: f32[9,4], index: 6, kind: input, shape index: {}]
  %s7 = inlined_call_operand.vmem [shape: f32[1,4], index: 7, kind: input, shape index: {}]
  %s8 = inlined_call_operand.vmem [shape: f32[32,9], index: 8, kind: input, shape index: {}]
  %s9 = inlined_call_operand.vmem [shape: f32[9,4], index: 9, kind: input, shape index: {}]
  %s10 = inlined_call_operand.vmem [shape: f32[1,4], index: 10, kind: input, shape index: {}]
  %s11 = inlined_call_operand.vmem [shape: f32[4,128], index: 11, kind: input, shape index: {}]
  %s12 = inlined_call_operand.vmem [shape: f32[128,32], index: 12, kind: input, shape index: {}]
  %s13 = inlined_call_operand.vmem [shape: f32[2,32,256], index: 13, kind: output, shape index: {}]
  %s14 = sld [smem:[#allocation0]]
  $region85: #{resblock_forward.1} parent=0
    _
  %s16 = ssub.s32 1, %s14
  %s17 = scalar_select 0, %s16, %s14
  loop: start=0, step=1, limit=4
  $region2: #{resblock_forward.1} parent=0 // loop_pre_header
    _
  $region3: #{resblock_forward.1} parent=0 // loop_header
    %s19 = sphi 0, %s23
    %p20 = scmp.ge.s32.totalorder %s19, 4
    %s29 = sphi 0, %s31
    %s32 = sphi 0, %s29
    %s33 = sphi 0, %s32
    %s49 = sphi 0, %s33
    %s53 = sphi 0, %s53
    %s55 = sphi 0, %s53
    %s56 = sphi 0, %s55
    %s70 = sphi 0, %s56
    %s74 = sphi 0, %s74
    %s76 = sphi 0, %s74
    %s77 = sphi 0, %s76
    %s91 = sphi 0, %s77
    %s95 = sphi 0, %s95
    %s97 = sphi 0, %s95
    %s98 = sphi 0, %s97
    %s112 = sphi 0, %s98
    %s116 = sphi 0, %s116
    %s118 = sphi 0, %s116
    %s119 = sphi 0, %s118
    %s133 = sphi 0, %s119
    %s137 = sphi 0, %s137
    %s139 = sphi 0, %s137
    %s140 = sphi 0, %s139
    %s154 = sphi 0, %s140
    %s158 = sphi 0, %s158
    %s160 = sphi 0, %s158
    %s161 = sphi 0, %s160
    %s175 = sphi 0, %s161
    %s179 = sphi 0, %s179
    %s181 = sphi 0, %s179
    %s182 = sphi 0, %s181
    %s196 = sphi 0, %s182
    %s200 = sphi 0, %s200
    %s202 = sphi 0, %s200
    %s203 = sphi 0, %s202
    %s217 = sphi 0, %s203
    %s221 = sphi 0, %s221
    %s223 = sphi 0, %s221
    %s224 = sphi 0, %s223
    %s238 = sphi 0, %s224
    %s242 = sphi 0, %s242
    %s244 = sphi 0, %s242
    %s245 = sphi 0, %s244
    %s259 = sphi 0, %s245
    %s263 = sphi 0, %s263
    %s265 = sphi 0, %s263
    %s266 = sphi 0, %s265
    %s280 = sphi 0, %s266
    %s284 = sphi 0, %s284
    %s286 = sphi 0, %s284
    %s287 = sphi 0, %s286
    %s301 = sphi 0, %s287
    %s307 = sphi 0, %s309
    %s310 = sphi 0, %s307
    %s311 = sphi 0, %s310
    %s327 = sphi 0, %s311
  $region4: #{resblock_forward.1} parent=0 // loop_header_branch
    %22 = sbr.rel (%p20) target = $region8
  $region5: #{resblock_forward.1} parent=0 // loop_body
    %s24 = ssub.s32 %s19, 1
    %s25 = ssub.s32 %s19, 2
    %s26 = sadd.s32 %s19, 1
    %s27 = ssub.s32 %s19, %s26
    %p28 = scmp.eq.s32.totalorder %s27, 0
    %s30 = sadd.s32 %s29, 1
    %s31 = scalar_select %p28, %s29, %s30
    %p34 = pneg %p28
    %p35 = scmp.eq.s32.totalorder %s19, 1
    %p36 = por %p34, %p35
    %p37 = scmp.ne.s32.totalorder %s29, %s32
    %p38 = scmp.eq.s32.totalorder %s19, 0
    %p39 = por %p37, %p38
    %p40 = scmp.ne.s32.totalorder %s29, %s32
    %p41 = scmp.eq.s32.totalorder %s24, 1
    %p42 = por %p40, %p41
    %p43 = scmp.ne.s32.totalorder %s32, %s33
    %p44 = scmp.eq.s32.totalorder %s24, 0
    %p45 = por %p43, %p44
    %p46 = scmp.ne.s32.totalorder %s32, %s33
    %p47 = scmp.eq.s32.totalorder %s25, 1
    %p48 = por %p46, %p47
    %p50 = scmp.ne.s32.totalorder %s33, %s49
    %p51 = scmp.eq.s32.totalorder %s25, 0
    %p52 = por %p50, %p51
    %s54 = sadd.s32 %s53, 1
    %p57 = scmp.eq.s32.totalorder %s19, 1
    %p58 = scmp.ne.s32.totalorder %s53, %s55
    %p59 = scmp.eq.s32.totalorder %s19, 0
    %p60 = por %p58, %p59
    %p61 = scmp.ne.s32.totalorder %s53, %s55
    %p62 = scmp.eq.s32.totalorder %s24, 1
    %p63 = por %p61, %p62
    %p64 = scmp.ne.s32.totalorder %s55, %s56
    %p65 = scmp.eq.s32.totalorder %s24, 0
    %p66 = por %p64, %p65
    %p67 = scmp.ne.s32.totalorder %s55, %s56
    %p68 = scmp.eq.s32.totalorder %s25, 1
    %p69 = por %p67, %p68
    %p71 = scmp.ne.s32.totalorder %s56, %s70
    %p72 = scmp.eq.s32.totalorder %s25, 0
    %p73 = por %p71, %p72
    %s75 = sadd.s32 %s74, 1
    %p78 = scmp.eq.s32.totalorder %s19, 1
    %p79 = scmp.ne.s32.totalorder %s74, %s76
    %p80 = scmp.eq.s32.totalorder %s19, 0
    %p81 = por %p79, %p80
    %p82 = scmp.ne.s32.totalorder %s74, %s76
    %p83 = scmp.eq.s32.totalorder %s24, 1
    %p84 = por %p82, %p83
    %p85 = scmp.ne.s32.totalorder %s76, %s77
    %p86 = scmp.eq.s32.totalorder %s24, 0
    %p87 = por %p85, %p86
    %p88 = scmp.ne.s32.totalorder %s76, %s77
    %p89 = scmp.eq.s32.totalorder %s25, 1
    %p90 = por %p88, %p89
    %p92 = scmp.ne.s32.totalorder %s77, %s91
    %p93 = scmp.eq.s32.totalorder %s25, 0
    %p94 = por %p92, %p93
    %s96 = sadd.s32 %s95, 1
    %p99 = scmp.eq.s32.totalorder %s19, 1
    %p100 = scmp.ne.s32.totalorder %s95, %s97
    %p101 = scmp.eq.s32.totalorder %s19, 0
    %p102 = por %p100, %p101
    %p103 = scmp.ne.s32.totalorder %s95, %s97
    %p104 = scmp.eq.s32.totalorder %s24, 1
    %p105 = por %p103, %p104
    %p106 = scmp.ne.s32.totalorder %s97, %s98
    %p107 = scmp.eq.s32.totalorder %s24, 0
    %p108 = por %p106, %p107
    %p109 = scmp.ne.s32.totalorder %s97, %s98
    %p110 = scmp.eq.s32.totalorder %s25, 1
    %p111 = por %p109, %p110
    %p113 = scmp.ne.s32.totalorder %s98, %s112
    %p114 = scmp.eq.s32.totalorder %s25, 0
    %p115 = por %p113, %p114
    %s117 = sadd.s32 %s116, 1
    %p120 = scmp.eq.s32.totalorder %s19, 1
    %p121 = scmp.ne.s32.totalorder %s116, %s118
    %p122 = scmp.eq.s32.totalorder %s19, 0
    %p123 = por %p121, %p122
    %p124 = scmp.ne.s32.totalorder %s116, %s118
    %p125 = scmp.eq.s32.totalorder %s24, 1
    %p126 = por %p124, %p125
    %p127 = scmp.ne.s32.totalorder %s118, %s119
    %p128 = scmp.eq.s32.totalorder %s24, 0
    %p129 = por %p127, %p128
    %p130 = scmp.ne.s32.totalorder %s118, %s119
    %p131 = scmp.eq.s32.totalorder %s25, 1
    %p132 = por %p130, %p131
    %p134 = scmp.ne.s32.totalorder %s119, %s133
    %p135 = scmp.eq.s32.totalorder %s25, 0
    %p136 = por %p134, %p135
    %s138 = sadd.s32 %s137, 1
    %p141 = scmp.eq.s32.totalorder %s19, 1
    %p142 = scmp.ne.s32.totalorder %s137, %s139
    %p143 = scmp.eq.s32.totalorder %s19, 0
    %p144 = por %p142, %p143
    %p145 = scmp.ne.s32.totalorder %s137, %s139
    %p146 = scmp.eq.s32.totalorder %s24, 1
    %p147 = por %p145, %p146
    %p148 = scmp.ne.s32.totalorder %s139, %s140
    %p149 = scmp.eq.s32.totalorder %s24, 0
    %p150 = por %p148, %p149
    %p151 = scmp.ne.s32.totalorder %s139, %s140
    %p152 = scmp.eq.s32.totalorder %s25, 1
    %p153 = por %p151, %p152
    %p155 = scmp.ne.s32.totalorder %s140, %s154
    %p156 = scmp.eq.s32.totalorder %s25, 0
    %p157 = por %p155, %p156
    %s159 = sadd.s32 %s158, 1
    %p162 = scmp.eq.s32.totalorder %s19, 1
    %p163 = scmp.ne.s32.totalorder %s158, %s160
    %p164 = scmp.eq.s32.totalorder %s19, 0
    %p165 = por %p163, %p164
    %p166 = scmp.ne.s32.totalorder %s158, %s160
    %p167 = scmp.eq.s32.totalorder %s24, 1
    %p168 = por %p166, %p167
    %p169 = scmp.ne.s32.totalorder %s160, %s161
    %p170 = scmp.eq.s32.totalorder %s24, 0
    %p171 = por %p169, %p170
    %p172 = scmp.ne.s32.totalorder %s160, %s161
    %p173 = scmp.eq.s32.totalorder %s25, 1
    %p174 = por %p172, %p173
    %p176 = scmp.ne.s32.totalorder %s161, %s175
    %p177 = scmp.eq.s32.totalorder %s25, 0
    %p178 = por %p176, %p177
    %s180 = sadd.s32 %s179, 1
    %p183 = scmp.eq.s32.totalorder %s19, 1
    %p184 = scmp.ne.s32.totalorder %s179, %s181
    %p185 = scmp.eq.s32.totalorder %s19, 0
    %p186 = por %p184, %p185
    %p187 = scmp.ne.s32.totalorder %s179, %s181
    %p188 = scmp.eq.s32.totalorder %s24, 1
    %p189 = por %p187, %p188
    %p190 = scmp.ne.s32.totalorder %s181, %s182
    %p191 = scmp.eq.s32.totalorder %s24, 0
    %p192 = por %p190, %p191
    %p193 = scmp.ne.s32.totalorder %s181, %s182
    %p194 = scmp.eq.s32.totalorder %s25, 1
    %p195 = por %p193, %p194
    %p197 = scmp.ne.s32.totalorder %s182, %s196
    %p198 = scmp.eq.s32.totalorder %s25, 0
    %p199 = por %p197, %p198
    %s201 = sadd.s32 %s200, 1
    %p204 = scmp.eq.s32.totalorder %s19, 1
    %p205 = scmp.ne.s32.totalorder %s200, %s202
    %p206 = scmp.eq.s32.totalorder %s19, 0
    %p207 = por %p205, %p206
    %p208 = scmp.ne.s32.totalorder %s200, %s202
    %p209 = scmp.eq.s32.totalorder %s24, 1
    %p210 = por %p208, %p209
    %p211 = scmp.ne.s32.totalorder %s202, %s203
    %p212 = scmp.eq.s32.totalorder %s24, 0
    %p213 = por %p211, %p212
    %p214 = scmp.ne.s32.totalorder %s202, %s203
    %p215 = scmp.eq.s32.totalorder %s25, 1
    %p216 = por %p214, %p215
    %p218 = scmp.ne.s32.totalorder %s203, %s217
    %p219 = scmp.eq.s32.totalorder %s25, 0
    %p220 = por %p218, %p219
    %s222 = sadd.s32 %s221, 1
    %p225 = scmp.eq.s32.totalorder %s19, 1
    %p226 = scmp.ne.s32.totalorder %s221, %s223
    %p227 = scmp.eq.s32.totalorder %s19, 0
    %p228 = por %p226, %p227
    %p229 = scmp.ne.s32.totalorder %s221, %s223
    %p230 = scmp.eq.s32.totalorder %s24, 1
    %p231 = por %p229, %p230
    %p232 = scmp.ne.s32.totalorder %s223, %s224
    %p233 = scmp.eq.s32.totalorder %s24, 0
    %p234 = por %p232, %p233
    %p235 = scmp.ne.s32.totalorder %s223, %s224
    %p236 = scmp.eq.s32.totalorder %s25, 1
    %p237 = por %p235, %p236
    %p239 = scmp.ne.s32.totalorder %s224, %s238
    %p240 = scmp.eq.s32.totalorder %s25, 0
    %p241 = por %p239, %p240
    %s243 = sadd.s32 %s242, 1
    %p246 = scmp.eq.s32.totalorder %s19, 1
    %p247 = scmp.ne.s32.totalorder %s242, %s244
    %p248 = scmp.eq.s32.totalorder %s19, 0
    %p249 = por %p247, %p248
    %p250 = scmp.ne.s32.totalorder %s242, %s244
    %p251 = scmp.eq.s32.totalorder %s24, 1
    %p252 = por %p250, %p251
    %p253 = scmp.ne.s32.totalorder %s244, %s245
    %p254 = scmp.eq.s32.totalorder %s24, 0
    %p255 = por %p253, %p254
    %p256 = scmp.ne.s32.totalorder %s244, %s245
    %p257 = scmp.eq.s32.totalorder %s25, 1
    %p258 = por %p256, %p257
    %p260 = scmp.ne.s32.totalorder %s245, %s259
    %p261 = scmp.eq.s32.totalorder %s25, 0
    %p262 = por %p260, %p261
    %s264 = sadd.s32 %s263, 1
    %p267 = scmp.eq.s32.totalorder %s19, 1
    %p268 = scmp.ne.s32.totalorder %s263, %s265
    %p269 = scmp.eq.s32.totalorder %s19, 0
    %p270 = por %p268, %p269
    %p271 = scmp.ne.s32.totalorder %s263, %s265
    %p272 = scmp.eq.s32.totalorder %s24, 1
    %p273 = por %p271, %p272
    %p274 = scmp.ne.s32.totalorder %s265, %s266
    %p275 = scmp.eq.s32.totalorder %s24, 0
    %p276 = por %p274, %p275
    %p277 = scmp.ne.s32.totalorder %s265, %s266
    %p278 = scmp.eq.s32.totalorder %s25, 1
    %p279 = por %p277, %p278
    %p281 = scmp.ne.s32.totalorder %s266, %s280
    %p282 = scmp.eq.s32.totalorder %s25, 0
    %p283 = por %p281, %p282
    %s285 = sadd.s32 %s284, 1
    %p288 = scmp.eq.s32.totalorder %s19, 1
    %p289 = scmp.ne.s32.totalorder %s284, %s286
    %p290 = scmp.eq.s32.totalorder %s19, 0
    %p291 = por %p289, %p290
    %p292 = scmp.ne.s32.totalorder %s284, %s286
    %p293 = scmp.eq.s32.totalorder %s24, 1
    %p294 = por %p292, %p293
    %p295 = scmp.ne.s32.totalorder %s286, %s287
    %p296 = scmp.eq.s32.totalorder %s24, 0
    %p297 = por %p295, %p296
    %p298 = scmp.ne.s32.totalorder %s286, %s287
    %p299 = scmp.eq.s32.totalorder %s25, 1
    %p300 = por %p298, %p299
    %p302 = scmp.ne.s32.totalorder %s287, %s301
    %p303 = scmp.eq.s32.totalorder %s25, 0
    %p304 = por %p302, %p303
    %s305 = ssub.s32 %s19, %s26
    %p306 = scmp.eq.s32.totalorder %s305, 0
    %s308 = sadd.s32 %s307, 1
    %s309 = scalar_select %p306, %s307, %s308
    %p312 = pneg %p306
    %p313 = scmp.eq.s32.totalorder %s19, 1
    %p314 = por %p312, %p313
    %p315 = scmp.ne.s32.totalorder %s307, %s310
    %p316 = scmp.eq.s32.totalorder %s19, 0
    %p317 = por %p315, %p316
    %p318 = scmp.ne.s32.totalorder %s307, %s310
    %p319 = scmp.eq.s32.totalorder %s24, 1
    %p320 = por %p318, %p319
    %p321 = scmp.ne.s32.totalorder %s310, %s311
    %p322 = scmp.eq.s32.totalorder %s24, 0
    %p323 = por %p321, %p322
    %p324 = scmp.ne.s32.totalorder %s310, %s311
    %p325 = scmp.eq.s32.totalorder %s25, 1
    %p326 = por %p324, %p325
    %p328 = scmp.ne.s32.totalorder %s311, %s327
    %p329 = scmp.eq.s32.totalorder %s25, 0
    %p330 = por %p328, %p329
    %p331 = scmp.le.s32.totalorder 1, %s19
    %p332 = scmp.lt.s32.totalorder %s19, 3
    %p333 = pnand %p331, %p332
    %p334 = pneg %p333
    // Predicated region
    $region9: #{resblock_forward.1} parent=5 // pred_check
      _
    $region10: #{resblock_forward.1} parent=5 // pred_check_branch
      %336 = sbr.rel (%p333) target = $region12
    $region11: #{resblock_forward.1} parent=5 // pred_region
      %s337 = ssub.s32 %s19, 1
      // Predicated region
      $region13: #{resblock_forward.1} parent=11 // pred_check
        %p338 = pneg %p66
      $region14: #{resblock_forward.1} parent=11 // pred_check_branch
        %340 = sbr.rel (%p338) target = $region16
      $region15: #{resblock_forward.1} parent=11 // pred_region
        _
      $region16: #{resblock_forward.1} parent=11 // pred_fallthru
        _
      // Predicated region
      $region17: #{resblock_forward.1} parent=11 // pred_check
        %p341 = pneg %p87
      $region18: #{resblock_forward.1} parent=11 // pred_check_branch
        %343 = sbr.rel (%p341) target = $region20
      $region19: #{resblock_forward.1} parent=11 // pred_region
        _
      $region20: #{resblock_forward.1} parent=11 // pred_fallthru
        _
      // Predicated region
      $region21: #{resblock_forward.1} parent=11 // pred_check
        %p344 = pneg %p108
      $region22: #{resblock_forward.1} parent=11 // pred_check_branch
        %346 = sbr.rel (%p344) target = $region24
      $region23: #{resblock_forward.1} parent=11 // pred_region
        _
      $region24: #{resblock_forward.1} parent=11 // pred_fallthru
        _
      // Predicated region
      $region25: #{resblock_forward.1} parent=11 // pred_check
        %p347 = pneg %p129
      $region26: #{resblock_forward.1} parent=11 // pred_check_branch
        %349 = sbr.rel (%p347) target = $region28
      $region27: #{resblock_forward.1} parent=11 // pred_region
        _
      $region28: #{resblock_forward.1} parent=11 // pred_fallthru
        _
      // Predicated region
      $region29: #{resblock_forward.1} parent=11 // pred_check
        %p350 = pneg %p150
      $region30: #{resblock_forward.1} parent=11 // pred_check_branch
        %352 = sbr.rel (%p350) target = $region32
      $region31: #{resblock_forward.1} parent=11 // pred_region
        _
      $region32: #{resblock_forward.1} parent=11 // pred_fallthru
        _
      // Predicated region
      $region33: #{resblock_forward.1} parent=11 // pred_check
        %p353 = pneg %p171
      $region34: #{resblock_forward.1} parent=11 // pred_check_branch
        %355 = sbr.rel (%p353) target = $region36
      $region35: #{resblock_forward.1} parent=11 // pred_region
        _
      $region36: #{resblock_forward.1} parent=11 // pred_fallthru
        _
      // Predicated region
      $region37: #{resblock_forward.1} parent=11 // pred_check
        %p356 = pneg %p192
      $region38: #{resblock_forward.1} parent=11 // pred_check_branch
        %358 = sbr.rel (%p356) target = $region40
      $region39: #{resblock_forward.1} parent=11 // pred_region
        _
      $region40: #{resblock_forward.1} parent=11 // pred_fallthru
        _
      // Predicated region
      $region41: #{resblock_forward.1} parent=11 // pred_check
        %p359 = pneg %p213
      $region42: #{resblock_forward.1} parent=11 // pred_check_branch
        %361 = sbr.rel (%p359) target = $region44
      $region43: #{resblock_forward.1} parent=11 // pred_region
        _
      $region44: #{resblock_forward.1} parent=11 // pred_fallthru
        _
      // Predicated region
      $region45: #{resblock_forward.1} parent=11 // pred_check
        %p362 = pneg %p234
      $region46: #{resblock_forward.1} parent=11 // pred_check_branch
        %364 = sbr.rel (%p362) target = $region48
      $region47: #{resblock_forward.1} parent=11 // pred_region
        _
      $region48: #{resblock_forward.1} parent=11 // pred_fallthru
        _
      // Predicated region
      $region49: #{resblock_forward.1} parent=11 // pred_check
        %p365 = pneg %p255
      $region50: #{resblock_forward.1} parent=11 // pred_check_branch
        %367 = sbr.rel (%p365) target = $region52
      $region51: #{resblock_forward.1} parent=11 // pred_region
        _
      $region52: #{resblock_forward.1} parent=11 // pred_fallthru
        _
      // Predicated region
      $region53: #{resblock_forward.1} parent=11 // pred_check
        %p368 = pneg %p276
      $region54: #{resblock_forward.1} parent=11 // pred_check_branch
        %370 = sbr.rel (%p368) target = $region56
      $region55: #{resblock_forward.1} parent=11 // pred_region
        _
      $region56: #{resblock_forward.1} parent=11 // pred_fallthru
        _
      // Predicated region
      $region57: #{resblock_forward.1} parent=11 // pred_check
        %p371 = pneg %p297
      $region58: #{resblock_forward.1} parent=11 // pred_check_branch
        %373 = sbr.rel (%p371) target = $region60
      $region59: #{resblock_forward.1} parent=11 // pred_region
        _
      $region60: #{resblock_forward.1} parent=11 // pred_fallthru
        _
    $region12: #{resblock_forward.1} parent=5 // pred_fallthru
      _
    %p374 = scmp.lt.s32.totalorder %s19, 2
    // Predicated region
    $region61: #{resblock_forward.1} parent=5 // pred_check
      %p375 = pneg %p374
    $region62: #{resblock_forward.1} parent=5 // pred_check_branch
      %377 = sbr.rel (%p375) target = $region64
    $region63: #{resblock_forward.1} parent=5 // pred_region
      // Predicated region
      $region65: #{resblock_forward.1} parent=63 // pred_check
        %p378 = pneg %p39
      $region66: #{resblock_forward.1} parent=63 // pred_check_branch
        %380 = sbr.rel (%p378) target = $region68
      $region67: #{resblock_forward.1} parent=63 // pred_region
        %p381 = scmp.lt.s32.totalorder %s19, 1
        %s382 = scalar_select %p381, %s19, 1
        %s383 = smul.addr %s382, 8
        %s384 = smul.addr %s383, 8
        %s385 = scalar_lea.vmem %s0, %s384
      $region68: #{resblock_forward.1} parent=63 // pred_fallthru
        _
    $region64: #{resblock_forward.1} parent=5 // pred_fallthru
      _
    %p386 = scmp.le.s32.totalorder 1, %s19
    %p387 = scmp.lt.s32.totalorder %s19, 3
    %p388 = pnand %p386, %p387
    %p389 = pneg %p388
    // Predicated region
    $region69: #{resblock_forward.1} parent=5 // pred_check
      _
    $region70: #{resblock_forward.1} parent=5 // pred_check_branch
      %391 = sbr.rel (%p388) target = $region72
    $region71: #{resblock_forward.1} parent=5 // pred_region
      %s392 = ssub.s32 %s19, 1
      %p393 = scmp.lt.s32.totalorder %s24, 1
      %s394 = scalar_select %p393, %s24, 1
      %s395 = smul.addr %s394, 8
      %s396 = smul.addr %s395, 8
      %s397 = scalar_lea.vmem %s0, %s396
      %p398 = pneg %p45
      %p399 = pneg %p42
      %p400 = pneg %p66
      %p401 = pneg %p63
      %p402 = pneg %p87
      %p403 = pneg %p84
      %p404 = pneg %p108
      %p405 = pneg %p105
      %p406 = pneg %p129
      %p407 = pneg %p126
      %p408 = pneg %p150
      %p409 = pneg %p147
      %p410 = pneg %p171
      %p411 = pneg %p168
      %p412 = pneg %p192
      %p413 = pneg %p189
      %p414 = pneg %p213
      %p415 = pneg %p210
      %p416 = pneg %p234
      %p417 = pneg %p231
      %p418 = pneg %p255
      %p419 = pneg %p252
      %p420 = pneg %p276
      %p421 = pneg %p273
      %p422 = pneg %p297
      %p423 = pneg %p294
      %p424 = pneg %p323
      %p425 = pneg %p320
      %p426 = scmp.lt.s32.totalorder %s24, 1
      %s427 = scalar_select %p426, %s24, 1
      %s428 = smul.addr %s427, 8
      %s429 = smul.addr %s428, 8
      %s430 = scalar_lea.vmem %s13, %s429
      %p431 = scmp.lt.s32.totalorder %s24, 1
      %s432 = scalar_select %p431, %s24, 1
      %s433 = smul.addr %s432, 8
      %s434 = smul.addr %s433, 8
      %s435 = scalar_lea.vmem %s0, %s434
      %p436 = scmp.lt.s32.totalorder %s24, 1
      %s437 = scalar_select %p436, %s24, 1
      %s438 = smul.addr %s437, 8
      %s439 = smul.addr %s438, 8
      %s440 = scalar_lea.vmem %s13, %s439
      %v441 = vld [vmem:[%s435] sm:$0xff]
      %v442 = vld [vmem:[%s435 + $0x8] sm:$0xff]
      %v443 = vld [vmem:[%s435 + $0x10] sm:$0xff]
      %v444 = vld [vmem:[%s435 + $0x18] sm:$0xff]
      %v445 = vld [vmem:[%s435 + $0x20] sm:$0xff]
      %v446 = vld [vmem:[%s435 + $0x28] sm:$0xff]
      %v447 = vld [vmem:[%s435 + $0x30] sm:$0xff]
      %v448 = vld [vmem:[%s435 + $0x38] sm:$0xff]
      %449 = vxpose.xlu0.b32.start [1/16] %v441, 128
      %450 = vxpose.xlu0.b32.cont [2/16] %v443, 128
      %451 = vxpose.xlu0.b32.cont [3/16] %v445, 128
      %452 = vxpose.xlu0.b32.cont [4/16] %v447, 128
      %453 = vxpose.xlu0.b32.cont [5/16] 0.0, 128
      %454 = vxpose.xlu0.b32.cont [6/16] 0.0, 128
      %455 = vxpose.xlu0.b32.cont [7/16] 0.0, 128
      %456 = vxpose.xlu0.b32.cont [8/16] 0.0, 128
      %457 = vxpose.xlu0.b32.cont [9/16] 0.0, 128
      %458 = vxpose.xlu0.b32.cont [10/16] 0.0, 128
      %459 = vxpose.xlu0.b32.cont [11/16] 0.0, 128
      %460 = vxpose.xlu0.b32.cont [12/16] 0.0, 128
      %461 = vxpose.xlu0.b32.cont [13/16] 0.0, 128
      %462 = vxpose.xlu0.b32.cont [14/16] 0.0, 128
      %463 = vxpose.xlu0.b32.cont [15/16] 0.0, 128
      %464 = vxpose.xlu0.b32.end [16/16] 0.0, 128
      %v465 = vpop.trf.xlu0
      %v466 = vpop.trf.xlu0
      %v467 = vpop.trf.xlu0
      %v468 = vpop.trf.xlu0
      %v469 = vpop.trf.xlu0
      %v470 = vpop.trf.xlu0
      %v471 = vpop.trf.xlu0
      %v472 = vpop.trf.xlu0
      %v473 = vpop.trf.xlu0
      %v474 = vpop.trf.xlu0
      %v475 = vpop.trf.xlu0
      %v476 = vpop.trf.xlu0
      %v477 = vpop.trf.xlu0
      %v478 = vpop.trf.xlu0
      %v479 = vpop.trf.xlu0
      %v480 = vpop.trf.xlu0
      %481 = vxpose.xlu0.b32.start [1/16] %v442, 128
      %482 = vxpose.xlu0.b32.cont [2/16] %v444, 128
      %483 = vxpose.xlu0.b32.cont [3/16] %v446, 128
      %484 = vxpose.xlu0.b32.cont [4/16] %v448, 128
      %485 = vxpose.xlu0.b32.cont [5/16] 0.0, 128
      %486 = vxpose.xlu0.b32.cont [6/16] 0.0, 128
      %487 = vxpose.xlu0.b32.cont [7/16] 0.0, 128
      %488 = vxpose.xlu0.b32.cont [8/16] 0.0, 128
      %489 = vxpose.xlu0.b32.cont [9/16] 0.0, 128
      %490 = vxpose.xlu0.b32.cont [10/16] 0.0, 128
      %491 = vxpose.xlu0.b32.cont [11/16] 0.0, 128
      %492 = vxpose.xlu0.b32.cont [12/16] 0.0, 128
      %493 = vxpose.xlu0.b32.cont [13/16] 0.0, 128
      %494 = vxpose.xlu0.b32.cont [14/16] 0.0, 128
      %495 = vxpose.xlu0.b32.cont [15/16] 0.0, 128
      %496 = vxpose.xlu0.b32.end [16/16] 0.0, 128
      %v497 = vpop.trf.xlu0
      %v498 = vpop.trf.xlu0
      %v499 = vpop.trf.xlu0
      %v500 = vpop.trf.xlu0
      %v501 = vpop.trf.xlu0
      %v502 = vpop.trf.xlu0
      %v503 = vpop.trf.xlu0
      %v504 = vpop.trf.xlu0
      %v505 = vpop.trf.xlu0
      %v506 = vpop.trf.xlu0
      %v507 = vpop.trf.xlu0
      %v508 = vpop.trf.xlu0
      %v509 = vpop.trf.xlu0
      %v510 = vpop.trf.xlu0
      %v511 = vpop.trf.xlu0
      %v512 = vpop.trf.xlu0
      %v513 = vld [vmem:[%s5] sm:$0xff]
      %v514 = vld [vmem:[%s5 + $0x8] sm:$0xff]
      %v515 = vld [vmem:[%s5 + $0x10] sm:$0xff]
      %v516 = vld [vmem:[%s5 + $0x18] sm:$0xff]
      %v517 = vld [vmem:[%s6] sm:$0xff]
      %v518 = vld [vmem:[%s6 + $0x8] sm:$0x1]
      %v519 = vld [vmem:[%s7] sm:$0x1]
      %vm520 = vcmask 261120
      %v521 = vsel %vm520, %v465, 0.0
      %v522 = vsel %vm520, %v466, 0.0
      %v523 = vadd.f32 %v521, %v522
      %v524 = vsel %vm520, %v467, 0.0
      %v525 = vadd.f32 %v523, %v524
      %v526 = vsel %vm520, %v468, 0.0
      %v527 = vadd.f32 %v525, %v526
      %v528 = vsel %vm520, %v469, 0.0
      %v529 = vadd.f32 %v527, %v528
      %v530 = vsel %vm520, %v470, 0.0
      %v531 = vadd.f32 %v529, %v530
      %v532 = vsel %vm520, %v471, 0.0
      %v533 = vadd.f32 %v531, %v532
      %v534 = vsel %vm520, %v472, 0.0
      %v535 = vadd.f32 %v533, %v534
      %v536 = vsel %vm520, %v473, 0.0
      %v537 = vadd.f32 %v535, %v536
      %v538 = vsel %vm520, %v474, 0.0
      %v539 = vadd.f32 %v537, %v538
      %v540 = vsel %vm520, %v475, 0.0
      %v541 = vadd.f32 %v539, %v540
      %v542 = vsel %vm520, %v476, 0.0
      %v543 = vadd.f32 %v541, %v542
      %v544 = vsel %vm520, %v477, 0.0
      %v545 = vadd.f32 %v543, %v544
      %v546 = vsel %vm520, %v478, 0.0
      %v547 = vadd.f32 %v545, %v546
      %v548 = vsel %vm520, %v479, 0.0
      %v549 = vadd.f32 %v547, %v548
      %v550 = vsel %vm520, %v480, 0.0
      %v551 = vadd.f32 %v549, %v550
      %v552 = vsel %vm520, %v497, 0.0
      %v553 = vadd.f32 %v551, %v552
      %v554 = vsel %vm520, %v498, 0.0
      %v555 = vadd.f32 %v553, %v554
      %v556 = vsel %vm520, %v499, 0.0
      %v557 = vadd.f32 %v555, %v556
      %v558 = vsel %vm520, %v500, 0.0
      %v559 = vadd.f32 %v557, %v558
      %v560 = vsel %vm520, %v501, 0.0
      %v561 = vadd.f32 %v559, %v560
      %v562 = vsel %vm520, %v502, 0.0
      %v563 = vadd.f32 %v561, %v562
      %v564 = vsel %vm520, %v503, 0.0
      %v565 = vadd.f32 %v563, %v564
      %v566 = vsel %vm520, %v504, 0.0
      %v567 = vadd.f32 %v565, %v566
      %v568 = vsel %vm520, %v505, 0.0
      %v569 = vadd.f32 %v567, %v568
      %v570 = vsel %vm520, %v506, 0.0
      %v571 = vadd.f32 %v569, %v570
      %v572 = vsel %vm520, %v507, 0.0
      %v573 = vadd.f32 %v571, %v572
      %v574 = vsel %vm520, %v508, 0.0
      %v575 = vadd.f32 %v573, %v574
      %v576 = vsel %vm520, %v509, 0.0
      %v577 = vadd.f32 %v575, %v576
      %v578 = vsel %vm520, %v510, 0.0
      %v579 = vadd.f32 %v577, %v578
      %v580 = vsel %vm520, %v511, 0.0
      %v581 = vadd.f32 %v579, %v580
      %v582 = vsel %vm520, %v512, 0.0
      %v583 = vadd.f32 %v581, %v582
      %v584 = vrot.slane %v583, 4
      %v585 = vadd.f32 %v583, %v584
      %v586 = vrot.slane %v585, 2
      %v587 = vadd.f32 %v585, %v586
      %v588 = vrot.slane %v587, 1
      %v589 = vadd.f32 %v587, %v588
      %v590 = vrcp.pop 256.0
      %v591 = vmul.f32 %v589, %v590
      %v593 = vsel %vm520, %v591, 0
      %595 = vmatprep.subr.mxu0 0.0
      %596 = vmatpush1.msra.mxu0 %v513
      %597 = vmatprep.subr.mxu0 0.0
      %598 = vmatpush1.msra.mxu0 %v514
      %599 = vmatprep.subr.mxu0 0.0
      %600 = vmatpush1.msra.mxu0 %v515
      %601 = vmatprep.subr.mxu0 0.0
      %602 = vmatpush1.msra.mxu0 %v516
      %603 = vmatprep.subr.mxu0 0.0
      %604 = vmatpush1.msra.mxu0 0.0
      %605 = vmatprep.subr.mxu0 0.0
      %606 = vmatpush1.msra.mxu0 0.0
      %607 = vmatprep.subr.mxu0 0.0
      %608 = vmatpush1.msra.mxu0 0.0
      %609 = vmatprep.subr.mxu0 0.0
      %610 = vmatpush1.msra.mxu0 0.0
      %611 = vmatprep.subr.mxu0 0.0
      %612 = vmatpush1.msra.mxu0 0.0
      %613 = vmatprep.subr.mxu0 0.0
      %614 = vmatpush1.msra.mxu0 0.0
      %615 = vmatprep.subr.mxu0 0.0
      %616 = vmatpush1.msra.mxu0 0.0
      %617 = vmatprep.subr.mxu0 0.0
      %618 = vmatpush1.msra.mxu0 0.0
      %619 = vmatprep.subr.mxu0 0.0
      %620 = vmatpush1.msra.mxu0 0.0
      %621 = vmatprep.subr.mxu0 0.0
      %622 = vmatpush1.msra.mxu0 0.0
      %623 = vmatprep.subr.mxu0 0.0
      %624 = vmatpush1.msra.mxu0 0.0
      %625 = vmatprep.subr.mxu0 0.0
      %626 = vmatpush1.msra.mxu0 0.0
      %627 = vmatprep.subr.mxu0 0.0
      %628 = vmatpush1.msra.mxu0 0.0
      %629 = vmatprep.subr.mxu0 0.0
      %630 = vmatpush1.msra.mxu0 0.0
      %631 = vmatprep.subr.mxu0 0.0
      %632 = vmatpush1.msra.mxu0 0.0
      %633 = vmatprep.subr.mxu0 0.0
      %634 = vmatpush1.msra.mxu0 0.0
      %635 = vmatprep.subr.mxu0 0.0
      %636 = vmatpush1.msra.mxu0 0.0
      %637 = vmatprep.subr.mxu0 0.0
      %638 = vmatpush1.msra.mxu0 0.0
      %639 = vmatprep.subr.mxu0 0.0
      %640 = vmatpush1.msra.mxu0 0.0
      %641 = vmatprep.subr.mxu0 0.0
      %642 = vmatpush1.msra.mxu0 0.0
      %643 = vmatprep.subr.mxu0 0.0
      %644 = vmatpush1.msra.mxu0 0.0
      %645 = vmatprep.subr.mxu0 0.0
      %646 = vmatpush1.msra.mxu0 0.0
      %647 = vmatprep.subr.mxu0 0.0
      %648 = vmatpush1.msra.mxu0 0.0
      %649 = vmatprep.subr.mxu0 0.0
      %650 = vmatpush1.msra.mxu0 0.0
      %651 = vmatprep.subr.mxu0 0.0
      %652 = vmatpush1.msra.mxu0 0.0
      %653 = vmatprep.subr.mxu0 0.0
      %654 = vmatpush1.msra.mxu0 0.0
      %655 = vmatprep.subr.mxu0 0.0
      %656 = vmatpush1.msra.mxu0 0.0
      %657 = vmatprep.subr.mxu0 0.0
      %658 = vmatpush1.msra.mxu0 0.0
      %659 = vmatprep.mubr.f32.mxu0 0.0
      %660 = vmatmul.mubr.f32.gmra.mrb[0].mxu0 %v593
      %v661 = vpop.f32.mrb[0].mxu0
      %v662 = vadd.f32 0.0, %v661
      %v663 = vpop.f32.mrb[0].mxu0
      %664 = vdwg.mxu0
      %v665 = vmax.f32 %v662, 0.0
      %vm666 = vcmask 72704
      %v668 = vsel %vm666, %v665, 0
      %vm670 = vcmask 1040384
      %v672 = vsel %vm670, %v518, 0
      %674 = vmatprep.subr.mxu0 0.0
      %675 = vmatpush1.msra.mxu0 %v517
      %676 = vmatprep.subr.mxu0 0.0
      %677 = vmatpush1.msra.mxu0 %v672
      %678 = vmatprep.subr.mxu0 0.0
      %679 = vmatpush1.msra.mxu0 0.0
      %680 = vmatprep.subr.mxu0 0.0
      %681 = vmatpush1.msra.mxu0 0.0
      %682 = vmatprep.subr.mxu0 0.0
      %683 = vmatpush1.msra.mxu0 0.0
      %684 = vmatprep.subr.mxu0 0.0
      %685 = vmatpush1.msra.mxu0 0.0
      %686 = vmatprep.subr.mxu0 0.0
      %687 = vmatpush1.msra.mxu0 0.0
      %688 = vmatprep.subr.mxu0 0.0
      %689 = vmatpush1.msra.mxu0 0.0
      %690 = vmatprep.subr.mxu0 0.0
      %691 = vmatpush1.msra.mxu0 0.0
      %692 = vmatprep.subr.mxu0 0.0
      %693 = vmatpush1.msra.mxu0 0.0
      %694 = vmatprep.subr.mxu0 0.0
      %695 = vmatpush1.msra.mxu0 0.0
      %696 = vmatprep.subr.mxu0 0.0
      %697 = vmatpush1.msra.mxu0 0.0
      %698 = vmatprep.subr.mxu0 0.0
      %699 = vmatpush1.msra.mxu0 0.0
      %700 = vmatprep.subr.mxu0 0.0
      %701 = vmatpush1.msra.mxu0 0.0
      %702 = vmatprep.subr.mxu0 0.0
      %703 = vmatpush1.msra.mxu0 0.0
      %704 = vmatprep.subr.mxu0 0.0
      %705 = vmatpush1.msra.mxu0 0.0
      %706 = vmatprep.subr.mxu0 0.0
      %707 = vmatpush1.msra.mxu0 0.0
      %708 = vmatprep.subr.mxu0 0.0
      %709 = vmatpush1.msra.mxu0 0.0
      %710 = vmatprep.subr.mxu0 0.0
      %711 = vmatpush1.msra.mxu0 0.0
      %712 = vmatprep.subr.mxu0 0.0
      %713 = vmatpush1.msra.mxu0 0.0
      %714 = vmatprep.subr.mxu0 0.0
      %715 = vmatpush1.msra.mxu0 0.0
      %716 = vmatprep.subr.mxu0 0.0
      %717 = vmatpush1.msra.mxu0 0.0
      %718 = vmatprep.subr.mxu0 0.0
      %719 = vmatpush1.msra.mxu0 0.0
      %720 = vmatprep.subr.mxu0 0.0
      %721 = vmatpush1.msra.mxu0 0.0
      %722 = vmatprep.subr.mxu0 0.0
      %723 = vmatpush1.msra.mxu0 0.0
      %724 = vmatprep.subr.mxu0 0.0
      %725 = vmatpush1.msra.mxu0 0.0
      %726 = vmatprep.subr.mxu0 0.0
      %727 = vmatpush1.msra.mxu0 0.0
      %728 = vmatprep.subr.mxu0 0.0
      %729 = vmatpush1.msra.mxu0 0.0
      %730 = vmatprep.subr.mxu0 0.0
      %731 = vmatpush1.msra.mxu0 0.0
      %732 = vmatprep.subr.mxu0 0.0
      %733 = vmatpush1.msra.mxu0 0.0
      %734 = vmatprep.subr.mxu0 0.0
      %735 = vmatpush1.msra.mxu0 0.0
      %736 = vmatprep.subr.mxu0 0.0
      %737 = vmatpush1.msra.mxu0 0.0
      %738 = vmatprep.mubr.f32.mxu0 0.0
      %739 = vmatmul.mubr.f32.gmra.mrb[0].mxu0 %v668
      %v740 = vpop.f32.mrb[0].mxu0
      %v741 = vadd.f32 %v519, %v740
      %v742 = vpop.f32.mrb[0].mxu0
      %743 = vdwg.mxu0
      %v744 = vmul.f32 %v741, 0.029411765
      %vm745 = vcmask 24576
      %v746 = vsel %vm745, %v744, -inf
      %747 = vmax.xlane.f32.xlu0 %v746
      %v748 = vpop.xlane.xlu0 %747
      %v749 = vsub.f32 %v744, %v748
      %v750 = vmul.f32 %v749, 1.442695
      %v751 = vpow.pop %v750
      %v752 = vsel %vm745, %v751, 0.0
      %753 = vadd.xlane.f32.xlu0 %v752
      %v754 = vpop.xlane.xlu0 %753
      %v755 = vrcp.pop %v754
      %v756 = vmul.f32 %v751, %v755
      %v757 = vld [vmem:[%s11] sm:$0xf]
      %vm758 = vcmask 31744
      %v760 = vsel %vm758, %v756, 0
      %vm762 = vcmask 1043456
      %v764 = vsel %vm762, %v757, 0
      %766 = vmatprep.subr.mxu0 0.0
      %767 = vmatpush1.msra.mxu0 %v764
      %768 = vmatprep.subr.mxu0 0.0
      %769 = vmatpush1.msra.mxu0 0.0
      %770 = vmatprep.subr.mxu0 0.0
      %771 = vmatpush1.msra.mxu0 0.0
      %772 = vmatprep.subr.mxu0 0.0
      %773 = vmatpush1.msra.mxu0 0.0
      %774 = vmatprep.subr.mxu0 0.0
      %775 = vmatpush1.msra.mxu0 0.0
      %776 = vmatprep.subr.mxu0 0.0
      %777 = vmatpush1.msra.mxu0 0.0
      %778 = vmatprep.subr.mxu0 0.0
      %779 = vmatpush1.msra.mxu0 0.0
      %780 = vmatprep.subr.mxu0 0.0
      %781 = vmatpush1.msra.mxu0 0.0
      %782 = vmatprep.subr.mxu0 0.0
      %783 = vmatpush1.msra.mxu0 0.0
      %784 = vmatprep.subr.mxu0 0.0
      %785 = vmatpush1.msra.mxu0 0.0
      %786 = vmatprep.subr.mxu0 0.0
      %787 = vmatpush1.msra.mxu0 0.0
      %788 = vmatprep.subr.mxu0 0.0
      %789 = vmatpush1.msra.mxu0 0.0
      %790 = vmatprep.subr.mxu0 0.0
      %791 = vmatpush1.msra.mxu0 0.0
      %792 = vmatprep.subr.mxu0 0.0
      %793 = vmatpush1.msra.mxu0 0.0
      %794 = vmatprep.subr.mxu0 0.0
      %795 = vmatpush1.msra.mxu0 0.0
      %796 = vmatprep.subr.mxu0 0.0
      %797 = vmatpush1.msra.mxu0 0.0
      %798 = vmatprep.subr.mxu0 0.0
      %799 = vmatpush1.msra.mxu0 0.0
      %800 = vmatprep.subr.mxu0 0.0
      %801 = vmatpush1.msra.mxu0 0.0
      %802 = vmatprep.subr.mxu0 0.0
      %803 = vmatpush1.msra.mxu0 0.0
      %804 = vmatprep.subr.mxu0 0.0
      %805 = vmatpush1.msra.mxu0 0.0
      %806 = vmatprep.subr.mxu0 0.0
      %807 = vmatpush1.msra.mxu0 0.0
      %808 = vmatprep.subr.mxu0 0.0
      %809 = vmatpush1.msra.mxu0 0.0
      %810 = vmatprep.subr.mxu0 0.0
      %811 = vmatpush1.msra.mxu0 0.0
      %812 = vmatprep.subr.mxu0 0.0
      %813 = vmatpush1.msra.mxu0 0.0
      %814 = vmatprep.subr.mxu0 0.0
      %815 = vmatpush1.msra.mxu0 0.0
      %816 = vmatprep.subr.mxu0 0.0
      %817 = vmatpush1.msra.mxu0 0.0
      %818 = vmatprep.subr.mxu0 0.0
      %819 = vmatpush1.msra.mxu0 0.0
      %820 = vmatprep.subr.mxu0 0.0
      %821 = vmatpush1.msra.mxu0 0.0
      %822 = vmatprep.subr.mxu0 0.0
      %823 = vmatpush1.msra.mxu0 0.0
      %824 = vmatprep.subr.mxu0 0.0
      %825 = vmatpush1.msra.mxu0 0.0
      %826 = vmatprep.subr.mxu0 0.0
      %827 = vmatpush1.msra.mxu0 0.0
      %828 = vmatprep.subr.mxu0 0.0
      %829 = vmatpush1.msra.mxu0 0.0
      %830 = vmatprep.mubr.f32.mxu0 0.0
      %831 = vmatmul.mubr.f32.gmra.mrb[0].mxu0 %v760
      %v832 = vpop.f32.mrb[0].mxu0
      %v833 = vadd.f32 0.0, %v832
      %v834 = vpop.f32.mrb[0].mxu0
      %835 = vdwg.mxu0
      %836 = vst.msk [vmem:[#allocation2] sm:$0xff] %vm520, 0.0
      %837 = vst.msk [vmem:[#allocation2 + $0x8] sm:$0xff] %vm520, 0.0
      %vm838 = vcmask 254976
      %839 = vst.msk [vmem:[#allocation2 + $0x10] sm:$0x3] %vm838, 0.0
      %840 = vst.msk [vmem:[#allocation2 + $0x18] sm:$0xff] %vm520, 0.0
      %841 = vst.msk [vmem:[#allocation2 + $0x20] sm:$0xff] %vm520, 0.0
      %842 = vst.msk [vmem:[#allocation2 + $0x28] sm:$0x3] %vm838, 0.0
      %843 = vst.msk [vmem:[#allocation2 + $0x30] sm:$0xff] %vm520, 0.0
      %844 = vst.msk [vmem:[#allocation2 + $0x38] sm:$0xff] %vm520, 0.0
      %845 = vst.msk [vmem:[#allocation2 + $0x40] sm:$0x3] %vm838, 0.0
      %846 = vst.msk [vmem:[#allocation2 + $0x48] sm:$0xff] %vm520, 0.0
      %847 = vst.msk [vmem:[#allocation2 + $0x50] sm:$0xff] %vm520, 0.0
      %848 = vst.msk [vmem:[#allocation2 + $0x58] sm:$0x3] %vm838, 0.0
      %849 = vst.msk [vmem:[#allocation2 + $0x60] sm:$0xff] %vm520, 0.0
      %850 = vst.msk [vmem:[#allocation2 + $0x68] sm:$0xff] %vm520, 0.0
      %851 = vst.msk [vmem:[#allocation2 + $0x70] sm:$0x3] %vm838, 0.0
      %852 = vst.msk [vmem:[#allocation2 + $0x78] sm:$0xff] %vm520, 0.0
      %853 = vst.msk [vmem:[#allocation2 + $0x80] sm:$0xff] %vm520, 0.0
      %854 = vst.msk [vmem:[#allocation2 + $0x88] sm:$0x3] %vm838, 0.0
      %855 = vst.msk [vmem:[#allocation2 + $0x90] sm:$0xff] %vm520, 0.0
      %856 = vst.msk [vmem:[#allocation2 + $0x98] sm:$0xff] %vm520, 0.0
      %857 = vst.msk [vmem:[#allocation2 + $0xa0] sm:$0x3] %vm838, 0.0
      %858 = vst.msk [vmem:[#allocation2 + $0xa8] sm:$0xff] %vm520, 0.0
      %859 = vst.msk [vmem:[#allocation2 + $0xb0] sm:$0xff] %vm520, 0.0
      %860 = vst.msk [vmem:[#allocation2 + $0xb8] sm:$0x3] %vm838, 0.0
      %861 = vst.msk [vmem:[#allocation2 + $0xc0] sm:$0xff] %vm520, 0.0
      %862 = vst.msk [vmem:[#allocation2 + $0xc8] sm:$0xff] %vm520, 0.0
      %863 = vst.msk [vmem:[#allocation2 + $0xd0] sm:$0x3] %vm838, 0.0
      %864 = vst.msk [vmem:[#allocation2 + $0xd8] sm:$0xff] %vm520, 0.0
      %865 = vst.msk [vmem:[#allocation2 + $0xe0] sm:$0xff] %vm520, 0.0
      %866 = vst.msk [vmem:[#allocation2 + $0xe8] sm:$0x3] %vm838, 0.0
      %867 = vst.msk [vmem:[#allocation2 + $0xf0] sm:$0xff] %vm520, 0.0
      %868 = vst.msk [vmem:[#allocation2 + $0xf8] sm:$0xff] %vm520, 0.0
      %869 = vst.msk [vmem:[#allocation2 + $0x100] sm:$0x3] %vm838, 0.0
      %870 = vst.msk [vmem:[#allocation2 + $0x108] sm:$0xff] %vm520, 0.0
      %871 = vst.msk [vmem:[#allocation2 + $0x110] sm:$0xff] %vm520, 0.0
      %872 = vst.msk [vmem:[#allocation2 + $0x118] sm:$0x3] %vm838, 0.0
      %873 = vst.msk [vmem:[#allocation2 + $0x120] sm:$0xff] %vm520, 0.0
      %874 = vst.msk [vmem:[#allocation2 + $0x128] sm:$0xff] %vm520, 0.0
      %875 = vst.msk [vmem:[#allocation2 + $0x130] sm:$0x3] %vm838, 0.0
      %876 = vst.msk [vmem:[#allocation2 + $0x138] sm:$0xff] %vm520, 0.0
      %877 = vst.msk [vmem:[#allocation2 + $0x140] sm:$0xff] %vm520, 0.0
      %878 = vst.msk [vmem:[#allocation2 + $0x148] sm:$0x3] %vm838, 0.0
      %879 = vst.msk [vmem:[#allocation2 + $0x150] sm:$0xff] %vm520, 0.0
      %880 = vst.msk [vmem:[#allocation2 + $0x158] sm:$0xff] %vm520, 0.0
      %881 = vst.msk [vmem:[#allocation2 + $0x160] sm:$0x3] %vm838, 0.0
      %882 = vst.msk [vmem:[#allocation2 + $0x168] sm:$0xff] %vm520, 0.0
      %883 = vst.msk [vmem:[#allocation2 + $0x170] sm:$0xff] %vm520, 0.0
      %884 = vst.msk [vmem:[#allocation2 + $0x178] sm:$0x3] %vm838, 0.0
      %885 = vst.msk [vmem:[#allocation2 + $0x180] sm:$0xff] %vm520, 0.0
      %886 = vst.msk [vmem:[#allocation2 + $0x188] sm:$0xff] %vm520, 0.0
      %887 = vst.msk [vmem:[#allocation2 + $0x190] sm:$0x3] %vm838, 0.0
      %888 = vst.msk [vmem:[#allocation2 + $0x198] sm:$0xff] %vm520, 0.0
      %889 = vst.msk [vmem:[#allocation2 + $0x1a0] sm:$0xff] %vm520, 0.0
      %890 = vst.msk [vmem:[#allocation2 + $0x1a8] sm:$0x3] %vm838, 0.0
      %s891 = scalar_lea.vmem [#allocation2], 24
      %892 = vst.msk [vmem:[%s891 + $0x1] sm:$0xff] %vm520, %v465
      %893 = vst.msk [vmem:[%s891 + $0x9] sm:$0xff] %vm520, %v466
      %894 = vst.msk [vmem:[%s891 + $0x19] sm:$0xff] %vm520, %v467
      %895 = vst.msk [vmem:[%s891 + $0x21] sm:$0xff] %vm520, %v468
      %896 = vst.msk [vmem:[%s891 + $0x31] sm:$0xff] %vm520, %v469
      %897 = vst.msk [vmem:[%s891 + $0x39] sm:$0xff] %vm520, %v470
      %898 = vst.msk [vmem:[%s891 + $0x49] sm:$0xff] %vm520, %v471
      %899 = vst.msk [vmem:[%s891 + $0x51] sm:$0xff] %vm520, %v472
      %900 = vst.msk [vmem:[%s891 + $0x61] sm:$0xff] %vm520, %v473
      %901 = vst.msk [vmem:[%s891 + $0x69] sm:$0xff] %vm520, %v474
      %902 = vst.msk [vmem:[%s891 + $0x79] sm:$0xff] %vm520, %v475
      %903 = vst.msk [vmem:[%s891 + $0x81] sm:$0xff] %vm520, %v476
      %904 = vst.msk [vmem:[%s891 + $0x91] sm:$0xff] %vm520, %v477
      %905 = vst.msk [vmem:[%s891 + $0x99] sm:$0xff] %vm520, %v478
      %906 = vst.msk [vmem:[%s891 + $0xa9] sm:$0xff] %vm520, %v479
      %907 = vst.msk [vmem:[%s891 + $0xb1] sm:$0xff] %vm520, %v480
      %908 = vst.msk [vmem:[%s891 + $0xc1] sm:$0xff] %vm520, %v497
      %909 = vst.msk [vmem:[%s891 + $0xc9] sm:$0xff] %vm520, %v498
      %910 = vst.msk [vmem:[%s891 + $0xd9] sm:$0xff] %vm520, %v499
      %911 = vst.msk [vmem:[%s891 + $0xe1] sm:$0xff] %vm520, %v500
      %912 = vst.msk [vmem:[%s891 + $0xf1] sm:$0xff] %vm520, %v501
      %913 = vst.msk [vmem:[%s891 + $0xf9] sm:$0xff] %vm520, %v502
      %914 = vst.msk [vmem:[%s891 + $0x109] sm:$0xff] %vm520, %v503
      %915 = vst.msk [vmem:[%s891 + $0x111] sm:$0xff] %vm520, %v504
      %916 = vst.msk [vmem:[%s891 + $0x121] sm:$0xff] %vm520, %v505
      %917 = vst.msk [vmem:[%s891 + $0x129] sm:$0xff] %vm520, %v506
      %918 = vst.msk [vmem:[%s891 + $0x139] sm:$0xff] %vm520, %v507
      %919 = vst.msk [vmem:[%s891 + $0x141] sm:$0xff] %vm520, %v508
      %920 = vst.msk [vmem:[%s891 + $0x151] sm:$0xff] %vm520, %v509
      %921 = vst.msk [vmem:[%s891 + $0x159] sm:$0xff] %vm520, %v510
      %922 = vst.msk [vmem:[%s891 + $0x169] sm:$0xff] %vm520, %v511
      %923 = vst.msk [vmem:[%s891 + $0x171] sm:$0xff] %vm520, %v512
      %v924 = vld [vmem:[#allocation2] sm:$0xff]
      %v925 = vld [vmem:[#allocation2 + $0x8] sm:$0xff]
      %v926 = vld [vmem:[#allocation2 + $0x18] sm:$0xff]
      %v927 = vld [vmem:[#allocation2 + $0x20] sm:$0xff]
      %v928 = vld [vmem:[#allocation2 + $0x30] sm:$0xff]
      %v929 = vld [vmem:[#allocation2 + $0x38] sm:$0xff]
      %v930 = vld [vmem:[#allocation2 + $0x48] sm:$0xff]
      %v931 = vld [vmem:[#allocation2 + $0x50] sm:$0xff]
      %v932 = vld [vmem:[#allocation2 + $0x60] sm:$0xff]
      %v933 = vld [vmem:[#allocation2 + $0x68] sm:$0xff]
      %v934 = vld [vmem:[#allocation2 + $0x78] sm:$0xff]
      %v935 = vld [vmem:[#allocation2 + $0x80] sm:$0xff]
      %v936 = vld [vmem:[#allocation2 + $0x90] sm:$0xff]
      %v937 = vld [vmem:[#allocation2 + $0x98] sm:$0xff]
      %v938 = vld [vmem:[#allocation2 + $0xa8] sm:$0xff]
      %v939 = vld [vmem:[#allocation2 + $0xb0] sm:$0xff]
      %v940 = vld [vmem:[#allocation2 + $0xc0] sm:$0xff]
      %v941 = vld [vmem:[#allocation2 + $0xc8] sm:$0xff]
      %v942 = vld [vmem:[#allocation2 + $0xd8] sm:$0xff]
      %v943 = vld [vmem:[#allocation2 + $0xe0] sm:$0xff]
      %v944 = vld [vmem:[#allocation2 + $0xf0] sm:$0xff]
      %v945 = vld [vmem:[#allocation2 + $0xf8] sm:$0xff]
      %v946 = vld [vmem:[#allocation2 + $0x108] sm:$0xff]
      %v947 = vld [vmem:[#allocation2 + $0x110] sm:$0xff]
      %v948 = vld [vmem:[#allocation2 + $0x120] sm:$0xff]
      %v949 = vld [vmem:[#allocation2 + $0x128] sm:$0xff]
      %v950 = vld [vmem:[#allocation2 + $0x138] sm:$0xff]
      %v951 = vld [vmem:[#allocation2 + $0x140] sm:$0xff]
      %v952 = vld [vmem:[#allocation2 + $0x150] sm:$0xff]
      %v953 = vld [vmem:[#allocation2 + $0x158] sm:$0xff]
      %v954 = vld [vmem:[#allocation2 + $0x168] sm:$0xff]
      %v955 = vld [vmem:[#allocation2 + $0x170] sm:$0xff]
      %956 = vst.msk [vmem:[#allocation3] sm:$0xff] %vm520, %v924
      %957 = vst.msk [vmem:[#allocation3 + $0x18] sm:$0xff] %vm520, %v925
      %958 = vst.msk [vmem:[#allocation3 + $0x30] sm:$0xff] %vm520, %v926
      %959 = vst.msk [vmem:[#allocation3 + $0x48] sm:$0xff] %vm520, %v927
      %960 = vst.msk [vmem:[#allocation3 + $0x60] sm:$0xff] %vm520, %v928
      %961 = vst.msk [vmem:[#allocation3 + $0x78] sm:$0xff] %vm520, %v929
      %962 = vst.msk [vmem:[#allocation3 + $0x90] sm:$0xff] %vm520, %v930
      %963 = vst.msk [vmem:[#allocation3 + $0xa8] sm:$0xff] %vm520, %v931
      %964 = vst.msk [vmem:[#allocation3 + $0xc0] sm:$0xff] %vm520, %v932
      %965 = vst.msk [vmem:[#allocation3 + $0xd8] sm:$0xff] %vm520, %v933
      %966 = vst.msk [vmem:[#allocation3 + $0xf0] sm:$0xff] %vm520, %v934
      %967 = vst.msk [vmem:[#allocation3 + $0x108] sm:$0xff] %vm520, %v935
      %968 = vst.msk [vmem:[#allocation3 + $0x120] sm:$0xff] %vm520, %v936
      %969 = vst.msk [vmem:[#allocation3 + $0x138] sm:$0xff] %vm520, %v937
      %970 = vst.msk [vmem:[#allocation3 + $0x150] sm:$0xff] %vm520, %v938
      %971 = vst.msk [vmem:[#allocation3 + $0x168] sm:$0xff] %vm520, %v939
      %972 = vst.msk [vmem:[#allocation3 + $0x180] sm:$0xff] %vm520, %v940
      %973 = vst.msk [vmem:[#allocation3 + $0x198] sm:$0xff] %vm520, %v941
      %974 = vst.msk [vmem:[#allocation3 + $0x1b0] sm:$0xff] %vm520, %v942
      %975 = vst.msk [vmem:[#allocation3 + $0x1c8] sm:$0xff] %vm520, %v943
      %976 = vst.msk [vmem:[#allocation3 + $0x1e0] sm:$0xff] %vm520, %v944
      %977 = vst.msk [vmem:[#allocation3 + $0x1f8] sm:$0xff] %vm520, %v945
      %978 = vst.msk [vmem:[#allocation3 + $0x210] sm:$0xff] %vm520, %v946
      %979 = vst.msk [vmem:[#allocation3 + $0x228] sm:$0xff] %vm520, %v947
      %980 = vst.msk [vmem:[#allocation3 + $0x240] sm:$0xff] %vm520, %v948
      %981 = vst.msk [vmem:[#allocation3 + $0x258] sm:$0xff] %vm520, %v949
      %982 = vst.msk [vmem:[#allocation3 + $0x270] sm:$0xff] %vm520, %v950
      %983 = vst.msk [vmem:[#allocation3 + $0x288] sm:$0xff] %vm520, %v951
      %984 = vst.msk [vmem:[#allocation3 + $0x2a0] sm:$0xff] %vm520, %v952
      %985 = vst.msk [vmem:[#allocation3 + $0x2b8] sm:$0xff] %vm520, %v953
      %986 = vst.msk [vmem:[#allocation3 + $0x2d0] sm:$0xff] %vm520, %v954
      %987 = vst.msk [vmem:[#allocation3 + $0x2e8] sm:$0xff] %vm520, %v955
      %v988 = vld [vmem:[#allocation2 + $0x1] sm:$0xff]
      %v989 = vld [vmem:[#allocation2 + $0x9] sm:$0xff]
      %v990 = vld [vmem:[#allocation2 + $0x19] sm:$0xff]
      %v991 = vld [vmem:[#allocation2 + $0x21] sm:$0xff]
      %v992 = vld [vmem:[#allocation2 + $0x31] sm:$0xff]
      %v993 = vld [vmem:[#allocation2 + $0x39] sm:$0xff]
      %v994 = vld [vmem:[#allocation2 + $0x49] sm:$0xff]
      %v995 = vld [vmem:[#allocation2 + $0x51] sm:$0xff]
      %v996 = vld [vmem:[#allocation2 + $0x61] sm:$0xff]
      %v997 = vld [vmem:[#allocation2 + $0x69] sm:$0xff]
      %v998 = vld [vmem:[#allocation2 + $0x79] sm:$0xff]
      %v999 = vld [vmem:[#allocation2 + $0x81] sm:$0xff]
      %v1000 = vld [vmem:[#allocation2 + $0x91] sm:$0xff]
      %v1001 = vld [vmem:[#allocation2 + $0x99] sm:$0xff]
      %v1002 = vld [vmem:[#allocation2 + $0xa9] sm:$0xff]
      %v1003 = vld [vmem:[#allocation2 + $0xb1] sm:$0xff]
      %v1004 = vld [vmem:[#allocation2 + $0xc1] sm:$0xff]
      %v1005 = vld [vmem:[#allocation2 + $0xc9] sm:$0xff]
      %v1006 = vld [vmem:[#allocation2 + $0xd9] sm:$0xff]
      %v1007 = vld [vmem:[#allocation2 + $0xe1] sm:$0xff]
      %v1008 = vld [vmem:[#allocation2 + $0xf1] sm:$0xff]
      %v1009 = vld [vmem:[#allocation2 + $0xf9] sm:$0xff]
      %v1010 = vld [vmem:[#allocation2 + $0x109] sm:$0xff]
      %v1011 = vld [vmem:[#allocation2 + $0x111] sm:$0xff]
      %v1012 = vld [vmem:[#allocation2 + $0x121] sm:$0xff]
      %v1013 = vld [vmem:[#allocation2 + $0x129] sm:$0xff]
      %v1014 = vld [vmem:[#allocation2 + $0x139] sm:$0xff]
      %v1015 = vld [vmem:[#allocation2 + $0x141] sm:$0xff]
      %v1016 = vld [vmem:[#allocation2 + $0x151] sm:$0xff]
      %v1017 = vld [vmem:[#allocation2 + $0x159] sm:$0xff]
      %v1018 = vld [vmem:[#allocation2 + $0x169] sm:$0xff]
      %v1019 = vld [vmem:[#allocation2 + $0x171] sm:$0xff]
      %1052 = vrot.lane.b32.xlu0 %v988, 32
      %v1053 = vpop.permute.xlu0 %1052
      %1054 = vrot.lane.b32.xlu0 %v989, 32
      %v1055 = vpop.permute.xlu0 %1054
      %1056 = vrot.lane.b32.xlu0 %v990, 32
      %v1057 = vpop.permute.xlu0 %1056
      %1058 = vrot.lane.b32.xlu0 %v991, 32
      %v1059 = vpop.permute.xlu0 %1058
      %1060 = vrot.lane.b32.xlu0 %v992, 32
      %v1061 = vpop.permute.xlu0 %1060
      %1062 = vrot.lane.b32.xlu0 %v993, 32
      %v1063 = vpop.permute.xlu0 %1062
      %1064 = vrot.lane.b32.xlu0 %v994, 32
      %v1065 = vpop.permute.xlu0 %1064
      %1066 = vrot.lane.b32.xlu0 %v995, 32
      %v1067 = vpop.permute.xlu0 %1066
      %1068 = vrot.lane.b32.xlu0 %v996, 32
      %v1069 = vpop.permute.xlu0 %1068
      %1070 = vrot.lane.b32.xlu0 %v997, 32
      %v1071 = vpop.permute.xlu0 %1070
      %1072 = vrot.lane.b32.xlu0 %v998, 32
      %v1073 = vpop.permute.xlu0 %1072
      %1074 = vrot.lane.b32.xlu0 %v999, 32
      %v1075 = vpop.permute.xlu0 %1074
      %1076 = vrot.lane.b32.xlu0 %v1000, 32
      %v1077 = vpop.permute.xlu0 %1076
      %1078 = vrot.lane.b32.xlu0 %v1001, 32
      %v1079 = vpop.permute.xlu0 %1078
      %1080 = vrot.lane.b32.xlu0 %v1002, 32
      %v1081 = vpop.permute.xlu0 %1080
      %1082 = vrot.lane.b32.xlu0 %v1003, 32
      %v1083 = vpop.permute.xlu0 %1082
      %1084 = vrot.lane.b32.xlu0 %v1004, 32
      %v1085 = vpop.permute.xlu0 %1084
      %1086 = vrot.lane.b32.xlu0 %v1005, 32
      %v1087 = vpop.permute.xlu0 %1086
      %1088 = vrot.lane.b32.xlu0 %v1006, 32
      %v1089 = vpop.permute.xlu0 %1088
      %1090 = vrot.lane.b32.xlu0 %v1007, 32
      %v1091 = vpop.permute.xlu0 %1090
      %1092 = vrot.lane.b32.xlu0 %v1008, 32
      %v1093 = vpop.permute.xlu0 %1092
      %1094 = vrot.lane.b32.xlu0 %v1009, 32
      %v1095 = vpop.permute.xlu0 %1094
      %1096 = vrot.lane.b32.xlu0 %v1010, 32
      %v1097 = vpop.permute.xlu0 %1096
      %1098 = vrot.lane.b32.xlu0 %v1011, 32
      %v1099 = vpop.permute.xlu0 %1098
      %1100 = vrot.lane.b32.xlu0 %v1012, 32
      %v1101 = vpop.permute.xlu0 %1100
      %1102 = vrot.lane.b32.xlu0 %v1013, 32
      %v1103 = vpop.permute.xlu0 %1102
      %1104 = vrot.lane.b32.xlu0 %v1014, 32
      %v1105 = vpop.permute.xlu0 %1104
      %1106 = vrot.lane.b32.xlu0 %v1015, 32
      %v1107 = vpop.permute.xlu0 %1106
      %1108 = vrot.lane.b32.xlu0 %v1016, 32
      %v1109 = vpop.permute.xlu0 %1108
      %1110 = vrot.lane.b32.xlu0 %v1017, 32
      %v1111 = vpop.permute.xlu0 %1110
      %1112 = vrot.lane.b32.xlu0 %v1018, 32
      %v1113 = vpop.permute.xlu0 %1112
      %1114 = vrot.lane.b32.xlu0 %v1019, 32
      %v1115 = vpop.permute.xlu0 %1114
      %vm1148 = vcmask 523520
      %1149 = vst.msk [vmem:[#allocation3] sm:$0xff] %vm1148, %v1053
      %1150 = vst.msk [vmem:[#allocation3 + $0x18] sm:$0xff] %vm1148, %v1055
      %1151 = vst.msk [vmem:[#allocation3 + $0x30] sm:$0xff] %vm1148, %v1057
      %1152 = vst.msk [vmem:[#allocation3 + $0x48] sm:$0xff] %vm1148, %v1059
      %1153 = vst.msk [vmem:[#allocation3 + $0x60] sm:$0xff] %vm1148, %v1061
      %1154 = vst.msk [vmem:[#allocation3 + $0x78] sm:$0xff] %vm1148, %v1063
      %1155 = vst.msk [vmem:[#allocation3 + $0x90] sm:$0xff] %vm1148, %v1065
      %1156 = vst.msk [vmem:[#allocation3 + $0xa8] sm:$0xff] %vm1148, %v1067
      %1157 = vst.msk [vmem:[#allocation3 + $0xc0] sm:$0xff] %vm1148, %v1069
      %1158 = vst.msk [vmem:[#allocation3 + $0xd8] sm:$0xff] %vm1148, %v1071
      %1159 = vst.msk [vmem:[#allocation3 + $0xf0] sm:$0xff] %vm1148, %v1073
      %1160 = vst.msk [vmem:[#allocation3 + $0x108] sm:$0xff] %vm1148, %v1075
      %1161 = vst.msk [vmem:[#allocation3 + $0x120] sm:$0xff] %vm1148, %v1077
      %1162 = vst.msk [vmem:[#allocation3 + $0x138] sm:$0xff] %vm1148, %v1079
      %1163 = vst.msk [vmem:[#allocation3 + $0x150] sm:$0xff] %vm1148, %v1081
      %1164 = vst.msk [vmem:[#allocation3 + $0x168] sm:$0xff] %vm1148, %v1083
      %1165 = vst.msk [vmem:[#allocation3 + $0x180] sm:$0xff] %vm1148, %v1085
      %1166 = vst.msk [vmem:[#allocation3 + $0x198] sm:$0xff] %vm1148, %v1087
      %1167 = vst.msk [vmem:[#allocation3 + $0x1b0] sm:$0xff] %vm1148, %v1089
      %1168 = vst.msk [vmem:[#allocation3 + $0x1c8] sm:$0xff] %vm1148, %v1091
      %1169 = vst.msk [vmem:[#allocation3 + $0x1e0] sm:$0xff] %vm1148, %v1093
      %1170 = vst.msk [vmem:[#allocation3 + $0x1f8] sm:$0xff] %vm1148, %v1095
      %1171 = vst.msk [vmem:[#allocation3 + $0x210] sm:$0xff] %vm1148, %v1097
      %1172 = vst.msk [vmem:[#allocation3 + $0x228] sm:$0xff] %vm1148, %v1099
      %1173 = vst.msk [vmem:[#allocation3 + $0x240] sm:$0xff] %vm1148, %v1101
      %1174 = vst.msk [vmem:[#allocation3 + $0x258] sm:$0xff] %vm1148, %v1103
      %1175 = vst.msk [vmem:[#allocation3 + $0x270] sm:$0xff] %vm1148, %v1105
      %1176 = vst.msk [vmem:[#allocation3 + $0x288] sm:$0xff] %vm1148, %v1107
      %1177 = vst.msk [vmem:[#allocation3 + $0x2a0] sm:$0xff] %vm1148, %v1109
      %1178 = vst.msk [vmem:[#allocation3 + $0x2b8] sm:$0xff] %vm1148, %v1111
      %1179 = vst.msk [vmem:[#allocation3 + $0x2d0] sm:$0xff] %vm1148, %v1113
      %1180 = vst.msk [vmem:[#allocation3 + $0x2e8] sm:$0xff] %vm1148, %v1115
      %v1181 = vld [vmem:[#allocation2 + $0x2] sm:$0xff]
      %v1182 = vld [vmem:[#allocation2 + $0xa] sm:$0xff]
      %v1183 = vld [vmem:[#allocation2 + $0x1a] sm:$0xff]
      %v1184 = vld [vmem:[#allocation2 + $0x22] sm:$0xff]
      %v1185 = vld [vmem:[#allocation2 + $0x32] sm:$0xff]
      %v1186 = vld [vmem:[#allocation2 + $0x3a] sm:$0xff]
      %v1187 = vld [vmem:[#allocation2 + $0x4a] sm:$0xff]
      %v1188 = vld [vmem:[#allocation2 + $0x52] sm:$0xff]
      %v1189 = vld [vmem:[#allocation2 + $0x62] sm:$0xff]
      %v1190 = vld [vmem:[#allocation2 + $0x6a] sm:$0xff]
      %v1191 = vld [vmem:[#allocation2 + $0x7a] sm:$0xff]
      %v1192 = vld [vmem:[#allocation2 + $0x82] sm:$0xff]
      %v1193 = vld [vmem:[#allocation2 + $0x92] sm:$0xff]
      %v1194 = vld [vmem:[#allocation2 + $0x9a] sm:$0xff]
      %v1195 = vld [vmem:[#allocation2 + $0xaa] sm:$0xff]
      %v1196 = vld [vmem:[#allocation2 + $0xb2] sm:$0xff]
      %v1197 = vld [vmem:[#allocation2 + $0xc2] sm:$0xff]
      %v1198 = vld [vmem:[#allocation2 + $0xca] sm:$0xff]
      %v1199 = vld [vmem:[#allocation2 + $0xda] sm:$0xff]
      %v1200 = vld [vmem:[#allocation2 + $0xe2] sm:$0xff]
      %v1201 = vld [vmem:[#allocation2 + $0xf2] sm:$0xff]
      %v1202 = vld [vmem:[#allocation2 + $0xfa] sm:$0xff]
      %v1203 = vld [vmem:[#allocation2 + $0x10a] sm:$0xff]
      %v1204 = vld [vmem:[#allocation2 + $0x112] sm:$0xff]
      %v1205 = vld [vmem:[#allocation2 + $0x122] sm:$0xff]
      %v1206 = vld [vmem:[#allocation2 + $0x12a] sm:$0xff]
      %v1207 = vld [vmem:[#allocation2 + $0x13a] sm:$0xff]
      %v1208 = vld [vmem:[#allocation2 + $0x142] sm:$0xff]
      %v1209 = vld [vmem:[#allocation2 + $0x152] sm:$0xff]
      %v1210 = vld [vmem:[#allocation2 + $0x15a] sm:$0xff]
      %v1211 = vld [vmem:[#allocation2 + $0x16a] sm:$0xff]
      %v1212 = vld [vmem:[#allocation2 + $0x172] sm:$0xff]
      %1245 = vrot.lane.b32.xlu0 %v1181, 64
      %v1246 = vpop.permute.xlu0 %1245
      %1247 = vrot.lane.b32.xlu0 %v1182, 64
      %v1248 = vpop.permute.xlu0 %1247
      %1249 = vrot.lane.b32.xlu0 %v1183, 64
      %v1250 = vpop.permute.xlu0 %1249
      %1251 = vrot.lane.b32.xlu0 %v1184, 64
      %v1252 = vpop.permute.xlu0 %1251
      %1253 = vrot.lane.b32.xlu0 %v1185, 64
      %v1254 = vpop.permute.xlu0 %1253
      %1255 = vrot.lane.b32.xlu0 %v1186, 64
      %v1256 = vpop.permute.xlu0 %1255
      %1257 = vrot.lane.b32.xlu0 %v1187, 64
      %v1258 = vpop.permute.xlu0 %1257
      %1259 = vrot.lane.b32.xlu0 %v1188, 64
      %v1260 = vpop.permute.xlu0 %1259
      %1261 = vrot.lane.b32.xlu0 %v1189, 64
      %v1262 = vpop.permute.xlu0 %1261
      %1263 = vrot.lane.b32.xlu0 %v1190, 64
      %v1264 = vpop.permute.xlu0 %1263
      %1265 = vrot.lane.b32.xlu0 %v1191, 64
      %v1266 = vpop.permute.xlu0 %1265
      %1267 = vrot.lane.b32.xlu0 %v1192, 64
      %v1268 = vpop.permute.xlu0 %1267
      %1269 = vrot.lane.b32.xlu0 %v1193, 64
      %v1270 = vpop.permute.xlu0 %1269
      %1271 = vrot.lane.b32.xlu0 %v1194, 64
      %v1272 = vpop.permute.xlu0 %1271
      %1273 = vrot.lane.b32.xlu0 %v1195, 64
      %v1274 = vpop.permute.xlu0 %1273
      %1275 = vrot.lane.b32.xlu0 %v1196, 64
      %v1276 = vpop.permute.xlu0 %1275
      %1277 = vrot.lane.b32.xlu0 %v1197, 64
      %v1278 = vpop.permute.xlu0 %1277
      %1279 = vrot.lane.b32.xlu0 %v1198, 64
      %v1280 = vpop.permute.xlu0 %1279
      %1281 = vrot.lane.b32.xlu0 %v1199, 64
      %v1282 = vpop.permute.xlu0 %1281
      %1283 = vrot.lane.b32.xlu0 %v1200, 64
      %v1284 = vpop.permute.xlu0 %1283
      %1285 = vrot.lane.b32.xlu0 %v1201, 64
      %v1286 = vpop.permute.xlu0 %1285
      %1287 = vrot.lane.b32.xlu0 %v1202, 64
      %v1288 = vpop.permute.xlu0 %1287
      %1289 = vrot.lane.b32.xlu0 %v1203, 64
      %v1290 = vpop.permute.xlu0 %1289
      %1291 = vrot.lane.b32.xlu0 %v1204, 64
      %v1292 = vpop.permute.xlu0 %1291
      %1293 = vrot.lane.b32.xlu0 %v1205, 64
      %v1294 = vpop.permute.xlu0 %1293
      %1295 = vrot.lane.b32.xlu0 %v1206, 64
      %v1296 = vpop.permute.xlu0 %1295
      %1297 = vrot.lane.b32.xlu0 %v1207, 64
      %v1298 = vpop.permute.xlu0 %1297
      %1299 = vrot.lane.b32.xlu0 %v1208, 64
      %v1300 = vpop.permute.xlu0 %1299
      %1301 = vrot.lane.b32.xlu0 %v1209, 64
      %v1302 = vpop.permute.xlu0 %1301
      %1303 = vrot.lane.b32.xlu0 %v1210, 64
      %v1304 = vpop.permute.xlu0 %1303
      %1305 = vrot.lane.b32.xlu0 %v1211, 64
      %v1306 = vpop.permute.xlu0 %1305
      %1307 = vrot.lane.b32.xlu0 %v1212, 64
      %v1308 = vpop.permute.xlu0 %1307
      %vm1341 = vcmask 785920
      %1342 = vst.msk [vmem:[#allocation3] sm:$0xff] %vm1341, %v1246
      %1343 = vst.msk [vmem:[#allocation3 + $0x18] sm:$0xff] %vm1341, %v1248
      %1344 = vst.msk [vmem:[#allocation3 + $0x30] sm:$0xff] %vm1341, %v1250
      %1345 = vst.msk [vmem:[#allocation3 + $0x48] sm:$0xff] %vm1341, %v1252
      %1346 = vst.msk [vmem:[#allocation3 + $0x60] sm:$0xff] %vm1341, %v1254
      %1347 = vst.msk [vmem:[#allocation3 + $0x78] sm:$0xff] %vm1341, %v1256
      %1348 = vst.msk [vmem:[#allocation3 + $0x90] sm:$0xff] %vm1341, %v1258
      %1349 = vst.msk [vmem:[#allocation3 + $0xa8] sm:$0xff] %vm1341, %v1260
      %1350 = vst.msk [vmem:[#allocation3 + $0xc0] sm:$0xff] %vm1341, %v1262
      %1351 = vst.msk [vmem:[#allocation3 + $0xd8] sm:$0xff] %vm1341, %v1264
      %1352 = vst.msk [vmem:[#allocation3 + $0xf0] sm:$0xff] %vm1341, %v1266
      %1353 = vst.msk [vmem:[#allocation3 + $0x108] sm:$0xff] %vm1341, %v1268
      %1354 = vst.msk [vmem:[#allocation3 + $0x120] sm:$0xff] %vm1341, %v1270
      %1355 = vst.msk [vmem:[#allocation3 + $0x138] sm:$0xff] %vm1341, %v1272
      %1356 = vst.msk [vmem:[#allocation3 + $0x150] sm:$0xff] %vm1341, %v1274
      %1357 = vst.msk [vmem:[#allocation3 + $0x168] sm:$0xff] %vm1341, %v1276
      %1358 = vst.msk [vmem:[#allocation3 + $0x180] sm:$0xff] %vm1341, %v1278
      %1359 = vst.msk [vmem:[#allocation3 + $0x198] sm:$0xff] %vm1341, %v1280
      %1360 = vst.msk [vmem:[#allocation3 + $0x1b0] sm:$0xff] %vm1341, %v1282
      %1361 = vst.msk [vmem:[#allocation3 + $0x1c8] sm:$0xff] %vm1341, %v1284
      %1362 = vst.msk [vmem:[#allocation3 + $0x1e0] sm:$0xff] %vm1341, %v1286
      %1363 = vst.msk [vmem:[#allocation3 + $0x1f8] sm:$0xff] %vm1341, %v1288
      %1364 = vst.msk [vmem:[#allocation3 + $0x210] sm:$0xff] %vm1341, %v1290
      %1365 = vst.msk [vmem:[#allocation3 + $0x228] sm:$0xff] %vm1341, %v1292
      %1366 = vst.msk [vmem:[#allocation3 + $0x240] sm:$0xff] %vm1341, %v1294
      %1367 = vst.msk [vmem:[#allocation3 + $0x258] sm:$0xff] %vm1341, %v1296
      %1368 = vst.msk [vmem:[#allocation3 + $0x270] sm:$0xff] %vm1341, %v1298
      %1369 = vst.msk [vmem:[#allocation3 + $0x288] sm:$0xff] %vm1341, %v1300
      %1370 = vst.msk [vmem:[#allocation3 + $0x2a0] sm:$0xff] %vm1341, %v1302
      %1371 = vst.msk [vmem:[#allocation3 + $0x2b8] sm:$0xff] %vm1341, %v1304
      %1372 = vst.msk [vmem:[#allocation3 + $0x2d0] sm:$0xff] %vm1341, %v1306
      %1373 = vst.msk [vmem:[#allocation3 + $0x2e8] sm:$0xff] %vm1341, %v1308
      %v1374 = vld [vmem:[%s891] sm:$0xff]
      %v1375 = vld [vmem:[%s891 + $0x8] sm:$0xff]
      %v1376 = vld [vmem:[%s891 + $0x18] sm:$0xff]
      %v1377 = vld [vmem:[%s891 + $0x20] sm:$0xff]
      %v1378 = vld [vmem:[%s891 + $0x30] sm:$0xff]
      %v1379 = vld [vmem:[%s891 + $0x38] sm:$0xff]
      %v1380 = vld [vmem:[%s891 + $0x48] sm:$0xff]
      %v1381 = vld [vmem:[%s891 + $0x50] sm:$0xff]
      %v1382 = vld [vmem:[%s891 + $0x60] sm:$0xff]
      %v1383 = vld [vmem:[%s891 + $0x68] sm:$0xff]
      %v1384 = vld [vmem:[%s891 + $0x78] sm:$0xff]
      %v1385 = vld [vmem:[%s891 + $0x80] sm:$0xff]
      %v1386 = vld [vmem:[%s891 + $0x90] sm:$0xff]
      %v1387 = vld [vmem:[%s891 + $0x98] sm:$0xff]
      %v1388 = vld [vmem:[%s891 + $0xa8] sm:$0xff]
      %v1389 = vld [vmem:[%s891 + $0xb0] sm:$0xff]
      %v1390 = vld [vmem:[%s891 + $0xc0] sm:$0xff]
      %v1391 = vld [vmem:[%s891 + $0xc8] sm:$0xff]
      %v1392 = vld [vmem:[%s891 + $0xd8] sm:$0xff]
      %v1393 = vld [vmem:[%s891 + $0xe0] sm:$0xff]
      %v1394 = vld [vmem:[%s891 + $0xf0] sm:$0xff]
      %v1395 = vld [vmem:[%s891 + $0xf8] sm:$0xff]
      %v1396 = vld [vmem:[%s891 + $0x108] sm:$0xff]
      %v1397 = vld [vmem:[%s891 + $0x110] sm:$0xff]
      %v1398 = vld [vmem:[%s891 + $0x120] sm:$0xff]
      %v1399 = vld [vmem:[%s891 + $0x128] sm:$0xff]
      %v1400 = vld [vmem:[%s891 + $0x138] sm:$0xff]
      %v1401 = vld [vmem:[%s891 + $0x140] sm:$0xff]
      %v1402 = vld [vmem:[%s891 + $0x150] sm:$0xff]
      %v1403 = vld [vmem:[%s891 + $0x158] sm:$0xff]
      %v1404 = vld [vmem:[%s891 + $0x168] sm:$0xff]
      %v1405 = vld [vmem:[%s891 + $0x170] sm:$0xff]
      %1438 = vrot.lane.b32.xlu0 %v1374, 96
      %v1439 = vpop.permute.xlu0 %1438
      %1440 = vrot.lane.b32.xlu0 %v1375, 96
      %v1441 = vpop.permute.xlu0 %1440
      %1442 = vrot.lane.b32.xlu0 %v1376, 96
      %v1443 = vpop.permute.xlu0 %1442
      %1444 = vrot.lane.b32.xlu0 %v1377, 96
      %v1445 = vpop.permute.xlu0 %1444
      %1446 = vrot.lane.b32.xlu0 %v1378, 96
      %v1447 = vpop.permute.xlu0 %1446
      %1448 = vrot.lane.b32.xlu0 %v1379, 96
      %v1449 = vpop.permute.xlu0 %1448
      %1450 = vrot.lane.b32.xlu0 %v1380, 96
      %v1451 = vpop.permute.xlu0 %1450
      %1452 = vrot.lane.b32.xlu0 %v1381, 96
      %v1453 = vpop.permute.xlu0 %1452
      %1454 = vrot.lane.b32.xlu0 %v1382, 96
      %v1455 = vpop.permute.xlu0 %1454
      %1456 = vrot.lane.b32.xlu0 %v1383, 96
      %v1457 = vpop.permute.xlu0 %1456
      %1458 = vrot.lane.b32.xlu0 %v1384, 96
      %v1459 = vpop.permute.xlu0 %1458
      %1460 = vrot.lane.b32.xlu0 %v1385, 96
      %v1461 = vpop.permute.xlu0 %1460
      %1462 = vrot.lane.b32.xlu0 %v1386, 96
      %v1463 = vpop.permute.xlu0 %1462
      %1464 = vrot.lane.b32.xlu0 %v1387, 96
      %v1465 = vpop.permute.xlu0 %1464
      %1466 = vrot.lane.b32.xlu0 %v1388, 96
      %v1467 = vpop.permute.xlu0 %1466
      %1468 = vrot.lane.b32.xlu0 %v1389, 96
      %v1469 = vpop.permute.xlu0 %1468
      %1470 = vrot.lane.b32.xlu0 %v1390, 96
      %v1471 = vpop.permute.xlu0 %1470
      %1472 = vrot.lane.b32.xlu0 %v1391, 96
      %v1473 = vpop.permute.xlu0 %1472
      %1474 = vrot.lane.b32.xlu0 %v1392, 96
      %v1475 = vpop.permute.xlu0 %1474
      %1476 = vrot.lane.b32.xlu0 %v1393, 96
      %v1477 = vpop.permute.xlu0 %1476
      %1478 = vrot.lane.b32.xlu0 %v1394, 96
      %v1479 = vpop.permute.xlu0 %1478
      %1480 = vrot.lane.b32.xlu0 %v1395, 96
      %v1481 = vpop.permute.xlu0 %1480
      %1482 = vrot.lane.b32.xlu0 %v1396, 96
      %v1483 = vpop.permute.xlu0 %1482
      %1484 = vrot.lane.b32.xlu0 %v1397, 96
      %v1485 = vpop.permute.xlu0 %1484
      %1486 = vrot.lane.b32.xlu0 %v1398, 96
      %v1487 = vpop.permute.xlu0 %1486
      %1488 = vrot.lane.b32.xlu0 %v1399, 96
      %v1489 = vpop.permute.xlu0 %1488
      %1490 = vrot.lane.b32.xlu0 %v1400, 96
      %v1491 = vpop.permute.xlu0 %1490
      %1492 = vrot.lane.b32.xlu0 %v1401, 96
      %v1493 = vpop.permute.xlu0 %1492
      %1494 = vrot.lane.b32.xlu0 %v1402, 96
      %v1495 = vpop.permute.xlu0 %1494
      %1496 = vrot.lane.b32.xlu0 %v1403, 96
      %v1497 = vpop.permute.xlu0 %1496
      %1498 = vrot.lane.b32.xlu0 %v1404, 96
      %v1499 = vpop.permute.xlu0 %1498
      %1500 = vrot.lane.b32.xlu0 %v1405, 96
      %v1501 = vpop.permute.xlu0 %1500
      %vm1534 = vcmask 1048320
      %1535 = vst.msk [vmem:[#allocation3] sm:$0xff] %vm1534, %v1439
      %1536 = vst.msk [vmem:[#allocation3 + $0x18] sm:$0xff] %vm1534, %v1441
      %1537 = vst.msk [vmem:[#allocation3 + $0x30] sm:$0xff] %vm1534, %v1443
      %1538 = vst.msk [vmem:[#allocation3 + $0x48] sm:$0xff] %vm1534, %v1445
      %1539 = vst.msk [vmem:[#allocation3 + $0x60] sm:$0xff] %vm1534, %v1447
      %1540 = vst.msk [vmem:[#allocation3 + $0x78] sm:$0xff] %vm1534, %v1449
      %1541 = vst.msk [vmem:[#allocation3 + $0x90] sm:$0xff] %vm1534, %v1451
      %1542 = vst.msk [vmem:[#allocation3 + $0xa8] sm:$0xff] %vm1534, %v1453
      %1543 = vst.msk [vmem:[#allocation3 + $0xc0] sm:$0xff] %vm1534, %v1455
      %1544 = vst.msk [vmem:[#allocation3 + $0xd8] sm:$0xff] %vm1534, %v1457
      %1545 = vst.msk [vmem:[#allocation3 + $0xf0] sm:$0xff] %vm1534, %v1459
      %1546 = vst.msk [vmem:[#allocation3 + $0x108] sm:$0xff] %vm1534, %v1461
      %1547 = vst.msk [vmem:[#allocation3 + $0x120] sm:$0xff] %vm1534, %v1463
      %1548 = vst.msk [vmem:[#allocation3 + $0x138] sm:$0xff] %vm1534, %v1465
      %1549 = vst.msk [vmem:[#allocation3 + $0x150] sm:$0xff] %vm1534, %v1467
      %1550 = vst.msk [vmem:[#allocation3 + $0x168] sm:$0xff] %vm1534, %v1469
      %1551 = vst.msk [vmem:[#allocation3 + $0x180] sm:$0xff] %vm1534, %v1471
      %1552 = vst.msk [vmem:[#allocation3 + $0x198] sm:$0xff] %vm1534, %v1473
      %1553 = vst.msk [vmem:[#allocation3 + $0x1b0] sm:$0xff] %vm1534, %v1475
      %1554 = vst.msk [vmem:[#allocation3 + $0x1c8] sm:$0xff] %vm1534, %v1477
      %1555 = vst.msk [vmem:[#allocation3 + $0x1e0] sm:$0xff] %vm1534, %v1479
      %1556 = vst.msk [vmem:[#allocation3 + $0x1f8] sm:$0xff] %vm1534, %v1481
      %1557 = vst.msk [vmem:[#allocation3 + $0x210] sm:$0xff] %vm1534, %v1483
      %1558 = vst.msk [vmem:[#allocation3 + $0x228] sm:$0xff] %vm1534, %v1485
      %1559 = vst.msk [vmem:[#allocation3 + $0x240] sm:$0xff] %vm1534, %v1487
      %1560 = vst.msk [vmem:[#allocation3 + $0x258] sm:$0xff] %vm1534, %v1489
      %1561 = vst.msk [vmem:[#allocation3 + $0x270] sm:$0xff] %vm1534, %v1491
      %1562 = vst.msk [vmem:[#allocation3 + $0x288] sm:$0xff] %vm1534, %v1493
      %1563 = vst.msk [vmem:[#allocation3 + $0x2a0] sm:$0xff] %vm1534, %v1495
      %1564 = vst.msk [vmem:[#allocation3 + $0x2b8] sm:$0xff] %vm1534, %v1497
      %1565 = vst.msk [vmem:[#allocation3 + $0x2d0] sm:$0xff] %vm1534, %v1499
      %1566 = vst.msk [vmem:[#allocation3 + $0x2e8] sm:$0xff] %vm1534, %v1501
      %v1567 = vld [vmem:[%s891 + $0x1] sm:$0xff]
      %v1568 = vld [vmem:[%s891 + $0x9] sm:$0xff]
      %v1569 = vld [vmem:[%s891 + $0x19] sm:$0xff]
      %v1570 = vld [vmem:[%s891 + $0x21] sm:$0xff]
      %v1571 = vld [vmem:[%s891 + $0x31] sm:$0xff]
      %v1572 = vld [vmem:[%s891 + $0x39] sm:$0xff]
      %v1573 = vld [vmem:[%s891 + $0x49] sm:$0xff]
      %v1574 = vld [vmem:[%s891 + $0x51] sm:$0xff]
      %v1575 = vld [vmem:[%s891 + $0x61] sm:$0xff]
      %v1576 = vld [vmem:[%s891 + $0x69] sm:$0xff]
      %v1577 = vld [vmem:[%s891 + $0x79] sm:$0xff]
      %v1578 = vld [vmem:[%s891 + $0x81] sm:$0xff]
      %v1579 = vld [vmem:[%s891 + $0x91] sm:$0xff]
      %v1580 = vld [vmem:[%s891 + $0x99] sm:$0xff]
      %v1581 = vld [vmem:[%s891 + $0xa9] sm:$0xff]
      %v1582 = vld [vmem:[%s891 + $0xb1] sm:$0xff]
      %v1583 = vld [vmem:[%s891 + $0xc1] sm:$0xff]
      %v1584 = vld [vmem:[%s891 + $0xc9] sm:$0xff]
      %v1585 = vld [vmem:[%s891 + $0xd9] sm:$0xff]
      %v1586 = vld [vmem:[%s891 + $0xe1] sm:$0xff]
      %v1587 = vld [vmem:[%s891 + $0xf1] sm:$0xff]
      %v1588 = vld [vmem:[%s891 + $0xf9] sm:$0xff]
      %v1589 = vld [vmem:[%s891 + $0x109] sm:$0xff]
      %v1590 = vld [vmem:[%s891 + $0x111] sm:$0xff]
      %v1591 = vld [vmem:[%s891 + $0x121] sm:$0xff]
      %v1592 = vld [vmem:[%s891 + $0x129] sm:$0xff]
      %v1593 = vld [vmem:[%s891 + $0x139] sm:$0xff]
      %v1594 = vld [vmem:[%s891 + $0x141] sm:$0xff]
      %v1595 = vld [vmem:[%s891 + $0x151] sm:$0xff]
      %v1596 = vld [vmem:[%s891 + $0x159] sm:$0xff]
      %v1597 = vld [vmem:[%s891 + $0x169] sm:$0xff]
      %v1598 = vld [vmem:[%s891 + $0x171] sm:$0xff]
      %1599 = vst.msk [vmem:[#allocation3 + $0x8] sm:$0xff] %vm520, %v1567
      %1600 = vst.msk [vmem:[#allocation3 + $0x20] sm:$0xff] %vm520, %v1568
      %1601 = vst.msk [vmem:[#allocation3 + $0x38] sm:$0xff] %vm520, %v1569
      %1602 = vst.msk [vmem:[#allocation3 + $0x50] sm:$0xff] %vm520, %v1570
      %1603 = vst.msk [vmem:[#allocation3 + $0x68] sm:$0xff] %vm520, %v1571
      %1604 = vst.msk [vmem:[#allocation3 + $0x80] sm:$0xff] %vm520, %v1572
      %1605 = vst.msk [vmem:[#allocation3 + $0x98] sm:$0xff] %vm520, %v1573
      %1606 = vst.msk [vmem:[#allocation3 + $0xb0] sm:$0xff] %vm520, %v1574
      %1607 = vst.msk [vmem:[#allocation3 + $0xc8] sm:$0xff] %vm520, %v1575
      %1608 = vst.msk [vmem:[#allocation3 + $0xe0] sm:$0xff] %vm520, %v1576
      %1609 = vst.msk [vmem:[#allocation3 + $0xf8] sm:$0xff] %vm520, %v1577
      %1610 = vst.msk [vmem:[#allocation3 + $0x110] sm:$0xff] %vm520, %v1578
      %1611 = vst.msk [vmem:[#allocation3 + $0x128] sm:$0xff] %vm520, %v1579
      %1612 = vst.msk [vmem:[#allocation3 + $0x140] sm:$0xff] %vm520, %v1580
      %1613 = vst.msk [vmem:[#allocation3 + $0x158] sm:$0xff] %vm520, %v1581
      %1614 = vst.msk [vmem:[#allocation3 + $0x170] sm:$0xff] %vm520, %v1582
      %1615 = vst.msk [vmem:[#allocation3 + $0x188] sm:$0xff] %vm520, %v1583
      %1616 = vst.msk [vmem:[#allocation3 + $0x1a0] sm:$0xff] %vm520, %v1584
      %1617 = vst.msk [vmem:[#allocation3 + $0x1b8] sm:$0xff] %vm520, %v1585
      %1618 = vst.msk [vmem:[#allocation3 + $0x1d0] sm:$0xff] %vm520, %v1586
      %1619 = vst.msk [vmem:[#allocation3 + $0x1e8] sm:$0xff] %vm520, %v1587
      %1620 = vst.msk [vmem:[#allocation3 + $0x200] sm:$0xff] %vm520, %v1588
      %1621 = vst.msk [vmem:[#allocation3 + $0x218] sm:$0xff] %vm520, %v1589
      %1622 = vst.msk [vmem:[#allocation3 + $0x230] sm:$0xff] %vm520, %v1590
      %1623 = vst.msk [vmem:[#allocation3 + $0x248] sm:$0xff] %vm520, %v1591
      %1624 = vst.msk [vmem:[#allocation3 + $0x260] sm:$0xff] %vm520, %v1592
      %1625 = vst.msk [vmem:[#allocation3 + $0x278] sm:$0xff] %vm520, %v1593
      %1626 = vst.msk [vmem:[#allocation3 + $0x290] sm:$0xff] %vm520, %v1594
      %1627 = vst.msk [vmem:[#allocation3 + $0x2a8] sm:$0xff] %vm520, %v1595
      %1628 = vst.msk [vmem:[#allocation3 + $0x2c0] sm:$0xff] %vm520, %v1596
      %1629 = vst.msk [vmem:[#allocation3 + $0x2d8] sm:$0xff] %vm520, %v1597
      %1630 = vst.msk [vmem:[#allocation3 + $0x2f0] sm:$0xff] %vm520, %v1598
      %v1631 = vld [vmem:[%s891 + $0x2] sm:$0xff]
      %v1632 = vld [vmem:[%s891 + $0xa] sm:$0xff]
      %v1633 = vld [vmem:[%s891 + $0x1a] sm:$0xff]
      %v1634 = vld [vmem:[%s891 + $0x22] sm:$0xff]
      %v1635 = vld [vmem:[%s891 + $0x32] sm:$0xff]
      %v1636 = vld [vmem:[%s891 + $0x3a] sm:$0xff]
      %v1637 = vld [vmem:[%s891 + $0x4a] sm:$0xff]
      %v1638 = vld [vmem:[%s891 + $0x52] sm:$0xff]
      %v1639 = vld [vmem:[%s891 + $0x62] sm:$0xff]
      %v1640 = vld [vmem:[%s891 + $0x6a] sm:$0xff]
      %v1641 = vld [vmem:[%s891 + $0x7a] sm:$0xff]
      %v1642 = vld [vmem:[%s891 + $0x82] sm:$0xff]
      %v1643 = vld [vmem:[%s891 + $0x92] sm:$0xff]
      %v1644 = vld [vmem:[%s891 + $0x9a] sm:$0xff]
      %v1645 = vld [vmem:[%s891 + $0xaa] sm:$0xff]
      %v1646 = vld [vmem:[%s891 + $0xb2] sm:$0xff]
      %v1647 = vld [vmem:[%s891 + $0xc2] sm:$0xff]
      %v1648 = vld [vmem:[%s891 + $0xca] sm:$0xff]
      %v1649 = vld [vmem:[%s891 + $0xda] sm:$0xff]
      %v1650 = vld [vmem:[%s891 + $0xe2] sm:$0xff]
      %v1651 = vld [vmem:[%s891 + $0xf2] sm:$0xff]
      %v1652 = vld [vmem:[%s891 + $0xfa] sm:$0xff]
      %v1653 = vld [vmem:[%s891 + $0x10a] sm:$0xff]
      %v1654 = vld [vmem:[%s891 + $0x112] sm:$0xff]
      %v1655 = vld [vmem:[%s891 + $0x122] sm:$0xff]
      %v1656 = vld [vmem:[%s891 + $0x12a] sm:$0xff]
      %v1657 = vld [vmem:[%s891 + $0x13a] sm:$0xff]
      %v1658 = vld [vmem:[%s891 + $0x142] sm:$0xff]
      %v1659 = vld [vmem:[%s891 + $0x152] sm:$0xff]
      %v1660 = vld [vmem:[%s891 + $0x15a] sm:$0xff]
      %v1661 = vld [vmem:[%s891 + $0x16a] sm:$0xff]
      %v1662 = vld [vmem:[%s891 + $0x172] sm:$0xff]
      %1695 = vrot.lane.b32.xlu0 %v1631, 32
      %v1696 = vpop.permute.xlu0 %1695
      %1697 = vrot.lane.b32.xlu0 %v1632, 32
      %v1698 = vpop.permute.xlu0 %1697
      %1699 = vrot.lane.b32.xlu0 %v1633, 32
      %v1700 = vpop.permute.xlu0 %1699
      %1701 = vrot.lane.b32.xlu0 %v1634, 32
      %v1702 = vpop.permute.xlu0 %1701
      %1703 = vrot.lane.b32.xlu0 %v1635, 32
      %v1704 = vpop.permute.xlu0 %1703
      %1705 = vrot.lane.b32.xlu0 %v1636, 32
      %v1706 = vpop.permute.xlu0 %1705
      %1707 = vrot.lane.b32.xlu0 %v1637, 32
      %v1708 = vpop.permute.xlu0 %1707
      %1709 = vrot.lane.b32.xlu0 %v1638, 32
      %v1710 = vpop.permute.xlu0 %1709
      %1711 = vrot.lane.b32.xlu0 %v1639, 32
      %v1712 = vpop.permute.xlu0 %1711
      %1713 = vrot.lane.b32.xlu0 %v1640, 32
      %v1714 = vpop.permute.xlu0 %1713
      %1715 = vrot.lane.b32.xlu0 %v1641, 32
      %v1716 = vpop.permute.xlu0 %1715
      %1717 = vrot.lane.b32.xlu0 %v1642, 32
      %v1718 = vpop.permute.xlu0 %1717
      %1719 = vrot.lane.b32.xlu0 %v1643, 32
      %v1720 = vpop.permute.xlu0 %1719
      %1721 = vrot.lane.b32.xlu0 %v1644, 32
      %v1722 = vpop.permute.xlu0 %1721
      %1723 = vrot.lane.b32.xlu0 %v1645, 32
      %v1724 = vpop.permute.xlu0 %1723
      %1725 = vrot.lane.b32.xlu0 %v1646, 32
      %v1726 = vpop.permute.xlu0 %1725
      %1727 = vrot.lane.b32.xlu0 %v1647, 32
      %v1728 = vpop.permute.xlu0 %1727
      %1729 = vrot.lane.b32.xlu0 %v1648, 32
      %v1730 = vpop.permute.xlu0 %1729
      %1731 = vrot.lane.b32.xlu0 %v1649, 32
      %v1732 = vpop.permute.xlu0 %1731
      %1733 = vrot.lane.b32.xlu0 %v1650, 32
      %v1734 = vpop.permute.xlu0 %1733
      %1735 = vrot.lane.b32.xlu0 %v1651, 32
      %v1736 = vpop.permute.xlu0 %1735
      %1737 = vrot.lane.b32.xlu0 %v1652, 32
      %v1738 = vpop.permute.xlu0 %1737
      %1739 = vrot.lane.b32.xlu0 %v1653, 32
      %v1740 = vpop.permute.xlu0 %1739
      %1741 = vrot.lane.b32.xlu0 %v1654, 32
      %v1742 = vpop.permute.xlu0 %1741
      %1743 = vrot.lane.b32.xlu0 %v1655, 32
      %v1744 = vpop.permute.xlu0 %1743
      %1745 = vrot.lane.b32.xlu0 %v1656, 32
      %v1746 = vpop.permute.xlu0 %1745
      %1747 = vrot.lane.b32.xlu0 %v1657, 32
      %v1748 = vpop.permute.xlu0 %1747
      %1749 = vrot.lane.b32.xlu0 %v1658, 32
      %v1750 = vpop.permute.xlu0 %1749
      %1751 = vrot.lane.b32.xlu0 %v1659, 32
      %v1752 = vpop.permute.xlu0 %1751
      %1753 = vrot.lane.b32.xlu0 %v1660, 32
      %v1754 = vpop.permute.xlu0 %1753
      %1755 = vrot.lane.b32.xlu0 %v1661, 32
      %v1756 = vpop.permute.xlu0 %1755
      %1757 = vrot.lane.b32.xlu0 %v1662, 32
      %v1758 = vpop.permute.xlu0 %1757
      %1791 = vst.msk [vmem:[#allocation3 + $0x8] sm:$0xff] %vm1148, %v1696
      %1792 = vst.msk [vmem:[#allocation3 + $0x20] sm:$0xff] %vm1148, %v1698
      %1793 = vst.msk [vmem:[#allocation3 + $0x38] sm:$0xff] %vm1148, %v1700
      %1794 = vst.msk [vmem:[#allocation3 + $0x50] sm:$0xff] %vm1148, %v1702
      %1795 = vst.msk [vmem:[#allocation3 + $0x68] sm:$0xff] %vm1148, %v1704
      %1796 = vst.msk [vmem:[#allocation3 + $0x80] sm:$0xff] %vm1148, %v1706
      %1797 = vst.msk [vmem:[#allocation3 + $0x98] sm:$0xff] %vm1148, %v1708
      %1798 = vst.msk [vmem:[#allocation3 + $0xb0] sm:$0xff] %vm1148, %v1710
      %1799 = vst.msk [vmem:[#allocation3 + $0xc8] sm:$0xff] %vm1148, %v1712
      %1800 = vst.msk [vmem:[#allocation3 + $0xe0] sm:$0xff] %vm1148, %v1714
      %1801 = vst.msk [vmem:[#allocation3 + $0xf8] sm:$0xff] %vm1148, %v1716
      %1802 = vst.msk [vmem:[#allocation3 + $0x110] sm:$0xff] %vm1148, %v1718
      %1803 = vst.msk [vmem:[#allocation3 + $0x128] sm:$0xff] %vm1148, %v1720
      %1804 = vst.msk [vmem:[#allocation3 + $0x140] sm:$0xff] %vm1148, %v1722
      %1805 = vst.msk [vmem:[#allocation3 + $0x158] sm:$0xff] %vm1148, %v1724
      %1806 = vst.msk [vmem:[#allocation3 + $0x170] sm:$0xff] %vm1148, %v1726
      %1807 = vst.msk [vmem:[#allocation3 + $0x188] sm:$0xff] %vm1148, %v1728
      %1808 = vst.msk [vmem:[#allocation3 + $0x1a0] sm:$0xff] %vm1148, %v1730
      %1809 = vst.msk [vmem:[#allocation3 + $0x1b8] sm:$0xff] %vm1148, %v1732
      %1810 = vst.msk [vmem:[#allocation3 + $0x1d0] sm:$0xff] %vm1148, %v1734
      %1811 = vst.msk [vmem:[#allocation3 + $0x1e8] sm:$0xff] %vm1148, %v1736
      %1812 = vst.msk [vmem:[#allocation3 + $0x200] sm:$0xff] %vm1148, %v1738
      %1813 = vst.msk [vmem:[#allocation3 + $0x218] sm:$0xff] %vm1148, %v1740
      %1814 = vst.msk [vmem:[#allocation3 + $0x230] sm:$0xff] %vm1148, %v1742
      %1815 = vst.msk [vmem:[#allocation3 + $0x248] sm:$0xff] %vm1148, %v1744
      %1816 = vst.msk [vmem:[#allocation3 + $0x260] sm:$0xff] %vm1148, %v1746
      %1817 = vst.msk [vmem:[#allocation3 + $0x278] sm:$0xff] %vm1148, %v1748
      %1818 = vst.msk [vmem:[#allocation3 + $0x290] sm:$0xff] %vm1148, %v1750
      %1819 = vst.msk [vmem:[#allocation3 + $0x2a8] sm:$0xff] %vm1148, %v1752
      %1820 = vst.msk [vmem:[#allocation3 + $0x2c0] sm:$0xff] %vm1148, %v1754
      %1821 = vst.msk [vmem:[#allocation3 + $0x2d8] sm:$0xff] %vm1148, %v1756
      %1822 = vst.msk [vmem:[#allocation3 + $0x2f0] sm:$0xff] %vm1148, %v1758
      %s1823 = scalar_lea.vmem [#allocation2], 48
      %v1824 = vld [vmem:[%s1823] sm:$0xff]
      %v1825 = vld [vmem:[%s1823 + $0x8] sm:$0xff]
      %v1826 = vld [vmem:[%s1823 + $0x18] sm:$0xff]
      %v1827 = vld [vmem:[%s1823 + $0x20] sm:$0xff]
      %v1828 = vld [vmem:[%s1823 + $0x30] sm:$0xff]
      %v1829 = vld [vmem:[%s1823 + $0x38] sm:$0xff]
      %v1830 = vld [vmem:[%s1823 + $0x48] sm:$0xff]
      %v1831 = vld [vmem:[%s1823 + $0x50] sm:$0xff]
      %v1832 = vld [vmem:[%s1823 + $0x60] sm:$0xff]
      %v1833 = vld [vmem:[%s1823 + $0x68] sm:$0xff]
      %v1834 = vld [vmem:[%s1823 + $0x78] sm:$0xff]
      %v1835 = vld [vmem:[%s1823 + $0x80] sm:$0xff]
      %v1836 = vld [vmem:[%s1823 + $0x90] sm:$0xff]
      %v1837 = vld [vmem:[%s1823 + $0x98] sm:$0xff]
      %v1838 = vld [vmem:[%s1823 + $0xa8] sm:$0xff]
      %v1839 = vld [vmem:[%s1823 + $0xb0] sm:$0xff]
      %v1840 = vld [vmem:[%s1823 + $0xc0] sm:$0xff]
      %v1841 = vld [vmem:[%s1823 + $0xc8] sm:$0xff]
      %v1842 = vld [vmem:[%s1823 + $0xd8] sm:$0xff]
      %v1843 = vld [vmem:[%s1823 + $0xe0] sm:$0xff]
      %v1844 = vld [vmem:[%s1823 + $0xf0] sm:$0xff]
      %v1845 = vld [vmem:[%s1823 + $0xf8] sm:$0xff]
      %v1846 = vld [vmem:[%s1823 + $0x108] sm:$0xff]
      %v1847 = vld [vmem:[%s1823 + $0x110] sm:$0xff]
      %v1848 = vld [vmem:[%s1823 + $0x120] sm:$0xff]
      %v1849 = vld [vmem:[%s1823 + $0x128] sm:$0xff]
      %v1850 = vld [vmem:[%s1823 + $0x138] sm:$0xff]
      %v1851 = vld [vmem:[%s1823 + $0x140] sm:$0xff]
      %v1852 = vld [vmem:[%s1823 + $0x150] sm:$0xff]
      %v1853 = vld [vmem:[%s1823 + $0x158] sm:$0xff]
      %v1854 = vld [vmem:[%s1823 + $0x168] sm:$0xff]
      %v1855 = vld [vmem:[%s1823 + $0x170] sm:$0xff]
      %1888 = vrot.lane.b32.xlu0 %v1824, 64
      %v1889 = vpop.permute.xlu0 %1888
      %1890 = vrot.lane.b32.xlu0 %v1825, 64
      %v1891 = vpop.permute.xlu0 %1890
      %1892 = vrot.lane.b32.xlu0 %v1826, 64
      %v1893 = vpop.permute.xlu0 %1892
      %1894 = vrot.lane.b32.xlu0 %v1827, 64
      %v1895 = vpop.permute.xlu0 %1894
      %1896 = vrot.lane.b32.xlu0 %v1828, 64
      %v1897 = vpop.permute.xlu0 %1896
      %1898 = vrot.lane.b32.xlu0 %v1829, 64
      %v1899 = vpop.permute.xlu0 %1898
      %1900 = vrot.lane.b32.xlu0 %v1830, 64
      %v1901 = vpop.permute.xlu0 %1900
      %1902 = vrot.lane.b32.xlu0 %v1831, 64
      %v1903 = vpop.permute.xlu0 %1902
      %1904 = vrot.lane.b32.xlu0 %v1832, 64
      %v1905 = vpop.permute.xlu0 %1904
      %1906 = vrot.lane.b32.xlu0 %v1833, 64
      %v1907 = vpop.permute.xlu0 %1906
      %1908 = vrot.lane.b32.xlu0 %v1834, 64
      %v1909 = vpop.permute.xlu0 %1908
      %1910 = vrot.lane.b32.xlu0 %v1835, 64
      %v1911 = vpop.permute.xlu0 %1910
      %1912 = vrot.lane.b32.xlu0 %v1836, 64
      %v1913 = vpop.permute.xlu0 %1912
      %1914 = vrot.lane.b32.xlu0 %v1837, 64
      %v1915 = vpop.permute.xlu0 %1914
      %1916 = vrot.lane.b32.xlu0 %v1838, 64
      %v1917 = vpop.permute.xlu0 %1916
      %1918 = vrot.lane.b32.xlu0 %v1839, 64
      %v1919 = vpop.permute.xlu0 %1918
      %1920 = vrot.lane.b32.xlu0 %v1840, 64
      %v1921 = vpop.permute.xlu0 %1920
      %1922 = vrot.lane.b32.xlu0 %v1841, 64
      %v1923 = vpop.permute.xlu0 %1922
      %1924 = vrot.lane.b32.xlu0 %v1842, 64
      %v1925 = vpop.permute.xlu0 %1924
      %1926 = vrot.lane.b32.xlu0 %v1843, 64
      %v1927 = vpop.permute.xlu0 %1926
      %1928 = vrot.lane.b32.xlu0 %v1844, 64
      %v1929 = vpop.permute.xlu0 %1928
      %1930 = vrot.lane.b32.xlu0 %v1845, 64
      %v1931 = vpop.permute.xlu0 %1930
      %1932 = vrot.lane.b32.xlu0 %v1846, 64
      %v1933 = vpop.permute.xlu0 %1932
      %1934 = vrot.lane.b32.xlu0 %v1847, 64
      %v1935 = vpop.permute.xlu0 %1934
      %1936 = vrot.lane.b32.xlu0 %v1848, 64
      %v1937 = vpop.permute.xlu0 %1936
      %1938 = vrot.lane.b32.xlu0 %v1849, 64
      %v1939 = vpop.permute.xlu0 %1938
      %1940 = vrot.lane.b32.xlu0 %v1850, 64
      %v1941 = vpop.permute.xlu0 %1940
      %1942 = vrot.lane.b32.xlu0 %v1851, 64
      %v1943 = vpop.permute.xlu0 %1942
      %1944 = vrot.lane.b32.xlu0 %v1852, 64
      %v1945 = vpop.permute.xlu0 %1944
      %1946 = vrot.lane.b32.xlu0 %v1853, 64
      %v1947 = vpop.permute.xlu0 %1946
      %1948 = vrot.lane.b32.xlu0 %v1854, 64
      %v1949 = vpop.permute.xlu0 %1948
      %1950 = vrot.lane.b32.xlu0 %v1855, 64
      %v1951 = vpop.permute.xlu0 %1950
      %1984 = vst.msk [vmem:[#allocation3 + $0x8] sm:$0xff] %vm1341, %v1889
      %1985 = vst.msk [vmem:[#allocation3 + $0x20] sm:$0xff] %vm1341, %v1891
      %1986 = vst.msk [vmem:[#allocation3 + $0x38] sm:$0xff] %vm1341, %v1893
      %1987 = vst.msk [vmem:[#allocation3 + $0x50] sm:$0xff] %vm1341, %v1895
      %1988 = vst.msk [vmem:[#allocation3 + $0x68] sm:$0xff] %vm1341, %v1897
      %1989 = vst.msk [vmem:[#allocation3 + $0x80] sm:$0xff] %vm1341, %v1899
      %1990 = vst.msk [vmem:[#allocation3 + $0x98] sm:$0xff] %vm1341, %v1901
      %1991 = vst.msk [vmem:[#allocation3 + $0xb0] sm:$0xff] %vm1341, %v1903
      %1992 = vst.msk [vmem:[#allocation3 + $0xc8] sm:$0xff] %vm1341, %v1905
      %1993 = vst.msk [vmem:[#allocation3 + $0xe0] sm:$0xff] %vm1341, %v1907
      %1994 = vst.msk [vmem:[#allocation3 + $0xf8] sm:$0xff] %vm1341, %v1909
      %1995 = vst.msk [vmem:[#allocation3 + $0x110] sm:$0xff] %vm1341, %v1911
      %1996 = vst.msk [vmem:[#allocation3 + $0x128] sm:$0xff] %vm1341, %v1913
      %1997 = vst.msk [vmem:[#allocation3 + $0x140] sm:$0xff] %vm1341, %v1915
      %1998 = vst.msk [vmem:[#allocation3 + $0x158] sm:$0xff] %vm1341, %v1917
      %1999 = vst.msk [vmem:[#allocation3 + $0x170] sm:$0xff] %vm1341, %v1919
      %2000 = vst.msk [vmem:[#allocation3 + $0x188] sm:$0xff] %vm1341, %v1921
      %2001 = vst.msk [vmem:[#allocation3 + $0x1a0] sm:$0xff] %vm1341, %v1923
      %2002 = vst.msk [vmem:[#allocation3 + $0x1b8] sm:$0xff] %vm1341, %v1925
      %2003 = vst.msk [vmem:[#allocation3 + $0x1d0] sm:$0xff] %vm1341, %v1927
      %2004 = vst.msk [vmem:[#allocation3 + $0x1e8] sm:$0xff] %vm1341, %v1929
      %2005 = vst.msk [vmem:[#allocation3 + $0x200] sm:$0xff] %vm1341, %v1931
      %2006 = vst.msk [vmem:[#allocation3 + $0x218] sm:$0xff] %vm1341, %v1933
      %2007 = vst.msk [vmem:[#allocation3 + $0x230] sm:$0xff] %vm1341, %v1935
      %2008 = vst.msk [vmem:[#allocation3 + $0x248] sm:$0xff] %vm1341, %v1937
      %2009 = vst.msk [vmem:[#allocation3 + $0x260] sm:$0xff] %vm1341, %v1939
      %2010 = vst.msk [vmem:[#allocation3 + $0x278] sm:$0xff] %vm1341, %v1941
      %2011 = vst.msk [vmem:[#allocation3 + $0x290] sm:$0xff] %vm1341, %v1943
      %2012 = vst.msk [vmem:[#allocation3 + $0x2a8] sm:$0xff] %vm1341, %v1945
      %2013 = vst.msk [vmem:[#allocation3 + $0x2c0] sm:$0xff] %vm1341, %v1947
      %2014 = vst.msk [vmem:[#allocation3 + $0x2d8] sm:$0xff] %vm1341, %v1949
      %2015 = vst.msk [vmem:[#allocation3 + $0x2f0] sm:$0xff] %vm1341, %v1951
      %v2016 = vld [vmem:[%s1823 + $0x1] sm:$0xff]
      %v2017 = vld [vmem:[%s1823 + $0x9] sm:$0xff]
      %v2018 = vld [vmem:[%s1823 + $0x19] sm:$0xff]
      %v2019 = vld [vmem:[%s1823 + $0x21] sm:$0xff]
      %v2020 = vld [vmem:[%s1823 + $0x31] sm:$0xff]
      %v2021 = vld [vmem:[%s1823 + $0x39] sm:$0xff]
      %v2022 = vld [vmem:[%s1823 + $0x49] sm:$0xff]
      %v2023 = vld [vmem:[%s1823 + $0x51] sm:$0xff]
      %v2024 = vld [vmem:[%s1823 + $0x61] sm:$0xff]
      %v2025 = vld [vmem:[%s1823 + $0x69] sm:$0xff]
      %v2026 = vld [vmem:[%s1823 + $0x79] sm:$0xff]
      %v2027 = vld [vmem:[%s1823 + $0x81] sm:$0xff]
      %v2028 = vld [vmem:[%s1823 + $0x91] sm:$0xff]
      %v2029 = vld [vmem:[%s1823 + $0x99] sm:$0xff]
      %v2030 = vld [vmem:[%s1823 + $0xa9] sm:$0xff]
      %v2031 = vld [vmem:[%s1823 + $0xb1] sm:$0xff]
      %v2032 = vld [vmem:[%s1823 + $0xc1] sm:$0xff]
      %v2033 = vld [vmem:[%s1823 + $0xc9] sm:$0xff]
      %v2034 = vld [vmem:[%s1823 + $0xd9] sm:$0xff]
      %v2035 = vld [vmem:[%s1823 + $0xe1] sm:$0xff]
      %v2036 = vld [vmem:[%s1823 + $0xf1] sm:$0xff]
      %v2037 = vld [vmem:[%s1823 + $0xf9] sm:$0xff]
      %v2038 = vld [vmem:[%s1823 + $0x109] sm:$0xff]
      %v2039 = vld [vmem:[%s1823 + $0x111] sm:$0xff]
      %v2040 = vld [vmem:[%s1823 + $0x121] sm:$0xff]
      %v2041 = vld [vmem:[%s1823 + $0x129] sm:$0xff]
      %v2042 = vld [vmem:[%s1823 + $0x139] sm:$0xff]
      %v2043 = vld [vmem:[%s1823 + $0x141] sm:$0xff]
      %v2044 = vld [vmem:[%s1823 + $0x151] sm:$0xff]
      %v2045 = vld [vmem:[%s1823 + $0x159] sm:$0xff]
      %v2046 = vld [vmem:[%s1823 + $0x169] sm:$0xff]
      %v2047 = vld [vmem:[%s1823 + $0x171] sm:$0xff]
      %2080 = vrot.lane.b32.xlu0 %v2016, 96
      %v2081 = vpop.permute.xlu0 %2080
      %2082 = vrot.lane.b32.xlu0 %v2017, 96
      %v2083 = vpop.permute.xlu0 %2082
      %2084 = vrot.lane.b32.xlu0 %v2018, 96
      %v2085 = vpop.permute.xlu0 %2084
      %2086 = vrot.lane.b32.xlu0 %v2019, 96
      %v2087 = vpop.permute.xlu0 %2086
      %2088 = vrot.lane.b32.xlu0 %v2020, 96
      %v2089 = vpop.permute.xlu0 %2088
      %2090 = vrot.lane.b32.xlu0 %v2021, 96
      %v2091 = vpop.permute.xlu0 %2090
      %2092 = vrot.lane.b32.xlu0 %v2022, 96
      %v2093 = vpop.permute.xlu0 %2092
      %2094 = vrot.lane.b32.xlu0 %v2023, 96
      %v2095 = vpop.permute.xlu0 %2094
      %2096 = vrot.lane.b32.xlu0 %v2024, 96
      %v2097 = vpop.permute.xlu0 %2096
      %2098 = vrot.lane.b32.xlu0 %v2025, 96
      %v2099 = vpop.permute.xlu0 %2098
      %2100 = vrot.lane.b32.xlu0 %v2026, 96
      %v2101 = vpop.permute.xlu0 %2100
      %2102 = vrot.lane.b32.xlu0 %v2027, 96
      %v2103 = vpop.permute.xlu0 %2102
      %2104 = vrot.lane.b32.xlu0 %v2028, 96
      %v2105 = vpop.permute.xlu0 %2104
      %2106 = vrot.lane.b32.xlu0 %v2029, 96
      %v2107 = vpop.permute.xlu0 %2106
      %2108 = vrot.lane.b32.xlu0 %v2030, 96
      %v2109 = vpop.permute.xlu0 %2108
      %2110 = vrot.lane.b32.xlu0 %v2031, 96
      %v2111 = vpop.permute.xlu0 %2110
      %2112 = vrot.lane.b32.xlu0 %v2032, 96
      %v2113 = vpop.permute.xlu0 %2112
      %2114 = vrot.lane.b32.xlu0 %v2033, 96
      %v2115 = vpop.permute.xlu0 %2114
      %2116 = vrot.lane.b32.xlu0 %v2034, 96
      %v2117 = vpop.permute.xlu0 %2116
      %2118 = vrot.lane.b32.xlu0 %v2035, 96
      %v2119 = vpop.permute.xlu0 %2118
      %2120 = vrot.lane.b32.xlu0 %v2036, 96
      %v2121 = vpop.permute.xlu0 %2120
      %2122 = vrot.lane.b32.xlu0 %v2037, 96
      %v2123 = vpop.permute.xlu0 %2122
      %2124 = vrot.lane.b32.xlu0 %v2038, 96
      %v2125 = vpop.permute.xlu0 %2124
      %2126 = vrot.lane.b32.xlu0 %v2039, 96
      %v2127 = vpop.permute.xlu0 %2126
      %2128 = vrot.lane.b32.xlu0 %v2040, 96
      %v2129 = vpop.permute.xlu0 %2128
      %2130 = vrot.lane.b32.xlu0 %v2041, 96
      %v2131 = vpop.permute.xlu0 %2130
      %2132 = vrot.lane.b32.xlu0 %v2042, 96
      %v2133 = vpop.permute.xlu0 %2132
      %2134 = vrot.lane.b32.xlu0 %v2043, 96
      %v2135 = vpop.permute.xlu0 %2134
      %2136 = vrot.lane.b32.xlu0 %v2044, 96
      %v2137 = vpop.permute.xlu0 %2136
      %2138 = vrot.lane.b32.xlu0 %v2045, 96
      %v2139 = vpop.permute.xlu0 %2138
      %2140 = vrot.lane.b32.xlu0 %v2046, 96
      %v2141 = vpop.permute.xlu0 %2140
      %2142 = vrot.lane.b32.xlu0 %v2047, 96
      %v2143 = vpop.permute.xlu0 %2142
      %2176 = vst.msk [vmem:[#allocation3 + $0x8] sm:$0xff] %vm1534, %v2081
      %2177 = vst.msk [vmem:[#allocation3 + $0x20] sm:$0xff] %vm1534, %v2083
      %2178 = vst.msk [vmem:[#allocation3 + $0x38] sm:$0xff] %vm1534, %v2085
      %2179 = vst.msk [vmem:[#allocation3 + $0x50] sm:$0xff] %vm1534, %v2087
      %2180 = vst.msk [vmem:[#allocation3 + $0x68] sm:$0xff] %vm1534, %v2089
      %2181 = vst.msk [vmem:[#allocation3 + $0x80] sm:$0xff] %vm1534, %v2091
      %2182 = vst.msk [vmem:[#allocation3 + $0x98] sm:$0xff] %vm1534, %v2093
      %2183 = vst.msk [vmem:[#allocation3 + $0xb0] sm:$0xff] %vm1534, %v2095
      %2184 = vst.msk [vmem:[#allocation3 + $0xc8] sm:$0xff] %vm1534, %v2097
      %2185 = vst.msk [vmem:[#allocation3 + $0xe0] sm:$0xff] %vm1534, %v2099
      %2186 = vst.msk [vmem:[#allocation3 + $0xf8] sm:$0xff] %vm1534, %v2101
      %2187 = vst.msk [vmem:[#allocation3 + $0x110] sm:$0xff] %vm1534, %v2103
      %2188 = vst.msk [vmem:[#allocation3 + $0x128] sm:$0xff] %vm1534, %v2105
      %2189 = vst.msk [vmem:[#allocation3 + $0x140] sm:$0xff] %vm1534, %v2107
      %2190 = vst.msk [vmem:[#allocation3 + $0x158] sm:$0xff] %vm1534, %v2109
      %2191 = vst.msk [vmem:[#allocation3 + $0x170] sm:$0xff] %vm1534, %v2111
      %2192 = vst.msk [vmem:[#allocation3 + $0x188] sm:$0xff] %vm1534, %v2113
      %2193 = vst.msk [vmem:[#allocation3 + $0x1a0] sm:$0xff] %vm1534, %v2115
      %2194 = vst.msk [vmem:[#allocation3 + $0x1b8] sm:$0xff] %vm1534, %v2117
      %2195 = vst.msk [vmem:[#allocation3 + $0x1d0] sm:$0xff] %vm1534, %v2119
      %2196 = vst.msk [vmem:[#allocation3 + $0x1e8] sm:$0xff] %vm1534, %v2121
      %2197 = vst.msk [vmem:[#allocation3 + $0x200] sm:$0xff] %vm1534, %v2123
      %2198 = vst.msk [vmem:[#allocation3 + $0x218] sm:$0xff] %vm1534, %v2125
      %2199 = vst.msk [vmem:[#allocation3 + $0x230] sm:$0xff] %vm1534, %v2127
      %2200 = vst.msk [vmem:[#allocation3 + $0x248] sm:$0xff] %vm1534, %v2129
      %2201 = vst.msk [vmem:[#allocation3 + $0x260] sm:$0xff] %vm1534, %v2131
      %2202 = vst.msk [vmem:[#allocation3 + $0x278] sm:$0xff] %vm1534, %v2133
      %2203 = vst.msk [vmem:[#allocation3 + $0x290] sm:$0xff] %vm1534, %v2135
      %2204 = vst.msk [vmem:[#allocation3 + $0x2a8] sm:$0xff] %vm1534, %v2137
      %2205 = vst.msk [vmem:[#allocation3 + $0x2c0] sm:$0xff] %vm1534, %v2139
      %2206 = vst.msk [vmem:[#allocation3 + $0x2d8] sm:$0xff] %vm1534, %v2141
      %2207 = vst.msk [vmem:[#allocation3 + $0x2f0] sm:$0xff] %vm1534, %v2143
      %v2208 = vld [vmem:[%s1823 + $0x2] sm:$0xff]
      %v2209 = vld [vmem:[%s1823 + $0xa] sm:$0xff]
      %v2210 = vld [vmem:[%s1823 + $0x1a] sm:$0xff]
      %v2211 = vld [vmem:[%s1823 + $0x22] sm:$0xff]
      %v2212 = vld [vmem:[%s1823 + $0x32] sm:$0xff]
      %v2213 = vld [vmem:[%s1823 + $0x3a] sm:$0xff]
      %v2214 = vld [vmem:[%s1823 + $0x4a] sm:$0xff]
      %v2215 = vld [vmem:[%s1823 + $0x52] sm:$0xff]
      %v2216 = vld [vmem:[%s1823 + $0x62] sm:$0xff]
      %v2217 = vld [vmem:[%s1823 + $0x6a] sm:$0xff]
      %v2218 = vld [vmem:[%s1823 + $0x7a] sm:$0xff]
      %v2219 = vld [vmem:[%s1823 + $0x82] sm:$0xff]
      %v2220 = vld [vmem:[%s1823 + $0x92] sm:$0xff]
      %v2221 = vld [vmem:[%s1823 + $0x9a] sm:$0xff]
      %v2222 = vld [vmem:[%s1823 + $0xaa] sm:$0xff]
      %v2223 = vld [vmem:[%s1823 + $0xb2] sm:$0xff]
      %v2224 = vld [vmem:[%s1823 + $0xc2] sm:$0xff]
      %v2225 = vld [vmem:[%s1823 + $0xca] sm:$0xff]
      %v2226 = vld [vmem:[%s1823 + $0xda] sm:$0xff]
      %v2227 = vld [vmem:[%s1823 + $0xe2] sm:$0xff]
      %v2228 = vld [vmem:[%s1823 + $0xf2] sm:$0xff]
      %v2229 = vld [vmem:[%s1823 + $0xfa] sm:$0xff]
      %v2230 = vld [vmem:[%s1823 + $0x10a] sm:$0xff]
      %v2231 = vld [vmem:[%s1823 + $0x112] sm:$0xff]
      %v2232 = vld [vmem:[%s1823 + $0x122] sm:$0xff]
      %v2233 = vld [vmem:[%s1823 + $0x12a] sm:$0xff]
      %v2234 = vld [vmem:[%s1823 + $0x13a] sm:$0xff]
      %v2235 = vld [vmem:[%s1823 + $0x142] sm:$0xff]
      %v2236 = vld [vmem:[%s1823 + $0x152] sm:$0xff]
      %v2237 = vld [vmem:[%s1823 + $0x15a] sm:$0xff]
      %v2238 = vld [vmem:[%s1823 + $0x16a] sm:$0xff]
      %v2239 = vld [vmem:[%s1823 + $0x172] sm:$0xff]
      %2240 = vst.msk [vmem:[#allocation3 + $0x10] sm:$0xff] %vm520, %v2208
      %2241 = vst.msk [vmem:[#allocation3 + $0x28] sm:$0xff] %vm520, %v2209
      %2242 = vst.msk [vmem:[#allocation3 + $0x40] sm:$0xff] %vm520, %v2210
      %2243 = vst.msk [vmem:[#allocation3 + $0x58] sm:$0xff] %vm520, %v2211
      %2244 = vst.msk [vmem:[#allocation3 + $0x70] sm:$0xff] %vm520, %v2212
      %2245 = vst.msk [vmem:[#allocation3 + $0x88] sm:$0xff] %vm520, %v2213
      %2246 = vst.msk [vmem:[#allocation3 + $0xa0] sm:$0xff] %vm520, %v2214
      %2247 = vst.msk [vmem:[#allocation3 + $0xb8] sm:$0xff] %vm520, %v2215
      %2248 = vst.msk [vmem:[#allocation3 + $0xd0] sm:$0xff] %vm520, %v2216
      %2249 = vst.msk [vmem:[#allocation3 + $0xe8] sm:$0xff] %vm520, %v2217
      %2250 = vst.msk [vmem:[#allocation3 + $0x100] sm:$0xff] %vm520, %v2218
      %2251 = vst.msk [vmem:[#allocation3 + $0x118] sm:$0xff] %vm520, %v2219
      %2252 = vst.msk [vmem:[#allocation3 + $0x130] sm:$0xff] %vm520, %v2220
      %2253 = vst.msk [vmem:[#allocation3 + $0x148] sm:$0xff] %vm520, %v2221
      %2254 = vst.msk [vmem:[#allocation3 + $0x160] sm:$0xff] %vm520, %v2222
      %2255 = vst.msk [vmem:[#allocation3 + $0x178] sm:$0xff] %vm520, %v2223
      %2256 = vst.msk [vmem:[#allocation3 + $0x190] sm:$0xff] %vm520, %v2224
      %2257 = vst.msk [vmem:[#allocation3 + $0x1a8] sm:$0xff] %vm520, %v2225
      %2258 = vst.msk [vmem:[#allocation3 + $0x1c0] sm:$0xff] %vm520, %v2226
      %2259 = vst.msk [vmem:[#allocation3 + $0x1d8] sm:$0xff] %vm520, %v2227
      %2260 = vst.msk [vmem:[#allocation3 + $0x1f0] sm:$0xff] %vm520, %v2228
      %2261 = vst.msk [vmem:[#allocation3 + $0x208] sm:$0xff] %vm520, %v2229
      %2262 = vst.msk [vmem:[#allocation3 + $0x220] sm:$0xff] %vm520, %v2230
      %2263 = vst.msk [vmem:[#allocation3 + $0x238] sm:$0xff] %vm520, %v2231
      %2264 = vst.msk [vmem:[#allocation3 + $0x250] sm:$0xff] %vm520, %v2232
      %2265 = vst.msk [vmem:[#allocation3 + $0x268] sm:$0xff] %vm520, %v2233
      %2266 = vst.msk [vmem:[#allocation3 + $0x280] sm:$0xff] %vm520, %v2234
      %2267 = vst.msk [vmem:[#allocation3 + $0x298] sm:$0xff] %vm520, %v2235
      %2268 = vst.msk [vmem:[#allocation3 + $0x2b0] sm:$0xff] %vm520, %v2236
      %2269 = vst.msk [vmem:[#allocation3 + $0x2c8] sm:$0xff] %vm520, %v2237
      %2270 = vst.msk [vmem:[#allocation3 + $0x2e0] sm:$0xff] %vm520, %v2238
      %2271 = vst.msk [vmem:[#allocation3 + $0x2f8] sm:$0xff] %vm520, %v2239
      %v2272 = vld [vmem:[#allocation3] sm:$0xff]
      %v2273 = vld [vmem:[#allocation3 + $0x8] sm:$0xff]
      %v2274 = vld [vmem:[#allocation3 + $0x10] sm:$0xff]
      %v2275 = vld [vmem:[#allocation3 + $0x18] sm:$0xff]
      %v2276 = vld [vmem:[#allocation3 + $0x20] sm:$0xff]
      %v2277 = vld [vmem:[#allocation3 + $0x28] sm:$0xff]
      %v2278 = vld [vmem:[#allocation3 + $0x30] sm:$0xff]
      %v2279 = vld [vmem:[#allocation3 + $0x38] sm:$0xff]
      %v2280 = vld [vmem:[#allocation3 + $0x40] sm:$0xff]
      %v2281 = vld [vmem:[#allocation3 + $0x48] sm:$0xff]
      %v2282 = vld [vmem:[#allocation3 + $0x50] sm:$0xff]
      %v2283 = vld [vmem:[#allocation3 + $0x58] sm:$0xff]
      %v2284 = vld [vmem:[#allocation3 + $0x60] sm:$0xff]
      %v2285 = vld [vmem:[#allocation3 + $0x68] sm:$0xff]
      %v2286 = vld [vmem:[#allocation3 + $0x70] sm:$0xff]
      %v2287 = vld [vmem:[#allocation3 + $0x78] sm:$0xff]
      %v2288 = vld [vmem:[#allocation3 + $0x80] sm:$0xff]
      %v2289 = vld [vmem:[#allocation3 + $0x88] sm:$0xff]
      %v2290 = vld [vmem:[#allocation3 + $0x90] sm:$0xff]
      %v2291 = vld [vmem:[#allocation3 + $0x98] sm:$0xff]
      %v2292 = vld [vmem:[#allocation3 + $0xa0] sm:$0xff]
      %v2293 = vld [vmem:[#allocation3 + $0xa8] sm:$0xff]
      %v2294 = vld [vmem:[#allocation3 + $0xb0] sm:$0xff]
      %v2295 = vld [vmem:[#allocation3 + $0xb8] sm:$0xff]
      %v2296 = vld [vmem:[#allocation3 + $0xc0] sm:$0xff]
      %v2297 = vld [vmem:[#allocation3 + $0xc8] sm:$0xff]
      %v2298 = vld [vmem:[#allocation3 + $0xd0] sm:$0xff]
      %v2299 = vld [vmem:[#allocation3 + $0xd8] sm:$0xff]
      %v2300 = vld [vmem:[#allocation3 + $0xe0] sm:$0xff]
      %v2301 = vld [vmem:[#allocation3 + $0xe8] sm:$0xff]
      %v2302 = vld [vmem:[#allocation3 + $0xf0] sm:$0xff]
      %v2303 = vld [vmem:[#allocation3 + $0xf8] sm:$0xff]
      %v2304 = vld [vmem:[#allocation3 + $0x100] sm:$0xff]
      %v2305 = vld [vmem:[#allocation3 + $0x108] sm:$0xff]
      %v2306 = vld [vmem:[#allocation3 + $0x110] sm:$0xff]
      %v2307 = vld [vmem:[#allocation3 + $0x118] sm:$0xff]
      %v2308 = vld [vmem:[#allocation3 + $0x120] sm:$0xff]
      %v2309 = vld [vmem:[#allocation3 + $0x128] sm:$0xff]
      %v2310 = vld [vmem:[#allocation3 + $0x130] sm:$0xff]
      %v2311 = vld [vmem:[#allocation3 + $0x138] sm:$0xff]
      %v2312 = vld [vmem:[#allocation3 + $0x140] sm:$0xff]
      %v2313 = vld [vmem:[#allocation3 + $0x148] sm:$0xff]
      %v2314 = vld [vmem:[#allocation3 + $0x150] sm:$0xff]
      %v2315 = vld [vmem:[#allocation3 + $0x158] sm:$0xff]
      %v2316 = vld [vmem:[#allocation3 + $0x160] sm:$0xff]
      %v2317 = vld [vmem:[#allocation3 + $0x168] sm:$0xff]
      %v2318 = vld [vmem:[#allocation3 + $0x170] sm:$0xff]
      %v2319 = vld [vmem:[#allocation3 + $0x178] sm:$0xff]
      %v2320 = vld [vmem:[#allocation3 + $0x180] sm:$0xff]
      %v2321 = vld [vmem:[#allocation3 + $0x188] sm:$0xff]
      %v2322 = vld [vmem:[#allocation3 + $0x190] sm:$0xff]
      %v2323 = vld [vmem:[#allocation3 + $0x198] sm:$0xff]
      %v2324 = vld [vmem:[#allocation3 + $0x1a0] sm:$0xff]
      %v2325 = vld [vmem:[#allocation3 + $0x1a8] sm:$0xff]
      %v2326 = vld [vmem:[#allocation3 + $0x1b0] sm:$0xff]
      %v2327 = vld [vmem:[#allocation3 + $0x1b8] sm:$0xff]
      %v2328 = vld [vmem:[#allocation3 + $0x1c0] sm:$0xff]
      %v2329 = vld [vmem:[#allocation3 + $0x1c8] sm:$0xff]
      %v2330 = vld [vmem:[#allocation3 + $0x1d0] sm:$0xff]
      %v2331 = vld [vmem:[#allocation3 + $0x1d8] sm:$0xff]
      %v2332 = vld [vmem:[#allocation3 + $0x1e0] sm:$0xff]
      %v2333 = vld [vmem:[#allocation3 + $0x1e8] sm:$0xff]
      %v2334 = vld [vmem:[#allocation3 + $0x1f0] sm:$0xff]
      %v2335 = vld [vmem:[#allocation3 + $0x1f8] sm:$0xff]
      %v2336 = vld [vmem:[#allocation3 + $0x200] sm:$0xff]
      %v2337 = vld [vmem:[#allocation3 + $0x208] sm:$0xff]
      %v2338 = vld [vmem:[#allocation3 + $0x210] sm:$0xff]
      %v2339 = vld [vmem:[#allocation3 + $0x218] sm:$0xff]
      %v2340 = vld [vmem:[#allocation3 + $0x220] sm:$0xff]
      %v2341 = vld [vmem:[#allocation3 + $0x228] sm:$0xff]
      %v2342 = vld [vmem:[#allocation3 + $0x230] sm:$0xff]
      %v2343 = vld [vmem:[#allocation3 + $0x238] sm:$0xff]
      %v2344 = vld [vmem:[#allocation3 + $0x240] sm:$0xff]
      %v2345 = vld [vmem:[#allocation3 + $0x248] sm:$0xff]
      %v2346 = vld [vmem:[#allocation3 + $0x250] sm:$0xff]
      %v2347 = vld [vmem:[#allocation3 + $0x258] sm:$0xff]
      %v2348 = vld [vmem:[#allocation3 + $0x260] sm:$0xff]
      %v2349 = vld [vmem:[#allocation3 + $0x268] sm:$0xff]
      %v2350 = vld [vmem:[#allocation3 + $0x270] sm:$0xff]
      %v2351 = vld [vmem:[#allocation3 + $0x278] sm:$0xff]
      %v2352 = vld [vmem:[#allocation3 + $0x280] sm:$0xff]
      %v2353 = vld [vmem:[#allocation3 + $0x288] sm:$0xff]
      %v2354 = vld [vmem:[#allocation3 + $0x290] sm:$0xff]
      %v2355 = vld [vmem:[#allocation3 + $0x298] sm:$0xff]
      %v2356 = vld [vmem:[#allocation3 + $0x2a0] sm:$0xff]
      %v2357 = vld [vmem:[#allocation3 + $0x2a8] sm:$0xff]
      %v2358 = vld [vmem:[#allocation3 + $0x2b0] sm:$0xff]
      %v2359 = vld [vmem:[#allocation3 + $0x2b8] sm:$0xff]
      %v2360 = vld [vmem:[#allocation3 + $0x2c0] sm:$0xff]
      %v2361 = vld [vmem:[#allocation3 + $0x2c8] sm:$0xff]
      %v2362 = vld [vmem:[#allocation3 + $0x2d0] sm:$0xff]
      %v2363 = vld [vmem:[#allocation3 + $0x2d8] sm:$0xff]
      %v2364 = vld [vmem:[#allocation3 + $0x2e0] sm:$0xff]
      %v2365 = vld [vmem:[#allocation3 + $0x2e8] sm:$0xff]
      %v2366 = vld [vmem:[#allocation3 + $0x2f0] sm:$0xff]
      %v2367 = vld [vmem:[#allocation3 + $0x2f8] sm:$0xff]
      %v2368 = vld [vmem:[%s1] sm:$0xff]
      %v2369 = vld [vmem:[%s1 + $0x8] sm:$0xff]
      %v2370 = vld [vmem:[%s1 + $0x10] sm:$0xff]
      %v2371 = vld [vmem:[%s1 + $0x18] sm:$0xff]
      %v2372 = vld [vmem:[%s1 + $0x20] sm:$0xff]
      %v2373 = vld [vmem:[%s1 + $0x28] sm:$0xff]
      %v2374 = vld [vmem:[%s1 + $0x30] sm:$0xff]
      %v2375 = vld [vmem:[%s1 + $0x38] sm:$0xff]
      %v2376 = vld [vmem:[%s1 + $0x40] sm:$0xff]
      %v2377 = vld [vmem:[%s1 + $0x48] sm:$0xff]
      %v2378 = vld [vmem:[%s1 + $0x50] sm:$0xff]
      %v2379 = vld [vmem:[%s1 + $0x58] sm:$0xff]
      %v2380 = vld [vmem:[%s1 + $0x60] sm:$0xff]
      %v2381 = vld [vmem:[%s1 + $0x68] sm:$0xff]
      %v2382 = vld [vmem:[%s1 + $0x70] sm:$0xff]
      %v2383 = vld [vmem:[%s1 + $0x78] sm:$0xff]
      %v2384 = vld [vmem:[%s1 + $0x80] sm:$0xff]
      %v2385 = vld [vmem:[%s1 + $0x88] sm:$0xff]
      %v2386 = vld [vmem:[%s1 + $0x90] sm:$0xff]
      %v2387 = vld [vmem:[%s1 + $0x98] sm:$0xff]
      %v2388 = vld [vmem:[%s1 + $0xa0] sm:$0xff]
      %v2389 = vld [vmem:[%s1 + $0xa8] sm:$0xff]
      %v2390 = vld [vmem:[%s1 + $0xb0] sm:$0xff]
      %v2391 = vld [vmem:[%s1 + $0xb8] sm:$0xff]
      %v2392 = vld [vmem:[%s1 + $0xc0] sm:$0xff]
      %v2393 = vld [vmem:[%s1 + $0xc8] sm:$0xff]
      %v2394 = vld [vmem:[%s1 + $0xd0] sm:$0xff]
      %v2395 = vld [vmem:[%s1 + $0xd8] sm:$0xff]
      %v2396 = vld [vmem:[%s1 + $0xe0] sm:$0xff]
      %v2397 = vld [vmem:[%s1 + $0xe8] sm:$0xff]
      %v2398 = vld [vmem:[%s1 + $0xf0] sm:$0xff]
      %v2399 = vld [vmem:[%s1 + $0xf8] sm:$0xff]
      %v2400 = vld [vmem:[%s1 + $0x100] sm:$0xff]
      %v2401 = vld [vmem:[%s1 + $0x108] sm:$0xff]
      %v2402 = vld [vmem:[%s1 + $0x110] sm:$0xff]
      %v2403 = vld [vmem:[%s1 + $0x118] sm:$0xff]
      %v2404 = vld [vmem:[%s2] sm:$0x1]
      %v2406 = vlaneseq
      %v2407 = vshrl.u32 %v2406, 7
      %v2408 = vsub.s32 0, %v2407
      %v2409 = vrot.slane %v2404, %v2408
      %v2412 = vsel %vm520, %v2274, 0
      %v2415 = vsel %vm520, %v2277, 0
      %v2418 = vsel %vm520, %v2280, 0
      %v2421 = vsel %vm520, %v2283, 0
      %v2424 = vsel %vm520, %v2286, 0
      %v2427 = vsel %vm520, %v2289, 0
      %v2430 = vsel %vm520, %v2292, 0
      %v2433 = vsel %vm520, %v2295, 0
      %v2436 = vsel %vm520, %v2298, 0
      %v2439 = vsel %vm520, %v2301, 0
      %v2442 = vsel %vm520, %v2304, 0
      %v2445 = vsel %vm520, %v2307, 0
      %v2448 = vsel %vm520, %v2310, 0
      %v2451 = vsel %vm520, %v2313, 0
      %v2454 = vsel %vm520, %v2316, 0
      %v2457 = vsel %vm520, %v2319, 0
      %v2460 = vsel %vm520, %v2322, 0
      %v2463 = vsel %vm520, %v2325, 0
      %v2466 = vsel %vm520, %v2328, 0
      %v2469 = vsel %vm520, %v2331, 0
      %v2472 = vsel %vm520, %v2334, 0
      %v2475 = vsel %vm520, %v2337, 0
      %v2478 = vsel %vm520, %v2340, 0
      %v2481 = vsel %vm520, %v2343, 0
      %v2484 = vsel %vm520, %v2346, 0
      %v2487 = vsel %vm520, %v2349, 0
      %v2490 = vsel %vm520, %v2352, 0
      %v2493 = vsel %vm520, %v2355, 0
      %v2496 = vsel %vm520, %v2358, 0
      %v2499 = vsel %vm520, %v2361, 0
      %v2502 = vsel %vm520, %v2364, 0
      %v2505 = vsel %vm520, %v2367, 0
      %2507 = vmatprep.subr.mxu0 0.0
      %2508 = vmatpush1.msra.mxu0 %v2368
      %2509 = vmatprep.subr.mxu0 0.0
      %2510 = vmatpush1.msra.mxu0 %v2369
      %2511 = vmatprep.subr.mxu0 0.0
      %2512 = vmatpush1.msra.mxu0 %v2370
      %2513 = vmatprep.subr.mxu0 0.0
      %2514 = vmatpush1.msra.mxu0 %v2371
      %2515 = vmatprep.subr.mxu0 0.0
      %2516 = vmatpush1.msra.mxu0 %v2372
      %2517 = vmatprep.subr.mxu0 0.0
      %2518 = vmatpush1.msra.mxu0 %v2373
      %2519 = vmatprep.subr.mxu0 0.0
      %2520 = vmatpush1.msra.mxu0 %v2374
      %2521 = vmatprep.subr.mxu0 0.0
      %2522 = vmatpush1.msra.mxu0 %v2375
      %2523 = vmatprep.subr.mxu0 0.0
      %2524 = vmatpush1.msra.mxu0 %v2376
      %2525 = vmatprep.subr.mxu0 0.0
      %2526 = vmatpush1.msra.mxu0 %v2377
      %2527 = vmatprep.subr.mxu0 0.0
      %2528 = vmatpush1.msra.mxu0 %v2378
      %2529 = vmatprep.subr.mxu0 0.0
      %2530 = vmatpush1.msra.mxu0 %v2379
      %2531 = vmatprep.subr.mxu0 0.0
      %2532 = vmatpush1.msra.mxu0 %v2380
      %2533 = vmatprep.subr.mxu0 0.0
      %2534 = vmatpush1.msra.mxu0 %v2381
      %2535 = vmatprep.subr.mxu0 0.0
      %2536 = vmatpush1.msra.mxu0 %v2382
      %2537 = vmatprep.subr.mxu0 0.0
      %2538 = vmatpush1.msra.mxu0 %v2383
      %2539 = vmatprep.subr.mxu0 0.0
      %2540 = vmatpush1.msra.mxu0 %v2384
      %2541 = vmatprep.subr.mxu0 0.0
      %2542 = vmatpush1.msra.mxu0 %v2385
      %2543 = vmatprep.subr.mxu0 0.0
      %2544 = vmatpush1.msra.mxu0 %v2386
      %2545 = vmatprep.subr.mxu0 0.0
      %2546 = vmatpush1.msra.mxu0 %v2387
      %2547 = vmatprep.subr.mxu0 0.0
      %2548 = vmatpush1.msra.mxu0 %v2388
      %2549 = vmatprep.subr.mxu0 0.0
      %2550 = vmatpush1.msra.mxu0 %v2389
      %2551 = vmatprep.subr.mxu0 0.0
      %2552 = vmatpush1.msra.mxu0 %v2390
      %2553 = vmatprep.subr.mxu0 0.0
      %2554 = vmatpush1.msra.mxu0 %v2391
      %2555 = vmatprep.subr.mxu0 0.0
      %2556 = vmatpush1.msra.mxu0 %v2392
      %2557 = vmatprep.subr.mxu0 0.0
      %2558 = vmatpush1.msra.mxu0 %v2393
      %2559 = vmatprep.subr.mxu0 0.0
      %2560 = vmatpush1.msra.mxu0 %v2394
      %2561 = vmatprep.subr.mxu0 0.0
      %2562 = vmatpush1.msra.mxu0 %v2395
      %2563 = vmatprep.subr.mxu0 0.0
      %2564 = vmatpush1.msra.mxu0 %v2396
      %2565 = vmatprep.subr.mxu0 0.0
      %2566 = vmatpush1.msra.mxu0 %v2397
      %2567 = vmatprep.subr.mxu0 0.0
      %2568 = vmatpush1.msra.mxu0 %v2398
      %2569 = vmatprep.subr.mxu0 0.0
      %2570 = vmatpush1.msra.mxu0 %v2399
      %2571 = vmatprep.mubr.f32.mxu0 %v2273
      %2572 = vmatmul.mubr.f32.gmra.mrb[0].mxu0 %v2272
      %v2573 = vpop.f32.mrb[0].mxu0
      %v2574 = vadd.f32 %v2409, %v2573
      %v2575 = vpop.f32.mrb[0].mxu0
      %2576 = vmatprep.mubr.f32.mxu0 %v2276
      %2577 = vmatmul.mubr.f32.gmra.mrb[0].mxu0 %v2275
      %v2578 = vpop.f32.mrb[0].mxu0
      %v2579 = vadd.f32 %v2409, %v2578
      %v2580 = vpop.f32.mrb[0].mxu0
      %2581 = vmatprep.mubr.f32.mxu0 %v2279
      %2582 = vmatmul.mubr.f32.gmra.mrb[0].mxu0 %v2278
      %v2583 = vpop.f32.mrb[0].mxu0
      %v2584 = vadd.f32 %v2409, %v2583
      %v2585 = vpop.f32.mrb[0].mxu0
      %2586 = vmatprep.mubr.f32.mxu0 %v2282
      %2587 = vmatmul.mubr.f32.gmra.mrb[0].mxu0 %v2281
      %v2588 = vpop.f32.mrb[0].mxu0
      %v2589 = vadd.f32 %v2409, %v2588
      %v2590 = vpop.f32.mrb[0].mxu0
      %2591 = vmatprep.mubr.f32.mxu0 %v2285
      %2592 = vmatmul.mubr.f32.gmra.mrb[0].mxu0 %v2284
      %v2593 = vpop.f32.mrb[0].mxu0
      %v2594 = vadd.f32 %v2409, %v2593
      %v2595 = vpop.f32.mrb[0].mxu0
      %2596 = vmatprep.mubr.f32.mxu0 %v2288
      %2597 = vmatmul.mubr.f32.gmra.mrb[0].mxu0 %v2287
      %v2598 = vpop.f32.mrb[0].mxu0
      %v2599 = vadd.f32 %v2409, %v2598
      %v2600 = vpop.f32.mrb[0].mxu0
      %2601 = vmatprep.mubr.f32.mxu0 %v2291
      %2602 = vmatmul.mubr.f32.gmra.mrb[0].mxu0 %v2290
      %v2603 = vpop.f32.mrb[0].mxu0
      %v2604 = vadd.f32 %v2409, %v2603
      %v2605 = vpop.f32.mrb[0].mxu0
      %2606 = vmatprep.mubr.f32.mxu0 %v2294
      %2607 = vmatmul.mubr.f32.gmra.mrb[0].mxu0 %v2293
      %v2608 = vpop.f32.mrb[0].mxu0
      %v2609 = vadd.f32 %v2409, %v2608
      %v2610 = vpop.f32.mrb[0].mxu0
      %2611 = vmatprep.mubr.f32.mxu0 %v2297
      %2612 = vmatmul.mubr.f32.gmra.mrb[0].mxu0 %v2296
      %v2613 = vpop.f32.mrb[0].mxu0
      %v2614 = vadd.f32 %v2409, %v2613
      %v2615 = vpop.f32.mrb[0].mxu0
      %2616 = vmatprep.mubr.f32.mxu0 %v2300
      %2617 = vmatmul.mubr.f32.gmra.mrb[0].mxu0 %v2299
      %v2618 = vpop.f32.mrb[0].mxu0
      %v2619 = vadd.f32 %v2409, %v2618
      %v2620 = vpop.f32.mrb[0].mxu0
      %2621 = vmatprep.mubr.f32.mxu0 %v2303
      %2622 = vmatmul.mubr.f32.gmra.mrb[0].mxu0 %v2302
      %v2623 = vpop.f32.mrb[0].mxu0
      %v2624 = vadd.f32 %v2409, %v2623
      %v2625 = vpop.f32.mrb[0].mxu0
      %2626 = vmatprep.mubr.f32.mxu0 %v2306
      %2627 = vmatmul.mubr.f32.gmra.mrb[0].mxu0 %v2305
      %v2628 = vpop.f32.mrb[0].mxu0
      %v2629 = vadd.f32 %v2409, %v2628
      %v2630 = vpop.f32.mrb[0].mxu0
      %2631 = vmatprep.mubr.f32.mxu0 %v2309
      %2632 = vmatmul.mubr.f32.gmra.mrb[0].mxu0 %v2308
      %v2633 = vpop.f32.mrb[0].mxu0
      %v2634 = vadd.f32 %v2409, %v2633
      %v2635 = vpop.f32.mrb[0].mxu0
      %2636 = vmatprep.mubr.f32.mxu0 %v2312
      %2637 = vmatmul.mubr.f32.gmra.mrb[0].mxu0 %v2311
      %v2638 = vpop.f32.mrb[0].mxu0
      %v2639 = vadd.f32 %v2409, %v2638
      %v2640 = vpop.f32.mrb[0].mxu0
      %2641 = vmatprep.mubr.f32.mxu0 %v2315
      %2642 = vmatmul.mubr.f32.gmra.mrb[0].mxu0 %v2314
      %v2643 = vpop.f32.mrb[0].mxu0
      %v2644 = vadd.f32 %v2409, %v2643
      %v2645 = vpop.f32.mrb[0].mxu0
      %2646 = vmatprep.mubr.f32.mxu0 %v2318
      %2647 = vmatmul.mubr.f32.gmra.mrb[0].mxu0 %v2317
      %v2648 = vpop.f32.mrb[0].mxu0
      %v2649 = vadd.f32 %v2409, %v2648
      %v2650 = vpop.f32.mrb[0].mxu0
      %2651 = vmatprep.mubr.f32.mxu0 %v2321
      %2652 = vmatmul.mubr.f32.gmra.mrb[0].mxu0 %v2320
      %v2653 = vpop.f32.mrb[0].mxu0
      %v2654 = vadd.f32 %v2409, %v2653
      %v2655 = vpop.f32.mrb[0].mxu0
      %2656 = vmatprep.mubr.f32.mxu0 %v2324
      %2657 = vmatmul.mubr.f32.gmra.mrb[0].mxu0 %v2323
      %v2658 = vpop.f32.mrb[0].mxu0
      %v2659 = vadd.f32 %v2409, %v2658
      %v2660 = vpop.f32.mrb[0].mxu0
      %2661 = vmatprep.mubr.f32.mxu0 %v2327
      %2662 = vmatmul.mubr.f32.gmra.mrb[0].mxu0 %v2326
      %v2663 = vpop.f32.mrb[0].mxu0
      %v2664 = vadd.f32 %v2409, %v2663
      %v2665 = vpop.f32.mrb[0].mxu0
      %2666 = vmatprep.mubr.f32.mxu0 %v2330
      %2667 = vmatmul.mubr.f32.gmra.mrb[0].mxu0 %v2329
      %v2668 = vpop.f32.mrb[0].mxu0
      %v2669 = vadd.f32 %v2409, %v2668
      %v2670 = vpop.f32.mrb[0].mxu0
      %2671 = vmatprep.mubr.f32.mxu0 %v2333
      %2672 = vmatmul.mubr.f32.gmra.mrb[0].mxu0 %v2332
      %v2673 = vpop.f32.mrb[0].mxu0
      %v2674 = vadd.f32 %v2409, %v2673
      %v2675 = vpop.f32.mrb[0].mxu0
      %2676 = vmatprep.mubr.f32.mxu0 %v2336
      %2677 = vmatmul.mubr.f32.gmra.mrb[0].mxu0 %v2335
      %v2678 = vpop.f32.mrb[0].mxu0
      %v2679 = vadd.f32 %v2409, %v2678
      %v2680 = vpop.f32.mrb[0].mxu0
      %2681 = vmatprep.mubr.f32.mxu0 %v2339
      %2682 = vmatmul.mubr.f32.gmra.mrb[0].mxu0 %v2338
      %v2683 = vpop.f32.mrb[0].mxu0
      %v2684 = vadd.f32 %v2409, %v2683
      %v2685 = vpop.f32.mrb[0].mxu0
      %2686 = vmatprep.mubr.f32.mxu0 %v2342
      %2687 = vmatmul.mubr.f32.gmra.mrb[0].mxu0 %v2341
      %v2688 = vpop.f32.mrb[0].mxu0
      %v2689 = vadd.f32 %v2409, %v2688
      %v2690 = vpop.f32.mrb[0].mxu0
      %2691 = vmatprep.mubr.f32.mxu0 %v2345
      %2692 = vmatmul.mubr.f32.gmra.mrb[0].mxu0 %v2344
      %v2693 = vpop.f32.mrb[0].mxu0
      %v2694 = vadd.f32 %v2409, %v2693
      %v2695 = vpop.f32.mrb[0].mxu0
      %2696 = vmatprep.mubr.f32.mxu0 %v2348
      %2697 = vmatmul.mubr.f32.gmra.mrb[0].mxu0 %v2347
      %v2698 = vpop.f32.mrb[0].mxu0
      %v2699 = vadd.f32 %v2409, %v2698
      %v2700 = vpop.f32.mrb[0].mxu0
      %2701 = vmatprep.mubr.f32.mxu0 %v2351
      %2702 = vmatmul.mubr.f32.gmra.mrb[0].mxu0 %v2350
      %v2703 = vpop.f32.mrb[0].mxu0
      %v2704 = vadd.f32 %v2409, %v2703
      %v2705 = vpop.f32.mrb[0].mxu0
      %2706 = vmatprep.mubr.f32.mxu0 %v2354
      %2707 = vmatmul.mubr.f32.gmra.mrb[0].mxu0 %v2353
      %v2708 = vpop.f32.mrb[0].mxu0
      %v2709 = vadd.f32 %v2409, %v2708
      %v2710 = vpop.f32.mrb[0].mxu0
      %2711 = vmatprep.mubr.f32.mxu0 %v2357
      %2712 = vmatmul.mubr.f32.gmra.mrb[0].mxu0 %v2356
      %v2713 = vpop.f32.mrb[0].mxu0
      %v2714 = vadd.f32 %v2409, %v2713
      %v2715 = vpop.f32.mrb[0].mxu0
      %2716 = vmatprep.mubr.f32.mxu0 %v2360
      %2717 = vmatmul.mubr.f32.gmra.mrb[0].mxu0 %v2359
      %v2718 = vpop.f32.mrb[0].mxu0
      %v2719 = vadd.f32 %v2409, %v2718
      %v2720 = vpop.f32.mrb[0].mxu0
      %2721 = vmatprep.mubr.f32.mxu0 %v2363
      %2722 = vmatmul.mubr.f32.gmra.mrb[0].mxu0 %v2362
      %v2723 = vpop.f32.mrb[0].mxu0
      %v2724 = vadd.f32 %v2409, %v2723
      %v2725 = vpop.f32.mrb[0].mxu0
      %2726 = vmatprep.mubr.f32.mxu0 %v2366
      %2727 = vmatmul.mubr.f32.gmra.mrb[0].mxu0 %v2365
      %v2728 = vpop.f32.mrb[0].mxu0
      %v2729 = vadd.f32 %v2409, %v2728
      %v2730 = vpop.f32.mrb[0].mxu0
      %2731 = vdwg.mxu0
      %2732 = vmatprep.subr.mxu0 0.0
      %2733 = vmatpush1.msra.mxu0 %v2400
      %2734 = vmatprep.subr.mxu0 0.0
      %2735 = vmatpush1.msra.mxu0 %v2401
      %2736 = vmatprep.subr.mxu0 0.0
      %2737 = vmatpush1.msra.mxu0 %v2402
      %2738 = vmatprep.subr.mxu0 0.0
      %2739 = vmatpush1.msra.mxu0 %v2403
      %2740 = vmatprep.subr.mxu0 0.0
      %2741 = vmatpush1.msra.mxu0 0.0
      %2742 = vmatprep.subr.mxu0 0.0
      %2743 = vmatpush1.msra.mxu0 0.0
      %2744 = vmatprep.subr.mxu0 0.0
      %2745 = vmatpush1.msra.mxu0 0.0
      %2746 = vmatprep.subr.mxu0 0.0
      %2747 = vmatpush1.msra.mxu0 0.0
      %2748 = vmatprep.subr.mxu0 0.0
      %2749 = vmatpush1.msra.mxu0 0.0
      %2750 = vmatprep.subr.mxu0 0.0
      %2751 = vmatpush1.msra.mxu0 0.0
      %2752 = vmatprep.subr.mxu0 0.0
      %2753 = vmatpush1.msra.mxu0 0.0
      %2754 = vmatprep.subr.mxu0 0.0
      %2755 = vmatpush1.msra.mxu0 0.0
      %2756 = vmatprep.subr.mxu0 0.0
      %2757 = vmatpush1.msra.mxu0 0.0
      %2758 = vmatprep.subr.mxu0 0.0
      %2759 = vmatpush1.msra.mxu0 0.0
      %2760 = vmatprep.subr.mxu0 0.0
      %2761 = vmatpush1.msra.mxu0 0.0
      %2762 = vmatprep.subr.mxu0 0.0
      %2763 = vmatpush1.msra.mxu0 0.0
      %2764 = vmatprep.subr.mxu0 0.0
      %2765 = vmatpush1.msra.mxu0 0.0
      %2766 = vmatprep.subr.mxu0 0.0
      %2767 = vmatpush1.msra.mxu0 0.0
      %2768 = vmatprep.subr.mxu0 0.0
      %2769 = vmatpush1.msra.mxu0 0.0
      %2770 = vmatprep.subr.mxu0 0.0
      %2771 = vmatpush1.msra.mxu0 0.0
      %2772 = vmatprep.subr.mxu0 0.0
      %2773 = vmatpush1.msra.mxu0 0.0
      %2774 = vmatprep.subr.mxu0 0.0
      %2775 = vmatpush1.msra.mxu0 0.0
      %2776 = vmatprep.subr.mxu0 0.0
      %2777 = vmatpush1.msra.mxu0 0.0
      %2778 = vmatprep.subr.mxu0 0.0
      %2779 = vmatpush1.msra.mxu0 0.0
      %2780 = vmatprep.subr.mxu0 0.0
      %2781 = vmatpush1.msra.mxu0 0.0
      %2782 = vmatprep.subr.mxu0 0.0
      %2783 = vmatpush1.msra.mxu0 0.0
      %2784 = vmatprep.subr.mxu0 0.0
      %2785 = vmatpush1.msra.mxu0 0.0
      %2786 = vmatprep.subr.mxu0 0.0
      %2787 = vmatpush1.msra.mxu0 0.0
      %2788 = vmatprep.subr.mxu0 0.0
      %2789 = vmatpush1.msra.mxu0 0.0
      %2790 = vmatprep.subr.mxu0 0.0
      %2791 = vmatpush1.msra.mxu0 0.0
      %2792 = vmatprep.subr.mxu0 0.0
      %2793 = vmatpush1.msra.mxu0 0.0
      %2794 = vmatprep.subr.mxu0 0.0
      %2795 = vmatpush1.msra.mxu0 0.0
      %2796 = vmatprep.mubr.f32.mxu0 0.0
      %2797 = vmatmul.mubr.f32.gmra.mrb[0].mxu0 %v2412
      %v2798 = vpop.f32.mrb[0].mxu0
      %v2799 = vadd.f32 %v2574, %v2798
      %v2800 = vpop.f32.mrb[0].mxu0
      %2801 = vmatprep.mubr.f32.mxu0 0.0
      %2802 = vmatmul.mubr.f32.gmra.mrb[0].mxu0 %v2415
      %v2803 = vpop.f32.mrb[0].mxu0
      %v2804 = vadd.f32 %v2579, %v2803
      %v2805 = vpop.f32.mrb[0].mxu0
      %2806 = vmatprep.mubr.f32.mxu0 0.0
      %2807 = vmatmul.mubr.f32.gmra.mrb[0].mxu0 %v2418
      %v2808 = vpop.f32.mrb[0].mxu0
      %v2809 = vadd.f32 %v2584, %v2808
      %v2810 = vpop.f32.mrb[0].mxu0
      %2811 = vmatprep.mubr.f32.mxu0 0.0
      %2812 = vmatmul.mubr.f32.gmra.mrb[0].mxu0 %v2421
      %v2813 = vpop.f32.mrb[0].mxu0
      %v2814 = vadd.f32 %v2589, %v2813
      %v2815 = vpop.f32.mrb[0].mxu0
      %2816 = vmatprep.mubr.f32.mxu0 0.0
      %2817 = vmatmul.mubr.f32.gmra.mrb[0].mxu0 %v2424
      %v2818 = vpop.f32.mrb[0].mxu0
      %v2819 = vadd.f32 %v2594, %v2818
      %v2820 = vpop.f32.mrb[0].mxu0
      %2821 = vmatprep.mubr.f32.mxu0 0.0
      %2822 = vmatmul.mubr.f32.gmra.mrb[0].mxu0 %v2427
      %v2823 = vpop.f32.mrb[0].mxu0
      %v2824 = vadd.f32 %v2599, %v2823
      %v2825 = vpop.f32.mrb[0].mxu0
      %2826 = vmatprep.mubr.f32.mxu0 0.0
      %2827 = vmatmul.mubr.f32.gmra.mrb[0].mxu0 %v2430
      %v2828 = vpop.f32.mrb[0].mxu0
      %v2829 = vadd.f32 %v2604, %v2828
      %v2830 = vpop.f32.mrb[0].mxu0
      %2831 = vmatprep.mubr.f32.mxu0 0.0
      %2832 = vmatmul.mubr.f32.gmra.mrb[0].mxu0 %v2433
      %v2833 = vpop.f32.mrb[0].mxu0
      %v2834 = vadd.f32 %v2609, %v2833
      %v2835 = vpop.f32.mrb[0].mxu0
      %2836 = vmatprep.mubr.f32.mxu0 0.0
      %2837 = vmatmul.mubr.f32.gmra.mrb[0].mxu0 %v2436
      %v2838 = vpop.f32.mrb[0].mxu0
      %v2839 = vadd.f32 %v2614, %v2838
      %v2840 = vpop.f32.mrb[0].mxu0
      %2841 = vmatprep.mubr.f32.mxu0 0.0
      %2842 = vmatmul.mubr.f32.gmra.mrb[0].mxu0 %v2439
      %v2843 = vpop.f32.mrb[0].mxu0
      %v2844 = vadd.f32 %v2619, %v2843
      %v2845 = vpop.f32.mrb[0].mxu0
      %2846 = vmatprep.mubr.f32.mxu0 0.0
      %2847 = vmatmul.mubr.f32.gmra.mrb[0].mxu0 %v2442
      %v2848 = vpop.f32.mrb[0].mxu0
      %v2849 = vadd.f32 %v2624, %v2848
      %v2850 = vpop.f32.mrb[0].mxu0
      %2851 = vmatprep.mubr.f32.mxu0 0.0
      %2852 = vmatmul.mubr.f32.gmra.mrb[0].mxu0 %v2445
      %v2853 = vpop.f32.mrb[0].mxu0
      %v2854 = vadd.f32 %v2629, %v2853
      %v2855 = vpop.f32.mrb[0].mxu0
      %2856 = vmatprep.mubr.f32.mxu0 0.0
      %2857 = vmatmul.mubr.f32.gmra.mrb[0].mxu0 %v2448
      %v2858 = vpop.f32.mrb[0].mxu0
      %v2859 = vadd.f32 %v2634, %v2858
      %v2860 = vpop.f32.mrb[0].mxu0
      %2861 = vmatprep.mubr.f32.mxu0 0.0
      %2862 = vmatmul.mubr.f32.gmra.mrb[0].mxu0 %v2451
      %v2863 = vpop.f32.mrb[0].mxu0
      %v2864 = vadd.f32 %v2639, %v2863
      %v2865 = vpop.f32.mrb[0].mxu0
      %2866 = vmatprep.mubr.f32.mxu0 0.0
      %2867 = vmatmul.mubr.f32.gmra.mrb[0].mxu0 %v2454
      %v2868 = vpop.f32.mrb[0].mxu0
      %v2869 = vadd.f32 %v2644, %v2868
      %v2870 = vpop.f32.mrb[0].mxu0
      %2871 = vmatprep.mubr.f32.mxu0 0.0
      %2872 = vmatmul.mubr.f32.gmra.mrb[0].mxu0 %v2457
      %v2873 = vpop.f32.mrb[0].mxu0
      %v2874 = vadd.f32 %v2649, %v2873
      %v2875 = vpop.f32.mrb[0].mxu0
      %2876 = vmatprep.mubr.f32.mxu0 0.0
      %2877 = vmatmul.mubr.f32.gmra.mrb[0].mxu0 %v2460
      %v2878 = vpop.f32.mrb[0].mxu0
      %v2879 = vadd.f32 %v2654, %v2878
      %v2880 = vpop.f32.mrb[0].mxu0
      %2881 = vmatprep.mubr.f32.mxu0 0.0
      %2882 = vmatmul.mubr.f32.gmra.mrb[0].mxu0 %v2463
      %v2883 = vpop.f32.mrb[0].mxu0
      %v2884 = vadd.f32 %v2659, %v2883
      %v2885 = vpop.f32.mrb[0].mxu0
      %2886 = vmatprep.mubr.f32.mxu0 0.0
      %2887 = vmatmul.mubr.f32.gmra.mrb[0].mxu0 %v2466
      %v2888 = vpop.f32.mrb[0].mxu0
      %v2889 = vadd.f32 %v2664, %v2888
      %v2890 = vpop.f32.mrb[0].mxu0
      %2891 = vmatprep.mubr.f32.mxu0 0.0
      %2892 = vmatmul.mubr.f32.gmra.mrb[0].mxu0 %v2469
      %v2893 = vpop.f32.mrb[0].mxu0
      %v2894 = vadd.f32 %v2669, %v2893
      %v2895 = vpop.f32.mrb[0].mxu0
      %2896 = vmatprep.mubr.f32.mxu0 0.0
      %2897 = vmatmul.mubr.f32.gmra.mrb[0].mxu0 %v2472
      %v2898 = vpop.f32.mrb[0].mxu0
      %v2899 = vadd.f32 %v2674, %v2898
      %v2900 = vpop.f32.mrb[0].mxu0
      %2901 = vmatprep.mubr.f32.mxu0 0.0
      %2902 = vmatmul.mubr.f32.gmra.mrb[0].mxu0 %v2475
      %v2903 = vpop.f32.mrb[0].mxu0
      %v2904 = vadd.f32 %v2679, %v2903
      %v2905 = vpop.f32.mrb[0].mxu0
      %2906 = vmatprep.mubr.f32.mxu0 0.0
      %2907 = vmatmul.mubr.f32.gmra.mrb[0].mxu0 %v2478
      %v2908 = vpop.f32.mrb[0].mxu0
      %v2909 = vadd.f32 %v2684, %v2908
      %v2910 = vpop.f32.mrb[0].mxu0
      %2911 = vmatprep.mubr.f32.mxu0 0.0
      %2912 = vmatmul.mubr.f32.gmra.mrb[0].mxu0 %v2481
      %v2913 = vpop.f32.mrb[0].mxu0
      %v2914 = vadd.f32 %v2689, %v2913
      %v2915 = vpop.f32.mrb[0].mxu0
      %2916 = vmatprep.mubr.f32.mxu0 0.0
      %2917 = vmatmul.mubr.f32.gmra.mrb[0].mxu0 %v2484
      %v2918 = vpop.f32.mrb[0].mxu0
      %v2919 = vadd.f32 %v2694, %v2918
      %v2920 = vpop.f32.mrb[0].mxu0
      %2921 = vmatprep.mubr.f32.mxu0 0.0
      %2922 = vmatmul.mubr.f32.gmra.mrb[0].mxu0 %v2487
      %v2923 = vpop.f32.mrb[0].mxu0
      %v2924 = vadd.f32 %v2699, %v2923
      %v2925 = vpop.f32.mrb[0].mxu0
      %2926 = vmatprep.mubr.f32.mxu0 0.0
      %2927 = vmatmul.mubr.f32.gmra.mrb[0].mxu0 %v2490
      %v2928 = vpop.f32.mrb[0].mxu0
      %v2929 = vadd.f32 %v2704, %v2928
      %v2930 = vpop.f32.mrb[0].mxu0
      %2931 = vmatprep.mubr.f32.mxu0 0.0
      %2932 = vmatmul.mubr.f32.gmra.mrb[0].mxu0 %v2493
      %v2933 = vpop.f32.mrb[0].mxu0
      %v2934 = vadd.f32 %v2709, %v2933
      %v2935 = vpop.f32.mrb[0].mxu0
      %2936 = vmatprep.mubr.f32.mxu0 0.0
      %2937 = vmatmul.mubr.f32.gmra.mrb[0].mxu0 %v2496
      %v2938 = vpop.f32.mrb[0].mxu0
      %v2939 = vadd.f32 %v2714, %v2938
      %v2940 = vpop.f32.mrb[0].mxu0
      %2941 = vmatprep.mubr.f32.mxu0 0.0
      %2942 = vmatmul.mubr.f32.gmra.mrb[0].mxu0 %v2499
      %v2943 = vpop.f32.mrb[0].mxu0
      %v2944 = vadd.f32 %v2719, %v2943
      %v2945 = vpop.f32.mrb[0].mxu0
      %2946 = vmatprep.mubr.f32.mxu0 0.0
      %2947 = vmatmul.mubr.f32.gmra.mrb[0].mxu0 %v2502
      %v2948 = vpop.f32.mrb[0].mxu0
      %v2949 = vadd.f32 %v2724, %v2948
      %v2950 = vpop.f32.mrb[0].mxu0
      %2951 = vmatprep.mubr.f32.mxu0 0.0
      %2952 = vmatmul.mubr.f32.gmra.mrb[0].mxu0 %v2505
      %v2953 = vpop.f32.mrb[0].mxu0
      %v2954 = vadd.f32 %v2729, %v2953
      %v2955 = vpop.f32.mrb[0].mxu0
      %2956 = vdwg.mxu0
      %2957 = vst [vmem:[#allocation4] sm:$0xff] %v2799
      %2958 = vst [vmem:[#allocation4 + $0x8] sm:$0xff] %v2804
      %2959 = vst [vmem:[#allocation4 + $0x10] sm:$0xff] %v2809
      %2960 = vst [vmem:[#allocation4 + $0x18] sm:$0xff] %v2814
      %2961 = vst [vmem:[#allocation4 + $0x20] sm:$0xff] %v2819
      %2962 = vst [vmem:[#allocation4 + $0x28] sm:$0xff] %v2824
      %2963 = vst [vmem:[#allocation4 + $0x30] sm:$0xff] %v2829
      %2964 = vst [vmem:[#allocation4 + $0x38] sm:$0xff] %v2834
      %2965 = vst [vmem:[#allocation4 + $0x40] sm:$0xff] %v2839
      %2966 = vst [vmem:[#allocation4 + $0x48] sm:$0xff] %v2844
      %2967 = vst [vmem:[#allocation4 + $0x50] sm:$0xff] %v2849
      %2968 = vst [vmem:[#allocation4 + $0x58] sm:$0xff] %v2854
      %2969 = vst [vmem:[#allocation4 + $0x60] sm:$0xff] %v2859
      %2970 = vst [vmem:[#allocation4 + $0x68] sm:$0xff] %v2864
      %2971 = vst [vmem:[#allocation4 + $0x70] sm:$0xff] %v2869
      %2972 = vst [vmem:[#allocation4 + $0x78] sm:$0xff] %v2874
      %2973 = vst [vmem:[#allocation4 + $0x80] sm:$0xff] %v2879
      %2974 = vst [vmem:[#allocation4 + $0x88] sm:$0xff] %v2884
      %2975 = vst [vmem:[#allocation4 + $0x90] sm:$0xff] %v2889
      %2976 = vst [vmem:[#allocation4 + $0x98] sm:$0xff] %v2894
      %2977 = vst [vmem:[#allocation4 + $0xa0] sm:$0xff] %v2899
      %2978 = vst [vmem:[#allocation4 + $0xa8] sm:$0xff] %v2904
      %2979 = vst [vmem:[#allocation4 + $0xb0] sm:$0xff] %v2909
      %2980 = vst [vmem:[#allocation4 + $0xb8] sm:$0xff] %v2914
      %2981 = vst [vmem:[#allocation4 + $0xc0] sm:$0xff] %v2919
      %2982 = vst [vmem:[#allocation4 + $0xc8] sm:$0xff] %v2924
      %2983 = vst [vmem:[#allocation4 + $0xd0] sm:$0xff] %v2929
      %2984 = vst [vmem:[#allocation4 + $0xd8] sm:$0xff] %v2934
      %2985 = vst [vmem:[#allocation4 + $0xe0] sm:$0xff] %v2939
      %2986 = vst [vmem:[#allocation4 + $0xe8] sm:$0xff] %v2944
      %2987 = vst [vmem:[#allocation4 + $0xf0] sm:$0xff] %v2949
      %2988 = vst [vmem:[#allocation4 + $0xf8] sm:$0xff] %v2954
      %v2989 = vld [vmem:[#allocation4] sm:$0xff]
      %v2990 = vld [vmem:[#allocation4 + $0x8] sm:$0xff]
      %v2991 = vld [vmem:[#allocation4 + $0x10] sm:$0xff]
      %v2992 = vld [vmem:[#allocation4 + $0x18] sm:$0xff]
      %v2993 = vld [vmem:[#allocation4 + $0x20] sm:$0xff]
      %v2994 = vld [vmem:[#allocation4 + $0x28] sm:$0xff]
      %v2995 = vld [vmem:[#allocation4 + $0x30] sm:$0xff]
      %v2996 = vld [vmem:[#allocation4 + $0x38] sm:$0xff]
      %v2997 = vld [vmem:[#allocation4 + $0x40] sm:$0xff]
      %v2998 = vld [vmem:[#allocation4 + $0x48] sm:$0xff]
      %v2999 = vld [vmem:[#allocation4 + $0x50] sm:$0xff]
      %v3000 = vld [vmem:[#allocation4 + $0x58] sm:$0xff]
      %v3001 = vld [vmem:[#allocation4 + $0x60] sm:$0xff]
      %v3002 = vld [vmem:[#allocation4 + $0x68] sm:$0xff]
      %v3003 = vld [vmem:[#allocation4 + $0x70] sm:$0xff]
      %v3004 = vld [vmem:[#allocation4 + $0x78] sm:$0xff]
      %v3005 = vld [vmem:[#allocation4 + $0x80] sm:$0xff]
      %v3006 = vld [vmem:[#allocation4 + $0x88] sm:$0xff]
      %v3007 = vld [vmem:[#allocation4 + $0x90] sm:$0xff]
      %v3008 = vld [vmem:[#allocation4 + $0x98] sm:$0xff]
      %v3009 = vld [vmem:[#allocation4 + $0xa0] sm:$0xff]
      %v3010 = vld [vmem:[#allocation4 + $0xa8] sm:$0xff]
      %v3011 = vld [vmem:[#allocation4 + $0xb0] sm:$0xff]
      %v3012 = vld [vmem:[#allocation4 + $0xb8] sm:$0xff]
      %v3013 = vld [vmem:[#allocation4 + $0xc0] sm:$0xff]
      %v3014 = vld [vmem:[#allocation4 + $0xc8] sm:$0xff]
      %v3015 = vld [vmem:[#allocation4 + $0xd0] sm:$0xff]
      %v3016 = vld [vmem:[#allocation4 + $0xd8] sm:$0xff]
      %v3017 = vld [vmem:[#allocation4 + $0xe0] sm:$0xff]
      %v3018 = vld [vmem:[#allocation4 + $0xe8] sm:$0xff]
      %v3019 = vld [vmem:[#allocation4 + $0xf0] sm:$0xff]
      %v3020 = vld [vmem:[#allocation4 + $0xf8] sm:$0xff]
      %v3021 = vlaneseq
      %v3022 = vshrl.u32 %v3021, 7
      %v3023 = vsub.s32 0, %v3022
      %v3024 = vrot.slane %v833, %v3023
      %v3025 = vmul.f32 %v2989, %v3024
      %v3026 = vmul.f32 %v2990, %v3024
      %v3027 = vmul.f32 %v2991, %v3024
      %v3028 = vmul.f32 %v2992, %v3024
      %v3029 = vmul.f32 %v2993, %v3024
      %v3030 = vmul.f32 %v2994, %v3024
      %v3031 = vmul.f32 %v2995, %v3024
      %v3032 = vmul.f32 %v2996, %v3024
      %v3033 = vmul.f32 %v2997, %v3024
      %v3034 = vmul.f32 %v2998, %v3024
      %v3035 = vmul.f32 %v2999, %v3024
      %v3036 = vmul.f32 %v3000, %v3024
      %v3037 = vmul.f32 %v3001, %v3024
      %v3038 = vmul.f32 %v3002, %v3024
      %v3039 = vmul.f32 %v3003, %v3024
      %v3040 = vmul.f32 %v3004, %v3024
      %v3041 = vmul.f32 %v3005, %v3024
      %v3042 = vmul.f32 %v3006, %v3024
      %v3043 = vmul.f32 %v3007, %v3024
      %v3044 = vmul.f32 %v3008, %v3024
      %v3045 = vmul.f32 %v3009, %v3024
      %v3046 = vmul.f32 %v3010, %v3024
      %v3047 = vmul.f32 %v3011, %v3024
      %v3048 = vmul.f32 %v3012, %v3024
      %v3049 = vmul.f32 %v3013, %v3024
      %v3050 = vmul.f32 %v3014, %v3024
      %v3051 = vmul.f32 %v3015, %v3024
      %v3052 = vmul.f32 %v3016, %v3024
      %v3053 = vmul.f32 %v3017, %v3024
      %v3054 = vmul.f32 %v3018, %v3024
      %v3055 = vmul.f32 %v3019, %v3024
      %v3056 = vmul.f32 %v3020, %v3024
      %v3057 = vld [vmem:[%s12] sm:$0xff]
      %v3058 = vld [vmem:[%s12 + $0x8] sm:$0xff]
      %v3059 = vld [vmem:[%s12 + $0x10] sm:$0xff]
      %v3060 = vld [vmem:[%s12 + $0x18] sm:$0xff]
      %v3061 = vld [vmem:[%s12 + $0x20] sm:$0xff]
      %v3062 = vld [vmem:[%s12 + $0x28] sm:$0xff]
      %v3063 = vld [vmem:[%s12 + $0x30] sm:$0xff]
      %v3064 = vld [vmem:[%s12 + $0x38] sm:$0xff]
      %v3065 = vld [vmem:[%s12 + $0x40] sm:$0xff]
      %v3066 = vld [vmem:[%s12 + $0x48] sm:$0xff]
      %v3067 = vld [vmem:[%s12 + $0x50] sm:$0xff]
      %v3068 = vld [vmem:[%s12 + $0x58] sm:$0xff]
      %v3069 = vld [vmem:[%s12 + $0x60] sm:$0xff]
      %v3070 = vld [vmem:[%s12 + $0x68] sm:$0xff]
      %v3071 = vld [vmem:[%s12 + $0x70] sm:$0xff]
      %v3072 = vld [vmem:[%s12 + $0x78] sm:$0xff]
      %3073 = vmatprep.subr.mxu0 0.0
      %3074 = vmatpush1.msra.mxu0 %v3057
      %3075 = vmatprep.subr.mxu0 0.0
      %3076 = vmatpush1.msra.mxu0 %v3058
      %3077 = vmatprep.subr.mxu0 0.0
      %3078 = vmatpush1.msra.mxu0 %v3059
      %3079 = vmatprep.subr.mxu0 0.0
      %3080 = vmatpush1.msra.mxu0 %v3060
      %3081 = vmatprep.subr.mxu0 0.0
      %3082 = vmatpush1.msra.mxu0 %v3061
      %3083 = vmatprep.subr.mxu0 0.0
      %3084 = vmatpush1.msra.mxu0 %v3062
      %3085 = vmatprep.subr.mxu0 0.0
      %3086 = vmatpush1.msra.mxu0 %v3063
      %3087 = vmatprep.subr.mxu0 0.0
      %3088 = vmatpush1.msra.mxu0 %v3064
      %3089 = vmatprep.subr.mxu0 0.0
      %3090 = vmatpush1.msra.mxu0 %v3065
      %3091 = vmatprep.subr.mxu0 0.0
      %3092 = vmatpush1.msra.mxu0 %v3066
      %3093 = vmatprep.subr.mxu0 0.0
      %3094 = vmatpush1.msra.mxu0 %v3067
      %3095 = vmatprep.subr.mxu0 0.0
      %3096 = vmatpush1.msra.mxu0 %v3068
      %3097 = vmatprep.subr.mxu0 0.0
      %3098 = vmatpush1.msra.mxu0 %v3069
      %3099 = vmatprep.subr.mxu0 0.0
      %3100 = vmatpush1.msra.mxu0 %v3070
      %3101 = vmatprep.subr.mxu0 0.0
      %3102 = vmatpush1.msra.mxu0 %v3071
      %3103 = vmatprep.subr.mxu0 0.0
      %3104 = vmatpush1.msra.mxu0 %v3072
      %3105 = vmatprep.subr.mxu0 0.0
      %3106 = vmatpush1.msra.mxu0 0.0
      %3107 = vmatprep.subr.mxu0 0.0
      %3108 = vmatpush1.msra.mxu0 0.0
      %3109 = vmatprep.subr.mxu0 0.0
      %3110 = vmatpush1.msra.mxu0 0.0
      %3111 = vmatprep.subr.mxu0 0.0
      %3112 = vmatpush1.msra.mxu0 0.0
      %3113 = vmatprep.subr.mxu0 0.0
      %3114 = vmatpush1.msra.mxu0 0.0
      %3115 = vmatprep.subr.mxu0 0.0
      %3116 = vmatpush1.msra.mxu0 0.0
      %3117 = vmatprep.subr.mxu0 0.0
      %3118 = vmatpush1.msra.mxu0 0.0
      %3119 = vmatprep.subr.mxu0 0.0
      %3120 = vmatpush1.msra.mxu0 0.0
      %3121 = vmatprep.subr.mxu0 0.0
      %3122 = vmatpush1.msra.mxu0 0.0
      %3123 = vmatprep.subr.mxu0 0.0
      %3124 = vmatpush1.msra.mxu0 0.0
      %3125 = vmatprep.subr.mxu0 0.0
      %3126 = vmatpush1.msra.mxu0 0.0
      %3127 = vmatprep.subr.mxu0 0.0
      %3128 = vmatpush1.msra.mxu0 0.0
      %3129 = vmatprep.subr.mxu0 0.0
      %3130 = vmatpush1.msra.mxu0 0.0
      %3131 = vmatprep.subr.mxu0 0.0
      %3132 = vmatpush1.msra.mxu0 0.0
      %3133 = vmatprep.subr.mxu0 0.0
      %3134 = vmatpush1.msra.mxu0 0.0
      %3135 = vmatprep.subr.mxu0 0.0
      %3136 = vmatpush1.msra.mxu0 0.0
      %3137 = vmatprep.mubr.f32.mxu0 0.0
      %3138 = vmatmul.mubr.f32.gmra.mrb[0].mxu0 %v3025
      %v3139 = vpop.f32.mrb[0].mxu0
      %v3140 = vadd.f32 0.0, %v3139
      %v3141 = vpop.f32.mrb[0].mxu0
      %3142 = vmatprep.mubr.f32.mxu0 0.0
      %3143 = vmatmul.mubr.f32.gmra.mrb[0].mxu0 %v3026
      %v3144 = vpop.f32.mrb[0].mxu0
      %v3145 = vadd.f32 0.0, %v3144
      %v3146 = vpop.f32.mrb[0].mxu0
      %3147 = vmatprep.mubr.f32.mxu0 0.0
      %3148 = vmatmul.mubr.f32.gmra.mrb[0].mxu0 %v3027
      %v3149 = vpop.f32.mrb[0].mxu0
      %v3150 = vadd.f32 0.0, %v3149
      %v3151 = vpop.f32.mrb[0].mxu0
      %3152 = vmatprep.mubr.f32.mxu0 0.0
      %3153 = vmatmul.mubr.f32.gmra.mrb[0].mxu0 %v3028
      %v3154 = vpop.f32.mrb[0].mxu0
      %v3155 = vadd.f32 0.0, %v3154
      %v3156 = vpop.f32.mrb[0].mxu0
      %3157 = vmatprep.mubr.f32.mxu0 0.0
      %3158 = vmatmul.mubr.f32.gmra.mrb[0].mxu0 %v3029
      %v3159 = vpop.f32.mrb[0].mxu0
      %v3160 = vadd.f32 0.0, %v3159
      %v3161 = vpop.f32.mrb[0].mxu0
      %3162 = vmatprep.mubr.f32.mxu0 0.0
      %3163 = vmatmul.mubr.f32.gmra.mrb[0].mxu0 %v3030
      %v3164 = vpop.f32.mrb[0].mxu0
      %v3165 = vadd.f32 0.0, %v3164
      %v3166 = vpop.f32.mrb[0].mxu0
      %3167 = vmatprep.mubr.f32.mxu0 0.0
      %3168 = vmatmul.mubr.f32.gmra.mrb[0].mxu0 %v3031
      %v3169 = vpop.f32.mrb[0].mxu0
      %v3170 = vadd.f32 0.0, %v3169
      %v3171 = vpop.f32.mrb[0].mxu0
      %3172 = vmatprep.mubr.f32.mxu0 0.0
      %3173 = vmatmul.mubr.f32.gmra.mrb[0].mxu0 %v3032
      %v3174 = vpop.f32.mrb[0].mxu0
      %v3175 = vadd.f32 0.0, %v3174
      %v3176 = vpop.f32.mrb[0].mxu0
      %3177 = vmatprep.mubr.f32.mxu0 0.0
      %3178 = vmatmul.mubr.f32.gmra.mrb[0].mxu0 %v3033
      %v3179 = vpop.f32.mrb[0].mxu0
      %v3180 = vadd.f32 0.0, %v3179
      %v3181 = vpop.f32.mrb[0].mxu0
      %3182 = vmatprep.mubr.f32.mxu0 0.0
      %3183 = vmatmul.mubr.f32.gmra.mrb[0].mxu0 %v3034
      %v3184 = vpop.f32.mrb[0].mxu0
      %v3185 = vadd.f32 0.0, %v3184
      %v3186 = vpop.f32.mrb[0].mxu0
      %3187 = vmatprep.mubr.f32.mxu0 0.0
      %3188 = vmatmul.mubr.f32.gmra.mrb[0].mxu0 %v3035
      %v3189 = vpop.f32.mrb[0].mxu0
      %v3190 = vadd.f32 0.0, %v3189
      %v3191 = vpop.f32.mrb[0].mxu0
      %3192 = vmatprep.mubr.f32.mxu0 0.0
      %3193 = vmatmul.mubr.f32.gmra.mrb[0].mxu0 %v3036
      %v3194 = vpop.f32.mrb[0].mxu0
      %v3195 = vadd.f32 0.0, %v3194
      %v3196 = vpop.f32.mrb[0].mxu0
      %3197 = vmatprep.mubr.f32.mxu0 0.0
      %3198 = vmatmul.mubr.f32.gmra.mrb[0].mxu0 %v3037
      %v3199 = vpop.f32.mrb[0].mxu0
      %v3200 = vadd.f32 0.0, %v3199
      %v3201 = vpop.f32.mrb[0].mxu0
      %3202 = vmatprep.mubr.f32.mxu0 0.0
      %3203 = vmatmul.mubr.f32.gmra.mrb[0].mxu0 %v3038
      %v3204 = vpop.f32.mrb[0].mxu0
      %v3205 = vadd.f32 0.0, %v3204
      %v3206 = vpop.f32.mrb[0].mxu0
      %3207 = vmatprep.mubr.f32.mxu0 0.0
      %3208 = vmatmul.mubr.f32.gmra.mrb[0].mxu0 %v3039
      %v3209 = vpop.f32.mrb[0].mxu0
      %v3210 = vadd.f32 0.0, %v3209
      %v3211 = vpop.f32.mrb[0].mxu0
      %3212 = vmatprep.mubr.f32.mxu0 0.0
      %3213 = vmatmul.mubr.f32.gmra.mrb[0].mxu0 %v3040
      %v3214 = vpop.f32.mrb[0].mxu0
      %v3215 = vadd.f32 0.0, %v3214
      %v3216 = vpop.f32.mrb[0].mxu0
      %3217 = vmatprep.mubr.f32.mxu0 0.0
      %3218 = vmatmul.mubr.f32.gmra.mrb[0].mxu0 %v3041
      %v3219 = vpop.f32.mrb[0].mxu0
      %v3220 = vadd.f32 0.0, %v3219
      %v3221 = vpop.f32.mrb[0].mxu0
      %3222 = vmatprep.mubr.f32.mxu0 0.0
      %3223 = vmatmul.mubr.f32.gmra.mrb[0].mxu0 %v3042
      %v3224 = vpop.f32.mrb[0].mxu0
      %v3225 = vadd.f32 0.0, %v3224
      %v3226 = vpop.f32.mrb[0].mxu0
      %3227 = vmatprep.mubr.f32.mxu0 0.0
      %3228 = vmatmul.mubr.f32.gmra.mrb[0].mxu0 %v3043
      %v3229 = vpop.f32.mrb[0].mxu0
      %v3230 = vadd.f32 0.0, %v3229
      %v3231 = vpop.f32.mrb[0].mxu0
      %3232 = vmatprep.mubr.f32.mxu0 0.0
      %3233 = vmatmul.mubr.f32.gmra.mrb[0].mxu0 %v3044
      %v3234 = vpop.f32.mrb[0].mxu0
      %v3235 = vadd.f32 0.0, %v3234
      %v3236 = vpop.f32.mrb[0].mxu0
      %3237 = vmatprep.mubr.f32.mxu0 0.0
      %3238 = vmatmul.mubr.f32.gmra.mrb[0].mxu0 %v3045
      %v3239 = vpop.f32.mrb[0].mxu0
      %v3240 = vadd.f32 0.0, %v3239
      %v3241 = vpop.f32.mrb[0].mxu0
      %3242 = vmatprep.mubr.f32.mxu0 0.0
      %3243 = vmatmul.mubr.f32.gmra.mrb[0].mxu0 %v3046
      %v3244 = vpop.f32.mrb[0].mxu0
      %v3245 = vadd.f32 0.0, %v3244
      %v3246 = vpop.f32.mrb[0].mxu0
      %3247 = vmatprep.mubr.f32.mxu0 0.0
      %3248 = vmatmul.mubr.f32.gmra.mrb[0].mxu0 %v3047
      %v3249 = vpop.f32.mrb[0].mxu0
      %v3250 = vadd.f32 0.0, %v3249
      %v3251 = vpop.f32.mrb[0].mxu0
      %3252 = vmatprep.mubr.f32.mxu0 0.0
      %3253 = vmatmul.mubr.f32.gmra.mrb[0].mxu0 %v3048
      %v3254 = vpop.f32.mrb[0].mxu0
      %v3255 = vadd.f32 0.0, %v3254
      %v3256 = vpop.f32.mrb[0].mxu0
      %3257 = vmatprep.mubr.f32.mxu0 0.0
      %3258 = vmatmul.mubr.f32.gmra.mrb[0].mxu0 %v3049
      %v3259 = vpop.f32.mrb[0].mxu0
      %v3260 = vadd.f32 0.0, %v3259
      %v3261 = vpop.f32.mrb[0].mxu0
      %3262 = vmatprep.mubr.f32.mxu0 0.0
      %3263 = vmatmul.mubr.f32.gmra.mrb[0].mxu0 %v3050
      %v3264 = vpop.f32.mrb[0].mxu0
      %v3265 = vadd.f32 0.0, %v3264
      %v3266 = vpop.f32.mrb[0].mxu0
      %3267 = vmatprep.mubr.f32.mxu0 0.0
      %3268 = vmatmul.mubr.f32.gmra.mrb[0].mxu0 %v3051
      %v3269 = vpop.f32.mrb[0].mxu0
      %v3270 = vadd.f32 0.0, %v3269
      %v3271 = vpop.f32.mrb[0].mxu0
      %3272 = vmatprep.mubr.f32.mxu0 0.0
      %3273 = vmatmul.mubr.f32.gmra.mrb[0].mxu0 %v3052
      %v3274 = vpop.f32.mrb[0].mxu0
      %v3275 = vadd.f32 0.0, %v3274
      %v3276 = vpop.f32.mrb[0].mxu0
      %3277 = vmatprep.mubr.f32.mxu0 0.0
      %3278 = vmatmul.mubr.f32.gmra.mrb[0].mxu0 %v3053
      %v3279 = vpop.f32.mrb[0].mxu0
      %v3280 = vadd.f32 0.0, %v3279
      %v3281 = vpop.f32.mrb[0].mxu0
      %3282 = vmatprep.mubr.f32.mxu0 0.0
      %3283 = vmatmul.mubr.f32.gmra.mrb[0].mxu0 %v3054
      %v3284 = vpop.f32.mrb[0].mxu0
      %v3285 = vadd.f32 0.0, %v3284
      %v3286 = vpop.f32.mrb[0].mxu0
      %3287 = vmatprep.mubr.f32.mxu0 0.0
      %3288 = vmatmul.mubr.f32.gmra.mrb[0].mxu0 %v3055
      %v3289 = vpop.f32.mrb[0].mxu0
      %v3290 = vadd.f32 0.0, %v3289
      %v3291 = vpop.f32.mrb[0].mxu0
      %3292 = vmatprep.mubr.f32.mxu0 0.0
      %3293 = vmatmul.mubr.f32.gmra.mrb[0].mxu0 %v3056
      %v3294 = vpop.f32.mrb[0].mxu0
      %v3295 = vadd.f32 0.0, %v3294
      %v3296 = vpop.f32.mrb[0].mxu0
      %3297 = vdwg.mxu0
      %vm3298 = vcmp.ge.f32.partialorder %v3140, 0.0
      %vm3299 = vcmp.ge.f32.partialorder %v3145, 0.0
      %vm3300 = vcmp.ge.f32.partialorder %v3150, 0.0
      %vm3301 = vcmp.ge.f32.partialorder %v3155, 0.0
      %vm3302 = vcmp.ge.f32.partialorder %v3160, 0.0
      %vm3303 = vcmp.ge.f32.partialorder %v3165, 0.0
      %vm3304 = vcmp.ge.f32.partialorder %v3170, 0.0
      %vm3305 = vcmp.ge.f32.partialorder %v3175, 0.0
      %vm3306 = vcmp.ge.f32.partialorder %v3180, 0.0
      %vm3307 = vcmp.ge.f32.partialorder %v3185, 0.0
      %vm3308 = vcmp.ge.f32.partialorder %v3190, 0.0
      %vm3309 = vcmp.ge.f32.partialorder %v3195, 0.0
      %vm3310 = vcmp.ge.f32.partialorder %v3200, 0.0
      %vm3311 = vcmp.ge.f32.partialorder %v3205, 0.0
      %vm3312 = vcmp.ge.f32.partialorder %v3210, 0.0
      %vm3313 = vcmp.ge.f32.partialorder %v3215, 0.0
      %vm3314 = vcmp.ge.f32.partialorder %v3220, 0.0
      %vm3315 = vcmp.ge.f32.partialorder %v3225, 0.0
      %vm3316 = vcmp.ge.f32.partialorder %v3230, 0.0
      %vm3317 = vcmp.ge.f32.partialorder %v3235, 0.0
      %vm3318 = vcmp.ge.f32.partialorder %v3240, 0.0
      %vm3319 = vcmp.ge.f32.partialorder %v3245, 0.0
      %vm3320 = vcmp.ge.f32.partialorder %v3250, 0.0
      %vm3321 = vcmp.ge.f32.partialorder %v3255, 0.0
      %vm3322 = vcmp.ge.f32.partialorder %v3260, 0.0
      %vm3323 = vcmp.ge.f32.partialorder %v3265, 0.0
      %vm3324 = vcmp.ge.f32.partialorder %v3270, 0.0
      %vm3325 = vcmp.ge.f32.partialorder %v3275, 0.0
      %vm3326 = vcmp.ge.f32.partialorder %v3280, 0.0
      %vm3327 = vcmp.ge.f32.partialorder %v3285, 0.0
      %vm3328 = vcmp.ge.f32.partialorder %v3290, 0.0
      %vm3329 = vcmp.ge.f32.partialorder %v3295, 0.0
      %v3330 = vmul.f32 %v3140, 0.01
      %v3331 = vmul.f32 %v3145, 0.01
      %v3332 = vmul.f32 %v3150, 0.01
      %v3333 = vmul.f32 %v3155, 0.01
      %v3334 = vmul.f32 %v3160, 0.01
      %v3335 = vmul.f32 %v3165, 0.01
      %v3336 = vmul.f32 %v3170, 0.01
      %v3337 = vmul.f32 %v3175, 0.01
      %v3338 = vmul.f32 %v3180, 0.01
      %v3339 = vmul.f32 %v3185, 0.01
      %v3340 = vmul.f32 %v3190, 0.01
      %v3341 = vmul.f32 %v3195, 0.01
      %v3342 = vmul.f32 %v3200, 0.01
      %v3343 = vmul.f32 %v3205, 0.01
      %v3344 = vmul.f32 %v3210, 0.01
      %v3345 = vmul.f32 %v3215, 0.01
      %v3346 = vmul.f32 %v3220, 0.01
      %v3347 = vmul.f32 %v3225, 0.01
      %v3348 = vmul.f32 %v3230, 0.01
      %v3349 = vmul.f32 %v3235, 0.01
      %v3350 = vmul.f32 %v3240, 0.01
      %v3351 = vmul.f32 %v3245, 0.01
      %v3352 = vmul.f32 %v3250, 0.01
      %v3353 = vmul.f32 %v3255, 0.01
      %v3354 = vmul.f32 %v3260, 0.01
      %v3355 = vmul.f32 %v3265, 0.01
      %v3356 = vmul.f32 %v3270, 0.01
      %v3357 = vmul.f32 %v3275, 0.01
      %v3358 = vmul.f32 %v3280, 0.01
      %v3359 = vmul.f32 %v3285, 0.01
      %v3360 = vmul.f32 %v3290, 0.01
      %v3361 = vmul.f32 %v3295, 0.01
      %v3362 = vsel %vm3298, %v3140, %v3330
      %v3363 = vsel %vm3299, %v3145, %v3331
      %v3364 = vsel %vm3300, %v3150, %v3332
      %v3365 = vsel %vm3301, %v3155, %v3333
      %v3366 = vsel %vm3302, %v3160, %v3334
      %v3367 = vsel %vm3303, %v3165, %v3335
      %v3368 = vsel %vm3304, %v3170, %v3336
      %v3369 = vsel %vm3305, %v3175, %v3337
      %v3370 = vsel %vm3306, %v3180, %v3338
      %v3371 = vsel %vm3307, %v3185, %v3339
      %v3372 = vsel %vm3308, %v3190, %v3340
      %v3373 = vsel %vm3309, %v3195, %v3341
      %v3374 = vsel %vm3310, %v3200, %v3342
      %v3375 = vsel %vm3311, %v3205, %v3343
      %v3376 = vsel %vm3312, %v3210, %v3344
      %v3377 = vsel %vm3313, %v3215, %v3345
      %v3378 = vsel %vm3314, %v3220, %v3346
      %v3379 = vsel %vm3315, %v3225, %v3347
      %v3380 = vsel %vm3316, %v3230, %v3348
      %v3381 = vsel %vm3317, %v3235, %v3349
      %v3382 = vsel %vm3318, %v3240, %v3350
      %v3383 = vsel %vm3319, %v3245, %v3351
      %v3384 = vsel %vm3320, %v3250, %v3352
      %v3385 = vsel %vm3321, %v3255, %v3353
      %v3386 = vsel %vm3322, %v3260, %v3354
      %v3387 = vsel %vm3323, %v3265, %v3355
      %v3388 = vsel %vm3324, %v3270, %v3356
      %v3389 = vsel %vm3325, %v3275, %v3357
      %v3390 = vsel %vm3326, %v3280, %v3358
      %v3391 = vsel %vm3327, %v3285, %v3359
      %v3392 = vsel %vm3328, %v3290, %v3360
      %v3393 = vsel %vm3329, %v3295, %v3361
      %v3394 = vld [vmem:[%s8] sm:$0xff]
      %v3395 = vld [vmem:[%s8 + $0x8] sm:$0xff]
      %v3396 = vld [vmem:[%s8 + $0x10] sm:$0xff]
      %v3397 = vld [vmem:[%s8 + $0x18] sm:$0xff]
      %v3398 = vld [vmem:[%s9] sm:$0xff]
      %v3399 = vld [vmem:[%s9 + $0x8] sm:$0x1]
      %v3400 = vld [vmem:[%s10] sm:$0x1]
      %v3401 = vsel %vm520, %v3362, 0.0
      %v3402 = vsel %vm520, %v3363, 0.0
      %v3403 = vadd.f32 %v3401, %v3402
      %v3404 = vsel %vm520, %v3364, 0.0
      %v3405 = vadd.f32 %v3403, %v3404
      %v3406 = vsel %vm520, %v3365, 0.0
      %v3407 = vadd.f32 %v3405, %v3406
      %v3408 = vsel %vm520, %v3366, 0.0
      %v3409 = vadd.f32 %v3407, %v3408
      %v3410 = vsel %vm520, %v3367, 0.0
      %v3411 = vadd.f32 %v3409, %v3410
      %v3412 = vsel %vm520, %v3368, 0.0
      %v3413 = vadd.f32 %v3411, %v3412
      %v3414 = vsel %vm520, %v3369, 0.0
      %v3415 = vadd.f32 %v3413, %v3414
      %v3416 = vsel %vm520, %v3370, 0.0
      %v3417 = vadd.f32 %v3415, %v3416
      %v3418 = vsel %vm520, %v3371, 0.0
      %v3419 = vadd.f32 %v3417, %v3418
      %v3420 = vsel %vm520, %v3372, 0.0
      %v3421 = vadd.f32 %v3419, %v3420
      %v3422 = vsel %vm520, %v3373, 0.0
      %v3423 = vadd.f32 %v3421, %v3422
      %v3424 = vsel %vm520, %v3374, 0.0
      %v3425 = vadd.f32 %v3423, %v3424
      %v3426 = vsel %vm520, %v3375, 0.0
      %v3427 = vadd.f32 %v3425, %v3426
      %v3428 = vsel %vm520, %v3376, 0.0
      %v3429 = vadd.f32 %v3427, %v3428
      %v3430 = vsel %vm520, %v3377, 0.0
      %v3431 = vadd.f32 %v3429, %v3430
      %v3432 = vsel %vm520, %v3378, 0.0
      %v3433 = vadd.f32 %v3431, %v3432
      %v3434 = vsel %vm520, %v3379, 0.0
      %v3435 = vadd.f32 %v3433, %v3434
      %v3436 = vsel %vm520, %v3380, 0.0
      %v3437 = vadd.f32 %v3435, %v3436
      %v3438 = vsel %vm520, %v3381, 0.0
      %v3439 = vadd.f32 %v3437, %v3438
      %v3440 = vsel %vm520, %v3382, 0.0
      %v3441 = vadd.f32 %v3439, %v3440
      %v3442 = vsel %vm520, %v3383, 0.0
      %v3443 = vadd.f32 %v3441, %v3442
      %v3444 = vsel %vm520, %v3384, 0.0
      %v3445 = vadd.f32 %v3443, %v3444
      %v3446 = vsel %vm520, %v3385, 0.0
      %v3447 = vadd.f32 %v3445, %v3446
      %v3448 = vsel %vm520, %v3386, 0.0
      %v3449 = vadd.f32 %v3447, %v3448
      %v3450 = vsel %vm520, %v3387, 0.0
      %v3451 = vadd.f32 %v3449, %v3450
      %v3452 = vsel %vm520, %v3388, 0.0
      %v3453 = vadd.f32 %v3451, %v3452
      %v3454 = vsel %vm520, %v3389, 0.0
      %v3455 = vadd.f32 %v3453, %v3454
      %v3456 = vsel %vm520, %v3390, 0.0
      %v3457 = vadd.f32 %v3455, %v3456
      %v3458 = vsel %vm520, %v3391, 0.0
      %v3459 = vadd.f32 %v3457, %v3458
      %v3460 = vsel %vm520, %v3392, 0.0
      %v3461 = vadd.f32 %v3459, %v3460
      %v3462 = vsel %vm520, %v3393, 0.0
      %v3463 = vadd.f32 %v3461, %v3462
      %v3464 = vrot.slane %v3463, 4
      %v3465 = vadd.f32 %v3463, %v3464
      %v3466 = vrot.slane %v3465, 2
      %v3467 = vadd.f32 %v3465, %v3466
      %v3468 = vrot.slane %v3467, 1
      %v3469 = vadd.f32 %v3467, %v3468
      %v3470 = vmul.f32 %v3469, %v590
      %v3472 = vsel %vm520, %v3470, 0
      %3474 = vmatprep.subr.mxu0 0.0
      %3475 = vmatpush1.msra.mxu0 %v3394
      %3476 = vmatprep.subr.mxu0 0.0
      %3477 = vmatpush1.msra.mxu0 %v3395
      %3478 = vmatprep.subr.mxu0 0.0
      %3479 = vmatpush1.msra.mxu0 %v3396
      %3480 = vmatprep.subr.mxu0 0.0
      %3481 = vmatpush1.msra.mxu0 %v3397
      %3482 = vmatprep.subr.mxu0 0.0
      %3483 = vmatpush1.msra.mxu0 0.0
      %3484 = vmatprep.subr.mxu0 0.0
      %3485 = vmatpush1.msra.mxu0 0.0
      %3486 = vmatprep.subr.mxu0 0.0
      %3487 = vmatpush1.msra.mxu0 0.0
      %3488 = vmatprep.subr.mxu0 0.0
      %3489 = vmatpush1.msra.mxu0 0.0
      %3490 = vmatprep.subr.mxu0 0.0
      %3491 = vmatpush1.msra.mxu0 0.0
      %3492 = vmatprep.subr.mxu0 0.0
      %3493 = vmatpush1.msra.mxu0 0.0
      %3494 = vmatprep.subr.mxu0 0.0
      %3495 = vmatpush1.msra.mxu0 0.0
      %3496 = vmatprep.subr.mxu0 0.0
      %3497 = vmatpush1.msra.mxu0 0.0
      %3498 = vmatprep.subr.mxu0 0.0
      %3499 = vmatpush1.msra.mxu0 0.0
      %3500 = vmatprep.subr.mxu0 0.0
      %3501 = vmatpush1.msra.mxu0 0.0
      %3502 = vmatprep.subr.mxu0 0.0
      %3503 = vmatpush1.msra.mxu0 0.0
      %3504 = vmatprep.subr.mxu0 0.0
      %3505 = vmatpush1.msra.mxu0 0.0
      %3506 = vmatprep.subr.mxu0 0.0
      %3507 = vmatpush1.msra.mxu0 0.0
      %3508 = vmatprep.subr.mxu0 0.0
      %3509 = vmatpush1.msra.mxu0 0.0
      %3510 = vmatprep.subr.mxu0 0.0
      %3511 = vmatpush1.msra.mxu0 0.0
      %3512 = vmatprep.subr.mxu0 0.0
      %3513 = vmatpush1.msra.mxu0 0.0
      %3514 = vmatprep.subr.mxu0 0.0
      %3515 = vmatpush1.msra.mxu0 0.0
      %3516 = vmatprep.subr.mxu0 0.0
      %3517 = vmatpush1.msra.mxu0 0.0
      %3518 = vmatprep.subr.mxu0 0.0
      %3519 = vmatpush1.msra.mxu0 0.0
      %3520 = vmatprep.subr.mxu0 0.0
      %3521 = vmatpush1.msra.mxu0 0.0
      %3522 = vmatprep.subr.mxu0 0.0
      %3523 = vmatpush1.msra.mxu0 0.0
      %3524 = vmatprep.subr.mxu0 0.0
      %3525 = vmatpush1.msra.mxu0 0.0
      %3526 = vmatprep.subr.mxu0 0.0
      %3527 = vmatpush1.msra.mxu0 0.0
      %3528 = vmatprep.subr.mxu0 0.0
      %3529 = vmatpush1.msra.mxu0 0.0
      %3530 = vmatprep.subr.mxu0 0.0
      %3531 = vmatpush1.msra.mxu0 0.0
      %3532 = vmatprep.subr.mxu0 0.0
      %3533 = vmatpush1.msra.mxu0 0.0
      %3534 = vmatprep.subr.mxu0 0.0
      %3535 = vmatpush1.msra.mxu0 0.0
      %3536 = vmatprep.subr.mxu0 0.0
      %3537 = vmatpush1.msra.mxu0 0.0
      %3538 = vmatprep.mubr.f32.mxu0 0.0
      %3539 = vmatmul.mubr.f32.gmra.mrb[0].mxu0 %v3472
      %v3540 = vpop.f32.mrb[0].mxu0
      %v3541 = vadd.f32 0.0, %v3540
      %v3542 = vpop.f32.mrb[0].mxu0
      %3543 = vdwg.mxu0
      %v3544 = vmax.f32 %v3541, 0.0
      %v3546 = vsel %vm666, %v3544, 0
      %v3549 = vsel %vm670, %v3399, 0
      %3551 = vmatprep.subr.mxu0 0.0
      %3552 = vmatpush1.msra.mxu0 %v3398
      %3553 = vmatprep.subr.mxu0 0.0
      %3554 = vmatpush1.msra.mxu0 %v3549
      %3555 = vmatprep.subr.mxu0 0.0
      %3556 = vmatpush1.msra.mxu0 0.0
      %3557 = vmatprep.subr.mxu0 0.0
      %3558 = vmatpush1.msra.mxu0 0.0
      %3559 = vmatprep.subr.mxu0 0.0
      %3560 = vmatpush1.msra.mxu0 0.0
      %3561 = vmatprep.subr.mxu0 0.0
      %3562 = vmatpush1.msra.mxu0 0.0
      %3563 = vmatprep.subr.mxu0 0.0
      %3564 = vmatpush1.msra.mxu0 0.0
      %3565 = vmatprep.subr.mxu0 0.0
      %3566 = vmatpush1.msra.mxu0 0.0
      %3567 = vmatprep.subr.mxu0 0.0
      %3568 = vmatpush1.msra.mxu0 0.0
      %3569 = vmatprep.subr.mxu0 0.0
      %3570 = vmatpush1.msra.mxu0 0.0
      %3571 = vmatprep.subr.mxu0 0.0
      %3572 = vmatpush1.msra.mxu0 0.0
      %3573 = vmatprep.subr.mxu0 0.0
      %3574 = vmatpush1.msra.mxu0 0.0
      %3575 = vmatprep.subr.mxu0 0.0
      %3576 = vmatpush1.msra.mxu0 0.0
      %3577 = vmatprep.subr.mxu0 0.0
      %3578 = vmatpush1.msra.mxu0 0.0
      %3579 = vmatprep.subr.mxu0 0.0
      %3580 = vmatpush1.msra.mxu0 0.0
      %3581 = vmatprep.subr.mxu0 0.0
      %3582 = vmatpush1.msra.mxu0 0.0
      %3583 = vmatprep.subr.mxu0 0.0
      %3584 = vmatpush1.msra.mxu0 0.0
      %3585 = vmatprep.subr.mxu0 0.0
      %3586 = vmatpush1.msra.mxu0 0.0
      %3587 = vmatprep.subr.mxu0 0.0
      %3588 = vmatpush1.msra.mxu0 0.0
      %3589 = vmatprep.subr.mxu0 0.0
      %3590 = vmatpush1.msra.mxu0 0.0
      %3591 = vmatprep.subr.mxu0 0.0
      %3592 = vmatpush1.msra.mxu0 0.0
      %3593 = vmatprep.subr.mxu0 0.0
      %3594 = vmatpush1.msra.mxu0 0.0
      %3595 = vmatprep.subr.mxu0 0.0
      %3596 = vmatpush1.msra.mxu0 0.0
      %3597 = vmatprep.subr.mxu0 0.0
      %3598 = vmatpush1.msra.mxu0 0.0
      %3599 = vmatprep.subr.mxu0 0.0
      %3600 = vmatpush1.msra.mxu0 0.0
      %3601 = vmatprep.subr.mxu0 0.0
      %3602 = vmatpush1.msra.mxu0 0.0
      %3603 = vmatprep.subr.mxu0 0.0
      %3604 = vmatpush1.msra.mxu0 0.0
      %3605 = vmatprep.subr.mxu0 0.0
      %3606 = vmatpush1.msra.mxu0 0.0
      %3607 = vmatprep.subr.mxu0 0.0
      %3608 = vmatpush1.msra.mxu0 0.0
      %3609 = vmatprep.subr.mxu0 0.0
      %3610 = vmatpush1.msra.mxu0 0.0
      %3611 = vmatprep.subr.mxu0 0.0
      %3612 = vmatpush1.msra.mxu0 0.0
      %3613 = vmatprep.subr.mxu0 0.0
      %3614 = vmatpush1.msra.mxu0 0.0
      %3615 = vmatprep.mubr.f32.mxu0 0.0
      %3616 = vmatmul.mubr.f32.gmra.mrb[0].mxu0 %v3546
      %v3617 = vpop.f32.mrb[0].mxu0
      %v3618 = vadd.f32 %v3400, %v3617
      %v3619 = vpop.f32.mrb[0].mxu0
      %3620 = vdwg.mxu0
      %v3621 = vmul.f32 %v3618, 0.029411765
      %v3622 = vsel %vm745, %v3621, -inf
      %3623 = vmax.xlane.f32.xlu0 %v3622
      %v3624 = vpop.xlane.xlu0 %3623
      %v3625 = vsub.f32 %v3621, %v3624
      %v3626 = vmul.f32 %v3625, 1.442695
      %v3627 = vpow.pop %v3626
      %v3628 = vsel %vm745, %v3627, 0.0
      %3629 = vadd.xlane.f32.xlu0 %v3628
      %v3630 = vpop.xlane.xlu0 %3629
      %v3631 = vrcp.pop %v3630
      %v3632 = vmul.f32 %v3627, %v3631
      %v3633 = vld [vmem:[%s11] sm:$0xf]
      %v3635 = vsel %vm758, %v3632, 0
      %v3638 = vsel %vm762, %v3633, 0
      %3640 = vmatprep.subr.mxu0 0.0
      %3641 = vmatpush1.msra.mxu0 %v3638
      %3642 = vmatprep.subr.mxu0 0.0
      %3643 = vmatpush1.msra.mxu0 0.0
      %3644 = vmatprep.subr.mxu0 0.0
      %3645 = vmatpush1.msra.mxu0 0.0
      %3646 = vmatprep.subr.mxu0 0.0
      %3647 = vmatpush1.msra.mxu0 0.0
      %3648 = vmatprep.subr.mxu0 0.0
      %3649 = vmatpush1.msra.mxu0 0.0
      %3650 = vmatprep.subr.mxu0 0.0
      %3651 = vmatpush1.msra.mxu0 0.0
      %3652 = vmatprep.subr.mxu0 0.0
      %3653 = vmatpush1.msra.mxu0 0.0
      %3654 = vmatprep.subr.mxu0 0.0
      %3655 = vmatpush1.msra.mxu0 0.0
      %3656 = vmatprep.subr.mxu0 0.0
      %3657 = vmatpush1.msra.mxu0 0.0
      %3658 = vmatprep.subr.mxu0 0.0
      %3659 = vmatpush1.msra.mxu0 0.0
      %3660 = vmatprep.subr.mxu0 0.0
      %3661 = vmatpush1.msra.mxu0 0.0
      %3662 = vmatprep.subr.mxu0 0.0
      %3663 = vmatpush1.msra.mxu0 0.0
      %3664 = vmatprep.subr.mxu0 0.0
      %3665 = vmatpush1.msra.mxu0 0.0
      %3666 = vmatprep.subr.mxu0 0.0
      %3667 = vmatpush1.msra.mxu0 0.0
      %3668 = vmatprep.subr.mxu0 0.0
      %3669 = vmatpush1.msra.mxu0 0.0
      %3670 = vmatprep.subr.mxu0 0.0
      %3671 = vmatpush1.msra.mxu0 0.0
      %3672 = vmatprep.subr.mxu0 0.0
      %3673 = vmatpush1.msra.mxu0 0.0
      %3674 = vmatprep.subr.mxu0 0.0
      %3675 = vmatpush1.msra.mxu0 0.0
      %3676 = vmatprep.subr.mxu0 0.0
      %3677 = vmatpush1.msra.mxu0 0.0
      %3678 = vmatprep.subr.mxu0 0.0
      %3679 = vmatpush1.msra.mxu0 0.0
      %3680 = vmatprep.subr.mxu0 0.0
      %3681 = vmatpush1.msra.mxu0 0.0
      %3682 = vmatprep.subr.mxu0 0.0
      %3683 = vmatpush1.msra.mxu0 0.0
      %3684 = vmatprep.subr.mxu0 0.0
      %3685 = vmatpush1.msra.mxu0 0.0
      %3686 = vmatprep.subr.mxu0 0.0
      %3687 = vmatpush1.msra.mxu0 0.0
      %3688 = vmatprep.subr.mxu0 0.0
      %3689 = vmatpush1.msra.mxu0 0.0
      %3690 = vmatprep.subr.mxu0 0.0
      %3691 = vmatpush1.msra.mxu0 0.0
      %3692 = vmatprep.subr.mxu0 0.0
      %3693 = vmatpush1.msra.mxu0 0.0
      %3694 = vmatprep.subr.mxu0 0.0
      %3695 = vmatpush1.msra.mxu0 0.0
      %3696 = vmatprep.subr.mxu0 0.0
      %3697 = vmatpush1.msra.mxu0 0.0
      %3698 = vmatprep.subr.mxu0 0.0
      %3699 = vmatpush1.msra.mxu0 0.0
      %3700 = vmatprep.subr.mxu0 0.0
      %3701 = vmatpush1.msra.mxu0 0.0
      %3702 = vmatprep.subr.mxu0 0.0
      %3703 = vmatpush1.msra.mxu0 0.0
      %3704 = vmatprep.mubr.f32.mxu0 0.0
      %3705 = vmatmul.mubr.f32.gmra.mrb[0].mxu0 %v3635
      %v3706 = vpop.f32.mrb[0].mxu0
      %v3707 = vadd.f32 0.0, %v3706
      %v3708 = vpop.f32.mrb[0].mxu0
      %3709 = vdwg.mxu0
      %3710 = vst.msk [vmem:[#allocation2] sm:$0xff] %vm520, 0.0
      %3711 = vst.msk [vmem:[#allocation2 + $0x8] sm:$0xff] %vm520, 0.0
      %3712 = vst.msk [vmem:[#allocation2 + $0x10] sm:$0x3] %vm838, 0.0
      %3713 = vst.msk [vmem:[#allocation2 + $0x18] sm:$0xff] %vm520, 0.0
      %3714 = vst.msk [vmem:[#allocation2 + $0x20] sm:$0xff] %vm520, 0.0
      %3715 = vst.msk [vmem:[#allocation2 + $0x28] sm:$0x3] %vm838, 0.0
      %3716 = vst.msk [vmem:[#allocation2 + $0x30] sm:$0xff] %vm520, 0.0
      %3717 = vst.msk [vmem:[#allocation2 + $0x38] sm:$0xff] %vm520, 0.0
      %3718 = vst.msk [vmem:[#allocation2 + $0x40] sm:$0x3] %vm838, 0.0
      %3719 = vst.msk [vmem:[#allocation2 + $0x48] sm:$0xff] %vm520, 0.0
      %3720 = vst.msk [vmem:[#allocation2 + $0x50] sm:$0xff] %vm520, 0.0
      %3721 = vst.msk [vmem:[#allocation2 + $0x58] sm:$0x3] %vm838, 0.0
      %3722 = vst.msk [vmem:[#allocation2 + $0x60] sm:$0xff] %vm520, 0.0
      %3723 = vst.msk [vmem:[#allocation2 + $0x68] sm:$0xff] %vm520, 0.0
      %3724 = vst.msk [vmem:[#allocation2 + $0x70] sm:$0x3] %vm838, 0.0
      %3725 = vst.msk [vmem:[#allocation2 + $0x78] sm:$0xff] %vm520, 0.0
      %3726 = vst.msk [vmem:[#allocation2 + $0x80] sm:$0xff] %vm520, 0.0
      %3727 = vst.msk [vmem:[#allocation2 + $0x88] sm:$0x3] %vm838, 0.0
      %3728 = vst.msk [vmem:[#allocation2 + $0x90] sm:$0xff] %vm520, 0.0
      %3729 = vst.msk [vmem:[#allocation2 + $0x98] sm:$0xff] %vm520, 0.0
      %3730 = vst.msk [vmem:[#allocation2 + $0xa0] sm:$0x3] %vm838, 0.0
      %3731 = vst.msk [vmem:[#allocation2 + $0xa8] sm:$0xff] %vm520, 0.0
      %3732 = vst.msk [vmem:[#allocation2 + $0xb0] sm:$0xff] %vm520, 0.0
      %3733 = vst.msk [vmem:[#allocation2 + $0xb8] sm:$0x3] %vm838, 0.0
      %3734 = vst.msk [vmem:[#allocation2 + $0xc0] sm:$0xff] %vm520, 0.0
      %3735 = vst.msk [vmem:[#allocation2 + $0xc8] sm:$0xff] %vm520, 0.0
      %3736 = vst.msk [vmem:[#allocation2 + $0xd0] sm:$0x3] %vm838, 0.0
      %3737 = vst.msk [vmem:[#allocation2 + $0xd8] sm:$0xff] %vm520, 0.0
      %3738 = vst.msk [vmem:[#allocation2 + $0xe0] sm:$0xff] %vm520, 0.0
      %3739 = vst.msk [vmem:[#allocation2 + $0xe8] sm:$0x3] %vm838, 0.0
      %3740 = vst.msk [vmem:[#allocation2 + $0xf0] sm:$0xff] %vm520, 0.0
      %3741 = vst.msk [vmem:[#allocation2 + $0xf8] sm:$0xff] %vm520, 0.0
      %3742 = vst.msk [vmem:[#allocation2 + $0x100] sm:$0x3] %vm838, 0.0
      %3743 = vst.msk [vmem:[#allocation2 + $0x108] sm:$0xff] %vm520, 0.0
      %3744 = vst.msk [vmem:[#allocation2 + $0x110] sm:$0xff] %vm520, 0.0
      %3745 = vst.msk [vmem:[#allocation2 + $0x118] sm:$0x3] %vm838, 0.0
      %3746 = vst.msk [vmem:[#allocation2 + $0x120] sm:$0xff] %vm520, 0.0
      %3747 = vst.msk [vmem:[#allocation2 + $0x128] sm:$0xff] %vm520, 0.0
      %3748 = vst.msk [vmem:[#allocation2 + $0x130] sm:$0x3] %vm838, 0.0
      %3749 = vst.msk [vmem:[#allocation2 + $0x138] sm:$0xff] %vm520, 0.0
      %3750 = vst.msk [vmem:[#allocation2 + $0x140] sm:$0xff] %vm520, 0.0
      %3751 = vst.msk [vmem:[#allocation2 + $0x148] sm:$0x3] %vm838, 0.0
      %3752 = vst.msk [vmem:[#allocation2 + $0x150] sm:$0xff] %vm520, 0.0
      %3753 = vst.msk [vmem:[#allocation2 + $0x158] sm:$0xff] %vm520, 0.0
      %3754 = vst.msk [vmem:[#allocation2 + $0x160] sm:$0x3] %vm838, 0.0
      %3755 = vst.msk [vmem:[#allocation2 + $0x168] sm:$0xff] %vm520, 0.0
      %3756 = vst.msk [vmem:[#allocation2 + $0x170] sm:$0xff] %vm520, 0.0
      %3757 = vst.msk [vmem:[#allocation2 + $0x178] sm:$0x3] %vm838, 0.0
      %3758 = vst.msk [vmem:[#allocation2 + $0x180] sm:$0xff] %vm520, 0.0
      %3759 = vst.msk [vmem:[#allocation2 + $0x188] sm:$0xff] %vm520, 0.0
      %3760 = vst.msk [vmem:[#allocation2 + $0x190] sm:$0x3] %vm838, 0.0
      %3761 = vst.msk [vmem:[#allocation2 + $0x198] sm:$0xff] %vm520, 0.0
      %3762 = vst.msk [vmem:[#allocation2 + $0x1a0] sm:$0xff] %vm520, 0.0
      %3763 = vst.msk [vmem:[#allocation2 + $0x1a8] sm:$0x3] %vm838, 0.0
      %3764 = vst.msk [vmem:[%s891 + $0x1] sm:$0xff] %vm520, %v3362
      %3765 = vst.msk [vmem:[%s891 + $0x9] sm:$0xff] %vm520, %v3363
      %3766 = vst.msk [vmem:[%s891 + $0x19] sm:$0xff] %vm520, %v3364
      %3767 = vst.msk [vmem:[%s891 + $0x21] sm:$0xff] %vm520, %v3365
      %3768 = vst.msk [vmem:[%s891 + $0x31] sm:$0xff] %vm520, %v3366
      %3769 = vst.msk [vmem:[%s891 + $0x39] sm:$0xff] %vm520, %v3367
      %3770 = vst.msk [vmem:[%s891 + $0x49] sm:$0xff] %vm520, %v3368
      %3771 = vst.msk [vmem:[%s891 + $0x51] sm:$0xff] %vm520, %v3369
      %3772 = vst.msk [vmem:[%s891 + $0x61] sm:$0xff] %vm520, %v3370
      %3773 = vst.msk [vmem:[%s891 + $0x69] sm:$0xff] %vm520, %v3371
      %3774 = vst.msk [vmem:[%s891 + $0x79] sm:$0xff] %vm520, %v3372
      %3775 = vst.msk [vmem:[%s891 + $0x81] sm:$0xff] %vm520, %v3373
      %3776 = vst.msk [vmem:[%s891 + $0x91] sm:$0xff] %vm520, %v3374
      %3777 = vst.msk [vmem:[%s891 + $0x99] sm:$0xff] %vm520, %v3375
      %3778 = vst.msk [vmem:[%s891 + $0xa9] sm:$0xff] %vm520, %v3376
      %3779 = vst.msk [vmem:[%s891 + $0xb1] sm:$0xff] %vm520, %v3377
      %3780 = vst.msk [vmem:[%s891 + $0xc1] sm:$0xff] %vm520, %v3378
      %3781 = vst.msk [vmem:[%s891 + $0xc9] sm:$0xff] %vm520, %v3379
      %3782 = vst.msk [vmem:[%s891 + $0xd9] sm:$0xff] %vm520, %v3380
      %3783 = vst.msk [vmem:[%s891 + $0xe1] sm:$0xff] %vm520, %v3381
      %3784 = vst.msk [vmem:[%s891 + $0xf1] sm:$0xff] %vm520, %v3382
      %3785 = vst.msk [vmem:[%s891 + $0xf9] sm:$0xff] %vm520, %v3383
      %3786 = vst.msk [vmem:[%s891 + $0x109] sm:$0xff] %vm520, %v3384
      %3787 = vst.msk [vmem:[%s891 + $0x111] sm:$0xff] %vm520, %v3385
      %3788 = vst.msk [vmem:[%s891 + $0x121] sm:$0xff] %vm520, %v3386
      %3789 = vst.msk [vmem:[%s891 + $0x129] sm:$0xff] %vm520, %v3387
      %3790 = vst.msk [vmem:[%s891 + $0x139] sm:$0xff] %vm520, %v3388
      %3791 = vst.msk [vmem:[%s891 + $0x141] sm:$0xff] %vm520, %v3389
      %3792 = vst.msk [vmem:[%s891 + $0x151] sm:$0xff] %vm520, %v3390
      %3793 = vst.msk [vmem:[%s891 + $0x159] sm:$0xff] %vm520, %v3391
      %3794 = vst.msk [vmem:[%s891 + $0x169] sm:$0xff] %vm520, %v3392
      %3795 = vst.msk [vmem:[%s891 + $0x171] sm:$0xff] %vm520, %v3393
      %v3796 = vld [vmem:[#allocation2] sm:$0xff]
      %v3797 = vld [vmem:[#allocation2 + $0x8] sm:$0xff]
      %v3798 = vld [vmem:[#allocation2 + $0x18] sm:$0xff]
      %v3799 = vld [vmem:[#allocation2 + $0x20] sm:$0xff]
      %v3800 = vld [vmem:[#allocation2 + $0x30] sm:$0xff]
      %v3801 = vld [vmem:[#allocation2 + $0x38] sm:$0xff]
      %v3802 = vld [vmem:[#allocation2 + $0x48] sm:$0xff]
      %v3803 = vld [vmem:[#allocation2 + $0x50] sm:$0xff]
      %v3804 = vld [vmem:[#allocation2 + $0x60] sm:$0xff]
      %v3805 = vld [vmem:[#allocation2 + $0x68] sm:$0xff]
      %v3806 = vld [vmem:[#allocation2 + $0x78] sm:$0xff]
      %v3807 = vld [vmem:[#allocation2 + $0x80] sm:$0xff]
      %v3808 = vld [vmem:[#allocation2 + $0x90] sm:$0xff]
      %v3809 = vld [vmem:[#allocation2 + $0x98] sm:$0xff]
      %v3810 = vld [vmem:[#allocation2 + $0xa8] sm:$0xff]
      %v3811 = vld [vmem:[#allocation2 + $0xb0] sm:$0xff]
      %v3812 = vld [vmem:[#allocation2 + $0xc0] sm:$0xff]
      %v3813 = vld [vmem:[#allocation2 + $0xc8] sm:$0xff]
      %v3814 = vld [vmem:[#allocation2 + $0xd8] sm:$0xff]
      %v3815 = vld [vmem:[#allocation2 + $0xe0] sm:$0xff]
      %v3816 = vld [vmem:[#allocation2 + $0xf0] sm:$0xff]
      %v3817 = vld [vmem:[#allocation2 + $0xf8] sm:$0xff]
      %v3818 = vld [vmem:[#allocation2 + $0x108] sm:$0xff]
      %v3819 = vld [vmem:[#allocation2 + $0x110] sm:$0xff]
      %v3820 = vld [vmem:[#allocation2 + $0x120] sm:$0xff]
      %v3821 = vld [vmem:[#allocation2 + $0x128] sm:$0xff]
      %v3822 = vld [vmem:[#allocation2 + $0x138] sm:$0xff]
      %v3823 = vld [vmem:[#allocation2 + $0x140] sm:$0xff]
      %v3824 = vld [vmem:[#allocation2 + $0x150] sm:$0xff]
      %v3825 = vld [vmem:[#allocation2 + $0x158] sm:$0xff]
      %v3826 = vld [vmem:[#allocation2 + $0x168] sm:$0xff]
      %v3827 = vld [vmem:[#allocation2 + $0x170] sm:$0xff]
      %3828 = vst.msk [vmem:[#allocation3] sm:$0xff] %vm520, %v3796
      %3829 = vst.msk [vmem:[#allocation3 + $0x18] sm:$0xff] %vm520, %v3797
      %3830 = vst.msk [vmem:[#allocation3 + $0x30] sm:$0xff] %vm520, %v3798
      %3831 = vst.msk [vmem:[#allocation3 + $0x48] sm:$0xff] %vm520, %v3799
      %3832 = vst.msk [vmem:[#allocation3 + $0x60] sm:$0xff] %vm520, %v3800
      %3833 = vst.msk [vmem:[#allocation3 + $0x78] sm:$0xff] %vm520, %v3801
      %3834 = vst.msk [vmem:[#allocation3 + $0x90] sm:$0xff] %vm520, %v3802
      %3835 = vst.msk [vmem:[#allocation3 + $0xa8] sm:$0xff] %vm520, %v3803
      %3836 = vst.msk [vmem:[#allocation3 + $0xc0] sm:$0xff] %vm520, %v3804
      %3837 = vst.msk [vmem:[#allocation3 + $0xd8] sm:$0xff] %vm520, %v3805
      %3838 = vst.msk [vmem:[#allocation3 + $0xf0] sm:$0xff] %vm520, %v3806
      %3839 = vst.msk [vmem:[#allocation3 + $0x108] sm:$0xff] %vm520, %v3807
      %3840 = vst.msk [vmem:[#allocation3 + $0x120] sm:$0xff] %vm520, %v3808
      %3841 = vst.msk [vmem:[#allocation3 + $0x138] sm:$0xff] %vm520, %v3809
      %3842 = vst.msk [vmem:[#allocation3 + $0x150] sm:$0xff] %vm520, %v3810
      %3843 = vst.msk [vmem:[#allocation3 + $0x168] sm:$0xff] %vm520, %v3811
      %3844 = vst.msk [vmem:[#allocation3 + $0x180] sm:$0xff] %vm520, %v3812
      %3845 = vst.msk [vmem:[#allocation3 + $0x198] sm:$0xff] %vm520, %v3813
      %3846 = vst.msk [vmem:[#allocation3 + $0x1b0] sm:$0xff] %vm520, %v3814
      %3847 = vst.msk [vmem:[#allocation3 + $0x1c8] sm:$0xff] %vm520, %v3815
      %3848 = vst.msk [vmem:[#allocation3 + $0x1e0] sm:$0xff] %vm520, %v3816
      %3849 = vst.msk [vmem:[#allocation3 + $0x1f8] sm:$0xff] %vm520, %v3817
      %3850 = vst.msk [vmem:[#allocation3 + $0x210] sm:$0xff] %vm520, %v3818
      %3851 = vst.msk [vmem:[#allocation3 + $0x228] sm:$0xff] %vm520, %v3819
      %3852 = vst.msk [vmem:[#allocation3 + $0x240] sm:$0xff] %vm520, %v3820
      %3853 = vst.msk [vmem:[#allocation3 + $0x258] sm:$0xff] %vm520, %v3821
      %3854 = vst.msk [vmem:[#allocation3 + $0x270] sm:$0xff] %vm520, %v3822
      %3855 = vst.msk [vmem:[#allocation3 + $0x288] sm:$0xff] %vm520, %v3823
      %3856 = vst.msk [vmem:[#allocation3 + $0x2a0] sm:$0xff] %vm520, %v3824
      %3857 = vst.msk [vmem:[#allocation3 + $0x2b8] sm:$0xff] %vm520, %v3825
      %3858 = vst.msk [vmem:[#allocation3 + $0x2d0] sm:$0xff] %vm520, %v3826
      %3859 = vst.msk [vmem:[#allocation3 + $0x2e8] sm:$0xff] %vm520, %v3827
      %v3860 = vld [vmem:[#allocation2 + $0x1] sm:$0xff]
      %v3861 = vld [vmem:[#allocation2 + $0x9] sm:$0xff]
      %v3862 = vld [vmem:[#allocation2 + $0x19] sm:$0xff]
      %v3863 = vld [vmem:[#allocation2 + $0x21] sm:$0xff]
      %v3864 = vld [vmem:[#allocation2 + $0x31] sm:$0xff]
      %v3865 = vld [vmem:[#allocation2 + $0x39] sm:$0xff]
      %v3866 = vld [vmem:[#allocation2 + $0x49] sm:$0xff]
      %v3867 = vld [vmem:[#allocation2 + $0x51] sm:$0xff]
      %v3868 = vld [vmem:[#allocation2 + $0x61] sm:$0xff]
      %v3869 = vld [vmem:[#allocation2 + $0x69] sm:$0xff]
      %v3870 = vld [vmem:[#allocation2 + $0x79] sm:$0xff]
      %v3871 = vld [vmem:[#allocation2 + $0x81] sm:$0xff]
      %v3872 = vld [vmem:[#allocation2 + $0x91] sm:$0xff]
      %v3873 = vld [vmem:[#allocation2 + $0x99] sm:$0xff]
      %v3874 = vld [vmem:[#allocation2 + $0xa9] sm:$0xff]
      %v3875 = vld [vmem:[#allocation2 + $0xb1] sm:$0xff]
      %v3876 = vld [vmem:[#allocation2 + $0xc1] sm:$0xff]
      %v3877 = vld [vmem:[#allocation2 + $0xc9] sm:$0xff]
      %v3878 = vld [vmem:[#allocation2 + $0xd9] sm:$0xff]
      %v3879 = vld [vmem:[#allocation2 + $0xe1] sm:$0xff]
      %v3880 = vld [vmem:[#allocation2 + $0xf1] sm:$0xff]
      %v3881 = vld [vmem:[#allocation2 + $0xf9] sm:$0xff]
      %v3882 = vld [vmem:[#allocation2 + $0x109] sm:$0xff]
      %v3883 = vld [vmem:[#allocation2 + $0x111] sm:$0xff]
      %v3884 = vld [vmem:[#allocation2 + $0x121] sm:$0xff]
      %v3885 = vld [vmem:[#allocation2 + $0x129] sm:$0xff]
      %v3886 = vld [vmem:[#allocation2 + $0x139] sm:$0xff]
      %v3887 = vld [vmem:[#allocation2 + $0x141] sm:$0xff]
      %v3888 = vld [vmem:[#allocation2 + $0x151] sm:$0xff]
      %v3889 = vld [vmem:[#allocation2 + $0x159] sm:$0xff]
      %v3890 = vld [vmem:[#allocation2 + $0x169] sm:$0xff]
      %v3891 = vld [vmem:[#allocation2 + $0x171] sm:$0xff]
      %3924 = vrot.lane.b32.xlu0 %v3860, 32
      %v3925 = vpop.permute.xlu0 %3924
      %3926 = vrot.lane.b32.xlu0 %v3861, 32
      %v3927 = vpop.permute.xlu0 %3926
      %3928 = vrot.lane.b32.xlu0 %v3862, 32
      %v3929 = vpop.permute.xlu0 %3928
      %3930 = vrot.lane.b32.xlu0 %v3863, 32
      %v3931 = vpop.permute.xlu0 %3930
      %3932 = vrot.lane.b32.xlu0 %v3864, 32
      %v3933 = vpop.permute.xlu0 %3932
      %3934 = vrot.lane.b32.xlu0 %v3865, 32
      %v3935 = vpop.permute.xlu0 %3934
      %3936 = vrot.lane.b32.xlu0 %v3866, 32
      %v3937 = vpop.permute.xlu0 %3936
      %3938 = vrot.lane.b32.xlu0 %v3867, 32
      %v3939 = vpop.permute.xlu0 %3938
      %3940 = vrot.lane.b32.xlu0 %v3868, 32
      %v3941 = vpop.permute.xlu0 %3940
      %3942 = vrot.lane.b32.xlu0 %v3869, 32
      %v3943 = vpop.permute.xlu0 %3942
      %3944 = vrot.lane.b32.xlu0 %v3870, 32
      %v3945 = vpop.permute.xlu0 %3944
      %3946 = vrot.lane.b32.xlu0 %v3871, 32
      %v3947 = vpop.permute.xlu0 %3946
      %3948 = vrot.lane.b32.xlu0 %v3872, 32
      %v3949 = vpop.permute.xlu0 %3948
      %3950 = vrot.lane.b32.xlu0 %v3873, 32
      %v3951 = vpop.permute.xlu0 %3950
      %3952 = vrot.lane.b32.xlu0 %v3874, 32
      %v3953 = vpop.permute.xlu0 %3952
      %3954 = vrot.lane.b32.xlu0 %v3875, 32
      %v3955 = vpop.permute.xlu0 %3954
      %3956 = vrot.lane.b32.xlu0 %v3876, 32
      %v3957 = vpop.permute.xlu0 %3956
      %3958 = vrot.lane.b32.xlu0 %v3877, 32
      %v3959 = vpop.permute.xlu0 %3958
      %3960 = vrot.lane.b32.xlu0 %v3878, 32
      %v3961 = vpop.permute.xlu0 %3960
      %3962 = vrot.lane.b32.xlu0 %v3879, 32
      %v3963 = vpop.permute.xlu0 %3962
      %3964 = vrot.lane.b32.xlu0 %v3880, 32
      %v3965 = vpop.permute.xlu0 %3964
      %3966 = vrot.lane.b32.xlu0 %v3881, 32
      %v3967 = vpop.permute.xlu0 %3966
      %3968 = vrot.lane.b32.xlu0 %v3882, 32
      %v3969 = vpop.permute.xlu0 %3968
      %3970 = vrot.lane.b32.xlu0 %v3883, 32
      %v3971 = vpop.permute.xlu0 %3970
      %3972 = vrot.lane.b32.xlu0 %v3884, 32
      %v3973 = vpop.permute.xlu0 %3972
      %3974 = vrot.lane.b32.xlu0 %v3885, 32
      %v3975 = vpop.permute.xlu0 %3974
      %3976 = vrot.lane.b32.xlu0 %v3886, 32
      %v3977 = vpop.permute.xlu0 %3976
      %3978 = vrot.lane.b32.xlu0 %v3887, 32
      %v3979 = vpop.permute.xlu0 %3978
      %3980 = vrot.lane.b32.xlu0 %v3888, 32
      %v3981 = vpop.permute.xlu0 %3980
      %3982 = vrot.lane.b32.xlu0 %v3889, 32
      %v3983 = vpop.permute.xlu0 %3982
      %3984 = vrot.lane.b32.xlu0 %v3890, 32
      %v3985 = vpop.permute.xlu0 %3984
      %3986 = vrot.lane.b32.xlu0 %v3891, 32
      %v3987 = vpop.permute.xlu0 %3986
      %4020 = vst.msk [vmem:[#allocation3] sm:$0xff] %vm1148, %v3925
      %4021 = vst.msk [vmem:[#allocation3 + $0x18] sm:$0xff] %vm1148, %v3927
      %4022 = vst.msk [vmem:[#allocation3 + $0x30] sm:$0xff] %vm1148, %v3929
      %4023 = vst.msk [vmem:[#allocation3 + $0x48] sm:$0xff] %vm1148, %v3931
      %4024 = vst.msk [vmem:[#allocation3 + $0x60] sm:$0xff] %vm1148, %v3933
      %4025 = vst.msk [vmem:[#allocation3 + $0x78] sm:$0xff] %vm1148, %v3935
      %4026 = vst.msk [vmem:[#allocation3 + $0x90] sm:$0xff] %vm1148, %v3937
      %4027 = vst.msk [vmem:[#allocation3 + $0xa8] sm:$0xff] %vm1148, %v3939
      %4028 = vst.msk [vmem:[#allocation3 + $0xc0] sm:$0xff] %vm1148, %v3941
      %4029 = vst.msk [vmem:[#allocation3 + $0xd8] sm:$0xff] %vm1148, %v3943
      %4030 = vst.msk [vmem:[#allocation3 + $0xf0] sm:$0xff] %vm1148, %v3945
      %4031 = vst.msk [vmem:[#allocation3 + $0x108] sm:$0xff] %vm1148, %v3947
      %4032 = vst.msk [vmem:[#allocation3 + $0x120] sm:$0xff] %vm1148, %v3949
      %4033 = vst.msk [vmem:[#allocation3 + $0x138] sm:$0xff] %vm1148, %v3951
      %4034 = vst.msk [vmem:[#allocation3 + $0x150] sm:$0xff] %vm1148, %v3953
      %4035 = vst.msk [vmem:[#allocation3 + $0x168] sm:$0xff] %vm1148, %v3955
      %4036 = vst.msk [vmem:[#allocation3 + $0x180] sm:$0xff] %vm1148, %v3957
      %4037 = vst.msk [vmem:[#allocation3 + $0x198] sm:$0xff] %vm1148, %v3959
      %4038 = vst.msk [vmem:[#allocation3 + $0x1b0] sm:$0xff] %vm1148, %v3961
      %4039 = vst.msk [vmem:[#allocation3 + $0x1c8] sm:$0xff] %vm1148, %v3963
      %4040 = vst.msk [vmem:[#allocation3 + $0x1e0] sm:$0xff] %vm1148, %v3965
      %4041 = vst.msk [vmem:[#allocation3 + $0x1f8] sm:$0xff] %vm1148, %v3967
      %4042 = vst.msk [vmem:[#allocation3 + $0x210] sm:$0xff] %vm1148, %v3969
      %4043 = vst.msk [vmem:[#allocation3 + $0x228] sm:$0xff] %vm1148, %v3971
      %4044 = vst.msk [vmem:[#allocation3 + $0x240] sm:$0xff] %vm1148, %v3973
      %4045 = vst.msk [vmem:[#allocation3 + $0x258] sm:$0xff] %vm1148, %v3975
      %4046 = vst.msk [vmem:[#allocation3 + $0x270] sm:$0xff] %vm1148, %v3977
      %4047 = vst.msk [vmem:[#allocation3 + $0x288] sm:$0xff] %vm1148, %v3979
      %4048 = vst.msk [vmem:[#allocation3 + $0x2a0] sm:$0xff] %vm1148, %v3981
      %4049 = vst.msk [vmem:[#allocation3 + $0x2b8] sm:$0xff] %vm1148, %v3983
      %4050 = vst.msk [vmem:[#allocation3 + $0x2d0] sm:$0xff] %vm1148, %v3985
      %4051 = vst.msk [vmem:[#allocation3 + $0x2e8] sm:$0xff] %vm1148, %v3987
      %v4052 = vld [vmem:[#allocation2 + $0x2] sm:$0xff]
      %v4053 = vld [vmem:[#allocation2 + $0xa] sm:$0xff]
      %v4054 = vld [vmem:[#allocation2 + $0x1a] sm:$0xff]
      %v4055 = vld [vmem:[#allocation2 + $0x22] sm:$0xff]
      %v4056 = vld [vmem:[#allocation2 + $0x32] sm:$0xff]
      %v4057 = vld [vmem:[#allocation2 + $0x3a] sm:$0xff]
      %v4058 = vld [vmem:[#allocation2 + $0x4a] sm:$0xff]
      %v4059 = vld [vmem:[#allocation2 + $0x52] sm:$0xff]
      %v4060 = vld [vmem:[#allocation2 + $0x62] sm:$0xff]
      %v4061 = vld [vmem:[#allocation2 + $0x6a] sm:$0xff]
      %v4062 = vld [vmem:[#allocation2 + $0x7a] sm:$0xff]
      %v4063 = vld [vmem:[#allocation2 + $0x82] sm:$0xff]
      %v4064 = vld [vmem:[#allocation2 + $0x92] sm:$0xff]
      %v4065 = vld [vmem:[#allocation2 + $0x9a] sm:$0xff]
      %v4066 = vld [vmem:[#allocation2 + $0xaa] sm:$0xff]
      %v4067 = vld [vmem:[#allocation2 + $0xb2] sm:$0xff]
      %v4068 = vld [vmem:[#allocation2 + $0xc2] sm:$0xff]
      %v4069 = vld [vmem:[#allocation2 + $0xca] sm:$0xff]
      %v4070 = vld [vmem:[#allocation2 + $0xda] sm:$0xff]
      %v4071 = vld [vmem:[#allocation2 + $0xe2] sm:$0xff]
      %v4072 = vld [vmem:[#allocation2 + $0xf2] sm:$0xff]
      %v4073 = vld [vmem:[#allocation2 + $0xfa] sm:$0xff]
      %v4074 = vld [vmem:[#allocation2 + $0x10a] sm:$0xff]
      %v4075 = vld [vmem:[#allocation2 + $0x112] sm:$0xff]
      %v4076 = vld [vmem:[#allocation2 + $0x122] sm:$0xff]
      %v4077 = vld [vmem:[#allocation2 + $0x12a] sm:$0xff]
      %v4078 = vld [vmem:[#allocation2 + $0x13a] sm:$0xff]
      %v4079 = vld [vmem:[#allocation2 + $0x142] sm:$0xff]
      %v4080 = vld [vmem:[#allocation2 + $0x152] sm:$0xff]
      %v4081 = vld [vmem:[#allocation2 + $0x15a] sm:$0xff]
      %v4082 = vld [vmem:[#allocation2 + $0x16a] sm:$0xff]
      %v4083 = vld [vmem:[#allocation2 + $0x172] sm:$0xff]
      %4116 = vrot.lane.b32.xlu0 %v4052, 64
      %v4117 = vpop.permute.xlu0 %4116
      %4118 = vrot.lane.b32.xlu0 %v4053, 64
      %v4119 = vpop.permute.xlu0 %4118
      %4120 = vrot.lane.b32.xlu0 %v4054, 64
      %v4121 = vpop.permute.xlu0 %4120
      %4122 = vrot.lane.b32.xlu0 %v4055, 64
      %v4123 = vpop.permute.xlu0 %4122
      %4124 = vrot.lane.b32.xlu0 %v4056, 64
      %v4125 = vpop.permute.xlu0 %4124
      %4126 = vrot.lane.b32.xlu0 %v4057, 64
      %v4127 = vpop.permute.xlu0 %4126
      %4128 = vrot.lane.b32.xlu0 %v4058, 64
      %v4129 = vpop.permute.xlu0 %4128
      %4130 = vrot.lane.b32.xlu0 %v4059, 64
      %v4131 = vpop.permute.xlu0 %4130
      %4132 = vrot.lane.b32.xlu0 %v4060, 64
      %v4133 = vpop.permute.xlu0 %4132
      %4134 = vrot.lane.b32.xlu0 %v4061, 64
      %v4135 = vpop.permute.xlu0 %4134
      %4136 = vrot.lane.b32.xlu0 %v4062, 64
      %v4137 = vpop.permute.xlu0 %4136
      %4138 = vrot.lane.b32.xlu0 %v4063, 64
      %v4139 = vpop.permute.xlu0 %4138
      %4140 = vrot.lane.b32.xlu0 %v4064, 64
      %v4141 = vpop.permute.xlu0 %4140
      %4142 = vrot.lane.b32.xlu0 %v4065, 64
      %v4143 = vpop.permute.xlu0 %4142
      %4144 = vrot.lane.b32.xlu0 %v4066, 64
      %v4145 = vpop.permute.xlu0 %4144
      %4146 = vrot.lane.b32.xlu0 %v4067, 64
      %v4147 = vpop.permute.xlu0 %4146
      %4148 = vrot.lane.b32.xlu0 %v4068, 64
      %v4149 = vpop.permute.xlu0 %4148
      %4150 = vrot.lane.b32.xlu0 %v4069, 64
      %v4151 = vpop.permute.xlu0 %4150
      %4152 = vrot.lane.b32.xlu0 %v4070, 64
      %v4153 = vpop.permute.xlu0 %4152
      %4154 = vrot.lane.b32.xlu0 %v4071, 64
      %v4155 = vpop.permute.xlu0 %4154
      %4156 = vrot.lane.b32.xlu0 %v4072, 64
      %v4157 = vpop.permute.xlu0 %4156
      %4158 = vrot.lane.b32.xlu0 %v4073, 64
      %v4159 = vpop.permute.xlu0 %4158
      %4160 = vrot.lane.b32.xlu0 %v4074, 64
      %v4161 = vpop.permute.xlu0 %4160
      %4162 = vrot.lane.b32.xlu0 %v4075, 64
      %v4163 = vpop.permute.xlu0 %4162
      %4164 = vrot.lane.b32.xlu0 %v4076, 64
      %v4165 = vpop.permute.xlu0 %4164
      %4166 = vrot.lane.b32.xlu0 %v4077, 64
      %v4167 = vpop.permute.xlu0 %4166
      %4168 = vrot.lane.b32.xlu0 %v4078, 64
      %v4169 = vpop.permute.xlu0 %4168
      %4170 = vrot.lane.b32.xlu0 %v4079, 64
      %v4171 = vpop.permute.xlu0 %4170
      %4172 = vrot.lane.b32.xlu0 %v4080, 64
      %v4173 = vpop.permute.xlu0 %4172
      %4174 = vrot.lane.b32.xlu0 %v4081, 64
      %v4175 = vpop.permute.xlu0 %4174
      %4176 = vrot.lane.b32.xlu0 %v4082, 64
      %v4177 = vpop.permute.xlu0 %4176
      %4178 = vrot.lane.b32.xlu0 %v4083, 64
      %v4179 = vpop.permute.xlu0 %4178
      %4212 = vst.msk [vmem:[#allocation3] sm:$0xff] %vm1341, %v4117
      %4213 = vst.msk [vmem:[#allocation3 + $0x18] sm:$0xff] %vm1341, %v4119
      %4214 = vst.msk [vmem:[#allocation3 + $0x30] sm:$0xff] %vm1341, %v4121
      %4215 = vst.msk [vmem:[#allocation3 + $0x48] sm:$0xff] %vm1341, %v4123
      %4216 = vst.msk [vmem:[#allocation3 + $0x60] sm:$0xff] %vm1341, %v4125
      %4217 = vst.msk [vmem:[#allocation3 + $0x78] sm:$0xff] %vm1341, %v4127
      %4218 = vst.msk [vmem:[#allocation3 + $0x90] sm:$0xff] %vm1341, %v4129
      %4219 = vst.msk [vmem:[#allocation3 + $0xa8] sm:$0xff] %vm1341, %v4131
      %4220 = vst.msk [vmem:[#allocation3 + $0xc0] sm:$0xff] %vm1341, %v4133
      %4221 = vst.msk [vmem:[#allocation3 + $0xd8] sm:$0xff] %vm1341, %v4135
      %4222 = vst.msk [vmem:[#allocation3 + $0xf0] sm:$0xff] %vm1341, %v4137
      %4223 = vst.msk [vmem:[#allocation3 + $0x108] sm:$0xff] %vm1341, %v4139
      %4224 = vst.msk [vmem:[#allocation3 + $0x120] sm:$0xff] %vm1341, %v4141
      %4225 = vst.msk [vmem:[#allocation3 + $0x138] sm:$0xff] %vm1341, %v4143
      %4226 = vst.msk [vmem:[#allocation3 + $0x150] sm:$0xff] %vm1341, %v4145
      %4227 = vst.msk [vmem:[#allocation3 + $0x168] sm:$0xff] %vm1341, %v4147
      %4228 = vst.msk [vmem:[#allocation3 + $0x180] sm:$0xff] %vm1341, %v4149
      %4229 = vst.msk [vmem:[#allocation3 + $0x198] sm:$0xff] %vm1341, %v4151
      %4230 = vst.msk [vmem:[#allocation3 + $0x1b0] sm:$0xff] %vm1341, %v4153
      %4231 = vst.msk [vmem:[#allocation3 + $0x1c8] sm:$0xff] %vm1341, %v4155
      %4232 = vst.msk [vmem:[#allocation3 + $0x1e0] sm:$0xff] %vm1341, %v4157
      %4233 = vst.msk [vmem:[#allocation3 + $0x1f8] sm:$0xff] %vm1341, %v4159
      %4234 = vst.msk [vmem:[#allocation3 + $0x210] sm:$0xff] %vm1341, %v4161
      %4235 = vst.msk [vmem:[#allocation3 + $0x228] sm:$0xff] %vm1341, %v4163
      %4236 = vst.msk [vmem:[#allocation3 + $0x240] sm:$0xff] %vm1341, %v4165
      %4237 = vst.msk [vmem:[#allocation3 + $0x258] sm:$0xff] %vm1341, %v4167
      %4238 = vst.msk [vmem:[#allocation3 + $0x270] sm:$0xff] %vm1341, %v4169
      %4239 = vst.msk [vmem:[#allocation3 + $0x288] sm:$0xff] %vm1341, %v4171
      %4240 = vst.msk [vmem:[#allocation3 + $0x2a0] sm:$0xff] %vm1341, %v4173
      %4241 = vst.msk [vmem:[#allocation3 + $0x2b8] sm:$0xff] %vm1341, %v4175
      %4242 = vst.msk [vmem:[#allocation3 + $0x2d0] sm:$0xff] %vm1341, %v4177
      %4243 = vst.msk [vmem:[#allocation3 + $0x2e8] sm:$0xff] %vm1341, %v4179
      %v4244 = vld [vmem:[%s891] sm:$0xff]
      %v4245 = vld [vmem:[%s891 + $0x8] sm:$0xff]
      %v4246 = vld [vmem:[%s891 + $0x18] sm:$0xff]
      %v4247 = vld [vmem:[%s891 + $0x20] sm:$0xff]
      %v4248 = vld [vmem:[%s891 + $0x30] sm:$0xff]
      %v4249 = vld [vmem:[%s891 + $0x38] sm:$0xff]
      %v4250 = vld [vmem:[%s891 + $0x48] sm:$0xff]
      %v4251 = vld [vmem:[%s891 + $0x50] sm:$0xff]
      %v4252 = vld [vmem:[%s891 + $0x60] sm:$0xff]
      %v4253 = vld [vmem:[%s891 + $0x68] sm:$0xff]
      %v4254 = vld [vmem:[%s891 + $0x78] sm:$0xff]
      %v4255 = vld [vmem:[%s891 + $0x80] sm:$0xff]
      %v4256 = vld [vmem:[%s891 + $0x90] sm:$0xff]
      %v4257 = vld [vmem:[%s891 + $0x98] sm:$0xff]
      %v4258 = vld [vmem:[%s891 + $0xa8] sm:$0xff]
      %v4259 = vld [vmem:[%s891 + $0xb0] sm:$0xff]
      %v4260 = vld [vmem:[%s891 + $0xc0] sm:$0xff]
      %v4261 = vld [vmem:[%s891 + $0xc8] sm:$0xff]
      %v4262 = vld [vmem:[%s891 + $0xd8] sm:$0xff]
      %v4263 = vld [vmem:[%s891 + $0xe0] sm:$0xff]
      %v4264 = vld [vmem:[%s891 + $0xf0] sm:$0xff]
      %v4265 = vld [vmem:[%s891 + $0xf8] sm:$0xff]
      %v4266 = vld [vmem:[%s891 + $0x108] sm:$0xff]
      %v4267 = vld [vmem:[%s891 + $0x110] sm:$0xff]
      %v4268 = vld [vmem:[%s891 + $0x120] sm:$0xff]
      %v4269 = vld [vmem:[%s891 + $0x128] sm:$0xff]
      %v4270 = vld [vmem:[%s891 + $0x138] sm:$0xff]
      %v4271 = vld [vmem:[%s891 + $0x140] sm:$0xff]
      %v4272 = vld [vmem:[%s891 + $0x150] sm:$0xff]
      %v4273 = vld [vmem:[%s891 + $0x158] sm:$0xff]
      %v4274 = vld [vmem:[%s891 + $0x168] sm:$0xff]
      %v4275 = vld [vmem:[%s891 + $0x170] sm:$0xff]
      %4308 = vrot.lane.b32.xlu0 %v4244, 96
      %v4309 = vpop.permute.xlu0 %4308
      %4310 = vrot.lane.b32.xlu0 %v4245, 96
      %v4311 = vpop.permute.xlu0 %4310
      %4312 = vrot.lane.b32.xlu0 %v4246, 96
      %v4313 = vpop.permute.xlu0 %4312
      %4314 = vrot.lane.b32.xlu0 %v4247, 96
      %v4315 = vpop.permute.xlu0 %4314
      %4316 = vrot.lane.b32.xlu0 %v4248, 96
      %v4317 = vpop.permute.xlu0 %4316
      %4318 = vrot.lane.b32.xlu0 %v4249, 96
      %v4319 = vpop.permute.xlu0 %4318
      %4320 = vrot.lane.b32.xlu0 %v4250, 96
      %v4321 = vpop.permute.xlu0 %4320
      %4322 = vrot.lane.b32.xlu0 %v4251, 96
      %v4323 = vpop.permute.xlu0 %4322
      %4324 = vrot.lane.b32.xlu0 %v4252, 96
      %v4325 = vpop.permute.xlu0 %4324
      %4326 = vrot.lane.b32.xlu0 %v4253, 96
      %v4327 = vpop.permute.xlu0 %4326
      %4328 = vrot.lane.b32.xlu0 %v4254, 96
      %v4329 = vpop.permute.xlu0 %4328
      %4330 = vrot.lane.b32.xlu0 %v4255, 96
      %v4331 = vpop.permute.xlu0 %4330
      %4332 = vrot.lane.b32.xlu0 %v4256, 96
      %v4333 = vpop.permute.xlu0 %4332
      %4334 = vrot.lane.b32.xlu0 %v4257, 96
      %v4335 = vpop.permute.xlu0 %4334
      %4336 = vrot.lane.b32.xlu0 %v4258, 96
      %v4337 = vpop.permute.xlu0 %4336
      %4338 = vrot.lane.b32.xlu0 %v4259, 96
      %v4339 = vpop.permute.xlu0 %4338
      %4340 = vrot.lane.b32.xlu0 %v4260, 96
      %v4341 = vpop.permute.xlu0 %4340
      %4342 = vrot.lane.b32.xlu0 %v4261, 96
      %v4343 = vpop.permute.xlu0 %4342
      %4344 = vrot.lane.b32.xlu0 %v4262, 96
      %v4345 = vpop.permute.xlu0 %4344
      %4346 = vrot.lane.b32.xlu0 %v4263, 96
      %v4347 = vpop.permute.xlu0 %4346
      %4348 = vrot.lane.b32.xlu0 %v4264, 96
      %v4349 = vpop.permute.xlu0 %4348
      %4350 = vrot.lane.b32.xlu0 %v4265, 96
      %v4351 = vpop.permute.xlu0 %4350
      %4352 = vrot.lane.b32.xlu0 %v4266, 96
      %v4353 = vpop.permute.xlu0 %4352
      %4354 = vrot.lane.b32.xlu0 %v4267, 96
      %v4355 = vpop.permute.xlu0 %4354
      %4356 = vrot.lane.b32.xlu0 %v4268, 96
      %v4357 = vpop.permute.xlu0 %4356
      %4358 = vrot.lane.b32.xlu0 %v4269, 96
      %v4359 = vpop.permute.xlu0 %4358
      %4360 = vrot.lane.b32.xlu0 %v4270, 96
      %v4361 = vpop.permute.xlu0 %4360
      %4362 = vrot.lane.b32.xlu0 %v4271, 96
      %v4363 = vpop.permute.xlu0 %4362
      %4364 = vrot.lane.b32.xlu0 %v4272, 96
      %v4365 = vpop.permute.xlu0 %4364
      %4366 = vrot.lane.b32.xlu0 %v4273, 96
      %v4367 = vpop.permute.xlu0 %4366
      %4368 = vrot.lane.b32.xlu0 %v4274, 96
      %v4369 = vpop.permute.xlu0 %4368
      %4370 = vrot.lane.b32.xlu0 %v4275, 96
      %v4371 = vpop.permute.xlu0 %4370
      %4404 = vst.msk [vmem:[#allocation3] sm:$0xff] %vm1534, %v4309
      %4405 = vst.msk [vmem:[#allocation3 + $0x18] sm:$0xff] %vm1534, %v4311
      %4406 = vst.msk [vmem:[#allocation3 + $0x30] sm:$0xff] %vm1534, %v4313
      %4407 = vst.msk [vmem:[#allocation3 + $0x48] sm:$0xff] %vm1534, %v4315
      %4408 = vst.msk [vmem:[#allocation3 + $0x60] sm:$0xff] %vm1534, %v4317
      %4409 = vst.msk [vmem:[#allocation3 + $0x78] sm:$0xff] %vm1534, %v4319
      %4410 = vst.msk [vmem:[#allocation3 + $0x90] sm:$0xff] %vm1534, %v4321
      %4411 = vst.msk [vmem:[#allocation3 + $0xa8] sm:$0xff] %vm1534, %v4323
      %4412 = vst.msk [vmem:[#allocation3 + $0xc0] sm:$0xff] %vm1534, %v4325
      %4413 = vst.msk [vmem:[#allocation3 + $0xd8] sm:$0xff] %vm1534, %v4327
      %4414 = vst.msk [vmem:[#allocation3 + $0xf0] sm:$0xff] %vm1534, %v4329
      %4415 = vst.msk [vmem:[#allocation3 + $0x108] sm:$0xff] %vm1534, %v4331
      %4416 = vst.msk [vmem:[#allocation3 + $0x120] sm:$0xff] %vm1534, %v4333
      %4417 = vst.msk [vmem:[#allocation3 + $0x138] sm:$0xff] %vm1534, %v4335
      %4418 = vst.msk [vmem:[#allocation3 + $0x150] sm:$0xff] %vm1534, %v4337
      %4419 = vst.msk [vmem:[#allocation3 + $0x168] sm:$0xff] %vm1534, %v4339
      %4420 = vst.msk [vmem:[#allocation3 + $0x180] sm:$0xff] %vm1534, %v4341
      %4421 = vst.msk [vmem:[#allocation3 + $0x198] sm:$0xff] %vm1534, %v4343
      %4422 = vst.msk [vmem:[#allocation3 + $0x1b0] sm:$0xff] %vm1534, %v4345
      %4423 = vst.msk [vmem:[#allocation3 + $0x1c8] sm:$0xff] %vm1534, %v4347
      %4424 = vst.msk [vmem:[#allocation3 + $0x1e0] sm:$0xff] %vm1534, %v4349
      %4425 = vst.msk [vmem:[#allocation3 + $0x1f8] sm:$0xff] %vm1534, %v4351
      %4426 = vst.msk [vmem:[#allocation3 + $0x210] sm:$0xff] %vm1534, %v4353
      %4427 = vst.msk [vmem:[#allocation3 + $0x228] sm:$0xff] %vm1534, %v4355
      %4428 = vst.msk [vmem:[#allocation3 + $0x240] sm:$0xff] %vm1534, %v4357
      %4429 = vst.msk [vmem:[#allocation3 + $0x258] sm:$0xff] %vm1534, %v4359
      %4430 = vst.msk [vmem:[#allocation3 + $0x270] sm:$0xff] %vm1534, %v4361
      %4431 = vst.msk [vmem:[#allocation3 + $0x288] sm:$0xff] %vm1534, %v4363
      %4432 = vst.msk [vmem:[#allocation3 + $0x2a0] sm:$0xff] %vm1534, %v4365
      %4433 = vst.msk [vmem:[#allocation3 + $0x2b8] sm:$0xff] %vm1534, %v4367
      %4434 = vst.msk [vmem:[#allocation3 + $0x2d0] sm:$0xff] %vm1534, %v4369
      %4435 = vst.msk [vmem:[#allocation3 + $0x2e8] sm:$0xff] %vm1534, %v4371
      %v4436 = vld [vmem:[%s891 + $0x1] sm:$0xff]
      %v4437 = vld [vmem:[%s891 + $0x9] sm:$0xff]
      %v4438 = vld [vmem:[%s891 + $0x19] sm:$0xff]
      %v4439 = vld [vmem:[%s891 + $0x21] sm:$0xff]
      %v4440 = vld [vmem:[%s891 + $0x31] sm:$0xff]
      %v4441 = vld [vmem:[%s891 + $0x39] sm:$0xff]
      %v4442 = vld [vmem:[%s891 + $0x49] sm:$0xff]
      %v4443 = vld [vmem:[%s891 + $0x51] sm:$0xff]
      %v4444 = vld [vmem:[%s891 + $0x61] sm:$0xff]
      %v4445 = vld [vmem:[%s891 + $0x69] sm:$0xff]
      %v4446 = vld [vmem:[%s891 + $0x79] sm:$0xff]
      %v4447 = vld [vmem:[%s891 + $0x81] sm:$0xff]
      %v4448 = vld [vmem:[%s891 + $0x91] sm:$0xff]
      %v4449 = vld [vmem:[%s891 + $0x99] sm:$0xff]
      %v4450 = vld [vmem:[%s891 + $0xa9] sm:$0xff]
      %v4451 = vld [vmem:[%s891 + $0xb1] sm:$0xff]
      %v4452 = vld [vmem:[%s891 + $0xc1] sm:$0xff]
      %v4453 = vld [vmem:[%s891 + $0xc9] sm:$0xff]
      %v4454 = vld [vmem:[%s891 + $0xd9] sm:$0xff]
      %v4455 = vld [vmem:[%s891 + $0xe1] sm:$0xff]
      %v4456 = vld [vmem:[%s891 + $0xf1] sm:$0xff]
      %v4457 = vld [vmem:[%s891 + $0xf9] sm:$0xff]
      %v4458 = vld [vmem:[%s891 + $0x109] sm:$0xff]
      %v4459 = vld [vmem:[%s891 + $0x111] sm:$0xff]
      %v4460 = vld [vmem:[%s891 + $0x121] sm:$0xff]
      %v4461 = vld [vmem:[%s891 + $0x129] sm:$0xff]
      %v4462 = vld [vmem:[%s891 + $0x139] sm:$0xff]
      %v4463 = vld [vmem:[%s891 + $0x141] sm:$0xff]
      %v4464 = vld [vmem:[%s891 + $0x151] sm:$0xff]
      %v4465 = vld [vmem:[%s891 + $0x159] sm:$0xff]
      %v4466 = vld [vmem:[%s891 + $0x169] sm:$0xff]
      %v4467 = vld [vmem:[%s891 + $0x171] sm:$0xff]
      %4468 = vst.msk [vmem:[#allocation3 + $0x8] sm:$0xff] %vm520, %v4436
      %4469 = vst.msk [vmem:[#allocation3 + $0x20] sm:$0xff] %vm520, %v4437
      %4470 = vst.msk [vmem:[#allocation3 + $0x38] sm:$0xff] %vm520, %v4438
      %4471 = vst.msk [vmem:[#allocation3 + $0x50] sm:$0xff] %vm520, %v4439
      %4472 = vst.msk [vmem:[#allocation3 + $0x68] sm:$0xff] %vm520, %v4440
      %4473 = vst.msk [vmem:[#allocation3 + $0x80] sm:$0xff] %vm520, %v4441
      %4474 = vst.msk [vmem:[#allocation3 + $0x98] sm:$0xff] %vm520, %v4442
      %4475 = vst.msk [vmem:[#allocation3 + $0xb0] sm:$0xff] %vm520, %v4443
      %4476 = vst.msk [vmem:[#allocation3 + $0xc8] sm:$0xff] %vm520, %v4444
      %4477 = vst.msk [vmem:[#allocation3 + $0xe0] sm:$0xff] %vm520, %v4445
      %4478 = vst.msk [vmem:[#allocation3 + $0xf8] sm:$0xff] %vm520, %v4446
      %4479 = vst.msk [vmem:[#allocation3 + $0x110] sm:$0xff] %vm520, %v4447
      %4480 = vst.msk [vmem:[#allocation3 + $0x128] sm:$0xff] %vm520, %v4448
      %4481 = vst.msk [vmem:[#allocation3 + $0x140] sm:$0xff] %vm520, %v4449
      %4482 = vst.msk [vmem:[#allocation3 + $0x158] sm:$0xff] %vm520, %v4450
      %4483 = vst.msk [vmem:[#allocation3 + $0x170] sm:$0xff] %vm520, %v4451
      %4484 = vst.msk [vmem:[#allocation3 + $0x188] sm:$0xff] %vm520, %v4452
      %4485 = vst.msk [vmem:[#allocation3 + $0x1a0] sm:$0xff] %vm520, %v4453
      %4486 = vst.msk [vmem:[#allocation3 + $0x1b8] sm:$0xff] %vm520, %v4454
      %4487 = vst.msk [vmem:[#allocation3 + $0x1d0] sm:$0xff] %vm520, %v4455
      %4488 = vst.msk [vmem:[#allocation3 + $0x1e8] sm:$0xff] %vm520, %v4456
      %4489 = vst.msk [vmem:[#allocation3 + $0x200] sm:$0xff] %vm520, %v4457
      %4490 = vst.msk [vmem:[#allocation3 + $0x218] sm:$0xff] %vm520, %v4458
      %4491 = vst.msk [vmem:[#allocation3 + $0x230] sm:$0xff] %vm520, %v4459
      %4492 = vst.msk [vmem:[#allocation3 + $0x248] sm:$0xff] %vm520, %v4460
      %4493 = vst.msk [vmem:[#allocation3 + $0x260] sm:$0xff] %vm520, %v4461
      %4494 = vst.msk [vmem:[#allocation3 + $0x278] sm:$0xff] %vm520, %v4462
      %4495 = vst.msk [vmem:[#allocation3 + $0x290] sm:$0xff] %vm520, %v4463
      %4496 = vst.msk [vmem:[#allocation3 + $0x2a8] sm:$0xff] %vm520, %v4464
      %4497 = vst.msk [vmem:[#allocation3 + $0x2c0] sm:$0xff] %vm520, %v4465
      %4498 = vst.msk [vmem:[#allocation3 + $0x2d8] sm:$0xff] %vm520, %v4466
      %4499 = vst.msk [vmem:[#allocation3 + $0x2f0] sm:$0xff] %vm520, %v4467
      %v4500 = vld [vmem:[%s891 + $0x2] sm:$0xff]
      %v4501 = vld [vmem:[%s891 + $0xa] sm:$0xff]
      %v4502 = vld [vmem:[%s891 + $0x1a] sm:$0xff]
      %v4503 = vld [vmem:[%s891 + $0x22] sm:$0xff]
      %v4504 = vld [vmem:[%s891 + $0x32] sm:$0xff]
      %v4505 = vld [vmem:[%s891 + $0x3a] sm:$0xff]
      %v4506 = vld [vmem:[%s891 + $0x4a] sm:$0xff]
      %v4507 = vld [vmem:[%s891 + $0x52] sm:$0xff]
      %v4508 = vld [vmem:[%s891 + $0x62] sm:$0xff]
      %v4509 = vld [vmem:[%s891 + $0x6a] sm:$0xff]
      %v4510 = vld [vmem:[%s891 + $0x7a] sm:$0xff]
      %v4511 = vld [vmem:[%s891 + $0x82] sm:$0xff]
      %v4512 = vld [vmem:[%s891 + $0x92] sm:$0xff]
      %v4513 = vld [vmem:[%s891 + $0x9a] sm:$0xff]
      %v4514 = vld [vmem:[%s891 + $0xaa] sm:$0xff]
      %v4515 = vld [vmem:[%s891 + $0xb2] sm:$0xff]
      %v4516 = vld [vmem:[%s891 + $0xc2] sm:$0xff]
      %v4517 = vld [vmem:[%s891 + $0xca] sm:$0xff]
      %v4518 = vld [vmem:[%s891 + $0xda] sm:$0xff]
      %v4519 = vld [vmem:[%s891 + $0xe2] sm:$0xff]
      %v4520 = vld [vmem:[%s891 + $0xf2] sm:$0xff]
      %v4521 = vld [vmem:[%s891 + $0xfa] sm:$0xff]
      %v4522 = vld [vmem:[%s891 + $0x10a] sm:$0xff]
      %v4523 = vld [vmem:[%s891 + $0x112] sm:$0xff]
      %v4524 = vld [vmem:[%s891 + $0x122] sm:$0xff]
      %v4525 = vld [vmem:[%s891 + $0x12a] sm:$0xff]
      %v4526 = vld [vmem:[%s891 + $0x13a] sm:$0xff]
      %v4527 = vld [vmem:[%s891 + $0x142] sm:$0xff]
      %v4528 = vld [vmem:[%s891 + $0x152] sm:$0xff]
      %v4529 = vld [vmem:[%s891 + $0x15a] sm:$0xff]
      %v4530 = vld [vmem:[%s891 + $0x16a] sm:$0xff]
      %v4531 = vld [vmem:[%s891 + $0x172] sm:$0xff]
      %4564 = vrot.lane.b32.xlu0 %v4500, 32
      %v4565 = vpop.permute.xlu0 %4564
      %4566 = vrot.lane.b32.xlu0 %v4501, 32
      %v4567 = vpop.permute.xlu0 %4566
      %4568 = vrot.lane.b32.xlu0 %v4502, 32
      %v4569 = vpop.permute.xlu0 %4568
      %4570 = vrot.lane.b32.xlu0 %v4503, 32
      %v4571 = vpop.permute.xlu0 %4570
      %4572 = vrot.lane.b32.xlu0 %v4504, 32
      %v4573 = vpop.permute.xlu0 %4572
      %4574 = vrot.lane.b32.xlu0 %v4505, 32
      %v4575 = vpop.permute.xlu0 %4574
      %4576 = vrot.lane.b32.xlu0 %v4506, 32
      %v4577 = vpop.permute.xlu0 %4576
      %4578 = vrot.lane.b32.xlu0 %v4507, 32
      %v4579 = vpop.permute.xlu0 %4578
      %4580 = vrot.lane.b32.xlu0 %v4508, 32
      %v4581 = vpop.permute.xlu0 %4580
      %4582 = vrot.lane.b32.xlu0 %v4509, 32
      %v4583 = vpop.permute.xlu0 %4582
      %4584 = vrot.lane.b32.xlu0 %v4510, 32
      %v4585 = vpop.permute.xlu0 %4584
      %4586 = vrot.lane.b32.xlu0 %v4511, 32
      %v4587 = vpop.permute.xlu0 %4586
      %4588 = vrot.lane.b32.xlu0 %v4512, 32
      %v4589 = vpop.permute.xlu0 %4588
      %4590 = vrot.lane.b32.xlu0 %v4513, 32
      %v4591 = vpop.permute.xlu0 %4590
      %4592 = vrot.lane.b32.xlu0 %v4514, 32
      %v4593 = vpop.permute.xlu0 %4592
      %4594 = vrot.lane.b32.xlu0 %v4515, 32
      %v4595 = vpop.permute.xlu0 %4594
      %4596 = vrot.lane.b32.xlu0 %v4516, 32
      %v4597 = vpop.permute.xlu0 %4596
      %4598 = vrot.lane.b32.xlu0 %v4517, 32
      %v4599 = vpop.permute.xlu0 %4598
      %4600 = vrot.lane.b32.xlu0 %v4518, 32
      %v4601 = vpop.permute.xlu0 %4600
      %4602 = vrot.lane.b32.xlu0 %v4519, 32
      %v4603 = vpop.permute.xlu0 %4602
      %4604 = vrot.lane.b32.xlu0 %v4520, 32
      %v4605 = vpop.permute.xlu0 %4604
      %4606 = vrot.lane.b32.xlu0 %v4521, 32
      %v4607 = vpop.permute.xlu0 %4606
      %4608 = vrot.lane.b32.xlu0 %v4522, 32
      %v4609 = vpop.permute.xlu0 %4608
      %4610 = vrot.lane.b32.xlu0 %v4523, 32
      %v4611 = vpop.permute.xlu0 %4610
      %4612 = vrot.lane.b32.xlu0 %v4524, 32
      %v4613 = vpop.permute.xlu0 %4612
      %4614 = vrot.lane.b32.xlu0 %v4525, 32
      %v4615 = vpop.permute.xlu0 %4614
      %4616 = vrot.lane.b32.xlu0 %v4526, 32
      %v4617 = vpop.permute.xlu0 %4616
      %4618 = vrot.lane.b32.xlu0 %v4527, 32
      %v4619 = vpop.permute.xlu0 %4618
      %4620 = vrot.lane.b32.xlu0 %v4528, 32
      %v4621 = vpop.permute.xlu0 %4620
      %4622 = vrot.lane.b32.xlu0 %v4529, 32
      %v4623 = vpop.permute.xlu0 %4622
      %4624 = vrot.lane.b32.xlu0 %v4530, 32
      %v4625 = vpop.permute.xlu0 %4624
      %4626 = vrot.lane.b32.xlu0 %v4531, 32
      %v4627 = vpop.permute.xlu0 %4626
      %4660 = vst.msk [vmem:[#allocation3 + $0x8] sm:$0xff] %vm1148, %v4565
      %4661 = vst.msk [vmem:[#allocation3 + $0x20] sm:$0xff] %vm1148, %v4567
      %4662 = vst.msk [vmem:[#allocation3 + $0x38] sm:$0xff] %vm1148, %v4569
      %4663 = vst.msk [vmem:[#allocation3 + $0x50] sm:$0xff] %vm1148, %v4571
      %4664 = vst.msk [vmem:[#allocation3 + $0x68] sm:$0xff] %vm1148, %v4573
      %4665 = vst.msk [vmem:[#allocation3 + $0x80] sm:$0xff] %vm1148, %v4575
      %4666 = vst.msk [vmem:[#allocation3 + $0x98] sm:$0xff] %vm1148, %v4577
      %4667 = vst.msk [vmem:[#allocation3 + $0xb0] sm:$0xff] %vm1148, %v4579
      %4668 = vst.msk [vmem:[#allocation3 + $0xc8] sm:$0xff] %vm1148, %v4581
      %4669 = vst.msk [vmem:[#allocation3 + $0xe0] sm:$0xff] %vm1148, %v4583
      %4670 = vst.msk [vmem:[#allocation3 + $0xf8] sm:$0xff] %vm1148, %v4585
      %4671 = vst.msk [vmem:[#allocation3 + $0x110] sm:$0xff] %vm1148, %v4587
      %4672 = vst.msk [vmem:[#allocation3 + $0x128] sm:$0xff] %vm1148, %v4589
      %4673 = vst.msk [vmem:[#allocation3 + $0x140] sm:$0xff] %vm1148, %v4591
      %4674 = vst.msk [vmem:[#allocation3 + $0x158] sm:$0xff] %vm1148, %v4593
      %4675 = vst.msk [vmem:[#allocation3 + $0x170] sm:$0xff] %vm1148, %v4595
      %4676 = vst.msk [vmem:[#allocation3 + $0x188] sm:$0xff] %vm1148, %v4597
      %4677 = vst.msk [vmem:[#allocation3 + $0x1a0] sm:$0xff] %vm1148, %v4599
      %4678 = vst.msk [vmem:[#allocation3 + $0x1b8] sm:$0xff] %vm1148, %v4601
      %4679 = vst.msk [vmem:[#allocation3 + $0x1d0] sm:$0xff] %vm1148, %v4603
      %4680 = vst.msk [vmem:[#allocation3 + $0x1e8] sm:$0xff] %vm1148, %v4605
      %4681 = vst.msk [vmem:[#allocation3 + $0x200] sm:$0xff] %vm1148, %v4607
      %4682 = vst.msk [vmem:[#allocation3 + $0x218] sm:$0xff] %vm1148, %v4609
      %4683 = vst.msk [vmem:[#allocation3 + $0x230] sm:$0xff] %vm1148, %v4611
      %4684 = vst.msk [vmem:[#allocation3 + $0x248] sm:$0xff] %vm1148, %v4613
      %4685 = vst.msk [vmem:[#allocation3 + $0x260] sm:$0xff] %vm1148, %v4615
      %4686 = vst.msk [vmem:[#allocation3 + $0x278] sm:$0xff] %vm1148, %v4617
      %4687 = vst.msk [vmem:[#allocation3 + $0x290] sm:$0xff] %vm1148, %v4619
      %4688 = vst.msk [vmem:[#allocation3 + $0x2a8] sm:$0xff] %vm1148, %v4621
      %4689 = vst.msk [vmem:[#allocation3 + $0x2c0] sm:$0xff] %vm1148, %v4623
      %4690 = vst.msk [vmem:[#allocation3 + $0x2d8] sm:$0xff] %vm1148, %v4625
      %4691 = vst.msk [vmem:[#allocation3 + $0x2f0] sm:$0xff] %vm1148, %v4627
      %v4692 = vld [vmem:[%s1823] sm:$0xff]
      %v4693 = vld [vmem:[%s1823 + $0x8] sm:$0xff]
      %v4694 = vld [vmem:[%s1823 + $0x18] sm:$0xff]
      %v4695 = vld [vmem:[%s1823 + $0x20] sm:$0xff]
      %v4696 = vld [vmem:[%s1823 + $0x30] sm:$0xff]
      %v4697 = vld [vmem:[%s1823 + $0x38] sm:$0xff]
      %v4698 = vld [vmem:[%s1823 + $0x48] sm:$0xff]
      %v4699 = vld [vmem:[%s1823 + $0x50] sm:$0xff]
      %v4700 = vld [vmem:[%s1823 + $0x60] sm:$0xff]
      %v4701 = vld [vmem:[%s1823 + $0x68] sm:$0xff]
      %v4702 = vld [vmem:[%s1823 + $0x78] sm:$0xff]
      %v4703 = vld [vmem:[%s1823 + $0x80] sm:$0xff]
      %v4704 = vld [vmem:[%s1823 + $0x90] sm:$0xff]
      %v4705 = vld [vmem:[%s1823 + $0x98] sm:$0xff]
      %v4706 = vld [vmem:[%s1823 + $0xa8] sm:$0xff]
      %v4707 = vld [vmem:[%s1823 + $0xb0] sm:$0xff]
      %v4708 = vld [vmem:[%s1823 + $0xc0] sm:$0xff]
      %v4709 = vld [vmem:[%s1823 + $0xc8] sm:$0xff]
      %v4710 = vld [vmem:[%s1823 + $0xd8] sm:$0xff]
      %v4711 = vld [vmem:[%s1823 + $0xe0] sm:$0xff]
      %v4712 = vld [vmem:[%s1823 + $0xf0] sm:$0xff]
      %v4713 = vld [vmem:[%s1823 + $0xf8] sm:$0xff]
      %v4714 = vld [vmem:[%s1823 + $0x108] sm:$0xff]
      %v4715 = vld [vmem:[%s1823 + $0x110] sm:$0xff]
      %v4716 = vld [vmem:[%s1823 + $0x120] sm:$0xff]
      %v4717 = vld [vmem:[%s1823 + $0x128] sm:$0xff]
      %v4718 = vld [vmem:[%s1823 + $0x138] sm:$0xff]
      %v4719 = vld [vmem:[%s1823 + $0x140] sm:$0xff]
      %v4720 = vld [vmem:[%s1823 + $0x150] sm:$0xff]
      %v4721 = vld [vmem:[%s1823 + $0x158] sm:$0xff]
      %v4722 = vld [vmem:[%s1823 + $0x168] sm:$0xff]
      %v4723 = vld [vmem:[%s1823 + $0x170] sm:$0xff]
      %4756 = vrot.lane.b32.xlu0 %v4692, 64
      %v4757 = vpop.permute.xlu0 %4756
      %4758 = vrot.lane.b32.xlu0 %v4693, 64
      %v4759 = vpop.permute.xlu0 %4758
      %4760 = vrot.lane.b32.xlu0 %v4694, 64
      %v4761 = vpop.permute.xlu0 %4760
      %4762 = vrot.lane.b32.xlu0 %v4695, 64
      %v4763 = vpop.permute.xlu0 %4762
      %4764 = vrot.lane.b32.xlu0 %v4696, 64
      %v4765 = vpop.permute.xlu0 %4764
      %4766 = vrot.lane.b32.xlu0 %v4697, 64
      %v4767 = vpop.permute.xlu0 %4766
      %4768 = vrot.lane.b32.xlu0 %v4698, 64
      %v4769 = vpop.permute.xlu0 %4768
      %4770 = vrot.lane.b32.xlu0 %v4699, 64
      %v4771 = vpop.permute.xlu0 %4770
      %4772 = vrot.lane.b32.xlu0 %v4700, 64
      %v4773 = vpop.permute.xlu0 %4772
      %4774 = vrot.lane.b32.xlu0 %v4701, 64
      %v4775 = vpop.permute.xlu0 %4774
      %4776 = vrot.lane.b32.xlu0 %v4702, 64
      %v4777 = vpop.permute.xlu0 %4776
      %4778 = vrot.lane.b32.xlu0 %v4703, 64
      %v4779 = vpop.permute.xlu0 %4778
      %4780 = vrot.lane.b32.xlu0 %v4704, 64
      %v4781 = vpop.permute.xlu0 %4780
      %4782 = vrot.lane.b32.xlu0 %v4705, 64
      %v4783 = vpop.permute.xlu0 %4782
      %4784 = vrot.lane.b32.xlu0 %v4706, 64
      %v4785 = vpop.permute.xlu0 %4784
      %4786 = vrot.lane.b32.xlu0 %v4707, 64
      %v4787 = vpop.permute.xlu0 %4786
      %4788 = vrot.lane.b32.xlu0 %v4708, 64
      %v4789 = vpop.permute.xlu0 %4788
      %4790 = vrot.lane.b32.xlu0 %v4709, 64
      %v4791 = vpop.permute.xlu0 %4790
      %4792 = vrot.lane.b32.xlu0 %v4710, 64
      %v4793 = vpop.permute.xlu0 %4792
      %4794 = vrot.lane.b32.xlu0 %v4711, 64
      %v4795 = vpop.permute.xlu0 %4794
      %4796 = vrot.lane.b32.xlu0 %v4712, 64
      %v4797 = vpop.permute.xlu0 %4796
      %4798 = vrot.lane.b32.xlu0 %v4713, 64
      %v4799 = vpop.permute.xlu0 %4798
      %4800 = vrot.lane.b32.xlu0 %v4714, 64
      %v4801 = vpop.permute.xlu0 %4800
      %4802 = vrot.lane.b32.xlu0 %v4715, 64
      %v4803 = vpop.permute.xlu0 %4802
      %4804 = vrot.lane.b32.xlu0 %v4716, 64
      %v4805 = vpop.permute.xlu0 %4804
      %4806 = vrot.lane.b32.xlu0 %v4717, 64
      %v4807 = vpop.permute.xlu0 %4806
      %4808 = vrot.lane.b32.xlu0 %v4718, 64
      %v4809 = vpop.permute.xlu0 %4808
      %4810 = vrot.lane.b32.xlu0 %v4719, 64
      %v4811 = vpop.permute.xlu0 %4810
      %4812 = vrot.lane.b32.xlu0 %v4720, 64
      %v4813 = vpop.permute.xlu0 %4812
      %4814 = vrot.lane.b32.xlu0 %v4721, 64
      %v4815 = vpop.permute.xlu0 %4814
      %4816 = vrot.lane.b32.xlu0 %v4722, 64
      %v4817 = vpop.permute.xlu0 %4816
      %4818 = vrot.lane.b32.xlu0 %v4723, 64
      %v4819 = vpop.permute.xlu0 %4818
      %4852 = vst.msk [vmem:[#allocation3 + $0x8] sm:$0xff] %vm1341, %v4757
      %4853 = vst.msk [vmem:[#allocation3 + $0x20] sm:$0xff] %vm1341, %v4759
      %4854 = vst.msk [vmem:[#allocation3 + $0x38] sm:$0xff] %vm1341, %v4761
      %4855 = vst.msk [vmem:[#allocation3 + $0x50] sm:$0xff] %vm1341, %v4763
      %4856 = vst.msk [vmem:[#allocation3 + $0x68] sm:$0xff] %vm1341, %v4765
      %4857 = vst.msk [vmem:[#allocation3 + $0x80] sm:$0xff] %vm1341, %v4767
      %4858 = vst.msk [vmem:[#allocation3 + $0x98] sm:$0xff] %vm1341, %v4769
      %4859 = vst.msk [vmem:[#allocation3 + $0xb0] sm:$0xff] %vm1341, %v4771
      %4860 = vst.msk [vmem:[#allocation3 + $0xc8] sm:$0xff] %vm1341, %v4773
      %4861 = vst.msk [vmem:[#allocation3 + $0xe0] sm:$0xff] %vm1341, %v4775
      %4862 = vst.msk [vmem:[#allocation3 + $0xf8] sm:$0xff] %vm1341, %v4777
      %4863 = vst.msk [vmem:[#allocation3 + $0x110] sm:$0xff] %vm1341, %v4779
      %4864 = vst.msk [vmem:[#allocation3 + $0x128] sm:$0xff] %vm1341, %v4781
      %4865 = vst.msk [vmem:[#allocation3 + $0x140] sm:$0xff] %vm1341, %v4783
      %4866 = vst.msk [vmem:[#allocation3 + $0x158] sm:$0xff] %vm1341, %v4785
      %4867 = vst.msk [vmem:[#allocation3 + $0x170] sm:$0xff] %vm1341, %v4787
      %4868 = vst.msk [vmem:[#allocation3 + $0x188] sm:$0xff] %vm1341, %v4789
      %4869 = vst.msk [vmem:[#allocation3 + $0x1a0] sm:$0xff] %vm1341, %v4791
      %4870 = vst.msk [vmem:[#allocation3 + $0x1b8] sm:$0xff] %vm1341, %v4793
      %4871 = vst.msk [vmem:[#allocation3 + $0x1d0] sm:$0xff] %vm1341, %v4795
      %4872 = vst.msk [vmem:[#allocation3 + $0x1e8] sm:$0xff] %vm1341, %v4797
      %4873 = vst.msk [vmem:[#allocation3 + $0x200] sm:$0xff] %vm1341, %v4799
      %4874 = vst.msk [vmem:[#allocation3 + $0x218] sm:$0xff] %vm1341, %v4801
      %4875 = vst.msk [vmem:[#allocation3 + $0x230] sm:$0xff] %vm1341, %v4803
      %4876 = vst.msk [vmem:[#allocation3 + $0x248] sm:$0xff] %vm1341, %v4805
      %4877 = vst.msk [vmem:[#allocation3 + $0x260] sm:$0xff] %vm1341, %v4807
      %4878 = vst.msk [vmem:[#allocation3 + $0x278] sm:$0xff] %vm1341, %v4809
      %4879 = vst.msk [vmem:[#allocation3 + $0x290] sm:$0xff] %vm1341, %v4811
      %4880 = vst.msk [vmem:[#allocation3 + $0x2a8] sm:$0xff] %vm1341, %v4813
      %4881 = vst.msk [vmem:[#allocation3 + $0x2c0] sm:$0xff] %vm1341, %v4815
      %4882 = vst.msk [vmem:[#allocation3 + $0x2d8] sm:$0xff] %vm1341, %v4817
      %4883 = vst.msk [vmem:[#allocation3 + $0x2f0] sm:$0xff] %vm1341, %v4819
      %v4884 = vld [vmem:[%s1823 + $0x1] sm:$0xff]
      %v4885 = vld [vmem:[%s1823 + $0x9] sm:$0xff]
      %v4886 = vld [vmem:[%s1823 + $0x19] sm:$0xff]
      %v4887 = vld [vmem:[%s1823 + $0x21] sm:$0xff]
      %v4888 = vld [vmem:[%s1823 + $0x31] sm:$0xff]
      %v4889 = vld [vmem:[%s1823 + $0x39] sm:$0xff]
      %v4890 = vld [vmem:[%s1823 + $0x49] sm:$0xff]
      %v4891 = vld [vmem:[%s1823 + $0x51] sm:$0xff]
      %v4892 = vld [vmem:[%s1823 + $0x61] sm:$0xff]
      %v4893 = vld [vmem:[%s1823 + $0x69] sm:$0xff]
      %v4894 = vld [vmem:[%s1823 + $0x79] sm:$0xff]
      %v4895 = vld [vmem:[%s1823 + $0x81] sm:$0xff]
      %v4896 = vld [vmem:[%s1823 + $0x91] sm:$0xff]
      %v4897 = vld [vmem:[%s1823 + $0x99] sm:$0xff]
      %v4898 = vld [vmem:[%s1823 + $0xa9] sm:$0xff]
      %v4899 = vld [vmem:[%s1823 + $0xb1] sm:$0xff]
      %v4900 = vld [vmem:[%s1823 + $0xc1] sm:$0xff]
      %v4901 = vld [vmem:[%s1823 + $0xc9] sm:$0xff]
      %v4902 = vld [vmem:[%s1823 + $0xd9] sm:$0xff]
      %v4903 = vld [vmem:[%s1823 + $0xe1] sm:$0xff]
      %v4904 = vld [vmem:[%s1823 + $0xf1] sm:$0xff]
      %v4905 = vld [vmem:[%s1823 + $0xf9] sm:$0xff]
      %v4906 = vld [vmem:[%s1823 + $0x109] sm:$0xff]
      %v4907 = vld [vmem:[%s1823 + $0x111] sm:$0xff]
      %v4908 = vld [vmem:[%s1823 + $0x121] sm:$0xff]
      %v4909 = vld [vmem:[%s1823 + $0x129] sm:$0xff]
      %v4910 = vld [vmem:[%s1823 + $0x139] sm:$0xff]
      %v4911 = vld [vmem:[%s1823 + $0x141] sm:$0xff]
      %v4912 = vld [vmem:[%s1823 + $0x151] sm:$0xff]
      %v4913 = vld [vmem:[%s1823 + $0x159] sm:$0xff]
      %v4914 = vld [vmem:[%s1823 + $0x169] sm:$0xff]
      %v4915 = vld [vmem:[%s1823 + $0x171] sm:$0xff]
      %4948 = vrot.lane.b32.xlu0 %v4884, 96
      %v4949 = vpop.permute.xlu0 %4948
      %4950 = vrot.lane.b32.xlu0 %v4885, 96
      %v4951 = vpop.permute.xlu0 %4950
      %4952 = vrot.lane.b32.xlu0 %v4886, 96
      %v4953 = vpop.permute.xlu0 %4952
      %4954 = vrot.lane.b32.xlu0 %v4887, 96
      %v4955 = vpop.permute.xlu0 %4954
      %4956 = vrot.lane.b32.xlu0 %v4888, 96
      %v4957 = vpop.permute.xlu0 %4956
      %4958 = vrot.lane.b32.xlu0 %v4889, 96
      %v4959 = vpop.permute.xlu0 %4958
      %4960 = vrot.lane.b32.xlu0 %v4890, 96
      %v4961 = vpop.permute.xlu0 %4960
      %4962 = vrot.lane.b32.xlu0 %v4891, 96
      %v4963 = vpop.permute.xlu0 %4962
      %4964 = vrot.lane.b32.xlu0 %v4892, 96
      %v4965 = vpop.permute.xlu0 %4964
      %4966 = vrot.lane.b32.xlu0 %v4893, 96
      %v4967 = vpop.permute.xlu0 %4966
      %4968 = vrot.lane.b32.xlu0 %v4894, 96
      %v4969 = vpop.permute.xlu0 %4968
      %4970 = vrot.lane.b32.xlu0 %v4895, 96
      %v4971 = vpop.permute.xlu0 %4970
      %4972 = vrot.lane.b32.xlu0 %v4896, 96
      %v4973 = vpop.permute.xlu0 %4972
      %4974 = vrot.lane.b32.xlu0 %v4897, 96
      %v4975 = vpop.permute.xlu0 %4974
      %4976 = vrot.lane.b32.xlu0 %v4898, 96
      %v4977 = vpop.permute.xlu0 %4976
      %4978 = vrot.lane.b32.xlu0 %v4899, 96
      %v4979 = vpop.permute.xlu0 %4978
      %4980 = vrot.lane.b32.xlu0 %v4900, 96
      %v4981 = vpop.permute.xlu0 %4980
      %4982 = vrot.lane.b32.xlu0 %v4901, 96
      %v4983 = vpop.permute.xlu0 %4982
      %4984 = vrot.lane.b32.xlu0 %v4902, 96
      %v4985 = vpop.permute.xlu0 %4984
      %4986 = vrot.lane.b32.xlu0 %v4903, 96
      %v4987 = vpop.permute.xlu0 %4986
      %4988 = vrot.lane.b32.xlu0 %v4904, 96
      %v4989 = vpop.permute.xlu0 %4988
      %4990 = vrot.lane.b32.xlu0 %v4905, 96
      %v4991 = vpop.permute.xlu0 %4990
      %4992 = vrot.lane.b32.xlu0 %v4906, 96
      %v4993 = vpop.permute.xlu0 %4992
      %4994 = vrot.lane.b32.xlu0 %v4907, 96
      %v4995 = vpop.permute.xlu0 %4994
      %4996 = vrot.lane.b32.xlu0 %v4908, 96
      %v4997 = vpop.permute.xlu0 %4996
      %4998 = vrot.lane.b32.xlu0 %v4909, 96
      %v4999 = vpop.permute.xlu0 %4998
      %5000 = vrot.lane.b32.xlu0 %v4910, 96
      %v5001 = vpop.permute.xlu0 %5000
      %5002 = vrot.lane.b32.xlu0 %v4911, 96
      %v5003 = vpop.permute.xlu0 %5002
      %5004 = vrot.lane.b32.xlu0 %v4912, 96
      %v5005 = vpop.permute.xlu0 %5004
      %5006 = vrot.lane.b32.xlu0 %v4913, 96
      %v5007 = vpop.permute.xlu0 %5006
      %5008 = vrot.lane.b32.xlu0 %v4914, 96
      %v5009 = vpop.permute.xlu0 %5008
      %5010 = vrot.lane.b32.xlu0 %v4915, 96
      %v5011 = vpop.permute.xlu0 %5010
      %5044 = vst.msk [vmem:[#allocation3 + $0x8] sm:$0xff] %vm1534, %v4949
      %5045 = vst.msk [vmem:[#allocation3 + $0x20] sm:$0xff] %vm1534, %v4951
      %5046 = vst.msk [vmem:[#allocation3 + $0x38] sm:$0xff] %vm1534, %v4953
      %5047 = vst.msk [vmem:[#allocation3 + $0x50] sm:$0xff] %vm1534, %v4955
      %5048 = vst.msk [vmem:[#allocation3 + $0x68] sm:$0xff] %vm1534, %v4957
      %5049 = vst.msk [vmem:[#allocation3 + $0x80] sm:$0xff] %vm1534, %v4959
      %5050 = vst.msk [vmem:[#allocation3 + $0x98] sm:$0xff] %vm1534, %v4961
      %5051 = vst.msk [vmem:[#allocation3 + $0xb0] sm:$0xff] %vm1534, %v4963
      %5052 = vst.msk [vmem:[#allocation3 + $0xc8] sm:$0xff] %vm1534, %v4965
      %5053 = vst.msk [vmem:[#allocation3 + $0xe0] sm:$0xff] %vm1534, %v4967
      %5054 = vst.msk [vmem:[#allocation3 + $0xf8] sm:$0xff] %vm1534, %v4969
      %5055 = vst.msk [vmem:[#allocation3 + $0x110] sm:$0xff] %vm1534, %v4971
      %5056 = vst.msk [vmem:[#allocation3 + $0x128] sm:$0xff] %vm1534, %v4973
      %5057 = vst.msk [vmem:[#allocation3 + $0x140] sm:$0xff] %vm1534, %v4975
      %5058 = vst.msk [vmem:[#allocation3 + $0x158] sm:$0xff] %vm1534, %v4977
      %5059 = vst.msk [vmem:[#allocation3 + $0x170] sm:$0xff] %vm1534, %v4979
      %5060 = vst.msk [vmem:[#allocation3 + $0x188] sm:$0xff] %vm1534, %v4981
      %5061 = vst.msk [vmem:[#allocation3 + $0x1a0] sm:$0xff] %vm1534, %v4983
      %5062 = vst.msk [vmem:[#allocation3 + $0x1b8] sm:$0xff] %vm1534, %v4985
      %5063 = vst.msk [vmem:[#allocation3 + $0x1d0] sm:$0xff] %vm1534, %v4987
      %5064 = vst.msk [vmem:[#allocation3 + $0x1e8] sm:$0xff] %vm1534, %v4989
      %5065 = vst.msk [vmem:[#allocation3 + $0x200] sm:$0xff] %vm1534, %v4991
      %5066 = vst.msk [vmem:[#allocation3 + $0x218] sm:$0xff] %vm1534, %v4993
      %5067 = vst.msk [vmem:[#allocation3 + $0x230] sm:$0xff] %vm1534, %v4995
      %5068 = vst.msk [vmem:[#allocation3 + $0x248] sm:$0xff] %vm1534, %v4997
      %5069 = vst.msk [vmem:[#allocation3 + $0x260] sm:$0xff] %vm1534, %v4999
      %5070 = vst.msk [vmem:[#allocation3 + $0x278] sm:$0xff] %vm1534, %v5001
      %5071 = vst.msk [vmem:[#allocation3 + $0x290] sm:$0xff] %vm1534, %v5003
      %5072 = vst.msk [vmem:[#allocation3 + $0x2a8] sm:$0xff] %vm1534, %v5005
      %5073 = vst.msk [vmem:[#allocation3 + $0x2c0] sm:$0xff] %vm1534, %v5007
      %5074 = vst.msk [vmem:[#allocation3 + $0x2d8] sm:$0xff] %vm1534, %v5009
      %5075 = vst.msk [vmem:[#allocation3 + $0x2f0] sm:$0xff] %vm1534, %v5011
      %v5076 = vld [vmem:[%s1823 + $0x2] sm:$0xff]
      %v5077 = vld [vmem:[%s1823 + $0xa] sm:$0xff]
      %v5078 = vld [vmem:[%s1823 + $0x1a] sm:$0xff]
      %v5079 = vld [vmem:[%s1823 + $0x22] sm:$0xff]
      %v5080 = vld [vmem:[%s1823 + $0x32] sm:$0xff]
      %v5081 = vld [vmem:[%s1823 + $0x3a] sm:$0xff]
      %v5082 = vld [vmem:[%s1823 + $0x4a] sm:$0xff]
      %v5083 = vld [vmem:[%s1823 + $0x52] sm:$0xff]
      %v5084 = vld [vmem:[%s1823 + $0x62] sm:$0xff]
      %v5085 = vld [vmem:[%s1823 + $0x6a] sm:$0xff]
      %v5086 = vld [vmem:[%s1823 + $0x7a] sm:$0xff]
      %v5087 = vld [vmem:[%s1823 + $0x82] sm:$0xff]
      %v5088 = vld [vmem:[%s1823 + $0x92] sm:$0xff]
      %v5089 = vld [vmem:[%s1823 + $0x9a] sm:$0xff]
      %v5090 = vld [vmem:[%s1823 + $0xaa] sm:$0xff]
      %v5091 = vld [vmem:[%s1823 + $0xb2] sm:$0xff]
      %v5092 = vld [vmem:[%s1823 + $0xc2] sm:$0xff]
      %v5093 = vld [vmem:[%s1823 + $0xca] sm:$0xff]
      %v5094 = vld [vmem:[%s1823 + $0xda] sm:$0xff]
      %v5095 = vld [vmem:[%s1823 + $0xe2] sm:$0xff]
      %v5096 = vld [vmem:[%s1823 + $0xf2] sm:$0xff]
      %v5097 = vld [vmem:[%s1823 + $0xfa] sm:$0xff]
      %v5098 = vld [vmem:[%s1823 + $0x10a] sm:$0xff]
      %v5099 = vld [vmem:[%s1823 + $0x112] sm:$0xff]
      %v5100 = vld [vmem:[%s1823 + $0x122] sm:$0xff]
      %v5101 = vld [vmem:[%s1823 + $0x12a] sm:$0xff]
      %v5102 = vld [vmem:[%s1823 + $0x13a] sm:$0xff]
      %v5103 = vld [vmem:[%s1823 + $0x142] sm:$0xff]
      %v5104 = vld [vmem:[%s1823 + $0x152] sm:$0xff]
      %v5105 = vld [vmem:[%s1823 + $0x15a] sm:$0xff]
      %v5106 = vld [vmem:[%s1823 + $0x16a] sm:$0xff]
      %v5107 = vld [vmem:[%s1823 + $0x172] sm:$0xff]
      %5108 = vst.msk [vmem:[#allocation3 + $0x10] sm:$0xff] %vm520, %v5076
      %5109 = vst.msk [vmem:[#allocation3 + $0x28] sm:$0xff] %vm520, %v5077
      %5110 = vst.msk [vmem:[#allocation3 + $0x40] sm:$0xff] %vm520, %v5078
      %5111 = vst.msk [vmem:[#allocation3 + $0x58] sm:$0xff] %vm520, %v5079
      %5112 = vst.msk [vmem:[#allocation3 + $0x70] sm:$0xff] %vm520, %v5080
      %5113 = vst.msk [vmem:[#allocation3 + $0x88] sm:$0xff] %vm520, %v5081
      %5114 = vst.msk [vmem:[#allocation3 + $0xa0] sm:$0xff] %vm520, %v5082
      %5115 = vst.msk [vmem:[#allocation3 + $0xb8] sm:$0xff] %vm520, %v5083
      %5116 = vst.msk [vmem:[#allocation3 + $0xd0] sm:$0xff] %vm520, %v5084
      %5117 = vst.msk [vmem:[#allocation3 + $0xe8] sm:$0xff] %vm520, %v5085
      %5118 = vst.msk [vmem:[#allocation3 + $0x100] sm:$0xff] %vm520, %v5086
      %5119 = vst.msk [vmem:[#allocation3 + $0x118] sm:$0xff] %vm520, %v5087
      %5120 = vst.msk [vmem:[#allocation3 + $0x130] sm:$0xff] %vm520, %v5088
      %5121 = vst.msk [vmem:[#allocation3 + $0x148] sm:$0xff] %vm520, %v5089
      %5122 = vst.msk [vmem:[#allocation3 + $0x160] sm:$0xff] %vm520, %v5090
      %5123 = vst.msk [vmem:[#allocation3 + $0x178] sm:$0xff] %vm520, %v5091
      %5124 = vst.msk [vmem:[#allocation3 + $0x190] sm:$0xff] %vm520, %v5092
      %5125 = vst.msk [vmem:[#allocation3 + $0x1a8] sm:$0xff] %vm520, %v5093
      %5126 = vst.msk [vmem:[#allocation3 + $0x1c0] sm:$0xff] %vm520, %v5094
      %5127 = vst.msk [vmem:[#allocation3 + $0x1d8] sm:$0xff] %vm520, %v5095
      %5128 = vst.msk [vmem:[#allocation3 + $0x1f0] sm:$0xff] %vm520, %v5096
      %5129 = vst.msk [vmem:[#allocation3 + $0x208] sm:$0xff] %vm520, %v5097
      %5130 = vst.msk [vmem:[#allocation3 + $0x220] sm:$0xff] %vm520, %v5098
      %5131 = vst.msk [vmem:[#allocation3 + $0x238] sm:$0xff] %vm520, %v5099
      %5132 = vst.msk [vmem:[#allocation3 + $0x250] sm:$0xff] %vm520, %v5100
      %5133 = vst.msk [vmem:[#allocation3 + $0x268] sm:$0xff] %vm520, %v5101
      %5134 = vst.msk [vmem:[#allocation3 + $0x280] sm:$0xff] %vm520, %v5102
      %5135 = vst.msk [vmem:[#allocation3 + $0x298] sm:$0xff] %vm520, %v5103
      %5136 = vst.msk [vmem:[#allocation3 + $0x2b0] sm:$0xff] %vm520, %v5104
      %5137 = vst.msk [vmem:[#allocation3 + $0x2c8] sm:$0xff] %vm520, %v5105
      %5138 = vst.msk [vmem:[#allocation3 + $0x2e0] sm:$0xff] %vm520, %v5106
      %5139 = vst.msk [vmem:[#allocation3 + $0x2f8] sm:$0xff] %vm520, %v5107
      %v5140 = vld [vmem:[#allocation3] sm:$0xff]
      %v5141 = vld [vmem:[#allocation3 + $0x8] sm:$0xff]
      %v5142 = vld [vmem:[#allocation3 + $0x10] sm:$0xff]
      %v5143 = vld [vmem:[#allocation3 + $0x18] sm:$0xff]
      %v5144 = vld [vmem:[#allocation3 + $0x20] sm:$0xff]
      %v5145 = vld [vmem:[#allocation3 + $0x28] sm:$0xff]
      %v5146 = vld [vmem:[#allocation3 + $0x30] sm:$0xff]
      %v5147 = vld [vmem:[#allocation3 + $0x38] sm:$0xff]
      %v5148 = vld [vmem:[#allocation3 + $0x40] sm:$0xff]
      %v5149 = vld [vmem:[#allocation3 + $0x48] sm:$0xff]
      %v5150 = vld [vmem:[#allocation3 + $0x50] sm:$0xff]
      %v5151 = vld [vmem:[#allocation3 + $0x58] sm:$0xff]
      %v5152 = vld [vmem:[#allocation3 + $0x60] sm:$0xff]
      %v5153 = vld [vmem:[#allocation3 + $0x68] sm:$0xff]
      %v5154 = vld [vmem:[#allocation3 + $0x70] sm:$0xff]
      %v5155 = vld [vmem:[#allocation3 + $0x78] sm:$0xff]
      %v5156 = vld [vmem:[#allocation3 + $0x80] sm:$0xff]
      %v5157 = vld [vmem:[#allocation3 + $0x88] sm:$0xff]
      %v5158 = vld [vmem:[#allocation3 + $0x90] sm:$0xff]
      %v5159 = vld [vmem:[#allocation3 + $0x98] sm:$0xff]
      %v5160 = vld [vmem:[#allocation3 + $0xa0] sm:$0xff]
      %v5161 = vld [vmem:[#allocation3 + $0xa8] sm:$0xff]
      %v5162 = vld [vmem:[#allocation3 + $0xb0] sm:$0xff]
      %v5163 = vld [vmem:[#allocation3 + $0xb8] sm:$0xff]
      %v5164 = vld [vmem:[#allocation3 + $0xc0] sm:$0xff]
      %v5165 = vld [vmem:[#allocation3 + $0xc8] sm:$0xff]
      %v5166 = vld [vmem:[#allocation3 + $0xd0] sm:$0xff]
      %v5167 = vld [vmem:[#allocation3 + $0xd8] sm:$0xff]
      %v5168 = vld [vmem:[#allocation3 + $0xe0] sm:$0xff]
      %v5169 = vld [vmem:[#allocation3 + $0xe8] sm:$0xff]
      %v5170 = vld [vmem:[#allocation3 + $0xf0] sm:$0xff]
      %v5171 = vld [vmem:[#allocation3 + $0xf8] sm:$0xff]
      %v5172 = vld [vmem:[#allocation3 + $0x100] sm:$0xff]
      %v5173 = vld [vmem:[#allocation3 + $0x108] sm:$0xff]
      %v5174 = vld [vmem:[#allocation3 + $0x110] sm:$0xff]
      %v5175 = vld [vmem:[#allocation3 + $0x118] sm:$0xff]
      %v5176 = vld [vmem:[#allocation3 + $0x120] sm:$0xff]
      %v5177 = vld [vmem:[#allocation3 + $0x128] sm:$0xff]
      %v5178 = vld [vmem:[#allocation3 + $0x130] sm:$0xff]
      %v5179 = vld [vmem:[#allocation3 + $0x138] sm:$0xff]
      %v5180 = vld [vmem:[#allocation3 + $0x140] sm:$0xff]
      %v5181 = vld [vmem:[#allocation3 + $0x148] sm:$0xff]
      %v5182 = vld [vmem:[#allocation3 + $0x150] sm:$0xff]
      %v5183 = vld [vmem:[#allocation3 + $0x158] sm:$0xff]
      %v5184 = vld [vmem:[#allocation3 + $0x160] sm:$0xff]
      %v5185 = vld [vmem:[#allocation3 + $0x168] sm:$0xff]
      %v5186 = vld [vmem:[#allocation3 + $0x170] sm:$0xff]
      %v5187 = vld [vmem:[#allocation3 + $0x178] sm:$0xff]
      %v5188 = vld [vmem:[#allocation3 + $0x180] sm:$0xff]
      %v5189 = vld [vmem:[#allocation3 + $0x188] sm:$0xff]
      %v5190 = vld [vmem:[#allocation3 + $0x190] sm:$0xff]
      %v5191 = vld [vmem:[#allocation3 + $0x198] sm:$0xff]
      %v5192 = vld [vmem:[#allocation3 + $0x1a0] sm:$0xff]
      %v5193 = vld [vmem:[#allocation3 + $0x1a8] sm:$0xff]
      %v5194 = vld [vmem:[#allocation3 + $0x1b0] sm:$0xff]
      %v5195 = vld [vmem:[#allocation3 + $0x1b8] sm:$0xff]
      %v5196 = vld [vmem:[#allocation3 + $0x1c0] sm:$0xff]
      %v5197 = vld [vmem:[#allocation3 + $0x1c8] sm:$0xff]
      %v5198 = vld [vmem:[#allocation3 + $0x1d0] sm:$0xff]
      %v5199 = vld [vmem:[#allocation3 + $0x1d8] sm:$0xff]
      %v5200 = vld [vmem:[#allocation3 + $0x1e0] sm:$0xff]
      %v5201 = vld [vmem:[#allocation3 + $0x1e8] sm:$0xff]
      %v5202 = vld [vmem:[#allocation3 + $0x1f0] sm:$0xff]
      %v5203 = vld [vmem:[#allocation3 + $0x1f8] sm:$0xff]
      %v5204 = vld [vmem:[#allocation3 + $0x200] sm:$0xff]
      %v5205 = vld [vmem:[#allocation3 + $0x208] sm:$0xff]
      %v5206 = vld [vmem:[#allocation3 + $0x210] sm:$0xff]
      %v5207 = vld [vmem:[#allocation3 + $0x218] sm:$0xff]
      %v5208 = vld [vmem:[#allocation3 + $0x220] sm:$0xff]
      %v5209 = vld [vmem:[#allocation3 + $0x228] sm:$0xff]
      %v5210 = vld [vmem:[#allocation3 + $0x230] sm:$0xff]
      %v5211 = vld [vmem:[#allocation3 + $0x238] sm:$0xff]
      %v5212 = vld [vmem:[#allocation3 + $0x240] sm:$0xff]
      %v5213 = vld [vmem:[#allocation3 + $0x248] sm:$0xff]
      %v5214 = vld [vmem:[#allocation3 + $0x250] sm:$0xff]
      %v5215 = vld [vmem:[#allocation3 + $0x258] sm:$0xff]
      %v5216 = vld [vmem:[#allocation3 + $0x260] sm:$0xff]
      %v5217 = vld [vmem:[#allocation3 + $0x268] sm:$0xff]
      %v5218 = vld [vmem:[#allocation3 + $0x270] sm:$0xff]
      %v5219 = vld [vmem:[#allocation3 + $0x278] sm:$0xff]
      %v5220 = vld [vmem:[#allocation3 + $0x280] sm:$0xff]
      %v5221 = vld [vmem:[#allocation3 + $0x288] sm:$0xff]
      %v5222 = vld [vmem:[#allocation3 + $0x290] sm:$0xff]
      %v5223 = vld [vmem:[#allocation3 + $0x298] sm:$0xff]
      %v5224 = vld [vmem:[#allocation3 + $0x2a0] sm:$0xff]
      %v5225 = vld [vmem:[#allocation3 + $0x2a8] sm:$0xff]
      %v5226 = vld [vmem:[#allocation3 + $0x2b0] sm:$0xff]
      %v5227 = vld [vmem:[#allocation3 + $0x2b8] sm:$0xff]
      %v5228 = vld [vmem:[#allocation3 + $0x2c0] sm:$0xff]
      %v5229 = vld [vmem:[#allocation3 + $0x2c8] sm:$0xff]
      %v5230 = vld [vmem:[#allocation3 + $0x2d0] sm:$0xff]
      %v5231 = vld [vmem:[#allocation3 + $0x2d8] sm:$0xff]
      %v5232 = vld [vmem:[#allocation3 + $0x2e0] sm:$0xff]
      %v5233 = vld [vmem:[#allocation3 + $0x2e8] sm:$0xff]
      %v5234 = vld [vmem:[#allocation3 + $0x2f0] sm:$0xff]
      %v5235 = vld [vmem:[#allocation3 + $0x2f8] sm:$0xff]
      %v5236 = vld [vmem:[%s3] sm:$0xff]
      %v5237 = vld [vmem:[%s3 + $0x8] sm:$0xff]
      %v5238 = vld [vmem:[%s3 + $0x10] sm:$0xff]
      %v5239 = vld [vmem:[%s3 + $0x18] sm:$0xff]
      %v5240 = vld [vmem:[%s3 + $0x20] sm:$0xff]
      %v5241 = vld [vmem:[%s3 + $0x28] sm:$0xff]
      %v5242 = vld [vmem:[%s3 + $0x30] sm:$0xff]
      %v5243 = vld [vmem:[%s3 + $0x38] sm:$0xff]
      %v5244 = vld [vmem:[%s3 + $0x40] sm:$0xff]
      %v5245 = vld [vmem:[%s3 + $0x48] sm:$0xff]
      %v5246 = vld [vmem:[%s3 + $0x50] sm:$0xff]
      %v5247 = vld [vmem:[%s3 + $0x58] sm:$0xff]
      %v5248 = vld [vmem:[%s3 + $0x60] sm:$0xff]
      %v5249 = vld [vmem:[%s3 + $0x68] sm:$0xff]
      %v5250 = vld [vmem:[%s3 + $0x70] sm:$0xff]
      %v5251 = vld [vmem:[%s3 + $0x78] sm:$0xff]
      %v5252 = vld [vmem:[%s3 + $0x80] sm:$0xff]
      %v5253 = vld [vmem:[%s3 + $0x88] sm:$0xff]
      %v5254 = vld [vmem:[%s3 + $0x90] sm:$0xff]
      %v5255 = vld [vmem:[%s3 + $0x98] sm:$0xff]
      %v5256 = vld [vmem:[%s3 + $0xa0] sm:$0xff]
      %v5257 = vld [vmem:[%s3 + $0xa8] sm:$0xff]
      %v5258 = vld [vmem:[%s3 + $0xb0] sm:$0xff]
      %v5259 = vld [vmem:[%s3 + $0xb8] sm:$0xff]
      %v5260 = vld [vmem:[%s3 + $0xc0] sm:$0xff]
      %v5261 = vld [vmem:[%s3 + $0xc8] sm:$0xff]
      %v5262 = vld [vmem:[%s3 + $0xd0] sm:$0xff]
      %v5263 = vld [vmem:[%s3 + $0xd8] sm:$0xff]
      %v5264 = vld [vmem:[%s3 + $0xe0] sm:$0xff]
      %v5265 = vld [vmem:[%s3 + $0xe8] sm:$0xff]
      %v5266 = vld [vmem:[%s3 + $0xf0] sm:$0xff]
      %v5267 = vld [vmem:[%s3 + $0xf8] sm:$0xff]
      %v5268 = vld [vmem:[%s3 + $0x100] sm:$0xff]
      %v5269 = vld [vmem:[%s3 + $0x108] sm:$0xff]
      %v5270 = vld [vmem:[%s3 + $0x110] sm:$0xff]
      %v5271 = vld [vmem:[%s3 + $0x118] sm:$0xff]
      %v5272 = vld [vmem:[%s4] sm:$0x1]
      %v5274 = vlaneseq
      %v5275 = vshrl.u32 %v5274, 7
      %v5276 = vsub.s32 0, %v5275
      %v5277 = vrot.slane %v5272, %v5276
      %v5280 = vsel %vm520, %v5142, 0
      %v5283 = vsel %vm520, %v5145, 0
      %v5286 = vsel %vm520, %v5148, 0
      %v5289 = vsel %vm520, %v5151, 0
      %v5292 = vsel %vm520, %v5154, 0
      %v5295 = vsel %vm520, %v5157, 0
      %v5298 = vsel %vm520, %v5160, 0
      %v5301 = vsel %vm520, %v5163, 0
      %v5304 = vsel %vm520, %v5166, 0
      %v5307 = vsel %vm520, %v5169, 0
      %v5310 = vsel %vm520, %v5172, 0
      %v5313 = vsel %vm520, %v5175, 0
      %v5316 = vsel %vm520, %v5178, 0
      %v5319 = vsel %vm520, %v5181, 0
      %v5322 = vsel %vm520, %v5184, 0
      %v5325 = vsel %vm520, %v5187, 0
      %v5328 = vsel %vm520, %v5190, 0
      %v5331 = vsel %vm520, %v5193, 0
      %v5334 = vsel %vm520, %v5196, 0
      %v5337 = vsel %vm520, %v5199, 0
      %v5340 = vsel %vm520, %v5202, 0
      %v5343 = vsel %vm520, %v5205, 0
      %v5346 = vsel %vm520, %v5208, 0
      %v5349 = vsel %vm520, %v5211, 0
      %v5352 = vsel %vm520, %v5214, 0
      %v5355 = vsel %vm520, %v5217, 0
      %v5358 = vsel %vm520, %v5220, 0
      %v5361 = vsel %vm520, %v5223, 0
      %v5364 = vsel %vm520, %v5226, 0
      %v5367 = vsel %vm520, %v5229, 0
      %v5370 = vsel %vm520, %v5232, 0
      %v5373 = vsel %vm520, %v5235, 0
      %5375 = vmatprep.subr.mxu0 0.0
      %5376 = vmatpush1.msra.mxu0 %v5236
      %5377 = vmatprep.subr.mxu0 0.0
      %5378 = vmatpush1.msra.mxu0 %v5237
      %5379 = vmatprep.subr.mxu0 0.0
      %5380 = vmatpush1.msra.mxu0 %v5238
      %5381 = vmatprep.subr.mxu0 0.0
      %5382 = vmatpush1.msra.mxu0 %v5239
      %5383 = vmatprep.subr.mxu0 0.0
      %5384 = vmatpush1.msra.mxu0 %v5240
      %5385 = vmatprep.subr.mxu0 0.0
      %5386 = vmatpush1.msra.mxu0 %v5241
      %5387 = vmatprep.subr.mxu0 0.0
      %5388 = vmatpush1.msra.mxu0 %v5242
      %5389 = vmatprep.subr.mxu0 0.0
      %5390 = vmatpush1.msra.mxu0 %v5243
      %5391 = vmatprep.subr.mxu0 0.0
      %5392 = vmatpush1.msra.mxu0 %v5244
      %5393 = vmatprep.subr.mxu0 0.0
      %5394 = vmatpush1.msra.mxu0 %v5245
      %5395 = vmatprep.subr.mxu0 0.0
      %5396 = vmatpush1.msra.mxu0 %v5246
      %5397 = vmatprep.subr.mxu0 0.0
      %5398 = vmatpush1.msra.mxu0 %v5247
      %5399 = vmatprep.subr.mxu0 0.0
      %5400 = vmatpush1.msra.mxu0 %v5248
      %5401 = vmatprep.subr.mxu0 0.0
      %5402 = vmatpush1.msra.mxu0 %v5249
      %5403 = vmatprep.subr.mxu0 0.0
      %5404 = vmatpush1.msra.mxu0 %v5250
      %5405 = vmatprep.subr.mxu0 0.0
      %5406 = vmatpush1.msra.mxu0 %v5251
      %5407 = vmatprep.subr.mxu0 0.0
      %5408 = vmatpush1.msra.mxu0 %v5252
      %5409 = vmatprep.subr.mxu0 0.0
      %5410 = vmatpush1.msra.mxu0 %v5253
      %5411 = vmatprep.subr.mxu0 0.0
      %5412 = vmatpush1.msra.mxu0 %v5254
      %5413 = vmatprep.subr.mxu0 0.0
      %5414 = vmatpush1.msra.mxu0 %v5255
      %5415 = vmatprep.subr.mxu0 0.0
      %5416 = vmatpush1.msra.mxu0 %v5256
      %5417 = vmatprep.subr.mxu0 0.0
      %5418 = vmatpush1.msra.mxu0 %v5257
      %5419 = vmatprep.subr.mxu0 0.0
      %5420 = vmatpush1.msra.mxu0 %v5258
      %5421 = vmatprep.subr.mxu0 0.0
      %5422 = vmatpush1.msra.mxu0 %v5259
      %5423 = vmatprep.subr.mxu0 0.0
      %5424 = vmatpush1.msra.mxu0 %v5260
      %5425 = vmatprep.subr.mxu0 0.0
      %5426 = vmatpush1.msra.mxu0 %v5261
      %5427 = vmatprep.subr.mxu0 0.0
      %5428 = vmatpush1.msra.mxu0 %v5262
      %5429 = vmatprep.subr.mxu0 0.0
      %5430 = vmatpush1.msra.mxu0 %v5263
      %5431 = vmatprep.subr.mxu0 0.0
      %5432 = vmatpush1.msra.mxu0 %v5264
      %5433 = vmatprep.subr.mxu0 0.0
      %5434 = vmatpush1.msra.mxu0 %v5265
      %5435 = vmatprep.subr.mxu0 0.0
      %5436 = vmatpush1.msra.mxu0 %v5266
      %5437 = vmatprep.subr.mxu0 0.0
      %5438 = vmatpush1.msra.mxu0 %v5267
      %5439 = vmatprep.mubr.f32.mxu0 %v5141
      %5440 = vmatmul.mubr.f32.gmra.mrb[0].mxu0 %v5140
      %v5441 = vpop.f32.mrb[0].mxu0
      %v5442 = vadd.f32 %v5277, %v5441
      %v5443 = vpop.f32.mrb[0].mxu0
      %5444 = vmatprep.mubr.f32.mxu0 %v5144
      %5445 = vmatmul.mubr.f32.gmra.mrb[0].mxu0 %v5143
      %v5446 = vpop.f32.mrb[0].mxu0
      %v5447 = vadd.f32 %v5277, %v5446
      %v5448 = vpop.f32.mrb[0].mxu0
      %5449 = vmatprep.mubr.f32.mxu0 %v5147
      %5450 = vmatmul.mubr.f32.gmra.mrb[0].mxu0 %v5146
      %v5451 = vpop.f32.mrb[0].mxu0
      %v5452 = vadd.f32 %v5277, %v5451
      %v5453 = vpop.f32.mrb[0].mxu0
      %5454 = vmatprep.mubr.f32.mxu0 %v5150
      %5455 = vmatmul.mubr.f32.gmra.mrb[0].mxu0 %v5149
      %v5456 = vpop.f32.mrb[0].mxu0
      %v5457 = vadd.f32 %v5277, %v5456
      %v5458 = vpop.f32.mrb[0].mxu0
      %5459 = vmatprep.mubr.f32.mxu0 %v5153
      %5460 = vmatmul.mubr.f32.gmra.mrb[0].mxu0 %v5152
      %v5461 = vpop.f32.mrb[0].mxu0
      %v5462 = vadd.f32 %v5277, %v5461
      %v5463 = vpop.f32.mrb[0].mxu0
      %5464 = vmatprep.mubr.f32.mxu0 %v5156
      %5465 = vmatmul.mubr.f32.gmra.mrb[0].mxu0 %v5155
      %v5466 = vpop.f32.mrb[0].mxu0
      %v5467 = vadd.f32 %v5277, %v5466
      %v5468 = vpop.f32.mrb[0].mxu0
      %5469 = vmatprep.mubr.f32.mxu0 %v5159
      %5470 = vmatmul.mubr.f32.gmra.mrb[0].mxu0 %v5158
      %v5471 = vpop.f32.mrb[0].mxu0
      %v5472 = vadd.f32 %v5277, %v5471
      %v5473 = vpop.f32.mrb[0].mxu0
      %5474 = vmatprep.mubr.f32.mxu0 %v5162
      %5475 = vmatmul.mubr.f32.gmra.mrb[0].mxu0 %v5161
      %v5476 = vpop.f32.mrb[0].mxu0
      %v5477 = vadd.f32 %v5277, %v5476
      %v5478 = vpop.f32.mrb[0].mxu0
      %5479 = vmatprep.mubr.f32.mxu0 %v5165
      %5480 = vmatmul.mubr.f32.gmra.mrb[0].mxu0 %v5164
      %v5481 = vpop.f32.mrb[0].mxu0
      %v5482 = vadd.f32 %v5277, %v5481
      %v5483 = vpop.f32.mrb[0].mxu0
      %5484 = vmatprep.mubr.f32.mxu0 %v5168
      %5485 = vmatmul.mubr.f32.gmra.mrb[0].mxu0 %v5167
      %v5486 = vpop.f32.mrb[0].mxu0
      %v5487 = vadd.f32 %v5277, %v5486
      %v5488 = vpop.f32.mrb[0].mxu0
      %5489 = vmatprep.mubr.f32.mxu0 %v5171
      %5490 = vmatmul.mubr.f32.gmra.mrb[0].mxu0 %v5170
      %v5491 = vpop.f32.mrb[0].mxu0
      %v5492 = vadd.f32 %v5277, %v5491
      %v5493 = vpop.f32.mrb[0].mxu0
      %5494 = vmatprep.mubr.f32.mxu0 %v5174
      %5495 = vmatmul.mubr.f32.gmra.mrb[0].mxu0 %v5173
      %v5496 = vpop.f32.mrb[0].mxu0
      %v5497 = vadd.f32 %v5277, %v5496
      %v5498 = vpop.f32.mrb[0].mxu0
      %5499 = vmatprep.mubr.f32.mxu0 %v5177
      %5500 = vmatmul.mubr.f32.gmra.mrb[0].mxu0 %v5176
      %v5501 = vpop.f32.mrb[0].mxu0
      %v5502 = vadd.f32 %v5277, %v5501
      %v5503 = vpop.f32.mrb[0].mxu0
      %5504 = vmatprep.mubr.f32.mxu0 %v5180
      %5505 = vmatmul.mubr.f32.gmra.mrb[0].mxu0 %v5179
      %v5506 = vpop.f32.mrb[0].mxu0
      %v5507 = vadd.f32 %v5277, %v5506
      %v5508 = vpop.f32.mrb[0].mxu0
      %5509 = vmatprep.mubr.f32.mxu0 %v5183
      %5510 = vmatmul.mubr.f32.gmra.mrb[0].mxu0 %v5182
      %v5511 = vpop.f32.mrb[0].mxu0
      %v5512 = vadd.f32 %v5277, %v5511
      %v5513 = vpop.f32.mrb[0].mxu0
      %5514 = vmatprep.mubr.f32.mxu0 %v5186
      %5515 = vmatmul.mubr.f32.gmra.mrb[0].mxu0 %v5185
      %v5516 = vpop.f32.mrb[0].mxu0
      %v5517 = vadd.f32 %v5277, %v5516
      %v5518 = vpop.f32.mrb[0].mxu0
      %5519 = vmatprep.mubr.f32.mxu0 %v5189
      %5520 = vmatmul.mubr.f32.gmra.mrb[0].mxu0 %v5188
      %v5521 = vpop.f32.mrb[0].mxu0
      %v5522 = vadd.f32 %v5277, %v5521
      %v5523 = vpop.f32.mrb[0].mxu0
      %5524 = vmatprep.mubr.f32.mxu0 %v5192
      %5525 = vmatmul.mubr.f32.gmra.mrb[0].mxu0 %v5191
      %v5526 = vpop.f32.mrb[0].mxu0
      %v5527 = vadd.f32 %v5277, %v5526
      %v5528 = vpop.f32.mrb[0].mxu0
      %5529 = vmatprep.mubr.f32.mxu0 %v5195
      %5530 = vmatmul.mubr.f32.gmra.mrb[0].mxu0 %v5194
      %v5531 = vpop.f32.mrb[0].mxu0
      %v5532 = vadd.f32 %v5277, %v5531
      %v5533 = vpop.f32.mrb[0].mxu0
      %5534 = vmatprep.mubr.f32.mxu0 %v5198
      %5535 = vmatmul.mubr.f32.gmra.mrb[0].mxu0 %v5197
      %v5536 = vpop.f32.mrb[0].mxu0
      %v5537 = vadd.f32 %v5277, %v5536
      %v5538 = vpop.f32.mrb[0].mxu0
      %5539 = vmatprep.mubr.f32.mxu0 %v5201
      %5540 = vmatmul.mubr.f32.gmra.mrb[0].mxu0 %v5200
      %v5541 = vpop.f32.mrb[0].mxu0
      %v5542 = vadd.f32 %v5277, %v5541
      %v5543 = vpop.f32.mrb[0].mxu0
      %5544 = vmatprep.mubr.f32.mxu0 %v5204
      %5545 = vmatmul.mubr.f32.gmra.mrb[0].mxu0 %v5203
      %v5546 = vpop.f32.mrb[0].mxu0
      %v5547 = vadd.f32 %v5277, %v5546
      %v5548 = vpop.f32.mrb[0].mxu0
      %5549 = vmatprep.mubr.f32.mxu0 %v5207
      %5550 = vmatmul.mubr.f32.gmra.mrb[0].mxu0 %v5206
      %v5551 = vpop.f32.mrb[0].mxu0
      %v5552 = vadd.f32 %v5277, %v5551
      %v5553 = vpop.f32.mrb[0].mxu0
      %5554 = vmatprep.mubr.f32.mxu0 %v5210
      %5555 = vmatmul.mubr.f32.gmra.mrb[0].mxu0 %v5209
      %v5556 = vpop.f32.mrb[0].mxu0
      %v5557 = vadd.f32 %v5277, %v5556
      %v5558 = vpop.f32.mrb[0].mxu0
      %5559 = vmatprep.mubr.f32.mxu0 %v5213
      %5560 = vmatmul.mubr.f32.gmra.mrb[0].mxu0 %v5212
      %v5561 = vpop.f32.mrb[0].mxu0
      %v5562 = vadd.f32 %v5277, %v5561
      %v5563 = vpop.f32.mrb[0].mxu0
      %5564 = vmatprep.mubr.f32.mxu0 %v5216
      %5565 = vmatmul.mubr.f32.gmra.mrb[0].mxu0 %v5215
      %v5566 = vpop.f32.mrb[0].mxu0
      %v5567 = vadd.f32 %v5277, %v5566
      %v5568 = vpop.f32.mrb[0].mxu0
      %5569 = vmatprep.mubr.f32.mxu0 %v5219
      %5570 = vmatmul.mubr.f32.gmra.mrb[0].mxu0 %v5218
      %v5571 = vpop.f32.mrb[0].mxu0
      %v5572 = vadd.f32 %v5277, %v5571
      %v5573 = vpop.f32.mrb[0].mxu0
      %5574 = vmatprep.mubr.f32.mxu0 %v5222
      %5575 = vmatmul.mubr.f32.gmra.mrb[0].mxu0 %v5221
      %v5576 = vpop.f32.mrb[0].mxu0
      %v5577 = vadd.f32 %v5277, %v5576
      %v5578 = vpop.f32.mrb[0].mxu0
      %5579 = vmatprep.mubr.f32.mxu0 %v5225
      %5580 = vmatmul.mubr.f32.gmra.mrb[0].mxu0 %v5224
      %v5581 = vpop.f32.mrb[0].mxu0
      %v5582 = vadd.f32 %v5277, %v5581
      %v5583 = vpop.f32.mrb[0].mxu0
      %5584 = vmatprep.mubr.f32.mxu0 %v5228
      %5585 = vmatmul.mubr.f32.gmra.mrb[0].mxu0 %v5227
      %v5586 = vpop.f32.mrb[0].mxu0
      %v5587 = vadd.f32 %v5277, %v5586
      %v5588 = vpop.f32.mrb[0].mxu0
      %5589 = vmatprep.mubr.f32.mxu0 %v5231
      %5590 = vmatmul.mubr.f32.gmra.mrb[0].mxu0 %v5230
      %v5591 = vpop.f32.mrb[0].mxu0
      %v5592 = vadd.f32 %v5277, %v5591
      %v5593 = vpop.f32.mrb[0].mxu0
      %5594 = vmatprep.mubr.f32.mxu0 %v5234
      %5595 = vmatmul.mubr.f32.gmra.mrb[0].mxu0 %v5233
      %v5596 = vpop.f32.mrb[0].mxu0
      %v5597 = vadd.f32 %v5277, %v5596
      %v5598 = vpop.f32.mrb[0].mxu0
      %5599 = vdwg.mxu0
      %5600 = vmatprep.subr.mxu0 0.0
      %5601 = vmatpush1.msra.mxu0 %v5268
      %5602 = vmatprep.subr.mxu0 0.0
      %5603 = vmatpush1.msra.mxu0 %v5269
      %5604 = vmatprep.subr.mxu0 0.0
      %5605 = vmatpush1.msra.mxu0 %v5270
      %5606 = vmatprep.subr.mxu0 0.0
      %5607 = vmatpush1.msra.mxu0 %v5271
      %5608 = vmatprep.subr.mxu0 0.0
      %5609 = vmatpush1.msra.mxu0 0.0
      %5610 = vmatprep.subr.mxu0 0.0
      %5611 = vmatpush1.msra.mxu0 0.0
      %5612 = vmatprep.subr.mxu0 0.0
      %5613 = vmatpush1.msra.mxu0 0.0
      %5614 = vmatprep.subr.mxu0 0.0
      %5615 = vmatpush1.msra.mxu0 0.0
      %5616 = vmatprep.subr.mxu0 0.0
      %5617 = vmatpush1.msra.mxu0 0.0
      %5618 = vmatprep.subr.mxu0 0.0
      %5619 = vmatpush1.msra.mxu0 0.0
      %5620 = vmatprep.subr.mxu0 0.0
      %5621 = vmatpush1.msra.mxu0 0.0
      %5622 = vmatprep.subr.mxu0 0.0
      %5623 = vmatpush1.msra.mxu0 0.0
      %5624 = vmatprep.subr.mxu0 0.0
      %5625 = vmatpush1.msra.mxu0 0.0
      %5626 = vmatprep.subr.mxu0 0.0
      %5627 = vmatpush1.msra.mxu0 0.0
      %5628 = vmatprep.subr.mxu0 0.0
      %5629 = vmatpush1.msra.mxu0 0.0
      %5630 = vmatprep.subr.mxu0 0.0
      %5631 = vmatpush1.msra.mxu0 0.0
      %5632 = vmatprep.subr.mxu0 0.0
      %5633 = vmatpush1.msra.mxu0 0.0
      %5634 = vmatprep.subr.mxu0 0.0
      %5635 = vmatpush1.msra.mxu0 0.0
      %5636 = vmatprep.subr.mxu0 0.0
      %5637 = vmatpush1.msra.mxu0 0.0
      %5638 = vmatprep.subr.mxu0 0.0
      %5639 = vmatpush1.msra.mxu0 0.0
      %5640 = vmatprep.subr.mxu0 0.0
      %5641 = vmatpush1.msra.mxu0 0.0
      %5642 = vmatprep.subr.mxu0 0.0
      %5643 = vmatpush1.msra.mxu0 0.0
      %5644 = vmatprep.subr.mxu0 0.0
      %5645 = vmatpush1.msra.mxu0 0.0
      %5646 = vmatprep.subr.mxu0 0.0
      %5647 = vmatpush1.msra.mxu0 0.0
      %5648 = vmatprep.subr.mxu0 0.0
      %5649 = vmatpush1.msra.mxu0 0.0
      %5650 = vmatprep.subr.mxu0 0.0
      %5651 = vmatpush1.msra.mxu0 0.0
      %5652 = vmatprep.subr.mxu0 0.0
      %5653 = vmatpush1.msra.mxu0 0.0
      %5654 = vmatprep.subr.mxu0 0.0
      %5655 = vmatpush1.msra.mxu0 0.0
      %5656 = vmatprep.subr.mxu0 0.0
      %5657 = vmatpush1.msra.mxu0 0.0
      %5658 = vmatprep.subr.mxu0 0.0
      %5659 = vmatpush1.msra.mxu0 0.0
      %5660 = vmatprep.subr.mxu0 0.0
      %5661 = vmatpush1.msra.mxu0 0.0
      %5662 = vmatprep.subr.mxu0 0.0
      %5663 = vmatpush1.msra.mxu0 0.0
      %5664 = vmatprep.mubr.f32.mxu0 0.0
      %5665 = vmatmul.mubr.f32.gmra.mrb[0].mxu0 %v5280
      %v5666 = vpop.f32.mrb[0].mxu0
      %v5667 = vadd.f32 %v5442, %v5666
      %v5668 = vpop.f32.mrb[0].mxu0
      %5669 = vmatprep.mubr.f32.mxu0 0.0
      %5670 = vmatmul.mubr.f32.gmra.mrb[0].mxu0 %v5283
      %v5671 = vpop.f32.mrb[0].mxu0
      %v5672 = vadd.f32 %v5447, %v5671
      %v5673 = vpop.f32.mrb[0].mxu0
      %5674 = vmatprep.mubr.f32.mxu0 0.0
      %5675 = vmatmul.mubr.f32.gmra.mrb[0].mxu0 %v5286
      %v5676 = vpop.f32.mrb[0].mxu0
      %v5677 = vadd.f32 %v5452, %v5676
      %v5678 = vpop.f32.mrb[0].mxu0
      %5679 = vmatprep.mubr.f32.mxu0 0.0
      %5680 = vmatmul.mubr.f32.gmra.mrb[0].mxu0 %v5289
      %v5681 = vpop.f32.mrb[0].mxu0
      %v5682 = vadd.f32 %v5457, %v5681
      %v5683 = vpop.f32.mrb[0].mxu0
      %5684 = vmatprep.mubr.f32.mxu0 0.0
      %5685 = vmatmul.mubr.f32.gmra.mrb[0].mxu0 %v5292
      %v5686 = vpop.f32.mrb[0].mxu0
      %v5687 = vadd.f32 %v5462, %v5686
      %v5688 = vpop.f32.mrb[0].mxu0
      %5689 = vmatprep.mubr.f32.mxu0 0.0
      %5690 = vmatmul.mubr.f32.gmra.mrb[0].mxu0 %v5295
      %v5691 = vpop.f32.mrb[0].mxu0
      %v5692 = vadd.f32 %v5467, %v5691
      %v5693 = vpop.f32.mrb[0].mxu0
      %5694 = vmatprep.mubr.f32.mxu0 0.0
      %5695 = vmatmul.mubr.f32.gmra.mrb[0].mxu0 %v5298
      %v5696 = vpop.f32.mrb[0].mxu0
      %v5697 = vadd.f32 %v5472, %v5696
      %v5698 = vpop.f32.mrb[0].mxu0
      %5699 = vmatprep.mubr.f32.mxu0 0.0
      %5700 = vmatmul.mubr.f32.gmra.mrb[0].mxu0 %v5301
      %v5701 = vpop.f32.mrb[0].mxu0
      %v5702 = vadd.f32 %v5477, %v5701
      %v5703 = vpop.f32.mrb[0].mxu0
      %5704 = vmatprep.mubr.f32.mxu0 0.0
      %5705 = vmatmul.mubr.f32.gmra.mrb[0].mxu0 %v5304
      %v5706 = vpop.f32.mrb[0].mxu0
      %v5707 = vadd.f32 %v5482, %v5706
      %v5708 = vpop.f32.mrb[0].mxu0
      %5709 = vmatprep.mubr.f32.mxu0 0.0
      %5710 = vmatmul.mubr.f32.gmra.mrb[0].mxu0 %v5307
      %v5711 = vpop.f32.mrb[0].mxu0
      %v5712 = vadd.f32 %v5487, %v5711
      %v5713 = vpop.f32.mrb[0].mxu0
      %5714 = vmatprep.mubr.f32.mxu0 0.0
      %5715 = vmatmul.mubr.f32.gmra.mrb[0].mxu0 %v5310
      %v5716 = vpop.f32.mrb[0].mxu0
      %v5717 = vadd.f32 %v5492, %v5716
      %v5718 = vpop.f32.mrb[0].mxu0
      %5719 = vmatprep.mubr.f32.mxu0 0.0
      %5720 = vmatmul.mubr.f32.gmra.mrb[0].mxu0 %v5313
      %v5721 = vpop.f32.mrb[0].mxu0
      %v5722 = vadd.f32 %v5497, %v5721
      %v5723 = vpop.f32.mrb[0].mxu0
      %5724 = vmatprep.mubr.f32.mxu0 0.0
      %5725 = vmatmul.mubr.f32.gmra.mrb[0].mxu0 %v5316
      %v5726 = vpop.f32.mrb[0].mxu0
      %v5727 = vadd.f32 %v5502, %v5726
      %v5728 = vpop.f32.mrb[0].mxu0
      %5729 = vmatprep.mubr.f32.mxu0 0.0
      %5730 = vmatmul.mubr.f32.gmra.mrb[0].mxu0 %v5319
      %v5731 = vpop.f32.mrb[0].mxu0
      %v5732 = vadd.f32 %v5507, %v5731
      %v5733 = vpop.f32.mrb[0].mxu0
      %5734 = vmatprep.mubr.f32.mxu0 0.0
      %5735 = vmatmul.mubr.f32.gmra.mrb[0].mxu0 %v5322
      %v5736 = vpop.f32.mrb[0].mxu0
      %v5737 = vadd.f32 %v5512, %v5736
      %v5738 = vpop.f32.mrb[0].mxu0
      %5739 = vmatprep.mubr.f32.mxu0 0.0
      %5740 = vmatmul.mubr.f32.gmra.mrb[0].mxu0 %v5325
      %v5741 = vpop.f32.mrb[0].mxu0
      %v5742 = vadd.f32 %v5517, %v5741
      %v5743 = vpop.f32.mrb[0].mxu0
      %5744 = vmatprep.mubr.f32.mxu0 0.0
      %5745 = vmatmul.mubr.f32.gmra.mrb[0].mxu0 %v5328
      %v5746 = vpop.f32.mrb[0].mxu0
      %v5747 = vadd.f32 %v5522, %v5746
      %v5748 = vpop.f32.mrb[0].mxu0
      %5749 = vmatprep.mubr.f32.mxu0 0.0
      %5750 = vmatmul.mubr.f32.gmra.mrb[0].mxu0 %v5331
      %v5751 = vpop.f32.mrb[0].mxu0
      %v5752 = vadd.f32 %v5527, %v5751
      %v5753 = vpop.f32.mrb[0].mxu0
      %5754 = vmatprep.mubr.f32.mxu0 0.0
      %5755 = vmatmul.mubr.f32.gmra.mrb[0].mxu0 %v5334
      %v5756 = vpop.f32.mrb[0].mxu0
      %v5757 = vadd.f32 %v5532, %v5756
      %v5758 = vpop.f32.mrb[0].mxu0
      %5759 = vmatprep.mubr.f32.mxu0 0.0
      %5760 = vmatmul.mubr.f32.gmra.mrb[0].mxu0 %v5337
      %v5761 = vpop.f32.mrb[0].mxu0
      %v5762 = vadd.f32 %v5537, %v5761
      %v5763 = vpop.f32.mrb[0].mxu0
      %5764 = vmatprep.mubr.f32.mxu0 0.0
      %5765 = vmatmul.mubr.f32.gmra.mrb[0].mxu0 %v5340
      %v5766 = vpop.f32.mrb[0].mxu0
      %v5767 = vadd.f32 %v5542, %v5766
      %v5768 = vpop.f32.mrb[0].mxu0
      %5769 = vmatprep.mubr.f32.mxu0 0.0
      %5770 = vmatmul.mubr.f32.gmra.mrb[0].mxu0 %v5343
      %v5771 = vpop.f32.mrb[0].mxu0
      %v5772 = vadd.f32 %v5547, %v5771
      %v5773 = vpop.f32.mrb[0].mxu0
      %5774 = vmatprep.mubr.f32.mxu0 0.0
      %5775 = vmatmul.mubr.f32.gmra.mrb[0].mxu0 %v5346
      %v5776 = vpop.f32.mrb[0].mxu0
      %v5777 = vadd.f32 %v5552, %v5776
      %v5778 = vpop.f32.mrb[0].mxu0
      %5779 = vmatprep.mubr.f32.mxu0 0.0
      %5780 = vmatmul.mubr.f32.gmra.mrb[0].mxu0 %v5349
      %v5781 = vpop.f32.mrb[0].mxu0
      %v5782 = vadd.f32 %v5557, %v5781
      %v5783 = vpop.f32.mrb[0].mxu0
      %5784 = vmatprep.mubr.f32.mxu0 0.0
      %5785 = vmatmul.mubr.f32.gmra.mrb[0].mxu0 %v5352
      %v5786 = vpop.f32.mrb[0].mxu0
      %v5787 = vadd.f32 %v5562, %v5786
      %v5788 = vpop.f32.mrb[0].mxu0
      %5789 = vmatprep.mubr.f32.mxu0 0.0
      %5790 = vmatmul.mubr.f32.gmra.mrb[0].mxu0 %v5355
      %v5791 = vpop.f32.mrb[0].mxu0
      %v5792 = vadd.f32 %v5567, %v5791
      %v5793 = vpop.f32.mrb[0].mxu0
      %5794 = vmatprep.mubr.f32.mxu0 0.0
      %5795 = vmatmul.mubr.f32.gmra.mrb[0].mxu0 %v5358
      %v5796 = vpop.f32.mrb[0].mxu0
      %v5797 = vadd.f32 %v5572, %v5796
      %v5798 = vpop.f32.mrb[0].mxu0
      %5799 = vmatprep.mubr.f32.mxu0 0.0
      %5800 = vmatmul.mubr.f32.gmra.mrb[0].mxu0 %v5361
      %v5801 = vpop.f32.mrb[0].mxu0
      %v5802 = vadd.f32 %v5577, %v5801
      %v5803 = vpop.f32.mrb[0].mxu0
      %5804 = vmatprep.mubr.f32.mxu0 0.0
      %5805 = vmatmul.mubr.f32.gmra.mrb[0].mxu0 %v5364
      %v5806 = vpop.f32.mrb[0].mxu0
      %v5807 = vadd.f32 %v5582, %v5806
      %v5808 = vpop.f32.mrb[0].mxu0
      %5809 = vmatprep.mubr.f32.mxu0 0.0
      %5810 = vmatmul.mubr.f32.gmra.mrb[0].mxu0 %v5367
      %v5811 = vpop.f32.mrb[0].mxu0
      %v5812 = vadd.f32 %v5587, %v5811
      %v5813 = vpop.f32.mrb[0].mxu0
      %5814 = vmatprep.mubr.f32.mxu0 0.0
      %5815 = vmatmul.mubr.f32.gmra.mrb[0].mxu0 %v5370
      %v5816 = vpop.f32.mrb[0].mxu0
      %v5817 = vadd.f32 %v5592, %v5816
      %v5818 = vpop.f32.mrb[0].mxu0
      %5819 = vmatprep.mubr.f32.mxu0 0.0
      %5820 = vmatmul.mubr.f32.gmra.mrb[0].mxu0 %v5373
      %v5821 = vpop.f32.mrb[0].mxu0
      %v5822 = vadd.f32 %v5597, %v5821
      %v5823 = vpop.f32.mrb[0].mxu0
      %5824 = vdwg.mxu0
      %5825 = vst [vmem:[#allocation4] sm:$0xff] %v5667
      %5826 = vst [vmem:[#allocation4 + $0x8] sm:$0xff] %v5672
      %5827 = vst [vmem:[#allocation4 + $0x10] sm:$0xff] %v5677
      %5828 = vst [vmem:[#allocation4 + $0x18] sm:$0xff] %v5682
      %5829 = vst [vmem:[#allocation4 + $0x20] sm:$0xff] %v5687
      %5830 = vst [vmem:[#allocation4 + $0x28] sm:$0xff] %v5692
      %5831 = vst [vmem:[#allocation4 + $0x30] sm:$0xff] %v5697
      %5832 = vst [vmem:[#allocation4 + $0x38] sm:$0xff] %v5702
      %5833 = vst [vmem:[#allocation4 + $0x40] sm:$0xff] %v5707
      %5834 = vst [vmem:[#allocation4 + $0x48] sm:$0xff] %v5712
      %5835 = vst [vmem:[#allocation4 + $0x50] sm:$0xff] %v5717
      %5836 = vst [vmem:[#allocation4 + $0x58] sm:$0xff] %v5722
      %5837 = vst [vmem:[#allocation4 + $0x60] sm:$0xff] %v5727
      %5838 = vst [vmem:[#allocation4 + $0x68] sm:$0xff] %v5732
      %5839 = vst [vmem:[#allocation4 + $0x70] sm:$0xff] %v5737
      %5840 = vst [vmem:[#allocation4 + $0x78] sm:$0xff] %v5742
      %5841 = vst [vmem:[#allocation4 + $0x80] sm:$0xff] %v5747
      %5842 = vst [vmem:[#allocation4 + $0x88] sm:$0xff] %v5752
      %5843 = vst [vmem:[#allocation4 + $0x90] sm:$0xff] %v5757
      %5844 = vst [vmem:[#allocation4 + $0x98] sm:$0xff] %v5762
      %5845 = vst [vmem:[#allocation4 + $0xa0] sm:$0xff] %v5767
      %5846 = vst [vmem:[#allocation4 + $0xa8] sm:$0xff] %v5772
      %5847 = vst [vmem:[#allocation4 + $0xb0] sm:$0xff] %v5777
      %5848 = vst [vmem:[#allocation4 + $0xb8] sm:$0xff] %v5782
      %5849 = vst [vmem:[#allocation4 + $0xc0] sm:$0xff] %v5787
      %5850 = vst [vmem:[#allocation4 + $0xc8] sm:$0xff] %v5792
      %5851 = vst [vmem:[#allocation4 + $0xd0] sm:$0xff] %v5797
      %5852 = vst [vmem:[#allocation4 + $0xd8] sm:$0xff] %v5802
      %5853 = vst [vmem:[#allocation4 + $0xe0] sm:$0xff] %v5807
      %5854 = vst [vmem:[#allocation4 + $0xe8] sm:$0xff] %v5812
      %5855 = vst [vmem:[#allocation4 + $0xf0] sm:$0xff] %v5817
      %5856 = vst [vmem:[#allocation4 + $0xf8] sm:$0xff] %v5822
      %v5857 = vld [vmem:[#allocation4] sm:$0xff]
      %v5858 = vld [vmem:[#allocation4 + $0x8] sm:$0xff]
      %v5859 = vld [vmem:[#allocation4 + $0x10] sm:$0xff]
      %v5860 = vld [vmem:[#allocation4 + $0x18] sm:$0xff]
      %v5861 = vld [vmem:[#allocation4 + $0x20] sm:$0xff]
      %v5862 = vld [vmem:[#allocation4 + $0x28] sm:$0xff]
      %v5863 = vld [vmem:[#allocation4 + $0x30] sm:$0xff]
      %v5864 = vld [vmem:[#allocation4 + $0x38] sm:$0xff]
      %v5865 = vld [vmem:[#allocation4 + $0x40] sm:$0xff]
      %v5866 = vld [vmem:[#allocation4 + $0x48] sm:$0xff]
      %v5867 = vld [vmem:[#allocation4 + $0x50] sm:$0xff]
      %v5868 = vld [vmem:[#allocation4 + $0x58] sm:$0xff]
      %v5869 = vld [vmem:[#allocation4 + $0x60] sm:$0xff]
      %v5870 = vld [vmem:[#allocation4 + $0x68] sm:$0xff]
      %v5871 = vld [vmem:[#allocation4 + $0x70] sm:$0xff]
      %v5872 = vld [vmem:[#allocation4 + $0x78] sm:$0xff]
      %v5873 = vld [vmem:[#allocation4 + $0x80] sm:$0xff]
      %v5874 = vld [vmem:[#allocation4 + $0x88] sm:$0xff]
      %v5875 = vld [vmem:[#allocation4 + $0x90] sm:$0xff]
      %v5876 = vld [vmem:[#allocation4 + $0x98] sm:$0xff]
      %v5877 = vld [vmem:[#allocation4 + $0xa0] sm:$0xff]
      %v5878 = vld [vmem:[#allocation4 + $0xa8] sm:$0xff]
      %v5879 = vld [vmem:[#allocation4 + $0xb0] sm:$0xff]
      %v5880 = vld [vmem:[#allocation4 + $0xb8] sm:$0xff]
      %v5881 = vld [vmem:[#allocation4 + $0xc0] sm:$0xff]
      %v5882 = vld [vmem:[#allocation4 + $0xc8] sm:$0xff]
      %v5883 = vld [vmem:[#allocation4 + $0xd0] sm:$0xff]
      %v5884 = vld [vmem:[#allocation4 + $0xd8] sm:$0xff]
      %v5885 = vld [vmem:[#allocation4 + $0xe0] sm:$0xff]
      %v5886 = vld [vmem:[#allocation4 + $0xe8] sm:$0xff]
      %v5887 = vld [vmem:[#allocation4 + $0xf0] sm:$0xff]
      %v5888 = vld [vmem:[#allocation4 + $0xf8] sm:$0xff]
      %v5889 = vlaneseq
      %v5890 = vshrl.u32 %v5889, 7
      %v5891 = vsub.s32 0, %v5890
      %v5892 = vrot.slane %v3707, %v5891
      %v5893 = vmul.f32 %v5857, %v5892
      %v5894 = vmul.f32 %v5858, %v5892
      %v5895 = vmul.f32 %v5859, %v5892
      %v5896 = vmul.f32 %v5860, %v5892
      %v5897 = vmul.f32 %v5861, %v5892
      %v5898 = vmul.f32 %v5862, %v5892
      %v5899 = vmul.f32 %v5863, %v5892
      %v5900 = vmul.f32 %v5864, %v5892
      %v5901 = vmul.f32 %v5865, %v5892
      %v5902 = vmul.f32 %v5866, %v5892
      %v5903 = vmul.f32 %v5867, %v5892
      %v5904 = vmul.f32 %v5868, %v5892
      %v5905 = vmul.f32 %v5869, %v5892
      %v5906 = vmul.f32 %v5870, %v5892
      %v5907 = vmul.f32 %v5871, %v5892
      %v5908 = vmul.f32 %v5872, %v5892
      %v5909 = vmul.f32 %v5873, %v5892
      %v5910 = vmul.f32 %v5874, %v5892
      %v5911 = vmul.f32 %v5875, %v5892
      %v5912 = vmul.f32 %v5876, %v5892
      %v5913 = vmul.f32 %v5877, %v5892
      %v5914 = vmul.f32 %v5878, %v5892
      %v5915 = vmul.f32 %v5879, %v5892
      %v5916 = vmul.f32 %v5880, %v5892
      %v5917 = vmul.f32 %v5881, %v5892
      %v5918 = vmul.f32 %v5882, %v5892
      %v5919 = vmul.f32 %v5883, %v5892
      %v5920 = vmul.f32 %v5884, %v5892
      %v5921 = vmul.f32 %v5885, %v5892
      %v5922 = vmul.f32 %v5886, %v5892
      %v5923 = vmul.f32 %v5887, %v5892
      %v5924 = vmul.f32 %v5888, %v5892
      %v5925 = vld [vmem:[%s12] sm:$0xff]
      %v5926 = vld [vmem:[%s12 + $0x8] sm:$0xff]
      %v5927 = vld [vmem:[%s12 + $0x10] sm:$0xff]
      %v5928 = vld [vmem:[%s12 + $0x18] sm:$0xff]
      %v5929 = vld [vmem:[%s12 + $0x20] sm:$0xff]
      %v5930 = vld [vmem:[%s12 + $0x28] sm:$0xff]
      %v5931 = vld [vmem:[%s12 + $0x30] sm:$0xff]
      %v5932 = vld [vmem:[%s12 + $0x38] sm:$0xff]
      %v5933 = vld [vmem:[%s12 + $0x40] sm:$0xff]
      %v5934 = vld [vmem:[%s12 + $0x48] sm:$0xff]
      %v5935 = vld [vmem:[%s12 + $0x50] sm:$0xff]
      %v5936 = vld [vmem:[%s12 + $0x58] sm:$0xff]
      %v5937 = vld [vmem:[%s12 + $0x60] sm:$0xff]
      %v5938 = vld [vmem:[%s12 + $0x68] sm:$0xff]
      %v5939 = vld [vmem:[%s12 + $0x70] sm:$0xff]
      %v5940 = vld [vmem:[%s12 + $0x78] sm:$0xff]
      %5941 = vmatprep.subr.mxu0 0.0
      %5942 = vmatpush1.msra.mxu0 %v5925
      %5943 = vmatprep.subr.mxu0 0.0
      %5944 = vmatpush1.msra.mxu0 %v5926
      %5945 = vmatprep.subr.mxu0 0.0
      %5946 = vmatpush1.msra.mxu0 %v5927
      %5947 = vmatprep.subr.mxu0 0.0
      %5948 = vmatpush1.msra.mxu0 %v5928
      %5949 = vmatprep.subr.mxu0 0.0
      %5950 = vmatpush1.msra.mxu0 %v5929
      %5951 = vmatprep.subr.mxu0 0.0
      %5952 = vmatpush1.msra.mxu0 %v5930
      %5953 = vmatprep.subr.mxu0 0.0
      %5954 = vmatpush1.msra.mxu0 %v5931
      %5955 = vmatprep.subr.mxu0 0.0
      %5956 = vmatpush1.msra.mxu0 %v5932
      %5957 = vmatprep.subr.mxu0 0.0
      %5958 = vmatpush1.msra.mxu0 %v5933
      %5959 = vmatprep.subr.mxu0 0.0
      %5960 = vmatpush1.msra.mxu0 %v5934
      %5961 = vmatprep.subr.mxu0 0.0
      %5962 = vmatpush1.msra.mxu0 %v5935
      %5963 = vmatprep.subr.mxu0 0.0
      %5964 = vmatpush1.msra.mxu0 %v5936
      %5965 = vmatprep.subr.mxu0 0.0
      %5966 = vmatpush1.msra.mxu0 %v5937
      %5967 = vmatprep.subr.mxu0 0.0
      %5968 = vmatpush1.msra.mxu0 %v5938
      %5969 = vmatprep.subr.mxu0 0.0
      %5970 = vmatpush1.msra.mxu0 %v5939
      %5971 = vmatprep.subr.mxu0 0.0
      %5972 = vmatpush1.msra.mxu0 %v5940
      %5973 = vmatprep.subr.mxu0 0.0
      %5974 = vmatpush1.msra.mxu0 0.0
      %5975 = vmatprep.subr.mxu0 0.0
      %5976 = vmatpush1.msra.mxu0 0.0
      %5977 = vmatprep.subr.mxu0 0.0
      %5978 = vmatpush1.msra.mxu0 0.0
      %5979 = vmatprep.subr.mxu0 0.0
      %5980 = vmatpush1.msra.mxu0 0.0
      %5981 = vmatprep.subr.mxu0 0.0
      %5982 = vmatpush1.msra.mxu0 0.0
      %5983 = vmatprep.subr.mxu0 0.0
      %5984 = vmatpush1.msra.mxu0 0.0
      %5985 = vmatprep.subr.mxu0 0.0
      %5986 = vmatpush1.msra.mxu0 0.0
      %5987 = vmatprep.subr.mxu0 0.0
      %5988 = vmatpush1.msra.mxu0 0.0
      %5989 = vmatprep.subr.mxu0 0.0
      %5990 = vmatpush1.msra.mxu0 0.0
      %5991 = vmatprep.subr.mxu0 0.0
      %5992 = vmatpush1.msra.mxu0 0.0
      %5993 = vmatprep.subr.mxu0 0.0
      %5994 = vmatpush1.msra.mxu0 0.0
      %5995 = vmatprep.subr.mxu0 0.0
      %5996 = vmatpush1.msra.mxu0 0.0
      %5997 = vmatprep.subr.mxu0 0.0
      %5998 = vmatpush1.msra.mxu0 0.0
      %5999 = vmatprep.subr.mxu0 0.0
      %6000 = vmatpush1.msra.mxu0 0.0
      %6001 = vmatprep.subr.mxu0 0.0
      %6002 = vmatpush1.msra.mxu0 0.0
      %6003 = vmatprep.subr.mxu0 0.0
      %6004 = vmatpush1.msra.mxu0 0.0
      %6005 = vmatprep.mubr.f32.mxu0 0.0
      %6006 = vmatmul.mubr.f32.gmra.mrb[0].mxu0 %v5893
      %v6007 = vpop.f32.mrb[0].mxu0
      %v6008 = vadd.f32 0.0, %v6007
      %v6009 = vpop.f32.mrb[0].mxu0
      %6010 = vmatprep.mubr.f32.mxu0 0.0
      %6011 = vmatmul.mubr.f32.gmra.mrb[0].mxu0 %v5894
      %v6012 = vpop.f32.mrb[0].mxu0
      %v6013 = vadd.f32 0.0, %v6012
      %v6014 = vpop.f32.mrb[0].mxu0
      %6015 = vmatprep.mubr.f32.mxu0 0.0
      %6016 = vmatmul.mubr.f32.gmra.mrb[0].mxu0 %v5895
      %v6017 = vpop.f32.mrb[0].mxu0
      %v6018 = vadd.f32 0.0, %v6017
      %v6019 = vpop.f32.mrb[0].mxu0
      %6020 = vmatprep.mubr.f32.mxu0 0.0
      %6021 = vmatmul.mubr.f32.gmra.mrb[0].mxu0 %v5896
      %v6022 = vpop.f32.mrb[0].mxu0
      %v6023 = vadd.f32 0.0, %v6022
      %v6024 = vpop.f32.mrb[0].mxu0
      %6025 = vmatprep.mubr.f32.mxu0 0.0
      %6026 = vmatmul.mubr.f32.gmra.mrb[0].mxu0 %v5897
      %v6027 = vpop.f32.mrb[0].mxu0
      %v6028 = vadd.f32 0.0, %v6027
      %v6029 = vpop.f32.mrb[0].mxu0
      %6030 = vmatprep.mubr.f32.mxu0 0.0
      %6031 = vmatmul.mubr.f32.gmra.mrb[0].mxu0 %v5898
      %v6032 = vpop.f32.mrb[0].mxu0
      %v6033 = vadd.f32 0.0, %v6032
      %v6034 = vpop.f32.mrb[0].mxu0
      %6035 = vmatprep.mubr.f32.mxu0 0.0
      %6036 = vmatmul.mubr.f32.gmra.mrb[0].mxu0 %v5899
      %v6037 = vpop.f32.mrb[0].mxu0
      %v6038 = vadd.f32 0.0, %v6037
      %v6039 = vpop.f32.mrb[0].mxu0
      %6040 = vmatprep.mubr.f32.mxu0 0.0
      %6041 = vmatmul.mubr.f32.gmra.mrb[0].mxu0 %v5900
      %v6042 = vpop.f32.mrb[0].mxu0
      %v6043 = vadd.f32 0.0, %v6042
      %v6044 = vpop.f32.mrb[0].mxu0
      %6045 = vmatprep.mubr.f32.mxu0 0.0
      %6046 = vmatmul.mubr.f32.gmra.mrb[0].mxu0 %v5901
      %v6047 = vpop.f32.mrb[0].mxu0
      %v6048 = vadd.f32 0.0, %v6047
      %v6049 = vpop.f32.mrb[0].mxu0
      %6050 = vmatprep.mubr.f32.mxu0 0.0
      %6051 = vmatmul.mubr.f32.gmra.mrb[0].mxu0 %v5902
      %v6052 = vpop.f32.mrb[0].mxu0
      %v6053 = vadd.f32 0.0, %v6052
      %v6054 = vpop.f32.mrb[0].mxu0
      %6055 = vmatprep.mubr.f32.mxu0 0.0
      %6056 = vmatmul.mubr.f32.gmra.mrb[0].mxu0 %v5903
      %v6057 = vpop.f32.mrb[0].mxu0
      %v6058 = vadd.f32 0.0, %v6057
      %v6059 = vpop.f32.mrb[0].mxu0
      %6060 = vmatprep.mubr.f32.mxu0 0.0
      %6061 = vmatmul.mubr.f32.gmra.mrb[0].mxu0 %v5904
      %v6062 = vpop.f32.mrb[0].mxu0
      %v6063 = vadd.f32 0.0, %v6062
      %v6064 = vpop.f32.mrb[0].mxu0
      %6065 = vmatprep.mubr.f32.mxu0 0.0
      %6066 = vmatmul.mubr.f32.gmra.mrb[0].mxu0 %v5905
      %v6067 = vpop.f32.mrb[0].mxu0
      %v6068 = vadd.f32 0.0, %v6067
      %v6069 = vpop.f32.mrb[0].mxu0
      %6070 = vmatprep.mubr.f32.mxu0 0.0
      %6071 = vmatmul.mubr.f32.gmra.mrb[0].mxu0 %v5906
      %v6072 = vpop.f32.mrb[0].mxu0
      %v6073 = vadd.f32 0.0, %v6072
      %v6074 = vpop.f32.mrb[0].mxu0
      %6075 = vmatprep.mubr.f32.mxu0 0.0
      %6076 = vmatmul.mubr.f32.gmra.mrb[0].mxu0 %v5907
      %v6077 = vpop.f32.mrb[0].mxu0
      %v6078 = vadd.f32 0.0, %v6077
      %v6079 = vpop.f32.mrb[0].mxu0
      %6080 = vmatprep.mubr.f32.mxu0 0.0
      %6081 = vmatmul.mubr.f32.gmra.mrb[0].mxu0 %v5908
      %v6082 = vpop.f32.mrb[0].mxu0
      %v6083 = vadd.f32 0.0, %v6082
      %v6084 = vpop.f32.mrb[0].mxu0
      %6085 = vmatprep.mubr.f32.mxu0 0.0
      %6086 = vmatmul.mubr.f32.gmra.mrb[0].mxu0 %v5909
      %v6087 = vpop.f32.mrb[0].mxu0
      %v6088 = vadd.f32 0.0, %v6087
      %v6089 = vpop.f32.mrb[0].mxu0
      %6090 = vmatprep.mubr.f32.mxu0 0.0
      %6091 = vmatmul.mubr.f32.gmra.mrb[0].mxu0 %v5910
      %v6092 = vpop.f32.mrb[0].mxu0
      %v6093 = vadd.f32 0.0, %v6092
      %v6094 = vpop.f32.mrb[0].mxu0
      %6095 = vmatprep.mubr.f32.mxu0 0.0
      %6096 = vmatmul.mubr.f32.gmra.mrb[0].mxu0 %v5911
      %v6097 = vpop.f32.mrb[0].mxu0
      %v6098 = vadd.f32 0.0, %v6097
      %v6099 = vpop.f32.mrb[0].mxu0
      %6100 = vmatprep.mubr.f32.mxu0 0.0
      %6101 = vmatmul.mubr.f32.gmra.mrb[0].mxu0 %v5912
      %v6102 = vpop.f32.mrb[0].mxu0
      %v6103 = vadd.f32 0.0, %v6102
      %v6104 = vpop.f32.mrb[0].mxu0
      %6105 = vmatprep.mubr.f32.mxu0 0.0
      %6106 = vmatmul.mubr.f32.gmra.mrb[0].mxu0 %v5913
      %v6107 = vpop.f32.mrb[0].mxu0
      %v6108 = vadd.f32 0.0, %v6107
      %v6109 = vpop.f32.mrb[0].mxu0
      %6110 = vmatprep.mubr.f32.mxu0 0.0
      %6111 = vmatmul.mubr.f32.gmra.mrb[0].mxu0 %v5914
      %v6112 = vpop.f32.mrb[0].mxu0
      %v6113 = vadd.f32 0.0, %v6112
      %v6114 = vpop.f32.mrb[0].mxu0
      %6115 = vmatprep.mubr.f32.mxu0 0.0
      %6116 = vmatmul.mubr.f32.gmra.mrb[0].mxu0 %v5915
      %v6117 = vpop.f32.mrb[0].mxu0
      %v6118 = vadd.f32 0.0, %v6117
      %v6119 = vpop.f32.mrb[0].mxu0
      %6120 = vmatprep.mubr.f32.mxu0 0.0
      %6121 = vmatmul.mubr.f32.gmra.mrb[0].mxu0 %v5916
      %v6122 = vpop.f32.mrb[0].mxu0
      %v6123 = vadd.f32 0.0, %v6122
      %v6124 = vpop.f32.mrb[0].mxu0
      %6125 = vmatprep.mubr.f32.mxu0 0.0
      %6126 = vmatmul.mubr.f32.gmra.mrb[0].mxu0 %v5917
      %v6127 = vpop.f32.mrb[0].mxu0
      %v6128 = vadd.f32 0.0, %v6127
      %v6129 = vpop.f32.mrb[0].mxu0
      %6130 = vmatprep.mubr.f32.mxu0 0.0
      %6131 = vmatmul.mubr.f32.gmra.mrb[0].mxu0 %v5918
      %v6132 = vpop.f32.mrb[0].mxu0
      %v6133 = vadd.f32 0.0, %v6132
      %v6134 = vpop.f32.mrb[0].mxu0
      %6135 = vmatprep.mubr.f32.mxu0 0.0
      %6136 = vmatmul.mubr.f32.gmra.mrb[0].mxu0 %v5919
      %v6137 = vpop.f32.mrb[0].mxu0
      %v6138 = vadd.f32 0.0, %v6137
      %v6139 = vpop.f32.mrb[0].mxu0
      %6140 = vmatprep.mubr.f32.mxu0 0.0
      %6141 = vmatmul.mubr.f32.gmra.mrb[0].mxu0 %v5920
      %v6142 = vpop.f32.mrb[0].mxu0
      %v6143 = vadd.f32 0.0, %v6142
      %v6144 = vpop.f32.mrb[0].mxu0
      %6145 = vmatprep.mubr.f32.mxu0 0.0
      %6146 = vmatmul.mubr.f32.gmra.mrb[0].mxu0 %v5921
      %v6147 = vpop.f32.mrb[0].mxu0
      %v6148 = vadd.f32 0.0, %v6147
      %v6149 = vpop.f32.mrb[0].mxu0
      %6150 = vmatprep.mubr.f32.mxu0 0.0
      %6151 = vmatmul.mubr.f32.gmra.mrb[0].mxu0 %v5922
      %v6152 = vpop.f32.mrb[0].mxu0
      %v6153 = vadd.f32 0.0, %v6152
      %v6154 = vpop.f32.mrb[0].mxu0
      %6155 = vmatprep.mubr.f32.mxu0 0.0
      %6156 = vmatmul.mubr.f32.gmra.mrb[0].mxu0 %v5923
      %v6157 = vpop.f32.mrb[0].mxu0
      %v6158 = vadd.f32 0.0, %v6157
      %v6159 = vpop.f32.mrb[0].mxu0
      %6160 = vmatprep.mubr.f32.mxu0 0.0
      %6161 = vmatmul.mubr.f32.gmra.mrb[0].mxu0 %v5924
      %v6162 = vpop.f32.mrb[0].mxu0
      %v6163 = vadd.f32 0.0, %v6162
      %v6164 = vpop.f32.mrb[0].mxu0
      %6165 = vdwg.mxu0
      %6166 = vxpose.xlu0.b32.start [1/16] %v6008, 128
      %6167 = vxpose.xlu0.b32.cont [2/16] %v6013, 128
      %6168 = vxpose.xlu0.b32.cont [3/16] %v6018, 128
      %6169 = vxpose.xlu0.b32.cont [4/16] %v6023, 128
      %6170 = vxpose.xlu0.b32.cont [5/16] %v6028, 128
      %6171 = vxpose.xlu0.b32.cont [6/16] %v6033, 128
      %6172 = vxpose.xlu0.b32.cont [7/16] %v6038, 128
      %6173 = vxpose.xlu0.b32.cont [8/16] %v6043, 128
      %6174 = vxpose.xlu0.b32.cont [9/16] %v6048, 128
      %6175 = vxpose.xlu0.b32.cont [10/16] %v6053, 128
      %6176 = vxpose.xlu0.b32.cont [11/16] %v6058, 128
      %6177 = vxpose.xlu0.b32.cont [12/16] %v6063, 128
      %6178 = vxpose.xlu0.b32.cont [13/16] %v6068, 128
      %6179 = vxpose.xlu0.b32.cont [14/16] %v6073, 128
      %6180 = vxpose.xlu0.b32.cont [15/16] %v6078, 128
      %6181 = vxpose.xlu0.b32.end [16/16] %v6083, 128
      %v6182 = vpop.trf.xlu0
      %v6183 = vpop.trf.xlu0
      %v6184 = vpop.trf.xlu0
      %v6185 = vpop.trf.xlu0
      %v6186 = vpop.trf.xlu0
      %v6187 = vpop.trf.xlu0
      %v6188 = vpop.trf.xlu0
      %v6189 = vpop.trf.xlu0
      %v6190 = vpop.trf.xlu0
      %v6191 = vpop.trf.xlu0
      %v6192 = vpop.trf.xlu0
      %v6193 = vpop.trf.xlu0
      %v6194 = vpop.trf.xlu0
      %v6195 = vpop.trf.xlu0
      %v6196 = vpop.trf.xlu0
      %v6197 = vpop.trf.xlu0
      %6198 = vxpose.xlu0.b32.start [1/16] %v6088, 128
      %6199 = vxpose.xlu0.b32.cont [2/16] %v6093, 128
      %6200 = vxpose.xlu0.b32.cont [3/16] %v6098, 128
      %6201 = vxpose.xlu0.b32.cont [4/16] %v6103, 128
      %6202 = vxpose.xlu0.b32.cont [5/16] %v6108, 128
      %6203 = vxpose.xlu0.b32.cont [6/16] %v6113, 128
      %6204 = vxpose.xlu0.b32.cont [7/16] %v6118, 128
      %6205 = vxpose.xlu0.b32.cont [8/16] %v6123, 128
      %6206 = vxpose.xlu0.b32.cont [9/16] %v6128, 128
      %6207 = vxpose.xlu0.b32.cont [10/16] %v6133, 128
      %6208 = vxpose.xlu0.b32.cont [11/16] %v6138, 128
      %6209 = vxpose.xlu0.b32.cont [12/16] %v6143, 128
      %6210 = vxpose.xlu0.b32.cont [13/16] %v6148, 128
      %6211 = vxpose.xlu0.b32.cont [14/16] %v6153, 128
      %6212 = vxpose.xlu0.b32.cont [15/16] %v6158, 128
      %6213 = vxpose.xlu0.b32.end [16/16] %v6163, 128
      %v6214 = vpop.trf.xlu0
      %v6215 = vpop.trf.xlu0
      %v6216 = vpop.trf.xlu0
      %v6217 = vpop.trf.xlu0
      %v6218 = vpop.trf.xlu0
      %v6219 = vpop.trf.xlu0
      %v6220 = vpop.trf.xlu0
      %v6221 = vpop.trf.xlu0
      %v6222 = vpop.trf.xlu0
      %v6223 = vpop.trf.xlu0
      %v6224 = vpop.trf.xlu0
      %v6225 = vpop.trf.xlu0
      %v6226 = vpop.trf.xlu0
      %v6227 = vpop.trf.xlu0
      %v6228 = vpop.trf.xlu0
      %v6229 = vpop.trf.xlu0
      %v6230 = vadd.f32 %v441, %v6182
      %v6231 = vadd.f32 %v442, %v6214
      %v6232 = vadd.f32 %v443, %v6183
      %v6233 = vadd.f32 %v444, %v6215
      %v6234 = vadd.f32 %v445, %v6184
      %v6235 = vadd.f32 %v446, %v6216
      %v6236 = vadd.f32 %v447, %v6185
      %v6237 = vadd.f32 %v448, %v6217
      %6238 = vst [vmem:[%s440] sm:$0xff] %v6230
      %6239 = vst [vmem:[%s440 + $0x8] sm:$0xff] %v6231
      %6240 = vst [vmem:[%s440 + $0x10] sm:$0xff] %v6232
      %6241 = vst [vmem:[%s440 + $0x18] sm:$0xff] %v6233
      %6242 = vst [vmem:[%s440 + $0x20] sm:$0xff] %v6234
      %6243 = vst [vmem:[%s440 + $0x28] sm:$0xff] %v6235
      %6244 = vst [vmem:[%s440 + $0x30] sm:$0xff] %v6236
      %6245 = vst [vmem:[%s440 + $0x38] sm:$0xff] %v6237
      %p6246 = scmp.lt.s32.totalorder %s24, 1
      %s6247 = scalar_select %p6246, %s24, 1
      %s6248 = smul.addr %s6247, 8
      %s6249 = smul.addr %s6248, 8
      %s6250 = scalar_lea.vmem %s13, %s6249
      // Predicated region
      $region73: #{resblock_forward.1} parent=71 // pred_check
        %p6251 = pneg %p320
      $region74: #{resblock_forward.1} parent=71 // pred_check_branch
        %6253 = sbr.rel (%p6251) target = $region76
      $region75: #{resblock_forward.1} parent=71 // pred_region
        _
      $region76: #{resblock_forward.1} parent=71 // pred_fallthru
        _
    $region72: #{resblock_forward.1} parent=5 // pred_fallthru
      _
    %p6254 = scmp.le.s32.totalorder 2, %s19
    // Predicated region
    $region77: #{resblock_forward.1} parent=5 // pred_check
      %p6255 = pneg %p6254
    $region78: #{resblock_forward.1} parent=5 // pred_check_branch
      %6257 = sbr.rel (%p6255) target = $region80
    $region79: #{resblock_forward.1} parent=5 // pred_region
      %s6258 = ssub.s32 %s19, 2
      // Predicated region
      $region81: #{resblock_forward.1} parent=79 // pred_check
        %p6259 = pneg %p326
      $region82: #{resblock_forward.1} parent=79 // pred_check_branch
        %6261 = sbr.rel (%p6259) target = $region84
      $region83: #{resblock_forward.1} parent=79 // pred_region
        %p6262 = scmp.lt.s32.totalorder %s25, 1
        %s6263 = scalar_select %p6262, %s25, 1
        %s6264 = smul.addr %s6263, 8
        %s6265 = smul.addr %s6264, 8
        %s6266 = scalar_lea.vmem %s13, %s6265
      $region84: #{resblock_forward.1} parent=79 // pred_fallthru
        _
    $region80: #{resblock_forward.1} parent=5 // pred_fallthru
      _
  $region6: #{resblock_forward.1} parent=0 // loop_footer
    %s23 = sadd.s32 1, %s19
  $region7: #{resblock_forward.1} parent=0 // loop_footer_branch
    %18 = sbr.rel target = $region3
  $region8: #{resblock_forward.1} parent=0 // loop_exit
    _

</llo_original>
